<compile_context>
chip_gen: v7x
topology: tpu7x:2x2x1
jax: 0.10.0
libtpu: 0.0.40
codegen_flags: <defaults>
</compile_context>

<pallas_src>
import functools

import jax
import jax.numpy as jnp
from jax.experimental import pallas as pl
from jax.experimental.pallas import tpu as pltpu

LEAKY_SLOPE = 0.2   # nn.LeakyReLU(0.2)
IN_EPS = 1e-5       # nn.InstanceNorm2d default eps
LANE = 128


def _pad_to(n, m):
    return ((n + m - 1) // m) * m


# ----------------------------------------------------------------------------
# Pallas kernels
# ----------------------------------------------------------------------------
def _conv_gemm_kernel(x_ref, w_ref, b_ref, o_ref, *, neg_slope, instance_norm,
                      eps):
    """One sample's conv-as-GEMM with fused bias + LeakyReLU (+ InstanceNorm).

    x_ref: (Ms, K) bf16, w_ref: (K, Np) bf16, b_ref: (1, Np) f32,
    o_ref: (Ms, Np) f32, where Ms = Ho*Wo of a single sample.
    """
    y = jnp.dot(x_ref[...], w_ref[...], preferred_element_type=jnp.float32)
    y = y + b_ref[...]
    y = jnp.where(y > 0, y, neg_slope * y)            # LeakyReLU(0.2)
    if instance_norm:
        # InstanceNorm2d: per (sample, channel) stats over spatial positions
        # (= rows of this per-sample block); biased variance, no affine.
        mean = jnp.mean(y, axis=0, keepdims=True)
        var = jnp.mean(jnp.square(y - mean), axis=0, keepdims=True)
        y = (y - mean) * jax.lax.rsqrt(var + eps)
    o_ref[...] = y.astype(o_ref.dtype)


def _head_kernel(x_ref, w_ref, b_ref, o_ref, *, n_classes):
    """Linear + Softmax fused; lanes >= n_classes are padding and are masked."""
    logits = jnp.dot(x_ref[...], w_ref[...], preferred_element_type=jnp.float32)
    logits = logits + b_ref[...]
    lane = jax.lax.broadcasted_iota(jnp.int32, logits.shape, dimension=1)
    valid = lane < n_classes
    logits = jnp.where(valid, logits, -1e30)
    m = jnp.max(logits, axis=1, keepdims=True)
    p = jnp.where(valid, jnp.exp(logits - m), 0.0)
    o_ref[...] = (p / jnp.sum(p, axis=1, keepdims=True)).astype(o_ref.dtype)


# ----------------------------------------------------------------------------
# Wrappers (im2col / layout glue in plain JAX, GEMMs + epilogues in Pallas)
# ----------------------------------------------------------------------------
def conv_block(x_nhwc, w, b, *, instance_norm):
    """Conv2d(3x3, stride=2, pad=1) + LeakyReLU(0.2) [+ InstanceNorm2d].

    `x_nhwc` may carry zero-padded trailing channels (lane padding from the
    previous block); `w`'s input-channel dim is zero-padded to match, which is
    mathematically exact.  Returns NHWC with C_out padded to a multiple of 128.
    """
    B, H, W, Cx = x_nhwc.shape
    C_out, C_in, _, _ = w.shape
    if Cx > C_in:                                     # absorb lane padding
        w = jnp.pad(w, ((0, 0), (0, Cx - C_in), (0, 0), (0, 0)))

    Ho, Wo = (H - 1) // 2 + 1, (W - 1) // 2 + 1
    xp = jnp.pad(x_nhwc, ((0, 0), (1, 1), (1, 1), (0, 0)))
    # stride-2 im2col; K ordering is (dy, dx, c)
    cols = [xp[:, dy::2, dx::2, :][:, :Ho, :Wo, :]
            for dy in range(3) for dx in range(3)]
    patches = jnp.concatenate(cols, axis=-1).reshape(B, Ho * Wo, 9 * Cx)

    # PyTorch Conv2d weight [C_out, C_in, kh, kw] -> [K, C_out], K = (dy,dx,c)
    w_mat = jnp.transpose(w, (2, 3, 1, 0)).reshape(9 * Cx, C_out)

    K = 9 * Cx
    Kp = _pad_to(K, LANE)                             # lane-align contraction
    Np = _pad_to(C_out, LANE)                         # lane-dense output
    if Kp != K:
        patches = jnp.pad(patches, ((0, 0), (0, 0), (0, Kp - K)))
        w_mat = jnp.pad(w_mat, ((0, Kp - K), (0, 0)))
    if Np != C_out:
        w_mat = jnp.pad(w_mat, ((0, 0), (0, Np - C_out)))
        b = jnp.pad(b, (0, Np - C_out))
    Ms = Ho * Wo

    kernel = functools.partial(_conv_gemm_kernel, neg_slope=LEAKY_SLOPE,
                               instance_norm=instance_norm, eps=IN_EPS)
    out = pl.pallas_call(
        kernel,
        out_shape=jax.ShapeDtypeStruct((B, Ms, Np), jnp.float32),
        grid_spec=pltpu.PrefetchScalarGridSpec(
            num_scalar_prefetch=0,
            grid=(B,),
            in_specs=[
                pl.BlockSpec((pl.Squeezed(), Ms, Kp), lambda n: (n, 0, 0)),
                pl.BlockSpec((Kp, Np), lambda n: (0, 0)),
                pl.BlockSpec((1, Np), lambda n: (0, 0)),
            ],
            out_specs=pl.BlockSpec((pl.Squeezed(), Ms, Np),
                                   lambda n: (n, 0, 0)),
        ),
        compiler_params=pltpu.CompilerParams(
            dimension_semantics=("parallel",)),
    )(patches.astype(jnp.bfloat16), w_mat.astype(jnp.bfloat16),
      b.reshape(1, Np).astype(jnp.float32))
    return out.reshape(B, Ho, Wo, Np)


def classifier_head(feat, w_lin, b_lin, n_classes):
    """Linear(in_features, n_classes) + Softmax(dim=1), fused in one kernel."""
    B, _ = feat.shape
    Np = _pad_to(n_classes, LANE)
    w_mat = jnp.pad(jnp.transpose(w_lin), ((0, 0), (0, Np - n_classes)))
    b = jnp.pad(b_lin, (0, Np - n_classes))
    kernel = functools.partial(_head_kernel, n_classes=n_classes)
    out = pl.pallas_call(
        kernel,
        out_shape=jax.ShapeDtypeStruct((B, Np), jnp.float32),
    )(feat.astype(jnp.bfloat16), w_mat.astype(jnp.bfloat16),
      b.reshape(1, Np).astype(jnp.float32))
    return out[:, :n_classes]


# ----------------------------------------------------------------------------
# Model
# ----------------------------------------------------------------------------
def classifier_forward(img_nchw, params):
    x = jnp.transpose(img_nchw, (0, 2, 3, 1))         # NCHW -> NHWC
    x = conv_block(x, params["w1"], params["b1"], instance_norm=False)
    x = conv_block(x, params["w2"], params["b2"], instance_norm=True)
    x = conv_block(x, params["w3"], params["b3"], instance_norm=True)
    x = conv_block(x, params["w4"], params["b4"], instance_norm=True)
    # PyTorch's .view(B, -1) flattens NCHW features in (C, H, W) order.
    feat = jnp.transpose(x, (0, 3, 1, 2)).reshape(x.shape[0], -1)
    return classifier_head(feat, params["w_lin"], params["b_lin"],
                           params["b_lin"].shape[0])


def init_params(key, channels, img_size, n_classes):
    keys = jax.random.split(key, 10)

    def conv_init(kw_, kb_, cin, cout):
        w = jax.random.normal(kw_, (cout, cin, 3, 3), jnp.float32) / jnp.sqrt(
            9.0 * cin)
        b = 0.02 * jax.random.normal(kb_, (cout,), jnp.float32)
        return w, b

    w1, b1 = conv_init(keys[0], keys[1], channels, 64)
    w2, b2 = conv_init(keys[2], keys[3], 64, 128)
    w3, b3 = conv_init(keys[4], keys[5], 128, 256)
    w4, b4 = conv_init(keys[6], keys[7], 256, 512)
    in_feat = 512 * (img_size // 2 ** 4) ** 2
    w_lin = jax.random.normal(keys[8], (n_classes, in_feat),
                              jnp.float32) / jnp.sqrt(float(in_feat))
    b_lin = 0.02 * jax.random.normal(keys[9], (n_classes,), jnp.float32)
    return dict(w1=w1, b1=b1, w2=w2, b2=b2, w3=w3, b3=b3, w4=w4, b4=b4,
                w_lin=w_lin, b_lin=b_lin)


if __name__ == "__main__":
    # opt.channels=3, opt.img_size=32, opt.n_classes=10, batch=2
    BATCH, CHANNELS, IMG_SIZE, N_CLASSES = 2, 3, 32, 10
    key = jax.random.PRNGKey(0)
    k_img, k_par = jax.random.split(key)
    img = jax.random.normal(k_img, (BATCH, CHANNELS, IMG_SIZE, IMG_SIZE),
                            jnp.float32)
    params = init_params(k_par, CHANNELS, IMG_SIZE, N_CLASSES)

    label = jax.jit(classifier_forward)(img, params)
    label = jax.block_until_ready(label)

    assert label.shape == (BATCH, N_CLASSES), label.shape
    assert bool(jnp.all(jnp.isfinite(label)))
    assert bool(jnp.all(jnp.abs(jnp.sum(label, axis=-1) - 1.0) < 1e-3))
    print("KERNEL_OK")
</pallas_src>

<mosaic_0001>
module attributes {stable_mosaic.version = 11 : i64} {
  func.func @_conv_gemm_kernel(%arg0: i32, %arg1: memref<1x256x128xbf16, #tpu.memory_space<vmem>>, %arg2: memref<128x128xbf16, #tpu.memory_space<vmem>>, %arg3: memref<1x128xf32, #tpu.memory_space<vmem>>, %arg4: memref<1x256x128xf32, #tpu.memory_space<vmem>>) attributes {dimension_semantics = [#tpu.dimension_semantics<parallel>], iteration_bounds = array<i64: 2>, scalar_prefetch = 0 : i64, scratch_operands = 0 : i64, tpu.core_type = #tpu.core_type<tc>, window_params = [{transform_indices = @transform_0, window_bounds = array<i64: 1, 256, 128>}, {pipeline_mode = #tpu.pipeline_mode<synchronous>, transform_indices = @transform_1, window_bounds = array<i64: 128, 128>}, {pipeline_mode = #tpu.pipeline_mode<synchronous>, transform_indices = @transform_2, window_bounds = array<i64: 1, 128>}, {transform_indices = @transform_3, window_bounds = array<i64: 1, 256, 128>}]} {
    %c0 = arith.constant 0 : index
    %c0_0 = arith.constant 0 : index
    %c0_1 = arith.constant 0 : index
    %0 = vector.load %arg1[%c0, %c0_0, %c0_1] : memref<1x256x128xbf16, #tpu.memory_space<vmem>>, vector<1x256x128xbf16>
    %1 = vector.shape_cast %0 : vector<1x256x128xbf16> to vector<256x128xbf16>
    %c0_2 = arith.constant 0 : index
    %c0_3 = arith.constant 0 : index
    %2 = vector.load %arg2[%c0_2, %c0_3] : memref<128x128xbf16, #tpu.memory_space<vmem>>, vector<128x128xbf16>
    %cst = arith.constant dense<0.000000e+00> : vector<256x128xf32>
    %3 = tpu.matmul %1, %2, %cst {dimension_numbers = #tpu.dot_dimension_numbers<[1], [0], [0], [1], [0, 0, 1, 1], [], []>} : vector<256x128xbf16>, vector<128x128xbf16>, vector<256x128xf32> -> vector<256x128xf32>
    %c0_4 = arith.constant 0 : index
    %c0_5 = arith.constant 0 : index
    %4 = vector.load %arg3[%c0_4, %c0_5] : memref<1x128xf32, #tpu.memory_space<vmem>>, vector<1x128xf32>
    %5 = vector.broadcast %4 : vector<1x128xf32> to vector<256x128xf32>
    %6 = arith.addf %3, %5 : vector<256x128xf32>
    %cst_6 = arith.constant 0.000000e+00 : f32
    %7 = vector.broadcast %cst_6 : f32 to vector<256x128xf32>
    %8 = arith.cmpf ogt, %6, %7 : vector<256x128xf32>
    %cst_7 = arith.constant 2.000000e-01 : f32
    %9 = vector.broadcast %cst_7 : f32 to vector<256x128xf32>
    %10 = arith.mulf %9, %6 : vector<256x128xf32>
    %11 = arith.select %8, %6, %10 : vector<256x128xi1>, vector<256x128xf32>
    %c0_8 = arith.constant 0 : index
    %c0_9 = arith.constant 0 : index
    %c0_10 = arith.constant 0 : index
    %12 = vector.load %arg4[%c0_8, %c0_9, %c0_10] : memref<1x256x128xf32, #tpu.memory_space<vmem>>, vector<1x256x128xf32>
    %13 = vector.shape_cast %12 : vector<1x256x128xf32> to vector<256x128xf32>
    %14 = vector.shape_cast %11 : vector<256x128xf32> to vector<1x256x128xf32>
    tpu.vector_store %arg4[%c0_8, %c0_9, %c0_10], %14 {strides = array<i32>} : memref<1x256x128xf32, #tpu.memory_space<vmem>>, vector<1x256x128xf32>,
    return
  }
  func.func @transform_0(%arg0: i32) -> (i32, i32, i32) {
    %c0_i32 = arith.constant 0 : i32
    %c0_i32_0 = arith.constant 0 : i32
    %c0_i32_1 = arith.constant 0 : i32
    return %arg0, %c0_i32, %c0_i32_0 : i32, i32, i32
  }
  func.func @transform_1(%arg0: i32) -> (i32, i32) {
    %c0_i32 = arith.constant 0 : i32
    %c0_i32_0 = arith.constant 0 : i32
    %c0_i32_1 = arith.constant 0 : i32
    return %c0_i32, %c0_i32_0 : i32, i32
  }
  func.func @transform_2(%arg0: i32) -> (i32, i32) {
    %c0_i32 = arith.constant 0 : i32
    %c0_i32_0 = arith.constant 0 : i32
    %c0_i32_1 = arith.constant 0 : i32
    return %c0_i32, %c0_i32_0 : i32, i32
  }
  func.func @transform_3(%arg0: i32) -> (i32, i32, i32) {
    %c0_i32 = arith.constant 0 : i32
    %c0_i32_0 = arith.constant 0 : i32
    %c0_i32_1 = arith.constant 0 : i32
    return %arg0, %c0_i32, %c0_i32_0 : i32, i32, i32
  }
}

module attributes {stable_mosaic.version = 11 : i64} {
  func.func @_conv_gemm_kernel(%arg0: i32, %arg1: memref<1x64x1152xbf16, #tpu.memory_space<vmem>>, %arg2: memref<1152x128xbf16, #tpu.memory_space<vmem>>, %arg3: memref<1x128xf32, #tpu.memory_space<vmem>>, %arg4: memref<1x64x128xf32, #tpu.memory_space<vmem>>) attributes {dimension_semantics = [#tpu.dimension_semantics<parallel>], iteration_bounds = array<i64: 2>, scalar_prefetch = 0 : i64, scratch_operands = 0 : i64, tpu.core_type = #tpu.core_type<tc>, window_params = [{transform_indices = @transform_0, window_bounds = array<i64: 1, 64, 1152>}, {pipeline_mode = #tpu.pipeline_mode<synchronous>, transform_indices = @transform_1, window_bounds = array<i64: 1152, 128>}, {pipeline_mode = #tpu.pipeline_mode<synchronous>, transform_indices = @transform_2, window_bounds = array<i64: 1, 128>}, {transform_indices = @transform_3, window_bounds = array<i64: 1, 64, 128>}]} {
    %c0 = arith.constant 0 : index
    %c0_0 = arith.constant 0 : index
    %c0_1 = arith.constant 0 : index
    %0 = vector.load %arg1[%c0, %c0_0, %c0_1] : memref<1x64x1152xbf16, #tpu.memory_space<vmem>>, vector<1x64x1152xbf16>
    %1 = vector.shape_cast %0 : vector<1x64x1152xbf16> to vector<64x1152xbf16>
    %c0_2 = arith.constant 0 : index
    %c0_3 = arith.constant 0 : index
    %2 = vector.load %arg2[%c0_2, %c0_3] : memref<1152x128xbf16, #tpu.memory_space<vmem>>, vector<1152x128xbf16>
    %cst = arith.constant dense<0.000000e+00> : vector<64x128xf32>
    %3 = tpu.matmul %1, %2, %cst {dimension_numbers = #tpu.dot_dimension_numbers<[1], [0], [0], [1], [0, 0, 1, 1], [], []>} : vector<64x1152xbf16>, vector<1152x128xbf16>, vector<64x128xf32> -> vector<64x128xf32>
    %c0_4 = arith.constant 0 : index
    %c0_5 = arith.constant 0 : index
    %4 = vector.load %arg3[%c0_4, %c0_5] : memref<1x128xf32, #tpu.memory_space<vmem>>, vector<1x128xf32>
    %5 = vector.broadcast %4 : vector<1x128xf32> to vector<64x128xf32>
    %6 = arith.addf %3, %5 : vector<64x128xf32>
    %cst_6 = arith.constant 0.000000e+00 : f32
    %7 = vector.broadcast %cst_6 : f32 to vector<64x128xf32>
    %8 = arith.cmpf ogt, %6, %7 : vector<64x128xf32>
    %cst_7 = arith.constant 2.000000e-01 : f32
    %9 = vector.broadcast %cst_7 : f32 to vector<64x128xf32>
    %10 = arith.mulf %9, %6 : vector<64x128xf32>
    %11 = arith.select %8, %6, %10 : vector<64x128xi1>, vector<64x128xf32>
    %cst_8 = arith.constant dense<0.000000e+00> : vector<128xf32>
    %12 = vector.multi_reduction <add>, %11, %cst_8 [0] : vector<64x128xf32> to vector<128xf32>
    %13 = vector.shape_cast %12 : vector<128xf32> to vector<1x128xf32>
    %cst_9 = arith.constant 6.400000e+01 : f32
    %14 = vector.broadcast %cst_9 : f32 to vector<1x128xf32>
    %15 = arith.divf %13, %14 : vector<1x128xf32>
    %16 = vector.broadcast %15 : vector<1x128xf32> to vector<64x128xf32>
    %17 = arith.subf %11, %16 : vector<64x128xf32>
    %18 = arith.mulf %17, %17 : vector<64x128xf32>
    %cst_10 = arith.constant dense<0.000000e+00> : vector<128xf32>
    %19 = vector.multi_reduction <add>, %18, %cst_10 [0] : vector<64x128xf32> to vector<128xf32>
    %20 = vector.shape_cast %19 : vector<128xf32> to vector<1x128xf32>
    %cst_11 = arith.constant 6.400000e+01 : f32
    %21 = vector.broadcast %cst_11 : f32 to vector<1x128xf32>
    %22 = arith.divf %20, %21 : vector<1x128xf32>
    %23 = vector.broadcast %15 : vector<1x128xf32> to vector<64x128xf32>
    %24 = arith.subf %11, %23 : vector<64x128xf32>
    %cst_12 = arith.constant 9.99999974E-6 : f32
    %25 = vector.broadcast %cst_12 : f32 to vector<1x128xf32>
    %26 = arith.addf %22, %25 : vector<1x128xf32>
    %27 = math.rsqrt %26 : vector<1x128xf32>
    %28 = vector.broadcast %27 : vector<1x128xf32> to vector<64x128xf32>
    %29 = arith.mulf %24, %28 : vector<64x128xf32>
    %c0_13 = arith.constant 0 : index
    %c0_14 = arith.constant 0 : index
    %c0_15 = arith.constant 0 : index
    %30 = vector.load %arg4[%c0_13, %c0_14, %c0_15] : memref<1x64x128xf32, #tpu.memory_space<vmem>>, vector<1x64x128xf32>
    %31 = vector.shape_cast %30 : vector<1x64x128xf32> to vector<64x128xf32>
    %32 = vector.shape_cast %29 : vector<64x128xf32> to vector<1x64x128xf32>
    tpu.vector_store %arg4[%c0_13, %c0_14, %c0_15], %32 {strides = array<i32>} : memref<1x64x128xf32, #tpu.memory_space<vmem>>, vector<1x64x128xf32>,
    return
  }
  func.func @transform_0(%arg0: i32) -> (i32, i32, i32) {
    %c0_i32 = arith.constant 0 : i32
    %c0_i32_0 = arith.constant 0 : i32
    %c0_i32_1 = arith.constant 0 : i32
    return %arg0, %c0_i32, %c0_i32_0 : i32, i32, i32
  }
  func.func @transform_1(%arg0: i32) -> (i32, i32) {
    %c0_i32 = arith.constant 0 : i32
    %c0_i32_0 = arith.constant 0 : i32
    %c0_i32_1 = arith.constant 0 : i32
    return %c0_i32, %c0_i32_0 : i32, i32
  }
  func.func @transform_2(%arg0: i32) -> (i32, i32) {
    %c0_i32 = arith.constant 0 : i32
    %c0_i32_0 = arith.constant 0 : i32
    %c0_i32_1 = arith.constant 0 : i32
    return %c0_i32, %c0_i32_0 : i32, i32
  }
  func.func @transform_3(%arg0: i32) -> (i32, i32, i32) {
    %c0_i32 = arith.constant 0 : i32
    %c0_i32_0 = arith.constant 0 : i32
    %c0_i32_1 = arith.constant 0 : i32
    return %arg0, %c0_i32, %c0_i32_0 : i32, i32, i32
  }
}

module attributes {stable_mosaic.version = 11 : i64} {
  func.func @_conv_gemm_kernel(%arg0: i32, %arg1: memref<1x16x1152xbf16, #tpu.memory_space<vmem>>, %arg2: memref<1152x256xbf16, #tpu.memory_space<vmem>>, %arg3: memref<1x256xf32, #tpu.memory_space<vmem>>, %arg4: memref<1x16x256xf32, #tpu.memory_space<vmem>>) attributes {dimension_semantics = [#tpu.dimension_semantics<parallel>], iteration_bounds = array<i64: 2>, scalar_prefetch = 0 : i64, scratch_operands = 0 : i64, tpu.core_type = #tpu.core_type<tc>, window_params = [{transform_indices = @transform_0, window_bounds = array<i64: 1, 16, 1152>}, {pipeline_mode = #tpu.pipeline_mode<synchronous>, transform_indices = @transform_1, window_bounds = array<i64: 1152, 256>}, {pipeline_mode = #tpu.pipeline_mode<synchronous>, transform_indices = @transform_2, window_bounds = array<i64: 1, 256>}, {transform_indices = @transform_3, window_bounds = array<i64: 1, 16, 256>}]} {
    %c0 = arith.constant 0 : index
    %c0_0 = arith.constant 0 : index
    %c0_1 = arith.constant 0 : index
    %0 = vector.load %arg1[%c0, %c0_0, %c0_1] : memref<1x16x1152xbf16, #tpu.memory_space<vmem>>, vector<1x16x1152xbf16>
    %1 = vector.shape_cast %0 : vector<1x16x1152xbf16> to vector<16x1152xbf16>
    %c0_2 = arith.constant 0 : index
    %c0_3 = arith.constant 0 : index
    %2 = vector.load %arg2[%c0_2, %c0_3] : memref<1152x256xbf16, #tpu.memory_space<vmem>>, vector<1152x256xbf16>
    %cst = arith.constant dense<0.000000e+00> : vector<16x256xf32>
    %3 = tpu.matmul %1, %2, %cst {dimension_numbers = #tpu.dot_dimension_numbers<[1], [0], [0], [1], [0, 0, 1, 1], [], []>} : vector<16x1152xbf16>, vector<1152x256xbf16>, vector<16x256xf32> -> vector<16x256xf32>
    %c0_4 = arith.constant 0 : index
    %c0_5 = arith.constant 0 : index
    %4 = vector.load %arg3[%c0_4, %c0_5] : memref<1x256xf32, #tpu.memory_space<vmem>>, vector<1x256xf32>
    %5 = vector.broadcast %4 : vector<1x256xf32> to vector<16x256xf32>
    %6 = arith.addf %3, %5 : vector<16x256xf32>
    %cst_6 = arith.constant 0.000000e+00 : f32
    %7 = vector.broadcast %cst_6 : f32 to vector<16x256xf32>
    %8 = arith.cmpf ogt, %6, %7 : vector<16x256xf32>
    %cst_7 = arith.constant 2.000000e-01 : f32
    %9 = vector.broadcast %cst_7 : f32 to vector<16x256xf32>
    %10 = arith.mulf %9, %6 : vector<16x256xf32>
    %11 = arith.select %8, %6, %10 : vector<16x256xi1>, vector<16x256xf32>
    %cst_8 = arith.constant dense<0.000000e+00> : vector<256xf32>
    %12 = vector.multi_reduction <add>, %11, %cst_8 [0] : vector<16x256xf32> to vector<256xf32>
    %13 = vector.shape_cast %12 : vector<256xf32> to vector<1x256xf32>
    %cst_9 = arith.constant 1.600000e+01 : f32
    %14 = vector.broadcast %cst_9 : f32 to vector<1x256xf32>
    %15 = arith.divf %13, %14 : vector<1x256xf32>
    %16 = vector.broadcast %15 : vector<1x256xf32> to vector<16x256xf32>
    %17 = arith.subf %11, %16 : vector<16x256xf32>
    %18 = arith.mulf %17, %17 : vector<16x256xf32>
    %cst_10 = arith.constant dense<0.000000e+00> : vector<256xf32>
    %19 = vector.multi_reduction <add>, %18, %cst_10 [0] : vector<16x256xf32> to vector<256xf32>
    %20 = vector.shape_cast %19 : vector<256xf32> to vector<1x256xf32>
    %cst_11 = arith.constant 1.600000e+01 : f32
    %21 = vector.broadcast %cst_11 : f32 to vector<1x256xf32>
    %22 = arith.divf %20, %21 : vector<1x256xf32>
    %23 = vector.broadcast %15 : vector<1x256xf32> to vector<16x256xf32>
    %24 = arith.subf %11, %23 : vector<16x256xf32>
    %cst_12 = arith.constant 9.99999974E-6 : f32
    %25 = vector.broadcast %cst_12 : f32 to vector<1x256xf32>
    %26 = arith.addf %22, %25 : vector<1x256xf32>
    %27 = math.rsqrt %26 : vector<1x256xf32>
    %28 = vector.broadcast %27 : vector<1x256xf32> to vector<16x256xf32>
    %29 = arith.mulf %24, %28 : vector<16x256xf32>
    %c0_13 = arith.constant 0 : index
    %c0_14 = arith.constant 0 : index
    %c0_15 = arith.constant 0 : index
    %30 = vector.load %arg4[%c0_13, %c0_14, %c0_15] : memref<1x16x256xf32, #tpu.memory_space<vmem>>, vector<1x16x256xf32>
    %31 = vector.shape_cast %30 : vector<1x16x256xf32> to vector<16x256xf32>
    %32 = vector.shape_cast %29 : vector<16x256xf32> to vector<1x16x256xf32>
    tpu.vector_store %arg4[%c0_13, %c0_14, %c0_15], %32 {strides = array<i32>} : memref<1x16x256xf32, #tpu.memory_space<vmem>>, vector<1x16x256xf32>,
    return
  }
  func.func @transform_0(%arg0: i32) -> (i32, i32, i32) {
    %c0_i32 = arith.constant 0 : i32
    %c0_i32_0 = arith.constant 0 : i32
    %c0_i32_1 = arith.constant 0 : i32
    return %arg0, %c0_i32, %c0_i32_0 : i32, i32, i32
  }
  func.func @transform_1(%arg0: i32) -> (i32, i32) {
    %c0_i32 = arith.constant 0 : i32
    %c0_i32_0 = arith.constant 0 : i32
    %c0_i32_1 = arith.constant 0 : i32
    return %c0_i32, %c0_i32_0 : i32, i32
  }
  func.func @transform_2(%arg0: i32) -> (i32, i32) {
    %c0_i32 = arith.constant 0 : i32
    %c0_i32_0 = arith.constant 0 : i32
    %c0_i32_1 = arith.constant 0 : i32
    return %c0_i32, %c0_i32_0 : i32, i32
  }
  func.func @transform_3(%arg0: i32) -> (i32, i32, i32) {
    %c0_i32 = arith.constant 0 : i32
    %c0_i32_0 = arith.constant 0 : i32
    %c0_i32_1 = arith.constant 0 : i32
    return %arg0, %c0_i32, %c0_i32_0 : i32, i32, i32
  }
}

module attributes {stable_mosaic.version = 11 : i64} {
  func.func @_conv_gemm_kernel(%arg0: i32, %arg1: memref<1x4x2304xbf16, #tpu.memory_space<vmem>>, %arg2: memref<2304x512xbf16, #tpu.memory_space<vmem>>, %arg3: memref<1x512xf32, #tpu.memory_space<vmem>>, %arg4: memref<1x4x512xf32, #tpu.memory_space<vmem>>) attributes {dimension_semantics = [#tpu.dimension_semantics<parallel>], iteration_bounds = array<i64: 2>, scalar_prefetch = 0 : i64, scratch_operands = 0 : i64, tpu.core_type = #tpu.core_type<tc>, window_params = [{transform_indices = @transform_0, window_bounds = array<i64: 1, 4, 2304>}, {pipeline_mode = #tpu.pipeline_mode<synchronous>, transform_indices = @transform_1, window_bounds = array<i64: 2304, 512>}, {pipeline_mode = #tpu.pipeline_mode<synchronous>, transform_indices = @transform_2, window_bounds = array<i64: 1, 512>}, {transform_indices = @transform_3, window_bounds = array<i64: 1, 4, 512>}]} {
    %c0 = arith.constant 0 : index
    %c0_0 = arith.constant 0 : index
    %c0_1 = arith.constant 0 : index
    %0 = vector.load %arg1[%c0, %c0_0, %c0_1] : memref<1x4x2304xbf16, #tpu.memory_space<vmem>>, vector<1x4x2304xbf16>
    %1 = vector.shape_cast %0 : vector<1x4x2304xbf16> to vector<4x2304xbf16>
    %c0_2 = arith.constant 0 : index
    %c0_3 = arith.constant 0 : index
    %2 = vector.load %arg2[%c0_2, %c0_3] : memref<2304x512xbf16, #tpu.memory_space<vmem>>, vector<2304x512xbf16>
    %cst = arith.constant dense<0.000000e+00> : vector<4x512xf32>
    %3 = tpu.matmul %1, %2, %cst {dimension_numbers = #tpu.dot_dimension_numbers<[1], [0], [0], [1], [0, 0, 1, 1], [], []>} : vector<4x2304xbf16>, vector<2304x512xbf16>, vector<4x512xf32> -> vector<4x512xf32>
    %c0_4 = arith.constant 0 : index
    %c0_5 = arith.constant 0 : index
    %4 = vector.load %arg3[%c0_4, %c0_5] : memref<1x512xf32, #tpu.memory_space<vmem>>, vector<1x512xf32>
    %5 = vector.broadcast %4 : vector<1x512xf32> to vector<4x512xf32>
    %6 = arith.addf %3, %5 : vector<4x512xf32>
    %cst_6 = arith.constant 0.000000e+00 : f32
    %7 = vector.broadcast %cst_6 : f32 to vector<4x512xf32>
    %8 = arith.cmpf ogt, %6, %7 : vector<4x512xf32>
    %cst_7 = arith.constant 2.000000e-01 : f32
    %9 = vector.broadcast %cst_7 : f32 to vector<4x512xf32>
    %10 = arith.mulf %9, %6 : vector<4x512xf32>
    %11 = arith.select %8, %6, %10 : vector<4x512xi1>, vector<4x512xf32>
    %cst_8 = arith.constant dense<0.000000e+00> : vector<512xf32>
    %12 = vector.multi_reduction <add>, %11, %cst_8 [0] : vector<4x512xf32> to vector<512xf32>
    %13 = vector.shape_cast %12 : vector<512xf32> to vector<1x512xf32>
    %cst_9 = arith.constant 4.000000e+00 : f32
    %14 = vector.broadcast %cst_9 : f32 to vector<1x512xf32>
    %15 = arith.divf %13, %14 : vector<1x512xf32>
    %16 = vector.broadcast %15 : vector<1x512xf32> to vector<4x512xf32>
    %17 = arith.subf %11, %16 : vector<4x512xf32>
    %18 = arith.mulf %17, %17 : vector<4x512xf32>
    %cst_10 = arith.constant dense<0.000000e+00> : vector<512xf32>
    %19 = vector.multi_reduction <add>, %18, %cst_10 [0] : vector<4x512xf32> to vector<512xf32>
    %20 = vector.shape_cast %19 : vector<512xf32> to vector<1x512xf32>
    %cst_11 = arith.constant 4.000000e+00 : f32
    %21 = vector.broadcast %cst_11 : f32 to vector<1x512xf32>
    %22 = arith.divf %20, %21 : vector<1x512xf32>
    %23 = vector.broadcast %15 : vector<1x512xf32> to vector<4x512xf32>
    %24 = arith.subf %11, %23 : vector<4x512xf32>
    %cst_12 = arith.constant 9.99999974E-6 : f32
    %25 = vector.broadcast %cst_12 : f32 to vector<1x512xf32>
    %26 = arith.addf %22, %25 : vector<1x512xf32>
    %27 = math.rsqrt %26 : vector<1x512xf32>
    %28 = vector.broadcast %27 : vector<1x512xf32> to vector<4x512xf32>
    %29 = arith.mulf %24, %28 : vector<4x512xf32>
    %c0_13 = arith.constant 0 : index
    %c0_14 = arith.constant 0 : index
    %c0_15 = arith.constant 0 : index
    %30 = vector.load %arg4[%c0_13, %c0_14, %c0_15] : memref<1x4x512xf32, #tpu.memory_space<vmem>>, vector<1x4x512xf32>
    %31 = vector.shape_cast %30 : vector<1x4x512xf32> to vector<4x512xf32>
    %32 = vector.shape_cast %29 : vector<4x512xf32> to vector<1x4x512xf32>
    tpu.vector_store %arg4[%c0_13, %c0_14, %c0_15], %32 {strides = array<i32>} : memref<1x4x512xf32, #tpu.memory_space<vmem>>, vector<1x4x512xf32>,
    return
  }
  func.func @transform_0(%arg0: i32) -> (i32, i32, i32) {
    %c0_i32 = arith.constant 0 : i32
    %c0_i32_0 = arith.constant 0 : i32
    %c0_i32_1 = arith.constant 0 : i32
    return %arg0, %c0_i32, %c0_i32_0 : i32, i32, i32
  }
  func.func @transform_1(%arg0: i32) -> (i32, i32) {
    %c0_i32 = arith.constant 0 : i32
    %c0_i32_0 = arith.constant 0 : i32
    %c0_i32_1 = arith.constant 0 : i32
    return %c0_i32, %c0_i32_0 : i32, i32
  }
  func.func @transform_2(%arg0: i32) -> (i32, i32) {
    %c0_i32 = arith.constant 0 : i32
    %c0_i32_0 = arith.constant 0 : i32
    %c0_i32_1 = arith.constant 0 : i32
    return %c0_i32, %c0_i32_0 : i32, i32
  }
  func.func @transform_3(%arg0: i32) -> (i32, i32, i32) {
    %c0_i32 = arith.constant 0 : i32
    %c0_i32_0 = arith.constant 0 : i32
    %c0_i32_1 = arith.constant 0 : i32
    return %arg0, %c0_i32, %c0_i32_0 : i32, i32, i32
  }
}

module attributes {stable_mosaic.version = 11 : i64} {
  func.func @_head_kernel(%arg0: memref<2x2048xbf16, #tpu.memory_space<vmem>>, %arg1: memref<2048x128xbf16, #tpu.memory_space<vmem>>, %arg2: memref<1x128xf32, #tpu.memory_space<vmem>>, %arg3: memref<2x128xf32, #tpu.memory_space<vmem>>) attributes {dimension_semantics = [], scalar_prefetch = 0 : i64, scratch_operands = 0 : i64, tpu.core_type = #tpu.core_type<tc>} {
    %c0 = arith.constant 0 : index
    %c0_0 = arith.constant 0 : index
    %0 = vector.load %arg0[%c0, %c0_0] : memref<2x2048xbf16, #tpu.memory_space<vmem>>, vector<2x2048xbf16>
    %c0_1 = arith.constant 0 : index
    %c0_2 = arith.constant 0 : index
    %1 = vector.load %arg1[%c0_1, %c0_2] : memref<2048x128xbf16, #tpu.memory_space<vmem>>, vector<2048x128xbf16>
    %cst = arith.constant dense<0.000000e+00> : vector<2x128xf32>
    %2 = tpu.matmul %0, %1, %cst {dimension_numbers = #tpu.dot_dimension_numbers<[1], [0], [0], [1], [0, 0, 1, 1], [], []>} : vector<2x2048xbf16>, vector<2048x128xbf16>, vector<2x128xf32> -> vector<2x128xf32>
    %c0_3 = arith.constant 0 : index
    %c0_4 = arith.constant 0 : index
    %3 = vector.load %arg2[%c0_3, %c0_4] : memref<1x128xf32, #tpu.memory_space<vmem>>, vector<1x128xf32>
    %4 = vector.broadcast %3 : vector<1x128xf32> to vector<2x128xf32>
    %5 = arith.addf %2, %4 : vector<2x128xf32>
    %6 = tpu.iota {dimensions = array<i32: 1>} : vector<2x128xi32>
    %c10_i32 = arith.constant 10 : i32
    %7 = vector.broadcast %c10_i32 : i32 to vector<2x128xi32>
    %8 = arith.cmpi slt, %6, %7 : vector<2x128xi32>
    %cst_5 = arith.constant -1.000000e+30 : f32
    %9 = vector.broadcast %cst_5 : f32 to vector<2x128xf32>
    %10 = arith.select %8, %5, %9 : vector<2x128xi1>, vector<2x128xf32>
    %cst_6 = arith.constant dense<0xFF800000> : vector<2xf32>
    %11 = vector.multi_reduction <maximumf>, %10, %cst_6 [1] : vector<2x128xf32> to vector<2xf32>
    %12 = vector.shape_cast %11 : vector<2xf32> to vector<2x1xf32>
    %13 = vector.broadcast %12 : vector<2x1xf32> to vector<2x128xf32>
    %14 = arith.subf %10, %13 : vector<2x128xf32>
    %15 = math.exp %14 : vector<2x128xf32>
    %cst_7 = arith.constant 0.000000e+00 : f32
    %16 = vector.broadcast %cst_7 : f32 to vector<2x128xf32>
    %17 = arith.select %8, %15, %16 : vector<2x128xi1>, vector<2x128xf32>
    %cst_8 = arith.constant dense<0.000000e+00> : vector<2xf32>
    %18 = vector.multi_reduction <add>, %17, %cst_8 [1] : vector<2x128xf32> to vector<2xf32>
    %19 = vector.shape_cast %18 : vector<2xf32> to vector<2x1xf32>
    %20 = vector.broadcast %19 : vector<2x1xf32> to vector<2x128xf32>
    %21 = arith.divf %17, %20 : vector<2x128xf32>
    %c0_9 = arith.constant 0 : index
    %c0_10 = arith.constant 0 : index
    %22 = vector.load %arg3[%c0_9, %c0_10] : memref<2x128xf32, #tpu.memory_space<vmem>>, vector<2x128xf32>
    tpu.vector_store %arg3[%c0_9, %c0_10], %21 {strides = array<i32>} : memref<2x128xf32, #tpu.memory_space<vmem>>, vector<2x128xf32>,
    return
  }
}

</mosaic_0001>

<llo_original>
// kernel: classifier_forward.5
$region0: #{classifier_forward.5}
  #allocation0 [shape = 'u32[]', space=smem, size = 0x4, offset = 0x4, fixed_abs, tag = 'smem constant byte address 0x4 - core index']
  #allocation1 [shape = 'u32[144,128]{1,0:T(1,128)}', space=vmem, size = 0x12000, scoped, tag = 'internal scratch']
  %s0 = inlined_call_operand.vmem [shape: bf16[2,256,128], index: 0, kind: input, shape index: {}]
  %s1 = inlined_call_operand.vmem [shape: bf16[128,128], index: 1, kind: input, shape index: {}]
  %s2 = inlined_call_operand.vmem [shape: f32[1,128], index: 2, kind: input, shape index: {}]
  %s3 = inlined_call_operand.vmem [shape: f32[2,256,128], index: 3, kind: output, shape index: {}]
  %s4 = sld [smem:[#allocation0]]
  $region45: #{classifier_forward.5} parent=0
    _
  %s6 = ssub.s32 1, %s4
  %s7 = scalar_select 0, %s6, %s4
  loop: start=0, step=1, limit=4
  $region2: #{classifier_forward.5} parent=0 // loop_pre_header
    _
  $region3: #{classifier_forward.5} parent=0 // loop_header
    %s9 = sphi 0, %s13
    %p10 = scmp.ge.s32.totalorder %s9, 4
    %s19 = sphi 0, %s21
    %s22 = sphi 0, %s19
    %s23 = sphi 0, %s22
    %s39 = sphi 0, %s23
    %s43 = sphi 0, %s43
    %s45 = sphi 0, %s43
    %s46 = sphi 0, %s45
    %s60 = sphi 0, %s46
    %s64 = sphi 0, %s64
    %s66 = sphi 0, %s64
    %s67 = sphi 0, %s66
    %s81 = sphi 0, %s67
    %s87 = sphi 0, %s89
    %s90 = sphi 0, %s87
    %s91 = sphi 0, %s90
    %s107 = sphi 0, %s91
  $region4: #{classifier_forward.5} parent=0 // loop_header_branch
    %12 = sbr.rel (%p10) target = $region8
  $region5: #{classifier_forward.5} parent=0 // loop_body
    %s14 = ssub.s32 %s9, 1
    %s15 = ssub.s32 %s9, 2
    %s16 = sadd.s32 %s9, 1
    %s17 = ssub.s32 %s9, %s16
    %p18 = scmp.eq.s32.totalorder %s17, 0
    %s20 = sadd.s32 %s19, 1
    %s21 = scalar_select %p18, %s19, %s20
    %p24 = pneg %p18
    %p25 = scmp.eq.s32.totalorder %s9, 1
    %p26 = por %p24, %p25
    %p27 = scmp.ne.s32.totalorder %s19, %s22
    %p28 = scmp.eq.s32.totalorder %s9, 0
    %p29 = por %p27, %p28
    %p30 = scmp.ne.s32.totalorder %s19, %s22
    %p31 = scmp.eq.s32.totalorder %s14, 1
    %p32 = por %p30, %p31
    %p33 = scmp.ne.s32.totalorder %s22, %s23
    %p34 = scmp.eq.s32.totalorder %s14, 0
    %p35 = por %p33, %p34
    %p36 = scmp.ne.s32.totalorder %s22, %s23
    %p37 = scmp.eq.s32.totalorder %s15, 1
    %p38 = por %p36, %p37
    %p40 = scmp.ne.s32.totalorder %s23, %s39
    %p41 = scmp.eq.s32.totalorder %s15, 0
    %p42 = por %p40, %p41
    %s44 = sadd.s32 %s43, 1
    %p47 = scmp.eq.s32.totalorder %s9, 1
    %p48 = scmp.ne.s32.totalorder %s43, %s45
    %p49 = scmp.eq.s32.totalorder %s9, 0
    %p50 = por %p48, %p49
    %p51 = scmp.ne.s32.totalorder %s43, %s45
    %p52 = scmp.eq.s32.totalorder %s14, 1
    %p53 = por %p51, %p52
    %p54 = scmp.ne.s32.totalorder %s45, %s46
    %p55 = scmp.eq.s32.totalorder %s14, 0
    %p56 = por %p54, %p55
    %p57 = scmp.ne.s32.totalorder %s45, %s46
    %p58 = scmp.eq.s32.totalorder %s15, 1
    %p59 = por %p57, %p58
    %p61 = scmp.ne.s32.totalorder %s46, %s60
    %p62 = scmp.eq.s32.totalorder %s15, 0
    %p63 = por %p61, %p62
    %s65 = sadd.s32 %s64, 1
    %p68 = scmp.eq.s32.totalorder %s9, 1
    %p69 = scmp.ne.s32.totalorder %s64, %s66
    %p70 = scmp.eq.s32.totalorder %s9, 0
    %p71 = por %p69, %p70
    %p72 = scmp.ne.s32.totalorder %s64, %s66
    %p73 = scmp.eq.s32.totalorder %s14, 1
    %p74 = por %p72, %p73
    %p75 = scmp.ne.s32.totalorder %s66, %s67
    %p76 = scmp.eq.s32.totalorder %s14, 0
    %p77 = por %p75, %p76
    %p78 = scmp.ne.s32.totalorder %s66, %s67
    %p79 = scmp.eq.s32.totalorder %s15, 1
    %p80 = por %p78, %p79
    %p82 = scmp.ne.s32.totalorder %s67, %s81
    %p83 = scmp.eq.s32.totalorder %s15, 0
    %p84 = por %p82, %p83
    %s85 = ssub.s32 %s9, %s16
    %p86 = scmp.eq.s32.totalorder %s85, 0
    %s88 = sadd.s32 %s87, 1
    %s89 = scalar_select %p86, %s87, %s88
    %p92 = pneg %p86
    %p93 = scmp.eq.s32.totalorder %s9, 1
    %p94 = por %p92, %p93
    %p95 = scmp.ne.s32.totalorder %s87, %s90
    %p96 = scmp.eq.s32.totalorder %s9, 0
    %p97 = por %p95, %p96
    %p98 = scmp.ne.s32.totalorder %s87, %s90
    %p99 = scmp.eq.s32.totalorder %s14, 1
    %p100 = por %p98, %p99
    %p101 = scmp.ne.s32.totalorder %s90, %s91
    %p102 = scmp.eq.s32.totalorder %s14, 0
    %p103 = por %p101, %p102
    %p104 = scmp.ne.s32.totalorder %s90, %s91
    %p105 = scmp.eq.s32.totalorder %s15, 1
    %p106 = por %p104, %p105
    %p108 = scmp.ne.s32.totalorder %s91, %s107
    %p109 = scmp.eq.s32.totalorder %s15, 0
    %p110 = por %p108, %p109
    %p111 = scmp.le.s32.totalorder 1, %s9
    %p112 = scmp.lt.s32.totalorder %s9, 3
    %p113 = pnand %p111, %p112
    %p114 = pneg %p113
    // Predicated region
    $region9: #{classifier_forward.5} parent=5 // pred_check
      _
    $region10: #{classifier_forward.5} parent=5 // pred_check_branch
      %116 = sbr.rel (%p113) target = $region12
    $region11: #{classifier_forward.5} parent=5 // pred_region
      %s117 = ssub.s32 %s9, 1
      // Predicated region
      $region13: #{classifier_forward.5} parent=11 // pred_check
        %p118 = pneg %p56
      $region14: #{classifier_forward.5} parent=11 // pred_check_branch
        %120 = sbr.rel (%p118) target = $region16
      $region15: #{classifier_forward.5} parent=11 // pred_region
        _
      $region16: #{classifier_forward.5} parent=11 // pred_fallthru
        _
      // Predicated region
      $region17: #{classifier_forward.5} parent=11 // pred_check
        %p121 = pneg %p77
      $region18: #{classifier_forward.5} parent=11 // pred_check_branch
        %123 = sbr.rel (%p121) target = $region20
      $region19: #{classifier_forward.5} parent=11 // pred_region
        _
      $region20: #{classifier_forward.5} parent=11 // pred_fallthru
        _
    $region12: #{classifier_forward.5} parent=5 // pred_fallthru
      _
    %p124 = scmp.lt.s32.totalorder %s9, 2
    // Predicated region
    $region21: #{classifier_forward.5} parent=5 // pred_check
      %p125 = pneg %p124
    $region22: #{classifier_forward.5} parent=5 // pred_check_branch
      %127 = sbr.rel (%p125) target = $region24
    $region23: #{classifier_forward.5} parent=5 // pred_region
      // Predicated region
      $region25: #{classifier_forward.5} parent=23 // pred_check
        %p128 = pneg %p29
      $region26: #{classifier_forward.5} parent=23 // pred_check_branch
        %130 = sbr.rel (%p128) target = $region28
      $region27: #{classifier_forward.5} parent=23 // pred_region
        %p131 = scmp.lt.s32.totalorder %s9, 1
        %s132 = scalar_select %p131, %s9, 1
        %s133 = smul.addr %s132, 32
        %s134 = smul.addr %s133, 4
        %s135 = scalar_lea.vmem %s0, %s134
      $region28: #{classifier_forward.5} parent=23 // pred_fallthru
        _
    $region24: #{classifier_forward.5} parent=5 // pred_fallthru
      _
    %p136 = scmp.le.s32.totalorder 1, %s9
    %p137 = scmp.lt.s32.totalorder %s9, 3
    %p138 = pnand %p136, %p137
    %p139 = pneg %p138
    // Predicated region
    $region29: #{classifier_forward.5} parent=5 // pred_check
      _
    $region30: #{classifier_forward.5} parent=5 // pred_check_branch
      %141 = sbr.rel (%p138) target = $region32
    $region31: #{classifier_forward.5} parent=5 // pred_region
      %s142 = ssub.s32 %s9, 1
      %p143 = scmp.lt.s32.totalorder %s14, 1
      %s144 = scalar_select %p143, %s14, 1
      %s145 = smul.addr %s144, 32
      %s146 = smul.addr %s145, 4
      %s147 = scalar_lea.vmem %s0, %s146
      %p148 = pneg %p35
      %p149 = pneg %p32
      %p150 = pneg %p56
      %p151 = pneg %p53
      %p152 = pneg %p77
      %p153 = pneg %p74
      %p154 = pneg %p103
      %p155 = pneg %p100
      %p156 = scmp.lt.s32.totalorder %s14, 1
      %s157 = scalar_select %p156, %s14, 1
      %s158 = smul.addr %s157, 32
      %s159 = smul.addr %s158, 8
      %s160 = scalar_lea.vmem %s3, %s159
      %p161 = scmp.lt.s32.totalorder %s14, 1
      %s162 = scalar_select %p161, %s14, 1
      %s163 = smul.addr %s162, 32
      %s164 = smul.addr %s163, 4
      %s165 = scalar_lea.vmem %s0, %s164
      %p166 = scmp.lt.s32.totalorder %s14, 1
      %s167 = scalar_select %p166, %s14, 1
      %s168 = smul.addr %s167, 32
      %s169 = smul.addr %s168, 8
      %s170 = scalar_lea.vmem %s3, %s169
      %v172 = vld [vmem:[%s165] sm:$0xf]
      %v173 = vld [vmem:[%s165 + $0x4] sm:$0xf]
      %v174 = vld [vmem:[%s165 + $0x8] sm:$0xf]
      %v175 = vld [vmem:[%s165 + $0xc] sm:$0xf]
      %v176 = vld [vmem:[%s165 + $0x10] sm:$0xf]
      %v177 = vld [vmem:[%s165 + $0x14] sm:$0xf]
      %v178 = vld [vmem:[%s165 + $0x18] sm:$0xf]
      %v179 = vld [vmem:[%s165 + $0x1c] sm:$0xf]
      %v180 = vld [vmem:[%s165 + $0x20] sm:$0xf]
      %v181 = vld [vmem:[%s165 + $0x24] sm:$0xf]
      %v182 = vld [vmem:[%s165 + $0x28] sm:$0xf]
      %v183 = vld [vmem:[%s165 + $0x2c] sm:$0xf]
      %v184 = vld [vmem:[%s165 + $0x30] sm:$0xf]
      %v185 = vld [vmem:[%s165 + $0x34] sm:$0xf]
      %v186 = vld [vmem:[%s165 + $0x38] sm:$0xf]
      %v187 = vld [vmem:[%s165 + $0x3c] sm:$0xf]
      %v188 = vld [vmem:[%s165 + $0x40] sm:$0xf]
      %v189 = vld [vmem:[%s165 + $0x44] sm:$0xf]
      %v190 = vld [vmem:[%s165 + $0x48] sm:$0xf]
      %v191 = vld [vmem:[%s165 + $0x4c] sm:$0xf]
      %v192 = vld [vmem:[%s165 + $0x50] sm:$0xf]
      %v193 = vld [vmem:[%s165 + $0x54] sm:$0xf]
      %v194 = vld [vmem:[%s165 + $0x58] sm:$0xf]
      %v195 = vld [vmem:[%s165 + $0x5c] sm:$0xf]
      %v196 = vld [vmem:[%s165 + $0x60] sm:$0xf]
      %v197 = vld [vmem:[%s165 + $0x64] sm:$0xf]
      %v198 = vld [vmem:[%s165 + $0x68] sm:$0xf]
      %v199 = vld [vmem:[%s165 + $0x6c] sm:$0xf]
      %v200 = vld [vmem:[%s165 + $0x70] sm:$0xf]
      %v201 = vld [vmem:[%s165 + $0x74] sm:$0xf]
      %v202 = vld [vmem:[%s165 + $0x78] sm:$0xf]
      %v203 = vld [vmem:[%s165 + $0x7c] sm:$0xf]
      %v204 = vld [vmem:[%s1] sm:$0xf]
      %v205 = vld [vmem:[%s1 + $0x4] sm:$0xf]
      %v206 = vld [vmem:[%s1 + $0x8] sm:$0xf]
      %v207 = vld [vmem:[%s1 + $0xc] sm:$0xf]
      %v208 = vld [vmem:[%s1 + $0x10] sm:$0xf]
      %v209 = vld [vmem:[%s1 + $0x14] sm:$0xf]
      %v210 = vld [vmem:[%s1 + $0x18] sm:$0xf]
      %v211 = vld [vmem:[%s1 + $0x1c] sm:$0xf]
      %v212 = vld [vmem:[%s1 + $0x20] sm:$0xf]
      %v213 = vld [vmem:[%s1 + $0x24] sm:$0xf]
      %v214 = vld [vmem:[%s1 + $0x28] sm:$0xf]
      %v215 = vld [vmem:[%s1 + $0x2c] sm:$0xf]
      %v216 = vld [vmem:[%s1 + $0x30] sm:$0xf]
      %v217 = vld [vmem:[%s1 + $0x34] sm:$0xf]
      %v218 = vld [vmem:[%s1 + $0x38] sm:$0xf]
      %v219 = vld [vmem:[%s1 + $0x3c] sm:$0xf]
      %v220 = vld [vmem:[%s2] sm:$0x1]
      %v222 = vlaneseq
      %v223 = vshrl.u32 %v222, 7
      %v224 = vsub.s32 0, %v223
      %v225 = vrot.slane %v220, %v224
      %v259 = vunpack.c.l.b16 %v172
      %v260 = vunpack.c.l.b16 %v173
      %v261 = vunpack.c.l.b16 %v174
      %v262 = vunpack.c.l.b16 %v175
      %v263 = vunpack.c.l.b16 %v176
      %v264 = vunpack.c.l.b16 %v177
      %v265 = vunpack.c.l.b16 %v178
      %v266 = vunpack.c.l.b16 %v179
      %v267 = vunpack.c.l.b16 %v180
      %v268 = vunpack.c.l.b16 %v181
      %v269 = vunpack.c.l.b16 %v182
      %v270 = vunpack.c.l.b16 %v183
      %v271 = vunpack.c.l.b16 %v184
      %v272 = vunpack.c.l.b16 %v185
      %v273 = vunpack.c.l.b16 %v186
      %v274 = vunpack.c.l.b16 %v187
      %v275 = vunpack.c.l.b16 %v188
      %v276 = vunpack.c.l.b16 %v189
      %v277 = vunpack.c.l.b16 %v190
      %v278 = vunpack.c.l.b16 %v191
      %v279 = vunpack.c.l.b16 %v192
      %v280 = vunpack.c.l.b16 %v193
      %v281 = vunpack.c.l.b16 %v194
      %v282 = vunpack.c.l.b16 %v195
      %v283 = vunpack.c.l.b16 %v196
      %v284 = vunpack.c.l.b16 %v197
      %v285 = vunpack.c.l.b16 %v198
      %v286 = vunpack.c.l.b16 %v199
      %v287 = vunpack.c.l.b16 %v200
      %v288 = vunpack.c.l.b16 %v201
      %v289 = vunpack.c.l.b16 %v202
      %v290 = vunpack.c.l.b16 %v203
      %v291 = vpack.c.b16 %v260, %v259
      %v292 = vpack.c.b16 %v262, %v261
      %v293 = vpack.c.b16 %v264, %v263
      %v294 = vpack.c.b16 %v266, %v265
      %v295 = vpack.c.b16 %v268, %v267
      %v296 = vpack.c.b16 %v270, %v269
      %v297 = vpack.c.b16 %v272, %v271
      %v298 = vpack.c.b16 %v274, %v273
      %v299 = vpack.c.b16 %v276, %v275
      %v300 = vpack.c.b16 %v278, %v277
      %v301 = vpack.c.b16 %v280, %v279
      %v302 = vpack.c.b16 %v282, %v281
      %v303 = vpack.c.b16 %v284, %v283
      %v304 = vpack.c.b16 %v286, %v285
      %v305 = vpack.c.b16 %v288, %v287
      %v306 = vpack.c.b16 %v290, %v289
      %v339 = vunpack.c.l.b16 %v204
      %v340 = vunpack.c.l.b16 %v205
      %v341 = vunpack.c.l.b16 %v206
      %v342 = vunpack.c.l.b16 %v207
      %v343 = vunpack.c.l.b16 %v208
      %v344 = vunpack.c.l.b16 %v209
      %v345 = vunpack.c.l.b16 %v210
      %v346 = vunpack.c.l.b16 %v211
      %v347 = vunpack.c.l.b16 %v212
      %v348 = vunpack.c.l.b16 %v213
      %v349 = vunpack.c.l.b16 %v214
      %v350 = vunpack.c.l.b16 %v215
      %v351 = vunpack.c.l.b16 %v216
      %v352 = vunpack.c.l.b16 %v217
      %v353 = vunpack.c.l.b16 %v218
      %v354 = vunpack.c.l.b16 %v219
      %v355 = vpack.c.b16 %v340, %v339
      %v356 = vpack.c.b16 %v342, %v341
      %v357 = vpack.c.b16 %v344, %v343
      %v358 = vpack.c.b16 %v346, %v345
      %v359 = vpack.c.b16 %v348, %v347
      %v360 = vpack.c.b16 %v350, %v349
      %v361 = vpack.c.b16 %v352, %v351
      %v362 = vpack.c.b16 %v354, %v353
      %371 = vmatprep.subr.bf16.mxu0 0
      %372 = vmatpush1.bf16.msra.mxu0 %v355
      %373 = vmatprep.subr.bf16.mxu0 0
      %374 = vmatpush1.bf16.msra.mxu0 %v356
      %375 = vmatprep.subr.bf16.mxu0 0
      %376 = vmatpush1.bf16.msra.mxu0 %v357
      %377 = vmatprep.subr.bf16.mxu0 0
      %378 = vmatpush1.bf16.msra.mxu0 %v358
      %379 = vmatprep.subr.bf16.mxu0 0
      %380 = vmatpush1.bf16.msra.mxu0 %v359
      %381 = vmatprep.subr.bf16.mxu0 0
      %382 = vmatpush1.bf16.msra.mxu0 %v360
      %383 = vmatprep.subr.bf16.mxu0 0
      %384 = vmatpush1.bf16.msra.mxu0 %v361
      %385 = vmatprep.subr.bf16.mxu0 0
      %386 = vmatpush1.bf16.msra.mxu0 %v362
      %387 = vmatprep.subr.bf16.mxu0 0
      %388 = vmatpush1.bf16.msra.mxu0 0
      %389 = vmatprep.subr.bf16.mxu0 0
      %390 = vmatpush1.bf16.msra.mxu0 0
      %391 = vmatprep.subr.bf16.mxu0 0
      %392 = vmatpush1.bf16.msra.mxu0 0
      %393 = vmatprep.subr.bf16.mxu0 0
      %394 = vmatpush1.bf16.msra.mxu0 0
      %395 = vmatprep.subr.bf16.mxu0 0
      %396 = vmatpush1.bf16.msra.mxu0 0
      %397 = vmatprep.subr.bf16.mxu0 0
      %398 = vmatpush1.bf16.msra.mxu0 0
      %399 = vmatprep.subr.bf16.mxu0 0
      %400 = vmatpush1.bf16.msra.mxu0 0
      %401 = vmatprep.subr.bf16.mxu0 0
      %402 = vmatpush1.bf16.msra.mxu0 0
      %403 = vmatprep.mubr.bf16.mxu0 0
      %404 = vmatmul.mubr.bf16.gmra.mrb[0].mxu0 %v291
      %v405 = vpop.f32.mrb[0].mxu0
      %v406 = vadd.f32 %v225, %v405
      %v407 = vpop.f32.mrb[0].mxu0
      %v408 = vpop.f32.mrb[0].mxu0
      %v409 = vadd.f32 %v225, %v408
      %v410 = vpop.f32.mrb[0].mxu0
      %411 = vmatprep.mubr.bf16.mxu0 0
      %412 = vmatmul.mubr.bf16.gmra.mrb[0].mxu0 %v292
      %v413 = vpop.f32.mrb[0].mxu0
      %v414 = vadd.f32 %v225, %v413
      %v415 = vpop.f32.mrb[0].mxu0
      %v416 = vpop.f32.mrb[0].mxu0
      %v417 = vadd.f32 %v225, %v416
      %v418 = vpop.f32.mrb[0].mxu0
      %419 = vmatprep.mubr.bf16.mxu0 0
      %420 = vmatmul.mubr.bf16.gmra.mrb[0].mxu0 %v293
      %v421 = vpop.f32.mrb[0].mxu0
      %v422 = vadd.f32 %v225, %v421
      %v423 = vpop.f32.mrb[0].mxu0
      %v424 = vpop.f32.mrb[0].mxu0
      %v425 = vadd.f32 %v225, %v424
      %v426 = vpop.f32.mrb[0].mxu0
      %427 = vmatprep.mubr.bf16.mxu0 0
      %428 = vmatmul.mubr.bf16.gmra.mrb[0].mxu0 %v294
      %v429 = vpop.f32.mrb[0].mxu0
      %v430 = vadd.f32 %v225, %v429
      %v431 = vpop.f32.mrb[0].mxu0
      %v432 = vpop.f32.mrb[0].mxu0
      %v433 = vadd.f32 %v225, %v432
      %v434 = vpop.f32.mrb[0].mxu0
      %435 = vmatprep.mubr.bf16.mxu0 0
      %436 = vmatmul.mubr.bf16.gmra.mrb[0].mxu0 %v295
      %v437 = vpop.f32.mrb[0].mxu0
      %v438 = vadd.f32 %v225, %v437
      %v439 = vpop.f32.mrb[0].mxu0
      %v440 = vpop.f32.mrb[0].mxu0
      %v441 = vadd.f32 %v225, %v440
      %v442 = vpop.f32.mrb[0].mxu0
      %443 = vmatprep.mubr.bf16.mxu0 0
      %444 = vmatmul.mubr.bf16.gmra.mrb[0].mxu0 %v296
      %v445 = vpop.f32.mrb[0].mxu0
      %v446 = vadd.f32 %v225, %v445
      %v447 = vpop.f32.mrb[0].mxu0
      %v448 = vpop.f32.mrb[0].mxu0
      %v449 = vadd.f32 %v225, %v448
      %v450 = vpop.f32.mrb[0].mxu0
      %451 = vmatprep.mubr.bf16.mxu0 0
      %452 = vmatmul.mubr.bf16.gmra.mrb[0].mxu0 %v297
      %v453 = vpop.f32.mrb[0].mxu0
      %v454 = vadd.f32 %v225, %v453
      %v455 = vpop.f32.mrb[0].mxu0
      %v456 = vpop.f32.mrb[0].mxu0
      %v457 = vadd.f32 %v225, %v456
      %v458 = vpop.f32.mrb[0].mxu0
      %459 = vmatprep.mubr.bf16.mxu0 0
      %460 = vmatmul.mubr.bf16.gmra.mrb[0].mxu0 %v298
      %v461 = vpop.f32.mrb[0].mxu0
      %v462 = vadd.f32 %v225, %v461
      %v463 = vpop.f32.mrb[0].mxu0
      %v464 = vpop.f32.mrb[0].mxu0
      %v465 = vadd.f32 %v225, %v464
      %v466 = vpop.f32.mrb[0].mxu0
      %467 = vmatprep.mubr.bf16.mxu0 0
      %468 = vmatmul.mubr.bf16.gmra.mrb[0].mxu0 %v299
      %v469 = vpop.f32.mrb[0].mxu0
      %v470 = vadd.f32 %v225, %v469
      %v471 = vpop.f32.mrb[0].mxu0
      %v472 = vpop.f32.mrb[0].mxu0
      %v473 = vadd.f32 %v225, %v472
      %v474 = vpop.f32.mrb[0].mxu0
      %475 = vmatprep.mubr.bf16.mxu0 0
      %476 = vmatmul.mubr.bf16.gmra.mrb[0].mxu0 %v300
      %v477 = vpop.f32.mrb[0].mxu0
      %v478 = vadd.f32 %v225, %v477
      %v479 = vpop.f32.mrb[0].mxu0
      %v480 = vpop.f32.mrb[0].mxu0
      %v481 = vadd.f32 %v225, %v480
      %v482 = vpop.f32.mrb[0].mxu0
      %483 = vmatprep.mubr.bf16.mxu0 0
      %484 = vmatmul.mubr.bf16.gmra.mrb[0].mxu0 %v301
      %v485 = vpop.f32.mrb[0].mxu0
      %v486 = vadd.f32 %v225, %v485
      %v487 = vpop.f32.mrb[0].mxu0
      %v488 = vpop.f32.mrb[0].mxu0
      %v489 = vadd.f32 %v225, %v488
      %v490 = vpop.f32.mrb[0].mxu0
      %491 = vmatprep.mubr.bf16.mxu0 0
      %492 = vmatmul.mubr.bf16.gmra.mrb[0].mxu0 %v302
      %v493 = vpop.f32.mrb[0].mxu0
      %v494 = vadd.f32 %v225, %v493
      %v495 = vpop.f32.mrb[0].mxu0
      %v496 = vpop.f32.mrb[0].mxu0
      %v497 = vadd.f32 %v225, %v496
      %v498 = vpop.f32.mrb[0].mxu0
      %499 = vmatprep.mubr.bf16.mxu0 0
      %500 = vmatmul.mubr.bf16.gmra.mrb[0].mxu0 %v303
      %v501 = vpop.f32.mrb[0].mxu0
      %v502 = vadd.f32 %v225, %v501
      %v503 = vpop.f32.mrb[0].mxu0
      %v504 = vpop.f32.mrb[0].mxu0
      %v505 = vadd.f32 %v225, %v504
      %v506 = vpop.f32.mrb[0].mxu0
      %507 = vmatprep.mubr.bf16.mxu0 0
      %508 = vmatmul.mubr.bf16.gmra.mrb[0].mxu0 %v304
      %v509 = vpop.f32.mrb[0].mxu0
      %v510 = vadd.f32 %v225, %v509
      %v511 = vpop.f32.mrb[0].mxu0
      %v512 = vpop.f32.mrb[0].mxu0
      %v513 = vadd.f32 %v225, %v512
      %v514 = vpop.f32.mrb[0].mxu0
      %515 = vmatprep.mubr.bf16.mxu0 0
      %516 = vmatmul.mubr.bf16.gmra.mrb[0].mxu0 %v305
      %v517 = vpop.f32.mrb[0].mxu0
      %v518 = vadd.f32 %v225, %v517
      %v519 = vpop.f32.mrb[0].mxu0
      %v520 = vpop.f32.mrb[0].mxu0
      %v521 = vadd.f32 %v225, %v520
      %v522 = vpop.f32.mrb[0].mxu0
      %523 = vmatprep.mubr.bf16.mxu0 0
      %524 = vmatmul.mubr.bf16.gmra.mrb[0].mxu0 %v306
      %v525 = vpop.f32.mrb[0].mxu0
      %v526 = vadd.f32 %v225, %v525
      %v527 = vpop.f32.mrb[0].mxu0
      %v528 = vpop.f32.mrb[0].mxu0
      %v529 = vadd.f32 %v225, %v528
      %v530 = vpop.f32.mrb[0].mxu0
      %531 = vdwg.mxu0
      %vm532 = vcmp.gt.f32.partialorder %v406, 0.0
      %vm533 = vcmp.gt.f32.partialorder %v409, 0.0
      %vm534 = vcmp.gt.f32.partialorder %v414, 0.0
      %vm535 = vcmp.gt.f32.partialorder %v417, 0.0
      %vm536 = vcmp.gt.f32.partialorder %v422, 0.0
      %vm537 = vcmp.gt.f32.partialorder %v425, 0.0
      %vm538 = vcmp.gt.f32.partialorder %v430, 0.0
      %vm539 = vcmp.gt.f32.partialorder %v433, 0.0
      %vm540 = vcmp.gt.f32.partialorder %v438, 0.0
      %vm541 = vcmp.gt.f32.partialorder %v441, 0.0
      %vm542 = vcmp.gt.f32.partialorder %v446, 0.0
      %vm543 = vcmp.gt.f32.partialorder %v449, 0.0
      %vm544 = vcmp.gt.f32.partialorder %v454, 0.0
      %vm545 = vcmp.gt.f32.partialorder %v457, 0.0
      %vm546 = vcmp.gt.f32.partialorder %v462, 0.0
      %vm547 = vcmp.gt.f32.partialorder %v465, 0.0
      %vm548 = vcmp.gt.f32.partialorder %v470, 0.0
      %vm549 = vcmp.gt.f32.partialorder %v473, 0.0
      %vm550 = vcmp.gt.f32.partialorder %v478, 0.0
      %vm551 = vcmp.gt.f32.partialorder %v481, 0.0
      %vm552 = vcmp.gt.f32.partialorder %v486, 0.0
      %vm553 = vcmp.gt.f32.partialorder %v489, 0.0
      %vm554 = vcmp.gt.f32.partialorder %v494, 0.0
      %vm555 = vcmp.gt.f32.partialorder %v497, 0.0
      %vm556 = vcmp.gt.f32.partialorder %v502, 0.0
      %vm557 = vcmp.gt.f32.partialorder %v505, 0.0
      %vm558 = vcmp.gt.f32.partialorder %v510, 0.0
      %vm559 = vcmp.gt.f32.partialorder %v513, 0.0
      %vm560 = vcmp.gt.f32.partialorder %v518, 0.0
      %vm561 = vcmp.gt.f32.partialorder %v521, 0.0
      %vm562 = vcmp.gt.f32.partialorder %v526, 0.0
      %vm563 = vcmp.gt.f32.partialorder %v529, 0.0
      %v564 = vmul.f32 %v406, 0.2
      %v565 = vmul.f32 %v409, 0.2
      %v566 = vmul.f32 %v414, 0.2
      %v567 = vmul.f32 %v417, 0.2
      %v568 = vmul.f32 %v422, 0.2
      %v569 = vmul.f32 %v425, 0.2
      %v570 = vmul.f32 %v430, 0.2
      %v571 = vmul.f32 %v433, 0.2
      %v572 = vmul.f32 %v438, 0.2
      %v573 = vmul.f32 %v441, 0.2
      %v574 = vmul.f32 %v446, 0.2
      %v575 = vmul.f32 %v449, 0.2
      %v576 = vmul.f32 %v454, 0.2
      %v577 = vmul.f32 %v457, 0.2
      %v578 = vmul.f32 %v462, 0.2
      %v579 = vmul.f32 %v465, 0.2
      %v580 = vmul.f32 %v470, 0.2
      %v581 = vmul.f32 %v473, 0.2
      %v582 = vmul.f32 %v478, 0.2
      %v583 = vmul.f32 %v481, 0.2
      %v584 = vmul.f32 %v486, 0.2
      %v585 = vmul.f32 %v489, 0.2
      %v586 = vmul.f32 %v494, 0.2
      %v587 = vmul.f32 %v497, 0.2
      %v588 = vmul.f32 %v502, 0.2
      %v589 = vmul.f32 %v505, 0.2
      %v590 = vmul.f32 %v510, 0.2
      %v591 = vmul.f32 %v513, 0.2
      %v592 = vmul.f32 %v518, 0.2
      %v593 = vmul.f32 %v521, 0.2
      %v594 = vmul.f32 %v526, 0.2
      %v595 = vmul.f32 %v529, 0.2
      %v596 = vsel %vm532, %v406, %v564
      %v597 = vsel %vm533, %v409, %v565
      %v598 = vsel %vm534, %v414, %v566
      %v599 = vsel %vm535, %v417, %v567
      %v600 = vsel %vm536, %v422, %v568
      %v601 = vsel %vm537, %v425, %v569
      %v602 = vsel %vm538, %v430, %v570
      %v603 = vsel %vm539, %v433, %v571
      %v604 = vsel %vm540, %v438, %v572
      %v605 = vsel %vm541, %v441, %v573
      %v606 = vsel %vm542, %v446, %v574
      %v607 = vsel %vm543, %v449, %v575
      %v608 = vsel %vm544, %v454, %v576
      %v609 = vsel %vm545, %v457, %v577
      %v610 = vsel %vm546, %v462, %v578
      %v611 = vsel %vm547, %v465, %v579
      %v612 = vsel %vm548, %v470, %v580
      %v613 = vsel %vm549, %v473, %v581
      %v614 = vsel %vm550, %v478, %v582
      %v615 = vsel %vm551, %v481, %v583
      %v616 = vsel %vm552, %v486, %v584
      %v617 = vsel %vm553, %v489, %v585
      %v618 = vsel %vm554, %v494, %v586
      %v619 = vsel %vm555, %v497, %v587
      %v620 = vsel %vm556, %v502, %v588
      %v621 = vsel %vm557, %v505, %v589
      %v622 = vsel %vm558, %v510, %v590
      %v623 = vsel %vm559, %v513, %v591
      %v624 = vsel %vm560, %v518, %v592
      %v625 = vsel %vm561, %v521, %v593
      %v626 = vsel %vm562, %v526, %v594
      %v627 = vsel %vm563, %v529, %v595
      %628 = vst [vmem:[%s170] sm:$0xff] %v596
      %629 = vst [vmem:[%s170 + $0x8] sm:$0xff] %v597
      %630 = vst [vmem:[%s170 + $0x10] sm:$0xff] %v598
      %631 = vst [vmem:[%s170 + $0x18] sm:$0xff] %v599
      %632 = vst [vmem:[%s170 + $0x20] sm:$0xff] %v600
      %633 = vst [vmem:[%s170 + $0x28] sm:$0xff] %v601
      %634 = vst [vmem:[%s170 + $0x30] sm:$0xff] %v602
      %635 = vst [vmem:[%s170 + $0x38] sm:$0xff] %v603
      %636 = vst [vmem:[%s170 + $0x40] sm:$0xff] %v604
      %637 = vst [vmem:[%s170 + $0x48] sm:$0xff] %v605
      %638 = vst [vmem:[%s170 + $0x50] sm:$0xff] %v606
      %639 = vst [vmem:[%s170 + $0x58] sm:$0xff] %v607
      %640 = vst [vmem:[%s170 + $0x60] sm:$0xff] %v608
      %641 = vst [vmem:[%s170 + $0x68] sm:$0xff] %v609
      %642 = vst [vmem:[%s170 + $0x70] sm:$0xff] %v610
      %643 = vst [vmem:[%s170 + $0x78] sm:$0xff] %v611
      %644 = vst [vmem:[%s170 + $0x80] sm:$0xff] %v612
      %645 = vst [vmem:[%s170 + $0x88] sm:$0xff] %v613
      %646 = vst [vmem:[%s170 + $0x90] sm:$0xff] %v614
      %647 = vst [vmem:[%s170 + $0x98] sm:$0xff] %v615
      %648 = vst [vmem:[%s170 + $0xa0] sm:$0xff] %v616
      %649 = vst [vmem:[%s170 + $0xa8] sm:$0xff] %v617
      %650 = vst [vmem:[%s170 + $0xb0] sm:$0xff] %v618
      %651 = vst [vmem:[%s170 + $0xb8] sm:$0xff] %v619
      %652 = vst [vmem:[%s170 + $0xc0] sm:$0xff] %v620
      %653 = vst [vmem:[%s170 + $0xc8] sm:$0xff] %v621
      %654 = vst [vmem:[%s170 + $0xd0] sm:$0xff] %v622
      %655 = vst [vmem:[%s170 + $0xd8] sm:$0xff] %v623
      %656 = vst [vmem:[%s170 + $0xe0] sm:$0xff] %v624
      %657 = vst [vmem:[%s170 + $0xe8] sm:$0xff] %v625
      %658 = vst [vmem:[%s170 + $0xf0] sm:$0xff] %v626
      %659 = vst [vmem:[%s170 + $0xf8] sm:$0xff] %v627
      %p660 = scmp.lt.s32.totalorder %s14, 1
      %s661 = scalar_select %p660, %s14, 1
      %s662 = smul.addr %s661, 32
      %s663 = smul.addr %s662, 8
      %s664 = scalar_lea.vmem %s3, %s663
      // Predicated region
      $region33: #{classifier_forward.5} parent=31 // pred_check
        %p665 = pneg %p100
      $region34: #{classifier_forward.5} parent=31 // pred_check_branch
        %667 = sbr.rel (%p665) target = $region36
      $region35: #{classifier_forward.5} parent=31 // pred_region
        _
      $region36: #{classifier_forward.5} parent=31 // pred_fallthru
        _
    $region32: #{classifier_forward.5} parent=5 // pred_fallthru
      _
    %p668 = scmp.le.s32.totalorder 2, %s9
    // Predicated region
    $region37: #{classifier_forward.5} parent=5 // pred_check
      %p669 = pneg %p668
    $region38: #{classifier_forward.5} parent=5 // pred_check_branch
      %671 = sbr.rel (%p669) target = $region40
    $region39: #{classifier_forward.5} parent=5 // pred_region
      %s672 = ssub.s32 %s9, 2
      // Predicated region
      $region41: #{classifier_forward.5} parent=39 // pred_check
        %p673 = pneg %p106
      $region42: #{classifier_forward.5} parent=39 // pred_check_branch
        %675 = sbr.rel (%p673) target = $region44
      $region43: #{classifier_forward.5} parent=39 // pred_region
        %p676 = scmp.lt.s32.totalorder %s15, 1
        %s677 = scalar_select %p676, %s15, 1
        %s678 = smul.addr %s677, 32
        %s679 = smul.addr %s678, 8
        %s680 = scalar_lea.vmem %s3, %s679
      $region44: #{classifier_forward.5} parent=39 // pred_fallthru
        _
    $region40: #{classifier_forward.5} parent=5 // pred_fallthru
      _
  $region6: #{classifier_forward.5} parent=0 // loop_footer
    %s13 = sadd.s32 1, %s9
  $region7: #{classifier_forward.5} parent=0 // loop_footer_branch
    %8 = sbr.rel target = $region3
  $region8: #{classifier_forward.5} parent=0 // loop_exit
    _

// kernel: classifier_forward.6
$region0: #{classifier_forward.6}
  #allocation0 [shape = 'u32[]', space=smem, size = 0x4, offset = 0x4, fixed_abs, tag = 'smem constant byte address 0x4 - core index']
  #allocation1 [shape = 'u32[144,128]{1,0:T(1,128)}', space=vmem, size = 0x12000, scoped, tag = 'internal scratch']
  %s0 = inlined_call_operand.vmem [shape: bf16[2,64,1152], index: 0, kind: input, shape index: {}]
  %s1 = inlined_call_operand.vmem [shape: bf16[1152,128], index: 1, kind: input, shape index: {}]
  %s2 = inlined_call_operand.vmem [shape: f32[1,128], index: 2, kind: input, shape index: {}]
  %s3 = inlined_call_operand.vmem [shape: f32[2,64,128], index: 3, kind: output, shape index: {}]
  %s4 = sld [smem:[#allocation0]]
  $region45: #{classifier_forward.6} parent=0
    _
  %s6 = ssub.s32 1, %s4
  %s7 = scalar_select 0, %s6, %s4
  loop: start=0, step=1, limit=4
  $region2: #{classifier_forward.6} parent=0 // loop_pre_header
    _
  $region3: #{classifier_forward.6} parent=0 // loop_header
    %s9 = sphi 0, %s13
    %p10 = scmp.ge.s32.totalorder %s9, 4
    %s19 = sphi 0, %s21
    %s22 = sphi 0, %s19
    %s23 = sphi 0, %s22
    %s39 = sphi 0, %s23
    %s43 = sphi 0, %s43
    %s45 = sphi 0, %s43
    %s46 = sphi 0, %s45
    %s60 = sphi 0, %s46
    %s64 = sphi 0, %s64
    %s66 = sphi 0, %s64
    %s67 = sphi 0, %s66
    %s81 = sphi 0, %s67
    %s87 = sphi 0, %s89
    %s90 = sphi 0, %s87
    %s91 = sphi 0, %s90
    %s107 = sphi 0, %s91
  $region4: #{classifier_forward.6} parent=0 // loop_header_branch
    %12 = sbr.rel (%p10) target = $region8
  $region5: #{classifier_forward.6} parent=0 // loop_body
    %s14 = ssub.s32 %s9, 1
    %s15 = ssub.s32 %s9, 2
    %s16 = sadd.s32 %s9, 1
    %s17 = ssub.s32 %s9, %s16
    %p18 = scmp.eq.s32.totalorder %s17, 0
    %s20 = sadd.s32 %s19, 1
    %s21 = scalar_select %p18, %s19, %s20
    %p24 = pneg %p18
    %p25 = scmp.eq.s32.totalorder %s9, 1
    %p26 = por %p24, %p25
    %p27 = scmp.ne.s32.totalorder %s19, %s22
    %p28 = scmp.eq.s32.totalorder %s9, 0
    %p29 = por %p27, %p28
    %p30 = scmp.ne.s32.totalorder %s19, %s22
    %p31 = scmp.eq.s32.totalorder %s14, 1
    %p32 = por %p30, %p31
    %p33 = scmp.ne.s32.totalorder %s22, %s23
    %p34 = scmp.eq.s32.totalorder %s14, 0
    %p35 = por %p33, %p34
    %p36 = scmp.ne.s32.totalorder %s22, %s23
    %p37 = scmp.eq.s32.totalorder %s15, 1
    %p38 = por %p36, %p37
    %p40 = scmp.ne.s32.totalorder %s23, %s39
    %p41 = scmp.eq.s32.totalorder %s15, 0
    %p42 = por %p40, %p41
    %s44 = sadd.s32 %s43, 1
    %p47 = scmp.eq.s32.totalorder %s9, 1
    %p48 = scmp.ne.s32.totalorder %s43, %s45
    %p49 = scmp.eq.s32.totalorder %s9, 0
    %p50 = por %p48, %p49
    %p51 = scmp.ne.s32.totalorder %s43, %s45
    %p52 = scmp.eq.s32.totalorder %s14, 1
    %p53 = por %p51, %p52
    %p54 = scmp.ne.s32.totalorder %s45, %s46
    %p55 = scmp.eq.s32.totalorder %s14, 0
    %p56 = por %p54, %p55
    %p57 = scmp.ne.s32.totalorder %s45, %s46
    %p58 = scmp.eq.s32.totalorder %s15, 1
    %p59 = por %p57, %p58
    %p61 = scmp.ne.s32.totalorder %s46, %s60
    %p62 = scmp.eq.s32.totalorder %s15, 0
    %p63 = por %p61, %p62
    %s65 = sadd.s32 %s64, 1
    %p68 = scmp.eq.s32.totalorder %s9, 1
    %p69 = scmp.ne.s32.totalorder %s64, %s66
    %p70 = scmp.eq.s32.totalorder %s9, 0
    %p71 = por %p69, %p70
    %p72 = scmp.ne.s32.totalorder %s64, %s66
    %p73 = scmp.eq.s32.totalorder %s14, 1
    %p74 = por %p72, %p73
    %p75 = scmp.ne.s32.totalorder %s66, %s67
    %p76 = scmp.eq.s32.totalorder %s14, 0
    %p77 = por %p75, %p76
    %p78 = scmp.ne.s32.totalorder %s66, %s67
    %p79 = scmp.eq.s32.totalorder %s15, 1
    %p80 = por %p78, %p79
    %p82 = scmp.ne.s32.totalorder %s67, %s81
    %p83 = scmp.eq.s32.totalorder %s15, 0
    %p84 = por %p82, %p83
    %s85 = ssub.s32 %s9, %s16
    %p86 = scmp.eq.s32.totalorder %s85, 0
    %s88 = sadd.s32 %s87, 1
    %s89 = scalar_select %p86, %s87, %s88
    %p92 = pneg %p86
    %p93 = scmp.eq.s32.totalorder %s9, 1
    %p94 = por %p92, %p93
    %p95 = scmp.ne.s32.totalorder %s87, %s90
    %p96 = scmp.eq.s32.totalorder %s9, 0
    %p97 = por %p95, %p96
    %p98 = scmp.ne.s32.totalorder %s87, %s90
    %p99 = scmp.eq.s32.totalorder %s14, 1
    %p100 = por %p98, %p99
    %p101 = scmp.ne.s32.totalorder %s90, %s91
    %p102 = scmp.eq.s32.totalorder %s14, 0
    %p103 = por %p101, %p102
    %p104 = scmp.ne.s32.totalorder %s90, %s91
    %p105 = scmp.eq.s32.totalorder %s15, 1
    %p106 = por %p104, %p105
    %p108 = scmp.ne.s32.totalorder %s91, %s107
    %p109 = scmp.eq.s32.totalorder %s15, 0
    %p110 = por %p108, %p109
    %p111 = scmp.le.s32.totalorder 1, %s9
    %p112 = scmp.lt.s32.totalorder %s9, 3
    %p113 = pnand %p111, %p112
    %p114 = pneg %p113
    // Predicated region
    $region9: #{classifier_forward.6} parent=5 // pred_check
      _
    $region10: #{classifier_forward.6} parent=5 // pred_check_branch
      %116 = sbr.rel (%p113) target = $region12
    $region11: #{classifier_forward.6} parent=5 // pred_region
      %s117 = ssub.s32 %s9, 1
      // Predicated region
      $region13: #{classifier_forward.6} parent=11 // pred_check
        %p118 = pneg %p56
      $region14: #{classifier_forward.6} parent=11 // pred_check_branch
        %120 = sbr.rel (%p118) target = $region16
      $region15: #{classifier_forward.6} parent=11 // pred_region
        _
      $region16: #{classifier_forward.6} parent=11 // pred_fallthru
        _
      // Predicated region
      $region17: #{classifier_forward.6} parent=11 // pred_check
        %p121 = pneg %p77
      $region18: #{classifier_forward.6} parent=11 // pred_check_branch
        %123 = sbr.rel (%p121) target = $region20
      $region19: #{classifier_forward.6} parent=11 // pred_region
        _
      $region20: #{classifier_forward.6} parent=11 // pred_fallthru
        _
    $region12: #{classifier_forward.6} parent=5 // pred_fallthru
      _
    %p124 = scmp.lt.s32.totalorder %s9, 2
    // Predicated region
    $region21: #{classifier_forward.6} parent=5 // pred_check
      %p125 = pneg %p124
    $region22: #{classifier_forward.6} parent=5 // pred_check_branch
      %127 = sbr.rel (%p125) target = $region24
    $region23: #{classifier_forward.6} parent=5 // pred_region
      // Predicated region
      $region25: #{classifier_forward.6} parent=23 // pred_check
        %p128 = pneg %p29
      $region26: #{classifier_forward.6} parent=23 // pred_check_branch
        %130 = sbr.rel (%p128) target = $region28
      $region27: #{classifier_forward.6} parent=23 // pred_region
        %p131 = scmp.lt.s32.totalorder %s9, 1
        %s132 = scalar_select %p131, %s9, 1
        %s133 = smul.addr %s132, 72
        %s134 = smul.addr %s133, 4
        %s135 = scalar_lea.vmem %s0, %s134
      $region28: #{classifier_forward.6} parent=23 // pred_fallthru
        _
    $region24: #{classifier_forward.6} parent=5 // pred_fallthru
      _
    %p136 = scmp.le.s32.totalorder 1, %s9
    %p137 = scmp.lt.s32.totalorder %s9, 3
    %p138 = pnand %p136, %p137
    %p139 = pneg %p138
    // Predicated region
    $region29: #{classifier_forward.6} parent=5 // pred_check
      _
    $region30: #{classifier_forward.6} parent=5 // pred_check_branch
      %141 = sbr.rel (%p138) target = $region32
    $region31: #{classifier_forward.6} parent=5 // pred_region
      %s142 = ssub.s32 %s9, 1
      %p143 = scmp.lt.s32.totalorder %s14, 1
      %s144 = scalar_select %p143, %s14, 1
      %s145 = smul.addr %s144, 72
      %s146 = smul.addr %s145, 4
      %s147 = scalar_lea.vmem %s0, %s146
      %p148 = pneg %p35
      %p149 = pneg %p32
      %p150 = pneg %p56
      %p151 = pneg %p53
      %p152 = pneg %p77
      %p153 = pneg %p74
      %p154 = pneg %p103
      %p155 = pneg %p100
      %p156 = scmp.lt.s32.totalorder %s14, 1
      %s157 = scalar_select %p156, %s14, 1
      %s158 = smul.addr %s157, 8
      %s159 = smul.addr %s158, 8
      %s160 = scalar_lea.vmem %s3, %s159
      %p161 = scmp.lt.s32.totalorder %s14, 1
      %s162 = scalar_select %p161, %s14, 1
      %s163 = smul.addr %s162, 72
      %s164 = smul.addr %s163, 4
      %s165 = scalar_lea.vmem %s0, %s164
      %p166 = scmp.lt.s32.totalorder %s14, 1
      %s167 = scalar_select %p166, %s14, 1
      %s168 = smul.addr %s167, 8
      %s169 = smul.addr %s168, 8
      %s170 = scalar_lea.vmem %s3, %s169
      %v172 = vld [vmem:[%s165] sm:$0xff]
      %v173 = vld [vmem:[%s165 + $0x8] sm:$0xff]
      %v174 = vld [vmem:[%s165 + $0x10] sm:$0xff]
      %v175 = vld [vmem:[%s165 + $0x18] sm:$0xff]
      %v176 = vld [vmem:[%s165 + $0x20] sm:$0xf]
      %v177 = vld [vmem:[%s165 + $0x24] sm:$0xff]
      %v178 = vld [vmem:[%s165 + $0x2c] sm:$0xff]
      %v179 = vld [vmem:[%s165 + $0x34] sm:$0xff]
      %v180 = vld [vmem:[%s165 + $0x3c] sm:$0xff]
      %v181 = vld [vmem:[%s165 + $0x44] sm:$0xf]
      %v182 = vld [vmem:[%s165 + $0x48] sm:$0xff]
      %v183 = vld [vmem:[%s165 + $0x50] sm:$0xff]
      %v184 = vld [vmem:[%s165 + $0x58] sm:$0xff]
      %v185 = vld [vmem:[%s165 + $0x60] sm:$0xff]
      %v186 = vld [vmem:[%s165 + $0x68] sm:$0xf]
      %v187 = vld [vmem:[%s165 + $0x6c] sm:$0xff]
      %v188 = vld [vmem:[%s165 + $0x74] sm:$0xff]
      %v189 = vld [vmem:[%s165 + $0x7c] sm:$0xff]
      %v190 = vld [vmem:[%s165 + $0x84] sm:$0xff]
      %v191 = vld [vmem:[%s165 + $0x8c] sm:$0xf]
      %v192 = vld [vmem:[%s165 + $0x90] sm:$0xff]
      %v193 = vld [vmem:[%s165 + $0x98] sm:$0xff]
      %v194 = vld [vmem:[%s165 + $0xa0] sm:$0xff]
      %v195 = vld [vmem:[%s165 + $0xa8] sm:$0xff]
      %v196 = vld [vmem:[%s165 + $0xb0] sm:$0xf]
      %v197 = vld [vmem:[%s165 + $0xb4] sm:$0xff]
      %v198 = vld [vmem:[%s165 + $0xbc] sm:$0xff]
      %v199 = vld [vmem:[%s165 + $0xc4] sm:$0xff]
      %v200 = vld [vmem:[%s165 + $0xcc] sm:$0xff]
      %v201 = vld [vmem:[%s165 + $0xd4] sm:$0xf]
      %v202 = vld [vmem:[%s165 + $0xd8] sm:$0xff]
      %v203 = vld [vmem:[%s165 + $0xe0] sm:$0xff]
      %v204 = vld [vmem:[%s165 + $0xe8] sm:$0xff]
      %v205 = vld [vmem:[%s165 + $0xf0] sm:$0xff]
      %v206 = vld [vmem:[%s165 + $0xf8] sm:$0xf]
      %v207 = vld [vmem:[%s165 + $0xfc] sm:$0xff]
      %v208 = vld [vmem:[%s165 + $0x104] sm:$0xff]
      %v209 = vld [vmem:[%s165 + $0x10c] sm:$0xff]
      %v210 = vld [vmem:[%s165 + $0x114] sm:$0xff]
      %v211 = vld [vmem:[%s165 + $0x11c] sm:$0xf]
      %v212 = vld [vmem:[%s1] sm:$0xf]
      %v213 = vld [vmem:[%s1 + $0x4] sm:$0xf]
      %v214 = vld [vmem:[%s1 + $0x8] sm:$0xf]
      %v215 = vld [vmem:[%s1 + $0xc] sm:$0xf]
      %v216 = vld [vmem:[%s1 + $0x10] sm:$0xf]
      %v217 = vld [vmem:[%s1 + $0x14] sm:$0xf]
      %v218 = vld [vmem:[%s1 + $0x18] sm:$0xf]
      %v219 = vld [vmem:[%s1 + $0x1c] sm:$0xf]
      %v220 = vld [vmem:[%s1 + $0x20] sm:$0xf]
      %v221 = vld [vmem:[%s1 + $0x24] sm:$0xf]
      %v222 = vld [vmem:[%s1 + $0x28] sm:$0xf]
      %v223 = vld [vmem:[%s1 + $0x2c] sm:$0xf]
      %v224 = vld [vmem:[%s1 + $0x30] sm:$0xf]
      %v225 = vld [vmem:[%s1 + $0x34] sm:$0xf]
      %v226 = vld [vmem:[%s1 + $0x38] sm:$0xf]
      %v227 = vld [vmem:[%s1 + $0x3c] sm:$0xf]
      %v228 = vld [vmem:[%s1 + $0x40] sm:$0xf]
      %v229 = vld [vmem:[%s1 + $0x44] sm:$0xf]
      %v230 = vld [vmem:[%s1 + $0x48] sm:$0xf]
      %v231 = vld [vmem:[%s1 + $0x4c] sm:$0xf]
      %v232 = vld [vmem:[%s1 + $0x50] sm:$0xf]
      %v233 = vld [vmem:[%s1 + $0x54] sm:$0xf]
      %v234 = vld [vmem:[%s1 + $0x58] sm:$0xf]
      %v235 = vld [vmem:[%s1 + $0x5c] sm:$0xf]
      %v236 = vld [vmem:[%s1 + $0x60] sm:$0xf]
      %v237 = vld [vmem:[%s1 + $0x64] sm:$0xf]
      %v238 = vld [vmem:[%s1 + $0x68] sm:$0xf]
      %v239 = vld [vmem:[%s1 + $0x6c] sm:$0xf]
      %v240 = vld [vmem:[%s1 + $0x70] sm:$0xf]
      %v241 = vld [vmem:[%s1 + $0x74] sm:$0xf]
      %v242 = vld [vmem:[%s1 + $0x78] sm:$0xf]
      %v243 = vld [vmem:[%s1 + $0x7c] sm:$0xf]
      %v244 = vld [vmem:[%s1 + $0x80] sm:$0xf]
      %v245 = vld [vmem:[%s1 + $0x84] sm:$0xf]
      %v246 = vld [vmem:[%s1 + $0x88] sm:$0xf]
      %v247 = vld [vmem:[%s1 + $0x8c] sm:$0xf]
      %v248 = vld [vmem:[%s1 + $0x90] sm:$0xf]
      %v249 = vld [vmem:[%s1 + $0x94] sm:$0xf]
      %v250 = vld [vmem:[%s1 + $0x98] sm:$0xf]
      %v251 = vld [vmem:[%s1 + $0x9c] sm:$0xf]
      %v252 = vld [vmem:[%s1 + $0xa0] sm:$0xf]
      %v253 = vld [vmem:[%s1 + $0xa4] sm:$0xf]
      %v254 = vld [vmem:[%s1 + $0xa8] sm:$0xf]
      %v255 = vld [vmem:[%s1 + $0xac] sm:$0xf]
      %v256 = vld [vmem:[%s1 + $0xb0] sm:$0xf]
      %v257 = vld [vmem:[%s1 + $0xb4] sm:$0xf]
      %v258 = vld [vmem:[%s1 + $0xb8] sm:$0xf]
      %v259 = vld [vmem:[%s1 + $0xbc] sm:$0xf]
      %v260 = vld [vmem:[%s1 + $0xc0] sm:$0xf]
      %v261 = vld [vmem:[%s1 + $0xc4] sm:$0xf]
      %v262 = vld [vmem:[%s1 + $0xc8] sm:$0xf]
      %v263 = vld [vmem:[%s1 + $0xcc] sm:$0xf]
      %v264 = vld [vmem:[%s1 + $0xd0] sm:$0xf]
      %v265 = vld [vmem:[%s1 + $0xd4] sm:$0xf]
      %v266 = vld [vmem:[%s1 + $0xd8] sm:$0xf]
      %v267 = vld [vmem:[%s1 + $0xdc] sm:$0xf]
      %v268 = vld [vmem:[%s1 + $0xe0] sm:$0xf]
      %v269 = vld [vmem:[%s1 + $0xe4] sm:$0xf]
      %v270 = vld [vmem:[%s1 + $0xe8] sm:$0xf]
      %v271 = vld [vmem:[%s1 + $0xec] sm:$0xf]
      %v272 = vld [vmem:[%s1 + $0xf0] sm:$0xf]
      %v273 = vld [vmem:[%s1 + $0xf4] sm:$0xf]
      %v274 = vld [vmem:[%s1 + $0xf8] sm:$0xf]
      %v275 = vld [vmem:[%s1 + $0xfc] sm:$0xf]
      %v276 = vld [vmem:[%s1 + $0x100] sm:$0xf]
      %v277 = vld [vmem:[%s1 + $0x104] sm:$0xf]
      %v278 = vld [vmem:[%s1 + $0x108] sm:$0xf]
      %v279 = vld [vmem:[%s1 + $0x10c] sm:$0xf]
      %v280 = vld [vmem:[%s1 + $0x110] sm:$0xf]
      %v281 = vld [vmem:[%s1 + $0x114] sm:$0xf]
      %v282 = vld [vmem:[%s1 + $0x118] sm:$0xf]
      %v283 = vld [vmem:[%s1 + $0x11c] sm:$0xf]
      %v284 = vld [vmem:[%s1 + $0x120] sm:$0xf]
      %v285 = vld [vmem:[%s1 + $0x124] sm:$0xf]
      %v286 = vld [vmem:[%s1 + $0x128] sm:$0xf]
      %v287 = vld [vmem:[%s1 + $0x12c] sm:$0xf]
      %v288 = vld [vmem:[%s1 + $0x130] sm:$0xf]
      %v289 = vld [vmem:[%s1 + $0x134] sm:$0xf]
      %v290 = vld [vmem:[%s1 + $0x138] sm:$0xf]
      %v291 = vld [vmem:[%s1 + $0x13c] sm:$0xf]
      %v292 = vld [vmem:[%s1 + $0x140] sm:$0xf]
      %v293 = vld [vmem:[%s1 + $0x144] sm:$0xf]
      %v294 = vld [vmem:[%s1 + $0x148] sm:$0xf]
      %v295 = vld [vmem:[%s1 + $0x14c] sm:$0xf]
      %v296 = vld [vmem:[%s1 + $0x150] sm:$0xf]
      %v297 = vld [vmem:[%s1 + $0x154] sm:$0xf]
      %v298 = vld [vmem:[%s1 + $0x158] sm:$0xf]
      %v299 = vld [vmem:[%s1 + $0x15c] sm:$0xf]
      %v300 = vld [vmem:[%s1 + $0x160] sm:$0xf]
      %v301 = vld [vmem:[%s1 + $0x164] sm:$0xf]
      %v302 = vld [vmem:[%s1 + $0x168] sm:$0xf]
      %v303 = vld [vmem:[%s1 + $0x16c] sm:$0xf]
      %v304 = vld [vmem:[%s1 + $0x170] sm:$0xf]
      %v305 = vld [vmem:[%s1 + $0x174] sm:$0xf]
      %v306 = vld [vmem:[%s1 + $0x178] sm:$0xf]
      %v307 = vld [vmem:[%s1 + $0x17c] sm:$0xf]
      %v308 = vld [vmem:[%s1 + $0x180] sm:$0xf]
      %v309 = vld [vmem:[%s1 + $0x184] sm:$0xf]
      %v310 = vld [vmem:[%s1 + $0x188] sm:$0xf]
      %v311 = vld [vmem:[%s1 + $0x18c] sm:$0xf]
      %v312 = vld [vmem:[%s1 + $0x190] sm:$0xf]
      %v313 = vld [vmem:[%s1 + $0x194] sm:$0xf]
      %v314 = vld [vmem:[%s1 + $0x198] sm:$0xf]
      %v315 = vld [vmem:[%s1 + $0x19c] sm:$0xf]
      %v316 = vld [vmem:[%s1 + $0x1a0] sm:$0xf]
      %v317 = vld [vmem:[%s1 + $0x1a4] sm:$0xf]
      %v318 = vld [vmem:[%s1 + $0x1a8] sm:$0xf]
      %v319 = vld [vmem:[%s1 + $0x1ac] sm:$0xf]
      %v320 = vld [vmem:[%s1 + $0x1b0] sm:$0xf]
      %v321 = vld [vmem:[%s1 + $0x1b4] sm:$0xf]
      %v322 = vld [vmem:[%s1 + $0x1b8] sm:$0xf]
      %v323 = vld [vmem:[%s1 + $0x1bc] sm:$0xf]
      %v324 = vld [vmem:[%s1 + $0x1c0] sm:$0xf]
      %v325 = vld [vmem:[%s1 + $0x1c4] sm:$0xf]
      %v326 = vld [vmem:[%s1 + $0x1c8] sm:$0xf]
      %v327 = vld [vmem:[%s1 + $0x1cc] sm:$0xf]
      %v328 = vld [vmem:[%s1 + $0x1d0] sm:$0xf]
      %v329 = vld [vmem:[%s1 + $0x1d4] sm:$0xf]
      %v330 = vld [vmem:[%s1 + $0x1d8] sm:$0xf]
      %v331 = vld [vmem:[%s1 + $0x1dc] sm:$0xf]
      %v332 = vld [vmem:[%s1 + $0x1e0] sm:$0xf]
      %v333 = vld [vmem:[%s1 + $0x1e4] sm:$0xf]
      %v334 = vld [vmem:[%s1 + $0x1e8] sm:$0xf]
      %v335 = vld [vmem:[%s1 + $0x1ec] sm:$0xf]
      %v336 = vld [vmem:[%s1 + $0x1f0] sm:$0xf]
      %v337 = vld [vmem:[%s1 + $0x1f4] sm:$0xf]
      %v338 = vld [vmem:[%s1 + $0x1f8] sm:$0xf]
      %v339 = vld [vmem:[%s1 + $0x1fc] sm:$0xf]
      %v340 = vld [vmem:[%s1 + $0x200] sm:$0xf]
      %v341 = vld [vmem:[%s1 + $0x204] sm:$0xf]
      %v342 = vld [vmem:[%s1 + $0x208] sm:$0xf]
      %v343 = vld [vmem:[%s1 + $0x20c] sm:$0xf]
      %v344 = vld [vmem:[%s1 + $0x210] sm:$0xf]
      %v345 = vld [vmem:[%s1 + $0x214] sm:$0xf]
      %v346 = vld [vmem:[%s1 + $0x218] sm:$0xf]
      %v347 = vld [vmem:[%s1 + $0x21c] sm:$0xf]
      %v348 = vld [vmem:[%s1 + $0x220] sm:$0xf]
      %v349 = vld [vmem:[%s1 + $0x224] sm:$0xf]
      %v350 = vld [vmem:[%s1 + $0x228] sm:$0xf]
      %v351 = vld [vmem:[%s1 + $0x22c] sm:$0xf]
      %v352 = vld [vmem:[%s1 + $0x230] sm:$0xf]
      %v353 = vld [vmem:[%s1 + $0x234] sm:$0xf]
      %v354 = vld [vmem:[%s1 + $0x238] sm:$0xf]
      %v355 = vld [vmem:[%s1 + $0x23c] sm:$0xf]
      %v356 = vld [vmem:[%s2] sm:$0x1]
      %v358 = vlaneseq
      %v359 = vshrl.u32 %v358, 7
      %v360 = vsub.s32 0, %v359
      %v361 = vrot.slane %v356, %v360
      %v403 = vunpack.c.l.b16 %v172
      %v404 = vunpack.c.h.b16 %v172
      %v405 = vunpack.c.l.b16 %v173
      %v406 = vunpack.c.h.b16 %v173
      %v407 = vunpack.c.l.b16 %v174
      %v408 = vunpack.c.h.b16 %v174
      %v409 = vunpack.c.l.b16 %v175
      %v410 = vunpack.c.h.b16 %v175
      %v411 = vunpack.c.l.b16 %v176
      %v412 = vunpack.c.l.b16 %v177
      %v413 = vunpack.c.h.b16 %v177
      %v414 = vunpack.c.l.b16 %v178
      %v415 = vunpack.c.h.b16 %v178
      %v416 = vunpack.c.l.b16 %v179
      %v417 = vunpack.c.h.b16 %v179
      %v418 = vunpack.c.l.b16 %v180
      %v419 = vunpack.c.h.b16 %v180
      %v420 = vunpack.c.l.b16 %v181
      %v421 = vunpack.c.l.b16 %v182
      %v422 = vunpack.c.h.b16 %v182
      %v423 = vunpack.c.l.b16 %v183
      %v424 = vunpack.c.h.b16 %v183
      %v425 = vunpack.c.l.b16 %v184
      %v426 = vunpack.c.h.b16 %v184
      %v427 = vunpack.c.l.b16 %v185
      %v428 = vunpack.c.h.b16 %v185
      %v429 = vunpack.c.l.b16 %v186
      %v430 = vunpack.c.l.b16 %v187
      %v431 = vunpack.c.h.b16 %v187
      %v432 = vunpack.c.l.b16 %v188
      %v433 = vunpack.c.h.b16 %v188
      %v434 = vunpack.c.l.b16 %v189
      %v435 = vunpack.c.h.b16 %v189
      %v436 = vunpack.c.l.b16 %v190
      %v437 = vunpack.c.h.b16 %v190
      %v438 = vunpack.c.l.b16 %v191
      %v439 = vunpack.c.l.b16 %v192
      %v440 = vunpack.c.h.b16 %v192
      %v441 = vunpack.c.l.b16 %v193
      %v442 = vunpack.c.h.b16 %v193
      %v443 = vunpack.c.l.b16 %v194
      %v444 = vunpack.c.h.b16 %v194
      %v445 = vunpack.c.l.b16 %v195
      %v446 = vunpack.c.h.b16 %v195
      %v447 = vunpack.c.l.b16 %v196
      %v448 = vunpack.c.l.b16 %v197
      %v449 = vunpack.c.h.b16 %v197
      %v450 = vunpack.c.l.b16 %v198
      %v451 = vunpack.c.h.b16 %v198
      %v452 = vunpack.c.l.b16 %v199
      %v453 = vunpack.c.h.b16 %v199
      %v454 = vunpack.c.l.b16 %v200
      %v455 = vunpack.c.h.b16 %v200
      %v456 = vunpack.c.l.b16 %v201
      %v457 = vunpack.c.l.b16 %v202
      %v458 = vunpack.c.h.b16 %v202
      %v459 = vunpack.c.l.b16 %v203
      %v460 = vunpack.c.h.b16 %v203
      %v461 = vunpack.c.l.b16 %v204
      %v462 = vunpack.c.h.b16 %v204
      %v463 = vunpack.c.l.b16 %v205
      %v464 = vunpack.c.h.b16 %v205
      %v465 = vunpack.c.l.b16 %v206
      %v466 = vunpack.c.l.b16 %v207
      %v467 = vunpack.c.h.b16 %v207
      %v468 = vunpack.c.l.b16 %v208
      %v469 = vunpack.c.h.b16 %v208
      %v470 = vunpack.c.l.b16 %v209
      %v471 = vunpack.c.h.b16 %v209
      %v472 = vunpack.c.l.b16 %v210
      %v473 = vunpack.c.h.b16 %v210
      %v474 = vunpack.c.l.b16 %v211
      %v475 = vpack.c.b16 %v412, %v403
      %v476 = vpack.c.b16 %v413, %v404
      %v477 = vpack.c.b16 %v414, %v405
      %v478 = vpack.c.b16 %v415, %v406
      %v479 = vpack.c.b16 %v416, %v407
      %v480 = vpack.c.b16 %v417, %v408
      %v481 = vpack.c.b16 %v418, %v409
      %v482 = vpack.c.b16 %v419, %v410
      %v483 = vpack.c.b16 %v420, %v411
      %v484 = vpack.c.b16 %v430, %v421
      %v485 = vpack.c.b16 %v431, %v422
      %v486 = vpack.c.b16 %v432, %v423
      %v487 = vpack.c.b16 %v433, %v424
      %v488 = vpack.c.b16 %v434, %v425
      %v489 = vpack.c.b16 %v435, %v426
      %v490 = vpack.c.b16 %v436, %v427
      %v491 = vpack.c.b16 %v437, %v428
      %v492 = vpack.c.b16 %v438, %v429
      %v493 = vpack.c.b16 %v448, %v439
      %v494 = vpack.c.b16 %v449, %v440
      %v495 = vpack.c.b16 %v450, %v441
      %v496 = vpack.c.b16 %v451, %v442
      %v497 = vpack.c.b16 %v452, %v443
      %v498 = vpack.c.b16 %v453, %v444
      %v499 = vpack.c.b16 %v454, %v445
      %v500 = vpack.c.b16 %v455, %v446
      %v501 = vpack.c.b16 %v456, %v447
      %v502 = vpack.c.b16 %v466, %v457
      %v503 = vpack.c.b16 %v467, %v458
      %v504 = vpack.c.b16 %v468, %v459
      %v505 = vpack.c.b16 %v469, %v460
      %v506 = vpack.c.b16 %v470, %v461
      %v507 = vpack.c.b16 %v471, %v462
      %v508 = vpack.c.b16 %v472, %v463
      %v509 = vpack.c.b16 %v473, %v464
      %v510 = vpack.c.b16 %v474, %v465
      %v691 = vunpack.c.l.b16 %v212
      %v692 = vunpack.c.l.b16 %v213
      %v693 = vunpack.c.l.b16 %v214
      %v694 = vunpack.c.l.b16 %v215
      %v695 = vunpack.c.l.b16 %v216
      %v696 = vunpack.c.l.b16 %v217
      %v697 = vunpack.c.l.b16 %v218
      %v698 = vunpack.c.l.b16 %v219
      %v699 = vunpack.c.l.b16 %v220
      %v700 = vunpack.c.l.b16 %v221
      %v701 = vunpack.c.l.b16 %v222
      %v702 = vunpack.c.l.b16 %v223
      %v703 = vunpack.c.l.b16 %v224
      %v704 = vunpack.c.l.b16 %v225
      %v705 = vunpack.c.l.b16 %v226
      %v706 = vunpack.c.l.b16 %v227
      %v707 = vunpack.c.l.b16 %v228
      %v708 = vunpack.c.l.b16 %v229
      %v709 = vunpack.c.l.b16 %v230
      %v710 = vunpack.c.l.b16 %v231
      %v711 = vunpack.c.l.b16 %v232
      %v712 = vunpack.c.l.b16 %v233
      %v713 = vunpack.c.l.b16 %v234
      %v714 = vunpack.c.l.b16 %v235
      %v715 = vunpack.c.l.b16 %v236
      %v716 = vunpack.c.l.b16 %v237
      %v717 = vunpack.c.l.b16 %v238
      %v718 = vunpack.c.l.b16 %v239
      %v719 = vunpack.c.l.b16 %v240
      %v720 = vunpack.c.l.b16 %v241
      %v721 = vunpack.c.l.b16 %v242
      %v722 = vunpack.c.l.b16 %v243
      %v723 = vunpack.c.l.b16 %v244
      %v724 = vunpack.c.l.b16 %v245
      %v725 = vunpack.c.l.b16 %v246
      %v726 = vunpack.c.l.b16 %v247
      %v727 = vunpack.c.l.b16 %v248
      %v728 = vunpack.c.l.b16 %v249
      %v729 = vunpack.c.l.b16 %v250
      %v730 = vunpack.c.l.b16 %v251
      %v731 = vunpack.c.l.b16 %v252
      %v732 = vunpack.c.l.b16 %v253
      %v733 = vunpack.c.l.b16 %v254
      %v734 = vunpack.c.l.b16 %v255
      %v735 = vunpack.c.l.b16 %v256
      %v736 = vunpack.c.l.b16 %v257
      %v737 = vunpack.c.l.b16 %v258
      %v738 = vunpack.c.l.b16 %v259
      %v739 = vunpack.c.l.b16 %v260
      %v740 = vunpack.c.l.b16 %v261
      %v741 = vunpack.c.l.b16 %v262
      %v742 = vunpack.c.l.b16 %v263
      %v743 = vunpack.c.l.b16 %v264
      %v744 = vunpack.c.l.b16 %v265
      %v745 = vunpack.c.l.b16 %v266
      %v746 = vunpack.c.l.b16 %v267
      %v747 = vunpack.c.l.b16 %v268
      %v748 = vunpack.c.l.b16 %v269
      %v749 = vunpack.c.l.b16 %v270
      %v750 = vunpack.c.l.b16 %v271
      %v751 = vunpack.c.l.b16 %v272
      %v752 = vunpack.c.l.b16 %v273
      %v753 = vunpack.c.l.b16 %v274
      %v754 = vunpack.c.l.b16 %v275
      %v755 = vunpack.c.l.b16 %v276
      %v756 = vunpack.c.l.b16 %v277
      %v757 = vunpack.c.l.b16 %v278
      %v758 = vunpack.c.l.b16 %v279
      %v759 = vunpack.c.l.b16 %v280
      %v760 = vunpack.c.l.b16 %v281
      %v761 = vunpack.c.l.b16 %v282
      %v762 = vunpack.c.l.b16 %v283
      %v763 = vunpack.c.l.b16 %v284
      %v764 = vunpack.c.l.b16 %v285
      %v765 = vunpack.c.l.b16 %v286
      %v766 = vunpack.c.l.b16 %v287
      %v767 = vunpack.c.l.b16 %v288
      %v768 = vunpack.c.l.b16 %v289
      %v769 = vunpack.c.l.b16 %v290
      %v770 = vunpack.c.l.b16 %v291
      %v771 = vunpack.c.l.b16 %v292
      %v772 = vunpack.c.l.b16 %v293
      %v773 = vunpack.c.l.b16 %v294
      %v774 = vunpack.c.l.b16 %v295
      %v775 = vunpack.c.l.b16 %v296
      %v776 = vunpack.c.l.b16 %v297
      %v777 = vunpack.c.l.b16 %v298
      %v778 = vunpack.c.l.b16 %v299
      %v779 = vunpack.c.l.b16 %v300
      %v780 = vunpack.c.l.b16 %v301
      %v781 = vunpack.c.l.b16 %v302
      %v782 = vunpack.c.l.b16 %v303
      %v783 = vunpack.c.l.b16 %v304
      %v784 = vunpack.c.l.b16 %v305
      %v785 = vunpack.c.l.b16 %v306
      %v786 = vunpack.c.l.b16 %v307
      %v787 = vunpack.c.l.b16 %v308
      %v788 = vunpack.c.l.b16 %v309
      %v789 = vunpack.c.l.b16 %v310
      %v790 = vunpack.c.l.b16 %v311
      %v791 = vunpack.c.l.b16 %v312
      %v792 = vunpack.c.l.b16 %v313
      %v793 = vunpack.c.l.b16 %v314
      %v794 = vunpack.c.l.b16 %v315
      %v795 = vunpack.c.l.b16 %v316
      %v796 = vunpack.c.l.b16 %v317
      %v797 = vunpack.c.l.b16 %v318
      %v798 = vunpack.c.l.b16 %v319
      %v799 = vunpack.c.l.b16 %v320
      %v800 = vunpack.c.l.b16 %v321
      %v801 = vunpack.c.l.b16 %v322
      %v802 = vunpack.c.l.b16 %v323
      %v803 = vunpack.c.l.b16 %v324
      %v804 = vunpack.c.l.b16 %v325
      %v805 = vunpack.c.l.b16 %v326
      %v806 = vunpack.c.l.b16 %v327
      %v807 = vunpack.c.l.b16 %v328
      %v808 = vunpack.c.l.b16 %v329
      %v809 = vunpack.c.l.b16 %v330
      %v810 = vunpack.c.l.b16 %v331
      %v811 = vunpack.c.l.b16 %v332
      %v812 = vunpack.c.l.b16 %v333
      %v813 = vunpack.c.l.b16 %v334
      %v814 = vunpack.c.l.b16 %v335
      %v815 = vunpack.c.l.b16 %v336
      %v816 = vunpack.c.l.b16 %v337
      %v817 = vunpack.c.l.b16 %v338
      %v818 = vunpack.c.l.b16 %v339
      %v819 = vunpack.c.l.b16 %v340
      %v820 = vunpack.c.l.b16 %v341
      %v821 = vunpack.c.l.b16 %v342
      %v822 = vunpack.c.l.b16 %v343
      %v823 = vunpack.c.l.b16 %v344
      %v824 = vunpack.c.l.b16 %v345
      %v825 = vunpack.c.l.b16 %v346
      %v826 = vunpack.c.l.b16 %v347
      %v827 = vunpack.c.l.b16 %v348
      %v828 = vunpack.c.l.b16 %v349
      %v829 = vunpack.c.l.b16 %v350
      %v830 = vunpack.c.l.b16 %v351
      %v831 = vunpack.c.l.b16 %v352
      %v832 = vunpack.c.l.b16 %v353
      %v833 = vunpack.c.l.b16 %v354
      %v834 = vunpack.c.l.b16 %v355
      %v835 = vpack.c.b16 %v692, %v691
      %v836 = vpack.c.b16 %v694, %v693
      %v837 = vpack.c.b16 %v696, %v695
      %v838 = vpack.c.b16 %v698, %v697
      %v839 = vpack.c.b16 %v700, %v699
      %v840 = vpack.c.b16 %v702, %v701
      %v841 = vpack.c.b16 %v704, %v703
      %v842 = vpack.c.b16 %v706, %v705
      %v843 = vpack.c.b16 %v708, %v707
      %v844 = vpack.c.b16 %v710, %v709
      %v845 = vpack.c.b16 %v712, %v711
      %v846 = vpack.c.b16 %v714, %v713
      %v847 = vpack.c.b16 %v716, %v715
      %v848 = vpack.c.b16 %v718, %v717
      %v849 = vpack.c.b16 %v720, %v719
      %v850 = vpack.c.b16 %v722, %v721
      %v851 = vpack.c.b16 %v724, %v723
      %v852 = vpack.c.b16 %v726, %v725
      %v853 = vpack.c.b16 %v728, %v727
      %v854 = vpack.c.b16 %v730, %v729
      %v855 = vpack.c.b16 %v732, %v731
      %v856 = vpack.c.b16 %v734, %v733
      %v857 = vpack.c.b16 %v736, %v735
      %v858 = vpack.c.b16 %v738, %v737
      %v859 = vpack.c.b16 %v740, %v739
      %v860 = vpack.c.b16 %v742, %v741
      %v861 = vpack.c.b16 %v744, %v743
      %v862 = vpack.c.b16 %v746, %v745
      %v863 = vpack.c.b16 %v748, %v747
      %v864 = vpack.c.b16 %v750, %v749
      %v865 = vpack.c.b16 %v752, %v751
      %v866 = vpack.c.b16 %v754, %v753
      %v867 = vpack.c.b16 %v756, %v755
      %v868 = vpack.c.b16 %v758, %v757
      %v869 = vpack.c.b16 %v760, %v759
      %v870 = vpack.c.b16 %v762, %v761
      %v871 = vpack.c.b16 %v764, %v763
      %v872 = vpack.c.b16 %v766, %v765
      %v873 = vpack.c.b16 %v768, %v767
      %v874 = vpack.c.b16 %v770, %v769
      %v875 = vpack.c.b16 %v772, %v771
      %v876 = vpack.c.b16 %v774, %v773
      %v877 = vpack.c.b16 %v776, %v775
      %v878 = vpack.c.b16 %v778, %v777
      %v879 = vpack.c.b16 %v780, %v779
      %v880 = vpack.c.b16 %v782, %v781
      %v881 = vpack.c.b16 %v784, %v783
      %v882 = vpack.c.b16 %v786, %v785
      %v883 = vpack.c.b16 %v788, %v787
      %v884 = vpack.c.b16 %v790, %v789
      %v885 = vpack.c.b16 %v792, %v791
      %v886 = vpack.c.b16 %v794, %v793
      %v887 = vpack.c.b16 %v796, %v795
      %v888 = vpack.c.b16 %v798, %v797
      %v889 = vpack.c.b16 %v800, %v799
      %v890 = vpack.c.b16 %v802, %v801
      %v891 = vpack.c.b16 %v804, %v803
      %v892 = vpack.c.b16 %v806, %v805
      %v893 = vpack.c.b16 %v808, %v807
      %v894 = vpack.c.b16 %v810, %v809
      %v895 = vpack.c.b16 %v812, %v811
      %v896 = vpack.c.b16 %v814, %v813
      %v897 = vpack.c.b16 %v816, %v815
      %v898 = vpack.c.b16 %v818, %v817
      %v899 = vpack.c.b16 %v820, %v819
      %v900 = vpack.c.b16 %v822, %v821
      %v901 = vpack.c.b16 %v824, %v823
      %v902 = vpack.c.b16 %v826, %v825
      %v903 = vpack.c.b16 %v828, %v827
      %v904 = vpack.c.b16 %v830, %v829
      %v905 = vpack.c.b16 %v832, %v831
      %v906 = vpack.c.b16 %v834, %v833
      %979 = vmatprep.subr.bf16.mxu0 0
      %980 = vmatpush1.bf16.msra.mxu0 %v835
      %981 = vmatprep.subr.bf16.mxu0 0
      %982 = vmatpush1.bf16.msra.mxu0 %v836
      %983 = vmatprep.subr.bf16.mxu0 0
      %984 = vmatpush1.bf16.msra.mxu0 %v837
      %985 = vmatprep.subr.bf16.mxu0 0
      %986 = vmatpush1.bf16.msra.mxu0 %v838
      %987 = vmatprep.subr.bf16.mxu0 0
      %988 = vmatpush1.bf16.msra.mxu0 %v839
      %989 = vmatprep.subr.bf16.mxu0 0
      %990 = vmatpush1.bf16.msra.mxu0 %v840
      %991 = vmatprep.subr.bf16.mxu0 0
      %992 = vmatpush1.bf16.msra.mxu0 %v841
      %993 = vmatprep.subr.bf16.mxu0 0
      %994 = vmatpush1.bf16.msra.mxu0 %v842
      %995 = vmatprep.subr.bf16.mxu0 0
      %996 = vmatpush1.bf16.msra.mxu0 %v843
      %997 = vmatprep.subr.bf16.mxu0 0
      %998 = vmatpush1.bf16.msra.mxu0 %v844
      %999 = vmatprep.subr.bf16.mxu0 0
      %1000 = vmatpush1.bf16.msra.mxu0 %v845
      %1001 = vmatprep.subr.bf16.mxu0 0
      %1002 = vmatpush1.bf16.msra.mxu0 %v846
      %1003 = vmatprep.subr.bf16.mxu0 0
      %1004 = vmatpush1.bf16.msra.mxu0 %v847
      %1005 = vmatprep.subr.bf16.mxu0 0
      %1006 = vmatpush1.bf16.msra.mxu0 %v848
      %1007 = vmatprep.subr.bf16.mxu0 0
      %1008 = vmatpush1.bf16.msra.mxu0 %v849
      %1009 = vmatprep.subr.bf16.mxu0 0
      %1010 = vmatpush1.bf16.msra.mxu0 %v850
      %1011 = vmatprep.mubr.bf16.mxu0 %v476
      %1012 = vmatmul.mubr.bf16.gmra.mrb[0].mxu0 %v475
      %v1013 = vpop.f32.mrb[0].mxu0
      %v1014 = vadd.f32 %v361, %v1013
      %v1015 = vpop.f32.mrb[0].mxu0
      %v1016 = vpop.f32.mrb[0].mxu0
      %v1017 = vadd.f32 %v361, %v1016
      %v1018 = vpop.f32.mrb[0].mxu0
      %1019 = vmatprep.mubr.bf16.mxu0 %v485
      %1020 = vmatmul.mubr.bf16.gmra.mrb[0].mxu0 %v484
      %v1021 = vpop.f32.mrb[0].mxu0
      %v1022 = vadd.f32 %v361, %v1021
      %v1023 = vpop.f32.mrb[0].mxu0
      %v1024 = vpop.f32.mrb[0].mxu0
      %v1025 = vadd.f32 %v361, %v1024
      %v1026 = vpop.f32.mrb[0].mxu0
      %1027 = vmatprep.mubr.bf16.mxu0 %v494
      %1028 = vmatmul.mubr.bf16.gmra.mrb[0].mxu0 %v493
      %v1029 = vpop.f32.mrb[0].mxu0
      %v1030 = vadd.f32 %v361, %v1029
      %v1031 = vpop.f32.mrb[0].mxu0
      %v1032 = vpop.f32.mrb[0].mxu0
      %v1033 = vadd.f32 %v361, %v1032
      %v1034 = vpop.f32.mrb[0].mxu0
      %1035 = vmatprep.mubr.bf16.mxu0 %v503
      %1036 = vmatmul.mubr.bf16.gmra.mrb[0].mxu0 %v502
      %v1037 = vpop.f32.mrb[0].mxu0
      %v1038 = vadd.f32 %v361, %v1037
      %v1039 = vpop.f32.mrb[0].mxu0
      %v1040 = vpop.f32.mrb[0].mxu0
      %v1041 = vadd.f32 %v361, %v1040
      %v1042 = vpop.f32.mrb[0].mxu0
      %1043 = vdwg.mxu0
      %1044 = vmatprep.subr.bf16.mxu0 0
      %1045 = vmatpush1.bf16.msra.mxu0 %v851
      %1046 = vmatprep.subr.bf16.mxu0 0
      %1047 = vmatpush1.bf16.msra.mxu0 %v852
      %1048 = vmatprep.subr.bf16.mxu0 0
      %1049 = vmatpush1.bf16.msra.mxu0 %v853
      %1050 = vmatprep.subr.bf16.mxu0 0
      %1051 = vmatpush1.bf16.msra.mxu0 %v854
      %1052 = vmatprep.subr.bf16.mxu0 0
      %1053 = vmatpush1.bf16.msra.mxu0 %v855
      %1054 = vmatprep.subr.bf16.mxu0 0
      %1055 = vmatpush1.bf16.msra.mxu0 %v856
      %1056 = vmatprep.subr.bf16.mxu0 0
      %1057 = vmatpush1.bf16.msra.mxu0 %v857
      %1058 = vmatprep.subr.bf16.mxu0 0
      %1059 = vmatpush1.bf16.msra.mxu0 %v858
      %1060 = vmatprep.subr.bf16.mxu0 0
      %1061 = vmatpush1.bf16.msra.mxu0 %v859
      %1062 = vmatprep.subr.bf16.mxu0 0
      %1063 = vmatpush1.bf16.msra.mxu0 %v860
      %1064 = vmatprep.subr.bf16.mxu0 0
      %1065 = vmatpush1.bf16.msra.mxu0 %v861
      %1066 = vmatprep.subr.bf16.mxu0 0
      %1067 = vmatpush1.bf16.msra.mxu0 %v862
      %1068 = vmatprep.subr.bf16.mxu0 0
      %1069 = vmatpush1.bf16.msra.mxu0 %v863
      %1070 = vmatprep.subr.bf16.mxu0 0
      %1071 = vmatpush1.bf16.msra.mxu0 %v864
      %1072 = vmatprep.subr.bf16.mxu0 0
      %1073 = vmatpush1.bf16.msra.mxu0 %v865
      %1074 = vmatprep.subr.bf16.mxu0 0
      %1075 = vmatpush1.bf16.msra.mxu0 %v866
      %1076 = vmatprep.mubr.bf16.mxu0 %v478
      %1077 = vmatmul.mubr.bf16.gmra.mrb[0].mxu0 %v477
      %v1078 = vpop.f32.mrb[0].mxu0
      %v1079 = vadd.f32 %v1014, %v1078
      %v1080 = vpop.f32.mrb[0].mxu0
      %v1081 = vpop.f32.mrb[0].mxu0
      %v1082 = vadd.f32 %v1017, %v1081
      %v1083 = vpop.f32.mrb[0].mxu0
      %1084 = vmatprep.mubr.bf16.mxu0 %v487
      %1085 = vmatmul.mubr.bf16.gmra.mrb[0].mxu0 %v486
      %v1086 = vpop.f32.mrb[0].mxu0
      %v1087 = vadd.f32 %v1022, %v1086
      %v1088 = vpop.f32.mrb[0].mxu0
      %v1089 = vpop.f32.mrb[0].mxu0
      %v1090 = vadd.f32 %v1025, %v1089
      %v1091 = vpop.f32.mrb[0].mxu0
      %1092 = vmatprep.mubr.bf16.mxu0 %v496
      %1093 = vmatmul.mubr.bf16.gmra.mrb[0].mxu0 %v495
      %v1094 = vpop.f32.mrb[0].mxu0
      %v1095 = vadd.f32 %v1030, %v1094
      %v1096 = vpop.f32.mrb[0].mxu0
      %v1097 = vpop.f32.mrb[0].mxu0
      %v1098 = vadd.f32 %v1033, %v1097
      %v1099 = vpop.f32.mrb[0].mxu0
      %1100 = vmatprep.mubr.bf16.mxu0 %v505
      %1101 = vmatmul.mubr.bf16.gmra.mrb[0].mxu0 %v504
      %v1102 = vpop.f32.mrb[0].mxu0
      %v1103 = vadd.f32 %v1038, %v1102
      %v1104 = vpop.f32.mrb[0].mxu0
      %v1105 = vpop.f32.mrb[0].mxu0
      %v1106 = vadd.f32 %v1041, %v1105
      %v1107 = vpop.f32.mrb[0].mxu0
      %1108 = vdwg.mxu0
      %1109 = vmatprep.subr.bf16.mxu0 0
      %1110 = vmatpush1.bf16.msra.mxu0 %v867
      %1111 = vmatprep.subr.bf16.mxu0 0
      %1112 = vmatpush1.bf16.msra.mxu0 %v868
      %1113 = vmatprep.subr.bf16.mxu0 0
      %1114 = vmatpush1.bf16.msra.mxu0 %v869
      %1115 = vmatprep.subr.bf16.mxu0 0
      %1116 = vmatpush1.bf16.msra.mxu0 %v870
      %1117 = vmatprep.subr.bf16.mxu0 0
      %1118 = vmatpush1.bf16.msra.mxu0 %v871
      %1119 = vmatprep.subr.bf16.mxu0 0
      %1120 = vmatpush1.bf16.msra.mxu0 %v872
      %1121 = vmatprep.subr.bf16.mxu0 0
      %1122 = vmatpush1.bf16.msra.mxu0 %v873
      %1123 = vmatprep.subr.bf16.mxu0 0
      %1124 = vmatpush1.bf16.msra.mxu0 %v874
      %1125 = vmatprep.subr.bf16.mxu0 0
      %1126 = vmatpush1.bf16.msra.mxu0 %v875
      %1127 = vmatprep.subr.bf16.mxu0 0
      %1128 = vmatpush1.bf16.msra.mxu0 %v876
      %1129 = vmatprep.subr.bf16.mxu0 0
      %1130 = vmatpush1.bf16.msra.mxu0 %v877
      %1131 = vmatprep.subr.bf16.mxu0 0
      %1132 = vmatpush1.bf16.msra.mxu0 %v878
      %1133 = vmatprep.subr.bf16.mxu0 0
      %1134 = vmatpush1.bf16.msra.mxu0 %v879
      %1135 = vmatprep.subr.bf16.mxu0 0
      %1136 = vmatpush1.bf16.msra.mxu0 %v880
      %1137 = vmatprep.subr.bf16.mxu0 0
      %1138 = vmatpush1.bf16.msra.mxu0 %v881
      %1139 = vmatprep.subr.bf16.mxu0 0
      %1140 = vmatpush1.bf16.msra.mxu0 %v882
      %1141 = vmatprep.mubr.bf16.mxu0 %v480
      %1142 = vmatmul.mubr.bf16.gmra.mrb[0].mxu0 %v479
      %v1143 = vpop.f32.mrb[0].mxu0
      %v1144 = vadd.f32 %v1079, %v1143
      %v1145 = vpop.f32.mrb[0].mxu0
      %v1146 = vpop.f32.mrb[0].mxu0
      %v1147 = vadd.f32 %v1082, %v1146
      %v1148 = vpop.f32.mrb[0].mxu0
      %1149 = vmatprep.mubr.bf16.mxu0 %v489
      %1150 = vmatmul.mubr.bf16.gmra.mrb[0].mxu0 %v488
      %v1151 = vpop.f32.mrb[0].mxu0
      %v1152 = vadd.f32 %v1087, %v1151
      %v1153 = vpop.f32.mrb[0].mxu0
      %v1154 = vpop.f32.mrb[0].mxu0
      %v1155 = vadd.f32 %v1090, %v1154
      %v1156 = vpop.f32.mrb[0].mxu0
      %1157 = vmatprep.mubr.bf16.mxu0 %v498
      %1158 = vmatmul.mubr.bf16.gmra.mrb[0].mxu0 %v497
      %v1159 = vpop.f32.mrb[0].mxu0
      %v1160 = vadd.f32 %v1095, %v1159
      %v1161 = vpop.f32.mrb[0].mxu0
      %v1162 = vpop.f32.mrb[0].mxu0
      %v1163 = vadd.f32 %v1098, %v1162
      %v1164 = vpop.f32.mrb[0].mxu0
      %1165 = vmatprep.mubr.bf16.mxu0 %v507
      %1166 = vmatmul.mubr.bf16.gmra.mrb[0].mxu0 %v506
      %v1167 = vpop.f32.mrb[0].mxu0
      %v1168 = vadd.f32 %v1103, %v1167
      %v1169 = vpop.f32.mrb[0].mxu0
      %v1170 = vpop.f32.mrb[0].mxu0
      %v1171 = vadd.f32 %v1106, %v1170
      %v1172 = vpop.f32.mrb[0].mxu0
      %1173 = vdwg.mxu0
      %1174 = vmatprep.subr.bf16.mxu0 0
      %1175 = vmatpush1.bf16.msra.mxu0 %v883
      %1176 = vmatprep.subr.bf16.mxu0 0
      %1177 = vmatpush1.bf16.msra.mxu0 %v884
      %1178 = vmatprep.subr.bf16.mxu0 0
      %1179 = vmatpush1.bf16.msra.mxu0 %v885
      %1180 = vmatprep.subr.bf16.mxu0 0
      %1181 = vmatpush1.bf16.msra.mxu0 %v886
      %1182 = vmatprep.subr.bf16.mxu0 0
      %1183 = vmatpush1.bf16.msra.mxu0 %v887
      %1184 = vmatprep.subr.bf16.mxu0 0
      %1185 = vmatpush1.bf16.msra.mxu0 %v888
      %1186 = vmatprep.subr.bf16.mxu0 0
      %1187 = vmatpush1.bf16.msra.mxu0 %v889
      %1188 = vmatprep.subr.bf16.mxu0 0
      %1189 = vmatpush1.bf16.msra.mxu0 %v890
      %1190 = vmatprep.subr.bf16.mxu0 0
      %1191 = vmatpush1.bf16.msra.mxu0 %v891
      %1192 = vmatprep.subr.bf16.mxu0 0
      %1193 = vmatpush1.bf16.msra.mxu0 %v892
      %1194 = vmatprep.subr.bf16.mxu0 0
      %1195 = vmatpush1.bf16.msra.mxu0 %v893
      %1196 = vmatprep.subr.bf16.mxu0 0
      %1197 = vmatpush1.bf16.msra.mxu0 %v894
      %1198 = vmatprep.subr.bf16.mxu0 0
      %1199 = vmatpush1.bf16.msra.mxu0 %v895
      %1200 = vmatprep.subr.bf16.mxu0 0
      %1201 = vmatpush1.bf16.msra.mxu0 %v896
      %1202 = vmatprep.subr.bf16.mxu0 0
      %1203 = vmatpush1.bf16.msra.mxu0 %v897
      %1204 = vmatprep.subr.bf16.mxu0 0
      %1205 = vmatpush1.bf16.msra.mxu0 %v898
      %1206 = vmatprep.mubr.bf16.mxu0 %v482
      %1207 = vmatmul.mubr.bf16.gmra.mrb[0].mxu0 %v481
      %v1208 = vpop.f32.mrb[0].mxu0
      %v1209 = vadd.f32 %v1144, %v1208
      %v1210 = vpop.f32.mrb[0].mxu0
      %v1211 = vpop.f32.mrb[0].mxu0
      %v1212 = vadd.f32 %v1147, %v1211
      %v1213 = vpop.f32.mrb[0].mxu0
      %1214 = vmatprep.mubr.bf16.mxu0 %v491
      %1215 = vmatmul.mubr.bf16.gmra.mrb[0].mxu0 %v490
      %v1216 = vpop.f32.mrb[0].mxu0
      %v1217 = vadd.f32 %v1152, %v1216
      %v1218 = vpop.f32.mrb[0].mxu0
      %v1219 = vpop.f32.mrb[0].mxu0
      %v1220 = vadd.f32 %v1155, %v1219
      %v1221 = vpop.f32.mrb[0].mxu0
      %1222 = vmatprep.mubr.bf16.mxu0 %v500
      %1223 = vmatmul.mubr.bf16.gmra.mrb[0].mxu0 %v499
      %v1224 = vpop.f32.mrb[0].mxu0
      %v1225 = vadd.f32 %v1160, %v1224
      %v1226 = vpop.f32.mrb[0].mxu0
      %v1227 = vpop.f32.mrb[0].mxu0
      %v1228 = vadd.f32 %v1163, %v1227
      %v1229 = vpop.f32.mrb[0].mxu0
      %1230 = vmatprep.mubr.bf16.mxu0 %v509
      %1231 = vmatmul.mubr.bf16.gmra.mrb[0].mxu0 %v508
      %v1232 = vpop.f32.mrb[0].mxu0
      %v1233 = vadd.f32 %v1168, %v1232
      %v1234 = vpop.f32.mrb[0].mxu0
      %v1235 = vpop.f32.mrb[0].mxu0
      %v1236 = vadd.f32 %v1171, %v1235
      %v1237 = vpop.f32.mrb[0].mxu0
      %1238 = vdwg.mxu0
      %1239 = vmatprep.subr.bf16.mxu0 0
      %1240 = vmatpush1.bf16.msra.mxu0 %v899
      %1241 = vmatprep.subr.bf16.mxu0 0
      %1242 = vmatpush1.bf16.msra.mxu0 %v900
      %1243 = vmatprep.subr.bf16.mxu0 0
      %1244 = vmatpush1.bf16.msra.mxu0 %v901
      %1245 = vmatprep.subr.bf16.mxu0 0
      %1246 = vmatpush1.bf16.msra.mxu0 %v902
      %1247 = vmatprep.subr.bf16.mxu0 0
      %1248 = vmatpush1.bf16.msra.mxu0 %v903
      %1249 = vmatprep.subr.bf16.mxu0 0
      %1250 = vmatpush1.bf16.msra.mxu0 %v904
      %1251 = vmatprep.subr.bf16.mxu0 0
      %1252 = vmatpush1.bf16.msra.mxu0 %v905
      %1253 = vmatprep.subr.bf16.mxu0 0
      %1254 = vmatpush1.bf16.msra.mxu0 %v906
      %1255 = vmatprep.subr.bf16.mxu0 0
      %1256 = vmatpush1.bf16.msra.mxu0 0
      %1257 = vmatprep.subr.bf16.mxu0 0
      %1258 = vmatpush1.bf16.msra.mxu0 0
      %1259 = vmatprep.subr.bf16.mxu0 0
      %1260 = vmatpush1.bf16.msra.mxu0 0
      %1261 = vmatprep.subr.bf16.mxu0 0
      %1262 = vmatpush1.bf16.msra.mxu0 0
      %1263 = vmatprep.subr.bf16.mxu0 0
      %1264 = vmatpush1.bf16.msra.mxu0 0
      %1265 = vmatprep.subr.bf16.mxu0 0
      %1266 = vmatpush1.bf16.msra.mxu0 0
      %1267 = vmatprep.subr.bf16.mxu0 0
      %1268 = vmatpush1.bf16.msra.mxu0 0
      %1269 = vmatprep.subr.bf16.mxu0 0
      %1270 = vmatpush1.bf16.msra.mxu0 0
      %1271 = vmatprep.mubr.bf16.mxu0 0
      %1272 = vmatmul.mubr.bf16.gmra.mrb[0].mxu0 %v483
      %v1273 = vpop.f32.mrb[0].mxu0
      %v1274 = vadd.f32 %v1209, %v1273
      %v1275 = vpop.f32.mrb[0].mxu0
      %v1276 = vpop.f32.mrb[0].mxu0
      %v1277 = vadd.f32 %v1212, %v1276
      %v1278 = vpop.f32.mrb[0].mxu0
      %1279 = vmatprep.mubr.bf16.mxu0 0
      %1280 = vmatmul.mubr.bf16.gmra.mrb[0].mxu0 %v492
      %v1281 = vpop.f32.mrb[0].mxu0
      %v1282 = vadd.f32 %v1217, %v1281
      %v1283 = vpop.f32.mrb[0].mxu0
      %v1284 = vpop.f32.mrb[0].mxu0
      %v1285 = vadd.f32 %v1220, %v1284
      %v1286 = vpop.f32.mrb[0].mxu0
      %1287 = vmatprep.mubr.bf16.mxu0 0
      %1288 = vmatmul.mubr.bf16.gmra.mrb[0].mxu0 %v501
      %v1289 = vpop.f32.mrb[0].mxu0
      %v1290 = vadd.f32 %v1225, %v1289
      %v1291 = vpop.f32.mrb[0].mxu0
      %v1292 = vpop.f32.mrb[0].mxu0
      %v1293 = vadd.f32 %v1228, %v1292
      %v1294 = vpop.f32.mrb[0].mxu0
      %1295 = vmatprep.mubr.bf16.mxu0 0
      %1296 = vmatmul.mubr.bf16.gmra.mrb[0].mxu0 %v510
      %v1297 = vpop.f32.mrb[0].mxu0
      %v1298 = vadd.f32 %v1233, %v1297
      %v1299 = vpop.f32.mrb[0].mxu0
      %v1300 = vpop.f32.mrb[0].mxu0
      %v1301 = vadd.f32 %v1236, %v1300
      %v1302 = vpop.f32.mrb[0].mxu0
      %1303 = vdwg.mxu0
      %vm1304 = vcmp.gt.f32.partialorder %v1274, 0.0
      %vm1305 = vcmp.gt.f32.partialorder %v1277, 0.0
      %vm1306 = vcmp.gt.f32.partialorder %v1282, 0.0
      %vm1307 = vcmp.gt.f32.partialorder %v1285, 0.0
      %vm1308 = vcmp.gt.f32.partialorder %v1290, 0.0
      %vm1309 = vcmp.gt.f32.partialorder %v1293, 0.0
      %vm1310 = vcmp.gt.f32.partialorder %v1298, 0.0
      %vm1311 = vcmp.gt.f32.partialorder %v1301, 0.0
      %v1312 = vmul.f32 %v1274, 0.2
      %v1313 = vmul.f32 %v1277, 0.2
      %v1314 = vmul.f32 %v1282, 0.2
      %v1315 = vmul.f32 %v1285, 0.2
      %v1316 = vmul.f32 %v1290, 0.2
      %v1317 = vmul.f32 %v1293, 0.2
      %v1318 = vmul.f32 %v1298, 0.2
      %v1319 = vmul.f32 %v1301, 0.2
      %v1320 = vsel %vm1304, %v1274, %v1312
      %v1321 = vsel %vm1305, %v1277, %v1313
      %v1322 = vsel %vm1306, %v1282, %v1314
      %v1323 = vsel %vm1307, %v1285, %v1315
      %v1324 = vsel %vm1308, %v1290, %v1316
      %v1325 = vsel %vm1309, %v1293, %v1317
      %v1326 = vsel %vm1310, %v1298, %v1318
      %v1327 = vsel %vm1311, %v1301, %v1319
      %v1328 = vadd.f32 %v1320, %v1321
      %v1329 = vadd.f32 %v1328, %v1322
      %v1330 = vadd.f32 %v1329, %v1323
      %v1331 = vadd.f32 %v1330, %v1324
      %v1332 = vadd.f32 %v1331, %v1325
      %v1333 = vadd.f32 %v1332, %v1326
      %v1334 = vadd.f32 %v1333, %v1327
      %v1335 = vrot.slane %v1334, 4
      %v1336 = vadd.f32 %v1334, %v1335
      %v1337 = vrot.slane %v1336, 2
      %v1338 = vadd.f32 %v1336, %v1337
      %v1339 = vrot.slane %v1338, 1
      %v1340 = vadd.f32 %v1338, %v1339
      %v1341 = vrcp.pop 64.0
      %v1342 = vmul.f32 %v1340, %v1341
      %v1343 = vsub.f32 %v1320, %v1342
      %v1344 = vsub.f32 %v1321, %v1342
      %v1345 = vsub.f32 %v1322, %v1342
      %v1346 = vsub.f32 %v1323, %v1342
      %v1347 = vsub.f32 %v1324, %v1342
      %v1348 = vsub.f32 %v1325, %v1342
      %v1349 = vsub.f32 %v1326, %v1342
      %v1350 = vsub.f32 %v1327, %v1342
      %v1351 = vmul.f32 %v1343, %v1343
      %v1352 = vmul.f32 %v1344, %v1344
      %v1353 = vmul.f32 %v1345, %v1345
      %v1354 = vmul.f32 %v1346, %v1346
      %v1355 = vmul.f32 %v1347, %v1347
      %v1356 = vmul.f32 %v1348, %v1348
      %v1357 = vmul.f32 %v1349, %v1349
      %v1358 = vmul.f32 %v1350, %v1350
      %v1359 = vadd.f32 %v1351, %v1352
      %v1360 = vadd.f32 %v1359, %v1353
      %v1361 = vadd.f32 %v1360, %v1354
      %v1362 = vadd.f32 %v1361, %v1355
      %v1363 = vadd.f32 %v1362, %v1356
      %v1364 = vadd.f32 %v1363, %v1357
      %v1365 = vadd.f32 %v1364, %v1358
      %v1366 = vrot.slane %v1365, 4
      %v1367 = vadd.f32 %v1365, %v1366
      %v1368 = vrot.slane %v1367, 2
      %v1369 = vadd.f32 %v1367, %v1368
      %v1370 = vrot.slane %v1369, 1
      %v1371 = vadd.f32 %v1369, %v1370
      %v1372 = vmul.f32 %v1371, %v1341
      %v1373 = vadd.f32 %v1372, 1e-05
      %v1374 = vrsqrt.pop %v1373
      %v1375 = vmul.f32 %v1343, %v1374
      %v1376 = vmul.f32 %v1344, %v1374
      %v1377 = vmul.f32 %v1345, %v1374
      %v1378 = vmul.f32 %v1346, %v1374
      %v1379 = vmul.f32 %v1347, %v1374
      %v1380 = vmul.f32 %v1348, %v1374
      %v1381 = vmul.f32 %v1349, %v1374
      %v1382 = vmul.f32 %v1350, %v1374
      %1383 = vst [vmem:[%s170] sm:$0xff] %v1375
      %1384 = vst [vmem:[%s170 + $0x8] sm:$0xff] %v1376
      %1385 = vst [vmem:[%s170 + $0x10] sm:$0xff] %v1377
      %1386 = vst [vmem:[%s170 + $0x18] sm:$0xff] %v1378
      %1387 = vst [vmem:[%s170 + $0x20] sm:$0xff] %v1379
      %1388 = vst [vmem:[%s170 + $0x28] sm:$0xff] %v1380
      %1389 = vst [vmem:[%s170 + $0x30] sm:$0xff] %v1381
      %1390 = vst [vmem:[%s170 + $0x38] sm:$0xff] %v1382
      %p1391 = scmp.lt.s32.totalorder %s14, 1
      %s1392 = scalar_select %p1391, %s14, 1
      %s1393 = smul.addr %s1392, 8
      %s1394 = smul.addr %s1393, 8
      %s1395 = scalar_lea.vmem %s3, %s1394
      // Predicated region
      $region33: #{classifier_forward.6} parent=31 // pred_check
        %p1396 = pneg %p100
      $region34: #{classifier_forward.6} parent=31 // pred_check_branch
        %1398 = sbr.rel (%p1396) target = $region36
      $region35: #{classifier_forward.6} parent=31 // pred_region
        _
      $region36: #{classifier_forward.6} parent=31 // pred_fallthru
        _
    $region32: #{classifier_forward.6} parent=5 // pred_fallthru
      _
    %p1399 = scmp.le.s32.totalorder 2, %s9
    // Predicated region
    $region37: #{classifier_forward.6} parent=5 // pred_check
      %p1400 = pneg %p1399
    $region38: #{classifier_forward.6} parent=5 // pred_check_branch
      %1402 = sbr.rel (%p1400) target = $region40
    $region39: #{classifier_forward.6} parent=5 // pred_region
      %s1403 = ssub.s32 %s9, 2
      // Predicated region
      $region41: #{classifier_forward.6} parent=39 // pred_check
        %p1404 = pneg %p106
      $region42: #{classifier_forward.6} parent=39 // pred_check_branch
        %1406 = sbr.rel (%p1404) target = $region44
      $region43: #{classifier_forward.6} parent=39 // pred_region
        %p1407 = scmp.lt.s32.totalorder %s15, 1
        %s1408 = scalar_select %p1407, %s15, 1
        %s1409 = smul.addr %s1408, 8
        %s1410 = smul.addr %s1409, 8
        %s1411 = scalar_lea.vmem %s3, %s1410
      $region44: #{classifier_forward.6} parent=39 // pred_fallthru
        _
    $region40: #{classifier_forward.6} parent=5 // pred_fallthru
      _
  $region6: #{classifier_forward.6} parent=0 // loop_footer
    %s13 = sadd.s32 1, %s9
  $region7: #{classifier_forward.6} parent=0 // loop_footer_branch
    %8 = sbr.rel target = $region3
  $region8: #{classifier_forward.6} parent=0 // loop_exit
    _

// kernel: classifier_forward.7
$region0: #{classifier_forward.7}
  #allocation0 [shape = 'u32[]', space=smem, size = 0x4, offset = 0x4, fixed_abs, tag = 'smem constant byte address 0x4 - core index']
  #allocation1 [shape = 'u32[144,128]{1,0:T(1,128)}', space=vmem, size = 0x12000, scoped, tag = 'internal scratch']
  %s0 = inlined_call_operand.vmem [shape: bf16[2,16,1152], index: 0, kind: input, shape index: {}]
  %s1 = inlined_call_operand.vmem [shape: bf16[1152,256], index: 1, kind: input, shape index: {}]
  %s2 = inlined_call_operand.vmem [shape: f32[1,256], index: 2, kind: input, shape index: {}]
  %s3 = inlined_call_operand.vmem [shape: f32[2,16,256], index: 3, kind: output, shape index: {}]
  %s4 = sld [smem:[#allocation0]]
  $region45: #{classifier_forward.7} parent=0
    _
  %s6 = ssub.s32 1, %s4
  %s7 = scalar_select 0, %s6, %s4
  loop: start=0, step=1, limit=4
  $region2: #{classifier_forward.7} parent=0 // loop_pre_header
    _
  $region3: #{classifier_forward.7} parent=0 // loop_header
    %s9 = sphi 0, %s13
    %p10 = scmp.ge.s32.totalorder %s9, 4
    %s19 = sphi 0, %s21
    %s22 = sphi 0, %s19
    %s23 = sphi 0, %s22
    %s39 = sphi 0, %s23
    %s43 = sphi 0, %s43
    %s45 = sphi 0, %s43
    %s46 = sphi 0, %s45
    %s60 = sphi 0, %s46
    %s64 = sphi 0, %s64
    %s66 = sphi 0, %s64
    %s67 = sphi 0, %s66
    %s81 = sphi 0, %s67
    %s87 = sphi 0, %s89
    %s90 = sphi 0, %s87
    %s91 = sphi 0, %s90
    %s107 = sphi 0, %s91
  $region4: #{classifier_forward.7} parent=0 // loop_header_branch
    %12 = sbr.rel (%p10) target = $region8
  $region5: #{classifier_forward.7} parent=0 // loop_body
    %s14 = ssub.s32 %s9, 1
    %s15 = ssub.s32 %s9, 2
    %s16 = sadd.s32 %s9, 1
    %s17 = ssub.s32 %s9, %s16
    %p18 = scmp.eq.s32.totalorder %s17, 0
    %s20 = sadd.s32 %s19, 1
    %s21 = scalar_select %p18, %s19, %s20
    %p24 = pneg %p18
    %p25 = scmp.eq.s32.totalorder %s9, 1
    %p26 = por %p24, %p25
    %p27 = scmp.ne.s32.totalorder %s19, %s22
    %p28 = scmp.eq.s32.totalorder %s9, 0
    %p29 = por %p27, %p28
    %p30 = scmp.ne.s32.totalorder %s19, %s22
    %p31 = scmp.eq.s32.totalorder %s14, 1
    %p32 = por %p30, %p31
    %p33 = scmp.ne.s32.totalorder %s22, %s23
    %p34 = scmp.eq.s32.totalorder %s14, 0
    %p35 = por %p33, %p34
    %p36 = scmp.ne.s32.totalorder %s22, %s23
    %p37 = scmp.eq.s32.totalorder %s15, 1
    %p38 = por %p36, %p37
    %p40 = scmp.ne.s32.totalorder %s23, %s39
    %p41 = scmp.eq.s32.totalorder %s15, 0
    %p42 = por %p40, %p41
    %s44 = sadd.s32 %s43, 1
    %p47 = scmp.eq.s32.totalorder %s9, 1
    %p48 = scmp.ne.s32.totalorder %s43, %s45
    %p49 = scmp.eq.s32.totalorder %s9, 0
    %p50 = por %p48, %p49
    %p51 = scmp.ne.s32.totalorder %s43, %s45
    %p52 = scmp.eq.s32.totalorder %s14, 1
    %p53 = por %p51, %p52
    %p54 = scmp.ne.s32.totalorder %s45, %s46
    %p55 = scmp.eq.s32.totalorder %s14, 0
    %p56 = por %p54, %p55
    %p57 = scmp.ne.s32.totalorder %s45, %s46
    %p58 = scmp.eq.s32.totalorder %s15, 1
    %p59 = por %p57, %p58
    %p61 = scmp.ne.s32.totalorder %s46, %s60
    %p62 = scmp.eq.s32.totalorder %s15, 0
    %p63 = por %p61, %p62
    %s65 = sadd.s32 %s64, 1
    %p68 = scmp.eq.s32.totalorder %s9, 1
    %p69 = scmp.ne.s32.totalorder %s64, %s66
    %p70 = scmp.eq.s32.totalorder %s9, 0
    %p71 = por %p69, %p70
    %p72 = scmp.ne.s32.totalorder %s64, %s66
    %p73 = scmp.eq.s32.totalorder %s14, 1
    %p74 = por %p72, %p73
    %p75 = scmp.ne.s32.totalorder %s66, %s67
    %p76 = scmp.eq.s32.totalorder %s14, 0
    %p77 = por %p75, %p76
    %p78 = scmp.ne.s32.totalorder %s66, %s67
    %p79 = scmp.eq.s32.totalorder %s15, 1
    %p80 = por %p78, %p79
    %p82 = scmp.ne.s32.totalorder %s67, %s81
    %p83 = scmp.eq.s32.totalorder %s15, 0
    %p84 = por %p82, %p83
    %s85 = ssub.s32 %s9, %s16
    %p86 = scmp.eq.s32.totalorder %s85, 0
    %s88 = sadd.s32 %s87, 1
    %s89 = scalar_select %p86, %s87, %s88
    %p92 = pneg %p86
    %p93 = scmp.eq.s32.totalorder %s9, 1
    %p94 = por %p92, %p93
    %p95 = scmp.ne.s32.totalorder %s87, %s90
    %p96 = scmp.eq.s32.totalorder %s9, 0
    %p97 = por %p95, %p96
    %p98 = scmp.ne.s32.totalorder %s87, %s90
    %p99 = scmp.eq.s32.totalorder %s14, 1
    %p100 = por %p98, %p99
    %p101 = scmp.ne.s32.totalorder %s90, %s91
    %p102 = scmp.eq.s32.totalorder %s14, 0
    %p103 = por %p101, %p102
    %p104 = scmp.ne.s32.totalorder %s90, %s91
    %p105 = scmp.eq.s32.totalorder %s15, 1
    %p106 = por %p104, %p105
    %p108 = scmp.ne.s32.totalorder %s91, %s107
    %p109 = scmp.eq.s32.totalorder %s15, 0
    %p110 = por %p108, %p109
    %p111 = scmp.le.s32.totalorder 1, %s9
    %p112 = scmp.lt.s32.totalorder %s9, 3
    %p113 = pnand %p111, %p112
    %p114 = pneg %p113
    // Predicated region
    $region9: #{classifier_forward.7} parent=5 // pred_check
      _
    $region10: #{classifier_forward.7} parent=5 // pred_check_branch
      %116 = sbr.rel (%p113) target = $region12
    $region11: #{classifier_forward.7} parent=5 // pred_region
      %s117 = ssub.s32 %s9, 1
      // Predicated region
      $region13: #{classifier_forward.7} parent=11 // pred_check
        %p118 = pneg %p56
      $region14: #{classifier_forward.7} parent=11 // pred_check_branch
        %120 = sbr.rel (%p118) target = $region16
      $region15: #{classifier_forward.7} parent=11 // pred_region
        _
      $region16: #{classifier_forward.7} parent=11 // pred_fallthru
        _
      // Predicated region
      $region17: #{classifier_forward.7} parent=11 // pred_check
        %p121 = pneg %p77
      $region18: #{classifier_forward.7} parent=11 // pred_check_branch
        %123 = sbr.rel (%p121) target = $region20
      $region19: #{classifier_forward.7} parent=11 // pred_region
        _
      $region20: #{classifier_forward.7} parent=11 // pred_fallthru
        _
    $region12: #{classifier_forward.7} parent=5 // pred_fallthru
      _
    %p124 = scmp.lt.s32.totalorder %s9, 2
    // Predicated region
    $region21: #{classifier_forward.7} parent=5 // pred_check
      %p125 = pneg %p124
    $region22: #{classifier_forward.7} parent=5 // pred_check_branch
      %127 = sbr.rel (%p125) target = $region24
    $region23: #{classifier_forward.7} parent=5 // pred_region
      // Predicated region
      $region25: #{classifier_forward.7} parent=23 // pred_check
        %p128 = pneg %p29
      $region26: #{classifier_forward.7} parent=23 // pred_check_branch
        %130 = sbr.rel (%p128) target = $region28
      $region27: #{classifier_forward.7} parent=23 // pred_region
        %p131 = scmp.lt.s32.totalorder %s9, 1
        %s132 = scalar_select %p131, %s9, 1
        %s133 = smul.addr %s132, 18
        %s134 = smul.addr %s133, 4
        %s135 = scalar_lea.vmem %s0, %s134
      $region28: #{classifier_forward.7} parent=23 // pred_fallthru
        _
    $region24: #{classifier_forward.7} parent=5 // pred_fallthru
      _
    %p136 = scmp.le.s32.totalorder 1, %s9
    %p137 = scmp.lt.s32.totalorder %s9, 3
    %p138 = pnand %p136, %p137
    %p139 = pneg %p138
    // Predicated region
    $region29: #{classifier_forward.7} parent=5 // pred_check
      _
    $region30: #{classifier_forward.7} parent=5 // pred_check_branch
      %141 = sbr.rel (%p138) target = $region32
    $region31: #{classifier_forward.7} parent=5 // pred_region
      %s142 = ssub.s32 %s9, 1
      %p143 = scmp.lt.s32.totalorder %s14, 1
      %s144 = scalar_select %p143, %s14, 1
      %s145 = smul.addr %s144, 18
      %s146 = smul.addr %s145, 4
      %s147 = scalar_lea.vmem %s0, %s146
      %p148 = pneg %p35
      %p149 = pneg %p32
      %p150 = pneg %p56
      %p151 = pneg %p53
      %p152 = pneg %p77
      %p153 = pneg %p74
      %p154 = pneg %p103
      %p155 = pneg %p100
      %p156 = scmp.lt.s32.totalorder %s14, 1
      %s157 = scalar_select %p156, %s14, 1
      %s158 = smul.addr %s157, 4
      %s159 = smul.addr %s158, 8
      %s160 = scalar_lea.vmem %s3, %s159
      %p161 = scmp.lt.s32.totalorder %s14, 1
      %s162 = scalar_select %p161, %s14, 1
      %s163 = smul.addr %s162, 18
      %s164 = smul.addr %s163, 4
      %s165 = scalar_lea.vmem %s0, %s164
      %p166 = scmp.lt.s32.totalorder %s14, 1
      %s167 = scalar_select %p166, %s14, 1
      %s168 = smul.addr %s167, 4
      %s169 = smul.addr %s168, 8
      %s170 = scalar_lea.vmem %s3, %s169
      %v172 = vld [vmem:[%s165] sm:$0xff]
      %v173 = vld [vmem:[%s165 + $0x8] sm:$0xff]
      %v174 = vld [vmem:[%s165 + $0x10] sm:$0xff]
      %v175 = vld [vmem:[%s165 + $0x18] sm:$0xff]
      %v176 = vld [vmem:[%s165 + $0x20] sm:$0xf]
      %v177 = vld [vmem:[%s165 + $0x24] sm:$0xff]
      %v178 = vld [vmem:[%s165 + $0x2c] sm:$0xff]
      %v179 = vld [vmem:[%s165 + $0x34] sm:$0xff]
      %v180 = vld [vmem:[%s165 + $0x3c] sm:$0xff]
      %v181 = vld [vmem:[%s165 + $0x44] sm:$0xf]
      %v182 = vld [vmem:[%s1] sm:$0xff]
      %v183 = vld [vmem:[%s1 + $0x8] sm:$0xff]
      %v184 = vld [vmem:[%s1 + $0x10] sm:$0xff]
      %v185 = vld [vmem:[%s1 + $0x18] sm:$0xff]
      %v186 = vld [vmem:[%s1 + $0x20] sm:$0xff]
      %v187 = vld [vmem:[%s1 + $0x28] sm:$0xff]
      %v188 = vld [vmem:[%s1 + $0x30] sm:$0xff]
      %v189 = vld [vmem:[%s1 + $0x38] sm:$0xff]
      %v190 = vld [vmem:[%s1 + $0x40] sm:$0xff]
      %v191 = vld [vmem:[%s1 + $0x48] sm:$0xff]
      %v192 = vld [vmem:[%s1 + $0x50] sm:$0xff]
      %v193 = vld [vmem:[%s1 + $0x58] sm:$0xff]
      %v194 = vld [vmem:[%s1 + $0x60] sm:$0xff]
      %v195 = vld [vmem:[%s1 + $0x68] sm:$0xff]
      %v196 = vld [vmem:[%s1 + $0x70] sm:$0xff]
      %v197 = vld [vmem:[%s1 + $0x78] sm:$0xff]
      %v198 = vld [vmem:[%s1 + $0x80] sm:$0xff]
      %v199 = vld [vmem:[%s1 + $0x88] sm:$0xff]
      %v200 = vld [vmem:[%s1 + $0x90] sm:$0xff]
      %v201 = vld [vmem:[%s1 + $0x98] sm:$0xff]
      %v202 = vld [vmem:[%s1 + $0xa0] sm:$0xff]
      %v203 = vld [vmem:[%s1 + $0xa8] sm:$0xff]
      %v204 = vld [vmem:[%s1 + $0xb0] sm:$0xff]
      %v205 = vld [vmem:[%s1 + $0xb8] sm:$0xff]
      %v206 = vld [vmem:[%s1 + $0xc0] sm:$0xff]
      %v207 = vld [vmem:[%s1 + $0xc8] sm:$0xff]
      %v208 = vld [vmem:[%s1 + $0xd0] sm:$0xff]
      %v209 = vld [vmem:[%s1 + $0xd8] sm:$0xff]
      %v210 = vld [vmem:[%s1 + $0xe0] sm:$0xff]
      %v211 = vld [vmem:[%s1 + $0xe8] sm:$0xff]
      %v212 = vld [vmem:[%s1 + $0xf0] sm:$0xff]
      %v213 = vld [vmem:[%s1 + $0xf8] sm:$0xff]
      %v214 = vld [vmem:[%s1 + $0x100] sm:$0xff]
      %v215 = vld [vmem:[%s1 + $0x108] sm:$0xff]
      %v216 = vld [vmem:[%s1 + $0x110] sm:$0xff]
      %v217 = vld [vmem:[%s1 + $0x118] sm:$0xff]
      %v218 = vld [vmem:[%s1 + $0x120] sm:$0xff]
      %v219 = vld [vmem:[%s1 + $0x128] sm:$0xff]
      %v220 = vld [vmem:[%s1 + $0x130] sm:$0xff]
      %v221 = vld [vmem:[%s1 + $0x138] sm:$0xff]
      %v222 = vld [vmem:[%s1 + $0x140] sm:$0xff]
      %v223 = vld [vmem:[%s1 + $0x148] sm:$0xff]
      %v224 = vld [vmem:[%s1 + $0x150] sm:$0xff]
      %v225 = vld [vmem:[%s1 + $0x158] sm:$0xff]
      %v226 = vld [vmem:[%s1 + $0x160] sm:$0xff]
      %v227 = vld [vmem:[%s1 + $0x168] sm:$0xff]
      %v228 = vld [vmem:[%s1 + $0x170] sm:$0xff]
      %v229 = vld [vmem:[%s1 + $0x178] sm:$0xff]
      %v230 = vld [vmem:[%s1 + $0x180] sm:$0xff]
      %v231 = vld [vmem:[%s1 + $0x188] sm:$0xff]
      %v232 = vld [vmem:[%s1 + $0x190] sm:$0xff]
      %v233 = vld [vmem:[%s1 + $0x198] sm:$0xff]
      %v234 = vld [vmem:[%s1 + $0x1a0] sm:$0xff]
      %v235 = vld [vmem:[%s1 + $0x1a8] sm:$0xff]
      %v236 = vld [vmem:[%s1 + $0x1b0] sm:$0xff]
      %v237 = vld [vmem:[%s1 + $0x1b8] sm:$0xff]
      %v238 = vld [vmem:[%s1 + $0x1c0] sm:$0xff]
      %v239 = vld [vmem:[%s1 + $0x1c8] sm:$0xff]
      %v240 = vld [vmem:[%s1 + $0x1d0] sm:$0xff]
      %v241 = vld [vmem:[%s1 + $0x1d8] sm:$0xff]
      %v242 = vld [vmem:[%s1 + $0x1e0] sm:$0xff]
      %v243 = vld [vmem:[%s1 + $0x1e8] sm:$0xff]
      %v244 = vld [vmem:[%s1 + $0x1f0] sm:$0xff]
      %v245 = vld [vmem:[%s1 + $0x1f8] sm:$0xff]
      %v246 = vld [vmem:[%s1 + $0x200] sm:$0xff]
      %v247 = vld [vmem:[%s1 + $0x208] sm:$0xff]
      %v248 = vld [vmem:[%s1 + $0x210] sm:$0xff]
      %v249 = vld [vmem:[%s1 + $0x218] sm:$0xff]
      %v250 = vld [vmem:[%s1 + $0x220] sm:$0xff]
      %v251 = vld [vmem:[%s1 + $0x228] sm:$0xff]
      %v252 = vld [vmem:[%s1 + $0x230] sm:$0xff]
      %v253 = vld [vmem:[%s1 + $0x238] sm:$0xff]
      %v254 = vld [vmem:[%s1 + $0x240] sm:$0xff]
      %v255 = vld [vmem:[%s1 + $0x248] sm:$0xff]
      %v256 = vld [vmem:[%s1 + $0x250] sm:$0xff]
      %v257 = vld [vmem:[%s1 + $0x258] sm:$0xff]
      %v258 = vld [vmem:[%s1 + $0x260] sm:$0xff]
      %v259 = vld [vmem:[%s1 + $0x268] sm:$0xff]
      %v260 = vld [vmem:[%s1 + $0x270] sm:$0xff]
      %v261 = vld [vmem:[%s1 + $0x278] sm:$0xff]
      %v262 = vld [vmem:[%s1 + $0x280] sm:$0xff]
      %v263 = vld [vmem:[%s1 + $0x288] sm:$0xff]
      %v264 = vld [vmem:[%s1 + $0x290] sm:$0xff]
      %v265 = vld [vmem:[%s1 + $0x298] sm:$0xff]
      %v266 = vld [vmem:[%s1 + $0x2a0] sm:$0xff]
      %v267 = vld [vmem:[%s1 + $0x2a8] sm:$0xff]
      %v268 = vld [vmem:[%s1 + $0x2b0] sm:$0xff]
      %v269 = vld [vmem:[%s1 + $0x2b8] sm:$0xff]
      %v270 = vld [vmem:[%s1 + $0x2c0] sm:$0xff]
      %v271 = vld [vmem:[%s1 + $0x2c8] sm:$0xff]
      %v272 = vld [vmem:[%s1 + $0x2d0] sm:$0xff]
      %v273 = vld [vmem:[%s1 + $0x2d8] sm:$0xff]
      %v274 = vld [vmem:[%s1 + $0x2e0] sm:$0xff]
      %v275 = vld [vmem:[%s1 + $0x2e8] sm:$0xff]
      %v276 = vld [vmem:[%s1 + $0x2f0] sm:$0xff]
      %v277 = vld [vmem:[%s1 + $0x2f8] sm:$0xff]
      %v278 = vld [vmem:[%s1 + $0x300] sm:$0xff]
      %v279 = vld [vmem:[%s1 + $0x308] sm:$0xff]
      %v280 = vld [vmem:[%s1 + $0x310] sm:$0xff]
      %v281 = vld [vmem:[%s1 + $0x318] sm:$0xff]
      %v282 = vld [vmem:[%s1 + $0x320] sm:$0xff]
      %v283 = vld [vmem:[%s1 + $0x328] sm:$0xff]
      %v284 = vld [vmem:[%s1 + $0x330] sm:$0xff]
      %v285 = vld [vmem:[%s1 + $0x338] sm:$0xff]
      %v286 = vld [vmem:[%s1 + $0x340] sm:$0xff]
      %v287 = vld [vmem:[%s1 + $0x348] sm:$0xff]
      %v288 = vld [vmem:[%s1 + $0x350] sm:$0xff]
      %v289 = vld [vmem:[%s1 + $0x358] sm:$0xff]
      %v290 = vld [vmem:[%s1 + $0x360] sm:$0xff]
      %v291 = vld [vmem:[%s1 + $0x368] sm:$0xff]
      %v292 = vld [vmem:[%s1 + $0x370] sm:$0xff]
      %v293 = vld [vmem:[%s1 + $0x378] sm:$0xff]
      %v294 = vld [vmem:[%s1 + $0x380] sm:$0xff]
      %v295 = vld [vmem:[%s1 + $0x388] sm:$0xff]
      %v296 = vld [vmem:[%s1 + $0x390] sm:$0xff]
      %v297 = vld [vmem:[%s1 + $0x398] sm:$0xff]
      %v298 = vld [vmem:[%s1 + $0x3a0] sm:$0xff]
      %v299 = vld [vmem:[%s1 + $0x3a8] sm:$0xff]
      %v300 = vld [vmem:[%s1 + $0x3b0] sm:$0xff]
      %v301 = vld [vmem:[%s1 + $0x3b8] sm:$0xff]
      %v302 = vld [vmem:[%s1 + $0x3c0] sm:$0xff]
      %v303 = vld [vmem:[%s1 + $0x3c8] sm:$0xff]
      %v304 = vld [vmem:[%s1 + $0x3d0] sm:$0xff]
      %v305 = vld [vmem:[%s1 + $0x3d8] sm:$0xff]
      %v306 = vld [vmem:[%s1 + $0x3e0] sm:$0xff]
      %v307 = vld [vmem:[%s1 + $0x3e8] sm:$0xff]
      %v308 = vld [vmem:[%s1 + $0x3f0] sm:$0xff]
      %v309 = vld [vmem:[%s1 + $0x3f8] sm:$0xff]
      %v310 = vld [vmem:[%s1 + $0x400] sm:$0xff]
      %v311 = vld [vmem:[%s1 + $0x408] sm:$0xff]
      %v312 = vld [vmem:[%s1 + $0x410] sm:$0xff]
      %v313 = vld [vmem:[%s1 + $0x418] sm:$0xff]
      %v314 = vld [vmem:[%s1 + $0x420] sm:$0xff]
      %v315 = vld [vmem:[%s1 + $0x428] sm:$0xff]
      %v316 = vld [vmem:[%s1 + $0x430] sm:$0xff]
      %v317 = vld [vmem:[%s1 + $0x438] sm:$0xff]
      %v318 = vld [vmem:[%s1 + $0x440] sm:$0xff]
      %v319 = vld [vmem:[%s1 + $0x448] sm:$0xff]
      %v320 = vld [vmem:[%s1 + $0x450] sm:$0xff]
      %v321 = vld [vmem:[%s1 + $0x458] sm:$0xff]
      %v322 = vld [vmem:[%s1 + $0x460] sm:$0xff]
      %v323 = vld [vmem:[%s1 + $0x468] sm:$0xff]
      %v324 = vld [vmem:[%s1 + $0x470] sm:$0xff]
      %v325 = vld [vmem:[%s1 + $0x478] sm:$0xff]
      %v326 = vld [vmem:[%s2] sm:$0x3]
      %v328 = vlaneseq
      %v329 = vshrl.u32 %v328, 7
      %v330 = vsub.s32 0, %v329
      %v331 = vrot.slane %v326, %v330
      %v332 = vlaneseq
      %v333 = vshrl.u32 %v332, 7
      %v334 = vsub.s32 1, %v333
      %v335 = vrot.slane %v326, %v334
      %v348 = vunpack.c.l.b16 %v172
      %v349 = vunpack.c.h.b16 %v172
      %v350 = vunpack.c.l.b16 %v173
      %v351 = vunpack.c.h.b16 %v173
      %v352 = vunpack.c.l.b16 %v174
      %v353 = vunpack.c.h.b16 %v174
      %v354 = vunpack.c.l.b16 %v175
      %v355 = vunpack.c.h.b16 %v175
      %v356 = vunpack.c.l.b16 %v176
      %v357 = vunpack.c.l.b16 %v177
      %v358 = vunpack.c.h.b16 %v177
      %v359 = vunpack.c.l.b16 %v178
      %v360 = vunpack.c.h.b16 %v178
      %v361 = vunpack.c.l.b16 %v179
      %v362 = vunpack.c.h.b16 %v179
      %v363 = vunpack.c.l.b16 %v180
      %v364 = vunpack.c.h.b16 %v180
      %v365 = vunpack.c.l.b16 %v181
      %v366 = vpack.c.b16 %v357, %v348
      %v367 = vpack.c.b16 %v358, %v349
      %v368 = vpack.c.b16 %v359, %v350
      %v369 = vpack.c.b16 %v360, %v351
      %v370 = vpack.c.b16 %v361, %v352
      %v371 = vpack.c.b16 %v362, %v353
      %v372 = vpack.c.b16 %v363, %v354
      %v373 = vpack.c.b16 %v364, %v355
      %v374 = vpack.c.b16 %v365, %v356
      %v528 = vunpack.c.l.b16 %v182
      %v529 = vunpack.c.h.b16 %v182
      %v530 = vunpack.c.l.b16 %v183
      %v531 = vunpack.c.h.b16 %v183
      %v532 = vunpack.c.l.b16 %v184
      %v533 = vunpack.c.h.b16 %v184
      %v534 = vunpack.c.l.b16 %v185
      %v535 = vunpack.c.h.b16 %v185
      %v536 = vunpack.c.l.b16 %v186
      %v537 = vunpack.c.h.b16 %v186
      %v538 = vunpack.c.l.b16 %v187
      %v539 = vunpack.c.h.b16 %v187
      %v540 = vunpack.c.l.b16 %v188
      %v541 = vunpack.c.h.b16 %v188
      %v542 = vunpack.c.l.b16 %v189
      %v543 = vunpack.c.h.b16 %v189
      %v544 = vunpack.c.l.b16 %v190
      %v545 = vunpack.c.h.b16 %v190
      %v546 = vunpack.c.l.b16 %v191
      %v547 = vunpack.c.h.b16 %v191
      %v548 = vunpack.c.l.b16 %v192
      %v549 = vunpack.c.h.b16 %v192
      %v550 = vunpack.c.l.b16 %v193
      %v551 = vunpack.c.h.b16 %v193
      %v552 = vunpack.c.l.b16 %v194
      %v553 = vunpack.c.h.b16 %v194
      %v554 = vunpack.c.l.b16 %v195
      %v555 = vunpack.c.h.b16 %v195
      %v556 = vunpack.c.l.b16 %v196
      %v557 = vunpack.c.h.b16 %v196
      %v558 = vunpack.c.l.b16 %v197
      %v559 = vunpack.c.h.b16 %v197
      %v560 = vunpack.c.l.b16 %v198
      %v561 = vunpack.c.h.b16 %v198
      %v562 = vunpack.c.l.b16 %v199
      %v563 = vunpack.c.h.b16 %v199
      %v564 = vunpack.c.l.b16 %v200
      %v565 = vunpack.c.h.b16 %v200
      %v566 = vunpack.c.l.b16 %v201
      %v567 = vunpack.c.h.b16 %v201
      %v568 = vunpack.c.l.b16 %v202
      %v569 = vunpack.c.h.b16 %v202
      %v570 = vunpack.c.l.b16 %v203
      %v571 = vunpack.c.h.b16 %v203
      %v572 = vunpack.c.l.b16 %v204
      %v573 = vunpack.c.h.b16 %v204
      %v574 = vunpack.c.l.b16 %v205
      %v575 = vunpack.c.h.b16 %v205
      %v576 = vunpack.c.l.b16 %v206
      %v577 = vunpack.c.h.b16 %v206
      %v578 = vunpack.c.l.b16 %v207
      %v579 = vunpack.c.h.b16 %v207
      %v580 = vunpack.c.l.b16 %v208
      %v581 = vunpack.c.h.b16 %v208
      %v582 = vunpack.c.l.b16 %v209
      %v583 = vunpack.c.h.b16 %v209
      %v584 = vunpack.c.l.b16 %v210
      %v585 = vunpack.c.h.b16 %v210
      %v586 = vunpack.c.l.b16 %v211
      %v587 = vunpack.c.h.b16 %v211
      %v588 = vunpack.c.l.b16 %v212
      %v589 = vunpack.c.h.b16 %v212
      %v590 = vunpack.c.l.b16 %v213
      %v591 = vunpack.c.h.b16 %v213
      %v592 = vunpack.c.l.b16 %v214
      %v593 = vunpack.c.h.b16 %v214
      %v594 = vunpack.c.l.b16 %v215
      %v595 = vunpack.c.h.b16 %v215
      %v596 = vunpack.c.l.b16 %v216
      %v597 = vunpack.c.h.b16 %v216
      %v598 = vunpack.c.l.b16 %v217
      %v599 = vunpack.c.h.b16 %v217
      %v600 = vunpack.c.l.b16 %v218
      %v601 = vunpack.c.h.b16 %v218
      %v602 = vunpack.c.l.b16 %v219
      %v603 = vunpack.c.h.b16 %v219
      %v604 = vunpack.c.l.b16 %v220
      %v605 = vunpack.c.h.b16 %v220
      %v606 = vunpack.c.l.b16 %v221
      %v607 = vunpack.c.h.b16 %v221
      %v608 = vunpack.c.l.b16 %v222
      %v609 = vunpack.c.h.b16 %v222
      %v610 = vunpack.c.l.b16 %v223
      %v611 = vunpack.c.h.b16 %v223
      %v612 = vunpack.c.l.b16 %v224
      %v613 = vunpack.c.h.b16 %v224
      %v614 = vunpack.c.l.b16 %v225
      %v615 = vunpack.c.h.b16 %v225
      %v616 = vunpack.c.l.b16 %v226
      %v617 = vunpack.c.h.b16 %v226
      %v618 = vunpack.c.l.b16 %v227
      %v619 = vunpack.c.h.b16 %v227
      %v620 = vunpack.c.l.b16 %v228
      %v621 = vunpack.c.h.b16 %v228
      %v622 = vunpack.c.l.b16 %v229
      %v623 = vunpack.c.h.b16 %v229
      %v624 = vunpack.c.l.b16 %v230
      %v625 = vunpack.c.h.b16 %v230
      %v626 = vunpack.c.l.b16 %v231
      %v627 = vunpack.c.h.b16 %v231
      %v628 = vunpack.c.l.b16 %v232
      %v629 = vunpack.c.h.b16 %v232
      %v630 = vunpack.c.l.b16 %v233
      %v631 = vunpack.c.h.b16 %v233
      %v632 = vunpack.c.l.b16 %v234
      %v633 = vunpack.c.h.b16 %v234
      %v634 = vunpack.c.l.b16 %v235
      %v635 = vunpack.c.h.b16 %v235
      %v636 = vunpack.c.l.b16 %v236
      %v637 = vunpack.c.h.b16 %v236
      %v638 = vunpack.c.l.b16 %v237
      %v639 = vunpack.c.h.b16 %v237
      %v640 = vunpack.c.l.b16 %v238
      %v641 = vunpack.c.h.b16 %v238
      %v642 = vunpack.c.l.b16 %v239
      %v643 = vunpack.c.h.b16 %v239
      %v644 = vunpack.c.l.b16 %v240
      %v645 = vunpack.c.h.b16 %v240
      %v646 = vunpack.c.l.b16 %v241
      %v647 = vunpack.c.h.b16 %v241
      %v648 = vunpack.c.l.b16 %v242
      %v649 = vunpack.c.h.b16 %v242
      %v650 = vunpack.c.l.b16 %v243
      %v651 = vunpack.c.h.b16 %v243
      %v652 = vunpack.c.l.b16 %v244
      %v653 = vunpack.c.h.b16 %v244
      %v654 = vunpack.c.l.b16 %v245
      %v655 = vunpack.c.h.b16 %v245
      %v656 = vunpack.c.l.b16 %v246
      %v657 = vunpack.c.h.b16 %v246
      %v658 = vunpack.c.l.b16 %v247
      %v659 = vunpack.c.h.b16 %v247
      %v660 = vunpack.c.l.b16 %v248
      %v661 = vunpack.c.h.b16 %v248
      %v662 = vunpack.c.l.b16 %v249
      %v663 = vunpack.c.h.b16 %v249
      %v664 = vunpack.c.l.b16 %v250
      %v665 = vunpack.c.h.b16 %v250
      %v666 = vunpack.c.l.b16 %v251
      %v667 = vunpack.c.h.b16 %v251
      %v668 = vunpack.c.l.b16 %v252
      %v669 = vunpack.c.h.b16 %v252
      %v670 = vunpack.c.l.b16 %v253
      %v671 = vunpack.c.h.b16 %v253
      %v672 = vunpack.c.l.b16 %v254
      %v673 = vunpack.c.h.b16 %v254
      %v674 = vunpack.c.l.b16 %v255
      %v675 = vunpack.c.h.b16 %v255
      %v676 = vunpack.c.l.b16 %v256
      %v677 = vunpack.c.h.b16 %v256
      %v678 = vunpack.c.l.b16 %v257
      %v679 = vunpack.c.h.b16 %v257
      %v680 = vunpack.c.l.b16 %v258
      %v681 = vunpack.c.h.b16 %v258
      %v682 = vunpack.c.l.b16 %v259
      %v683 = vunpack.c.h.b16 %v259
      %v684 = vunpack.c.l.b16 %v260
      %v685 = vunpack.c.h.b16 %v260
      %v686 = vunpack.c.l.b16 %v261
      %v687 = vunpack.c.h.b16 %v261
      %v688 = vunpack.c.l.b16 %v262
      %v689 = vunpack.c.h.b16 %v262
      %v690 = vunpack.c.l.b16 %v263
      %v691 = vunpack.c.h.b16 %v263
      %v692 = vunpack.c.l.b16 %v264
      %v693 = vunpack.c.h.b16 %v264
      %v694 = vunpack.c.l.b16 %v265
      %v695 = vunpack.c.h.b16 %v265
      %v696 = vunpack.c.l.b16 %v266
      %v697 = vunpack.c.h.b16 %v266
      %v698 = vunpack.c.l.b16 %v267
      %v699 = vunpack.c.h.b16 %v267
      %v700 = vunpack.c.l.b16 %v268
      %v701 = vunpack.c.h.b16 %v268
      %v702 = vunpack.c.l.b16 %v269
      %v703 = vunpack.c.h.b16 %v269
      %v704 = vunpack.c.l.b16 %v270
      %v705 = vunpack.c.h.b16 %v270
      %v706 = vunpack.c.l.b16 %v271
      %v707 = vunpack.c.h.b16 %v271
      %v708 = vunpack.c.l.b16 %v272
      %v709 = vunpack.c.h.b16 %v272
      %v710 = vunpack.c.l.b16 %v273
      %v711 = vunpack.c.h.b16 %v273
      %v712 = vunpack.c.l.b16 %v274
      %v713 = vunpack.c.h.b16 %v274
      %v714 = vunpack.c.l.b16 %v275
      %v715 = vunpack.c.h.b16 %v275
      %v716 = vunpack.c.l.b16 %v276
      %v717 = vunpack.c.h.b16 %v276
      %v718 = vunpack.c.l.b16 %v277
      %v719 = vunpack.c.h.b16 %v277
      %v720 = vunpack.c.l.b16 %v278
      %v721 = vunpack.c.h.b16 %v278
      %v722 = vunpack.c.l.b16 %v279
      %v723 = vunpack.c.h.b16 %v279
      %v724 = vunpack.c.l.b16 %v280
      %v725 = vunpack.c.h.b16 %v280
      %v726 = vunpack.c.l.b16 %v281
      %v727 = vunpack.c.h.b16 %v281
      %v728 = vunpack.c.l.b16 %v282
      %v729 = vunpack.c.h.b16 %v282
      %v730 = vunpack.c.l.b16 %v283
      %v731 = vunpack.c.h.b16 %v283
      %v732 = vunpack.c.l.b16 %v284
      %v733 = vunpack.c.h.b16 %v284
      %v734 = vunpack.c.l.b16 %v285
      %v735 = vunpack.c.h.b16 %v285
      %v736 = vunpack.c.l.b16 %v286
      %v737 = vunpack.c.h.b16 %v286
      %v738 = vunpack.c.l.b16 %v287
      %v739 = vunpack.c.h.b16 %v287
      %v740 = vunpack.c.l.b16 %v288
      %v741 = vunpack.c.h.b16 %v288
      %v742 = vunpack.c.l.b16 %v289
      %v743 = vunpack.c.h.b16 %v289
      %v744 = vunpack.c.l.b16 %v290
      %v745 = vunpack.c.h.b16 %v290
      %v746 = vunpack.c.l.b16 %v291
      %v747 = vunpack.c.h.b16 %v291
      %v748 = vunpack.c.l.b16 %v292
      %v749 = vunpack.c.h.b16 %v292
      %v750 = vunpack.c.l.b16 %v293
      %v751 = vunpack.c.h.b16 %v293
      %v752 = vunpack.c.l.b16 %v294
      %v753 = vunpack.c.h.b16 %v294
      %v754 = vunpack.c.l.b16 %v295
      %v755 = vunpack.c.h.b16 %v295
      %v756 = vunpack.c.l.b16 %v296
      %v757 = vunpack.c.h.b16 %v296
      %v758 = vunpack.c.l.b16 %v297
      %v759 = vunpack.c.h.b16 %v297
      %v760 = vunpack.c.l.b16 %v298
      %v761 = vunpack.c.h.b16 %v298
      %v762 = vunpack.c.l.b16 %v299
      %v763 = vunpack.c.h.b16 %v299
      %v764 = vunpack.c.l.b16 %v300
      %v765 = vunpack.c.h.b16 %v300
      %v766 = vunpack.c.l.b16 %v301
      %v767 = vunpack.c.h.b16 %v301
      %v768 = vunpack.c.l.b16 %v302
      %v769 = vunpack.c.h.b16 %v302
      %v770 = vunpack.c.l.b16 %v303
      %v771 = vunpack.c.h.b16 %v303
      %v772 = vunpack.c.l.b16 %v304
      %v773 = vunpack.c.h.b16 %v304
      %v774 = vunpack.c.l.b16 %v305
      %v775 = vunpack.c.h.b16 %v305
      %v776 = vunpack.c.l.b16 %v306
      %v777 = vunpack.c.h.b16 %v306
      %v778 = vunpack.c.l.b16 %v307
      %v779 = vunpack.c.h.b16 %v307
      %v780 = vunpack.c.l.b16 %v308
      %v781 = vunpack.c.h.b16 %v308
      %v782 = vunpack.c.l.b16 %v309
      %v783 = vunpack.c.h.b16 %v309
      %v784 = vunpack.c.l.b16 %v310
      %v785 = vunpack.c.h.b16 %v310
      %v786 = vunpack.c.l.b16 %v311
      %v787 = vunpack.c.h.b16 %v311
      %v788 = vunpack.c.l.b16 %v312
      %v789 = vunpack.c.h.b16 %v312
      %v790 = vunpack.c.l.b16 %v313
      %v791 = vunpack.c.h.b16 %v313
      %v792 = vunpack.c.l.b16 %v314
      %v793 = vunpack.c.h.b16 %v314
      %v794 = vunpack.c.l.b16 %v315
      %v795 = vunpack.c.h.b16 %v315
      %v796 = vunpack.c.l.b16 %v316
      %v797 = vunpack.c.h.b16 %v316
      %v798 = vunpack.c.l.b16 %v317
      %v799 = vunpack.c.h.b16 %v317
      %v800 = vunpack.c.l.b16 %v318
      %v801 = vunpack.c.h.b16 %v318
      %v802 = vunpack.c.l.b16 %v319
      %v803 = vunpack.c.h.b16 %v319
      %v804 = vunpack.c.l.b16 %v320
      %v805 = vunpack.c.h.b16 %v320
      %v806 = vunpack.c.l.b16 %v321
      %v807 = vunpack.c.h.b16 %v321
      %v808 = vunpack.c.l.b16 %v322
      %v809 = vunpack.c.h.b16 %v322
      %v810 = vunpack.c.l.b16 %v323
      %v811 = vunpack.c.h.b16 %v323
      %v812 = vunpack.c.l.b16 %v324
      %v813 = vunpack.c.h.b16 %v324
      %v814 = vunpack.c.l.b16 %v325
      %v815 = vunpack.c.h.b16 %v325
      %v816 = vpack.c.b16 %v530, %v528
      %v817 = vpack.c.b16 %v531, %v529
      %v818 = vpack.c.b16 %v534, %v532
      %v819 = vpack.c.b16 %v535, %v533
      %v820 = vpack.c.b16 %v538, %v536
      %v821 = vpack.c.b16 %v539, %v537
      %v822 = vpack.c.b16 %v542, %v540
      %v823 = vpack.c.b16 %v543, %v541
      %v824 = vpack.c.b16 %v546, %v544
      %v825 = vpack.c.b16 %v547, %v545
      %v826 = vpack.c.b16 %v550, %v548
      %v827 = vpack.c.b16 %v551, %v549
      %v828 = vpack.c.b16 %v554, %v552
      %v829 = vpack.c.b16 %v555, %v553
      %v830 = vpack.c.b16 %v558, %v556
      %v831 = vpack.c.b16 %v559, %v557
      %v832 = vpack.c.b16 %v562, %v560
      %v833 = vpack.c.b16 %v563, %v561
      %v834 = vpack.c.b16 %v566, %v564
      %v835 = vpack.c.b16 %v567, %v565
      %v836 = vpack.c.b16 %v570, %v568
      %v837 = vpack.c.b16 %v571, %v569
      %v838 = vpack.c.b16 %v574, %v572
      %v839 = vpack.c.b16 %v575, %v573
      %v840 = vpack.c.b16 %v578, %v576
      %v841 = vpack.c.b16 %v579, %v577
      %v842 = vpack.c.b16 %v582, %v580
      %v843 = vpack.c.b16 %v583, %v581
      %v844 = vpack.c.b16 %v586, %v584
      %v845 = vpack.c.b16 %v587, %v585
      %v846 = vpack.c.b16 %v590, %v588
      %v847 = vpack.c.b16 %v591, %v589
      %v848 = vpack.c.b16 %v594, %v592
      %v849 = vpack.c.b16 %v595, %v593
      %v850 = vpack.c.b16 %v598, %v596
      %v851 = vpack.c.b16 %v599, %v597
      %v852 = vpack.c.b16 %v602, %v600
      %v853 = vpack.c.b16 %v603, %v601
      %v854 = vpack.c.b16 %v606, %v604
      %v855 = vpack.c.b16 %v607, %v605
      %v856 = vpack.c.b16 %v610, %v608
      %v857 = vpack.c.b16 %v611, %v609
      %v858 = vpack.c.b16 %v614, %v612
      %v859 = vpack.c.b16 %v615, %v613
      %v860 = vpack.c.b16 %v618, %v616
      %v861 = vpack.c.b16 %v619, %v617
      %v862 = vpack.c.b16 %v622, %v620
      %v863 = vpack.c.b16 %v623, %v621
      %v864 = vpack.c.b16 %v626, %v624
      %v865 = vpack.c.b16 %v627, %v625
      %v866 = vpack.c.b16 %v630, %v628
      %v867 = vpack.c.b16 %v631, %v629
      %v868 = vpack.c.b16 %v634, %v632
      %v869 = vpack.c.b16 %v635, %v633
      %v870 = vpack.c.b16 %v638, %v636
      %v871 = vpack.c.b16 %v639, %v637
      %v872 = vpack.c.b16 %v642, %v640
      %v873 = vpack.c.b16 %v643, %v641
      %v874 = vpack.c.b16 %v646, %v644
      %v875 = vpack.c.b16 %v647, %v645
      %v876 = vpack.c.b16 %v650, %v648
      %v877 = vpack.c.b16 %v651, %v649
      %v878 = vpack.c.b16 %v654, %v652
      %v879 = vpack.c.b16 %v655, %v653
      %v880 = vpack.c.b16 %v658, %v656
      %v881 = vpack.c.b16 %v659, %v657
      %v882 = vpack.c.b16 %v662, %v660
      %v883 = vpack.c.b16 %v663, %v661
      %v884 = vpack.c.b16 %v666, %v664
      %v885 = vpack.c.b16 %v667, %v665
      %v886 = vpack.c.b16 %v670, %v668
      %v887 = vpack.c.b16 %v671, %v669
      %v888 = vpack.c.b16 %v674, %v672
      %v889 = vpack.c.b16 %v675, %v673
      %v890 = vpack.c.b16 %v678, %v676
      %v891 = vpack.c.b16 %v679, %v677
      %v892 = vpack.c.b16 %v682, %v680
      %v893 = vpack.c.b16 %v683, %v681
      %v894 = vpack.c.b16 %v686, %v684
      %v895 = vpack.c.b16 %v687, %v685
      %v896 = vpack.c.b16 %v690, %v688
      %v897 = vpack.c.b16 %v691, %v689
      %v898 = vpack.c.b16 %v694, %v692
      %v899 = vpack.c.b16 %v695, %v693
      %v900 = vpack.c.b16 %v698, %v696
      %v901 = vpack.c.b16 %v699, %v697
      %v902 = vpack.c.b16 %v702, %v700
      %v903 = vpack.c.b16 %v703, %v701
      %v904 = vpack.c.b16 %v706, %v704
      %v905 = vpack.c.b16 %v707, %v705
      %v906 = vpack.c.b16 %v710, %v708
      %v907 = vpack.c.b16 %v711, %v709
      %v908 = vpack.c.b16 %v714, %v712
      %v909 = vpack.c.b16 %v715, %v713
      %v910 = vpack.c.b16 %v718, %v716
      %v911 = vpack.c.b16 %v719, %v717
      %v912 = vpack.c.b16 %v722, %v720
      %v913 = vpack.c.b16 %v723, %v721
      %v914 = vpack.c.b16 %v726, %v724
      %v915 = vpack.c.b16 %v727, %v725
      %v916 = vpack.c.b16 %v730, %v728
      %v917 = vpack.c.b16 %v731, %v729
      %v918 = vpack.c.b16 %v734, %v732
      %v919 = vpack.c.b16 %v735, %v733
      %v920 = vpack.c.b16 %v738, %v736
      %v921 = vpack.c.b16 %v739, %v737
      %v922 = vpack.c.b16 %v742, %v740
      %v923 = vpack.c.b16 %v743, %v741
      %v924 = vpack.c.b16 %v746, %v744
      %v925 = vpack.c.b16 %v747, %v745
      %v926 = vpack.c.b16 %v750, %v748
      %v927 = vpack.c.b16 %v751, %v749
      %v928 = vpack.c.b16 %v754, %v752
      %v929 = vpack.c.b16 %v755, %v753
      %v930 = vpack.c.b16 %v758, %v756
      %v931 = vpack.c.b16 %v759, %v757
      %v932 = vpack.c.b16 %v762, %v760
      %v933 = vpack.c.b16 %v763, %v761
      %v934 = vpack.c.b16 %v766, %v764
      %v935 = vpack.c.b16 %v767, %v765
      %v936 = vpack.c.b16 %v770, %v768
      %v937 = vpack.c.b16 %v771, %v769
      %v938 = vpack.c.b16 %v774, %v772
      %v939 = vpack.c.b16 %v775, %v773
      %v940 = vpack.c.b16 %v778, %v776
      %v941 = vpack.c.b16 %v779, %v777
      %v942 = vpack.c.b16 %v782, %v780
      %v943 = vpack.c.b16 %v783, %v781
      %v944 = vpack.c.b16 %v786, %v784
      %v945 = vpack.c.b16 %v787, %v785
      %v946 = vpack.c.b16 %v790, %v788
      %v947 = vpack.c.b16 %v791, %v789
      %v948 = vpack.c.b16 %v794, %v792
      %v949 = vpack.c.b16 %v795, %v793
      %v950 = vpack.c.b16 %v798, %v796
      %v951 = vpack.c.b16 %v799, %v797
      %v952 = vpack.c.b16 %v802, %v800
      %v953 = vpack.c.b16 %v803, %v801
      %v954 = vpack.c.b16 %v806, %v804
      %v955 = vpack.c.b16 %v807, %v805
      %v956 = vpack.c.b16 %v810, %v808
      %v957 = vpack.c.b16 %v811, %v809
      %v958 = vpack.c.b16 %v814, %v812
      %v959 = vpack.c.b16 %v815, %v813
      %1104 = vmatprep.subr.bf16.mxu0 %v817
      %1105 = vmatpush1.bf16.msra.mxu0 %v816
      %1106 = vmatprep.subr.bf16.mxu0 %v819
      %1107 = vmatpush1.bf16.msra.mxu0 %v818
      %1108 = vmatprep.subr.bf16.mxu0 %v821
      %1109 = vmatpush1.bf16.msra.mxu0 %v820
      %1110 = vmatprep.subr.bf16.mxu0 %v823
      %1111 = vmatpush1.bf16.msra.mxu0 %v822
      %1112 = vmatprep.subr.bf16.mxu0 %v825
      %1113 = vmatpush1.bf16.msra.mxu0 %v824
      %1114 = vmatprep.subr.bf16.mxu0 %v827
      %1115 = vmatpush1.bf16.msra.mxu0 %v826
      %1116 = vmatprep.subr.bf16.mxu0 %v829
      %1117 = vmatpush1.bf16.msra.mxu0 %v828
      %1118 = vmatprep.subr.bf16.mxu0 %v831
      %1119 = vmatpush1.bf16.msra.mxu0 %v830
      %1120 = vmatprep.subr.bf16.mxu0 %v833
      %1121 = vmatpush1.bf16.msra.mxu0 %v832
      %1122 = vmatprep.subr.bf16.mxu0 %v835
      %1123 = vmatpush1.bf16.msra.mxu0 %v834
      %1124 = vmatprep.subr.bf16.mxu0 %v837
      %1125 = vmatpush1.bf16.msra.mxu0 %v836
      %1126 = vmatprep.subr.bf16.mxu0 %v839
      %1127 = vmatpush1.bf16.msra.mxu0 %v838
      %1128 = vmatprep.subr.bf16.mxu0 %v841
      %1129 = vmatpush1.bf16.msra.mxu0 %v840
      %1130 = vmatprep.subr.bf16.mxu0 %v843
      %1131 = vmatpush1.bf16.msra.mxu0 %v842
      %1132 = vmatprep.subr.bf16.mxu0 %v845
      %1133 = vmatpush1.bf16.msra.mxu0 %v844
      %1134 = vmatprep.subr.bf16.mxu0 %v847
      %1135 = vmatpush1.bf16.msra.mxu0 %v846
      %1136 = vmatprep.mubr.bf16.mxu0 %v367
      %1137 = vmatmul.mubr.bf16.gmra.mrb[0].mxu0 %v366
      %v1138 = vpop.f32.mrb[0].mxu0
      %v1139 = vadd.f32 %v331, %v1138
      %v1140 = vpop.f32.mrb[0].mxu0
      %v1141 = vadd.f32 %v335, %v1140
      %v1142 = vpop.f32.mrb[0].mxu0
      %v1143 = vadd.f32 %v331, %v1142
      %v1144 = vpop.f32.mrb[0].mxu0
      %v1145 = vadd.f32 %v335, %v1144
      %1146 = vdwg.mxu0
      %1147 = vmatprep.subr.bf16.mxu0 %v849
      %1148 = vmatpush1.bf16.msra.mxu0 %v848
      %1149 = vmatprep.subr.bf16.mxu0 %v851
      %1150 = vmatpush1.bf16.msra.mxu0 %v850
      %1151 = vmatprep.subr.bf16.mxu0 %v853
      %1152 = vmatpush1.bf16.msra.mxu0 %v852
      %1153 = vmatprep.subr.bf16.mxu0 %v855
      %1154 = vmatpush1.bf16.msra.mxu0 %v854
      %1155 = vmatprep.subr.bf16.mxu0 %v857
      %1156 = vmatpush1.bf16.msra.mxu0 %v856
      %1157 = vmatprep.subr.bf16.mxu0 %v859
      %1158 = vmatpush1.bf16.msra.mxu0 %v858
      %1159 = vmatprep.subr.bf16.mxu0 %v861
      %1160 = vmatpush1.bf16.msra.mxu0 %v860
      %1161 = vmatprep.subr.bf16.mxu0 %v863
      %1162 = vmatpush1.bf16.msra.mxu0 %v862
      %1163 = vmatprep.subr.bf16.mxu0 %v865
      %1164 = vmatpush1.bf16.msra.mxu0 %v864
      %1165 = vmatprep.subr.bf16.mxu0 %v867
      %1166 = vmatpush1.bf16.msra.mxu0 %v866
      %1167 = vmatprep.subr.bf16.mxu0 %v869
      %1168 = vmatpush1.bf16.msra.mxu0 %v868
      %1169 = vmatprep.subr.bf16.mxu0 %v871
      %1170 = vmatpush1.bf16.msra.mxu0 %v870
      %1171 = vmatprep.subr.bf16.mxu0 %v873
      %1172 = vmatpush1.bf16.msra.mxu0 %v872
      %1173 = vmatprep.subr.bf16.mxu0 %v875
      %1174 = vmatpush1.bf16.msra.mxu0 %v874
      %1175 = vmatprep.subr.bf16.mxu0 %v877
      %1176 = vmatpush1.bf16.msra.mxu0 %v876
      %1177 = vmatprep.subr.bf16.mxu0 %v879
      %1178 = vmatpush1.bf16.msra.mxu0 %v878
      %1179 = vmatprep.mubr.bf16.mxu0 %v369
      %1180 = vmatmul.mubr.bf16.gmra.mrb[0].mxu0 %v368
      %v1181 = vpop.f32.mrb[0].mxu0
      %v1182 = vadd.f32 %v1139, %v1181
      %v1183 = vpop.f32.mrb[0].mxu0
      %v1184 = vadd.f32 %v1141, %v1183
      %v1185 = vpop.f32.mrb[0].mxu0
      %v1186 = vadd.f32 %v1143, %v1185
      %v1187 = vpop.f32.mrb[0].mxu0
      %v1188 = vadd.f32 %v1145, %v1187
      %1189 = vdwg.mxu0
      %1190 = vmatprep.subr.bf16.mxu0 %v881
      %1191 = vmatpush1.bf16.msra.mxu0 %v880
      %1192 = vmatprep.subr.bf16.mxu0 %v883
      %1193 = vmatpush1.bf16.msra.mxu0 %v882
      %1194 = vmatprep.subr.bf16.mxu0 %v885
      %1195 = vmatpush1.bf16.msra.mxu0 %v884
      %1196 = vmatprep.subr.bf16.mxu0 %v887
      %1197 = vmatpush1.bf16.msra.mxu0 %v886
      %1198 = vmatprep.subr.bf16.mxu0 %v889
      %1199 = vmatpush1.bf16.msra.mxu0 %v888
      %1200 = vmatprep.subr.bf16.mxu0 %v891
      %1201 = vmatpush1.bf16.msra.mxu0 %v890
      %1202 = vmatprep.subr.bf16.mxu0 %v893
      %1203 = vmatpush1.bf16.msra.mxu0 %v892
      %1204 = vmatprep.subr.bf16.mxu0 %v895
      %1205 = vmatpush1.bf16.msra.mxu0 %v894
      %1206 = vmatprep.subr.bf16.mxu0 %v897
      %1207 = vmatpush1.bf16.msra.mxu0 %v896
      %1208 = vmatprep.subr.bf16.mxu0 %v899
      %1209 = vmatpush1.bf16.msra.mxu0 %v898
      %1210 = vmatprep.subr.bf16.mxu0 %v901
      %1211 = vmatpush1.bf16.msra.mxu0 %v900
      %1212 = vmatprep.subr.bf16.mxu0 %v903
      %1213 = vmatpush1.bf16.msra.mxu0 %v902
      %1214 = vmatprep.subr.bf16.mxu0 %v905
      %1215 = vmatpush1.bf16.msra.mxu0 %v904
      %1216 = vmatprep.subr.bf16.mxu0 %v907
      %1217 = vmatpush1.bf16.msra.mxu0 %v906
      %1218 = vmatprep.subr.bf16.mxu0 %v909
      %1219 = vmatpush1.bf16.msra.mxu0 %v908
      %1220 = vmatprep.subr.bf16.mxu0 %v911
      %1221 = vmatpush1.bf16.msra.mxu0 %v910
      %1222 = vmatprep.mubr.bf16.mxu0 %v371
      %1223 = vmatmul.mubr.bf16.gmra.mrb[0].mxu0 %v370
      %v1224 = vpop.f32.mrb[0].mxu0
      %v1225 = vadd.f32 %v1182, %v1224
      %v1226 = vpop.f32.mrb[0].mxu0
      %v1227 = vadd.f32 %v1184, %v1226
      %v1228 = vpop.f32.mrb[0].mxu0
      %v1229 = vadd.f32 %v1186, %v1228
      %v1230 = vpop.f32.mrb[0].mxu0
      %v1231 = vadd.f32 %v1188, %v1230
      %1232 = vdwg.mxu0
      %1233 = vmatprep.subr.bf16.mxu0 %v913
      %1234 = vmatpush1.bf16.msra.mxu0 %v912
      %1235 = vmatprep.subr.bf16.mxu0 %v915
      %1236 = vmatpush1.bf16.msra.mxu0 %v914
      %1237 = vmatprep.subr.bf16.mxu0 %v917
      %1238 = vmatpush1.bf16.msra.mxu0 %v916
      %1239 = vmatprep.subr.bf16.mxu0 %v919
      %1240 = vmatpush1.bf16.msra.mxu0 %v918
      %1241 = vmatprep.subr.bf16.mxu0 %v921
      %1242 = vmatpush1.bf16.msra.mxu0 %v920
      %1243 = vmatprep.subr.bf16.mxu0 %v923
      %1244 = vmatpush1.bf16.msra.mxu0 %v922
      %1245 = vmatprep.subr.bf16.mxu0 %v925
      %1246 = vmatpush1.bf16.msra.mxu0 %v924
      %1247 = vmatprep.subr.bf16.mxu0 %v927
      %1248 = vmatpush1.bf16.msra.mxu0 %v926
      %1249 = vmatprep.subr.bf16.mxu0 %v929
      %1250 = vmatpush1.bf16.msra.mxu0 %v928
      %1251 = vmatprep.subr.bf16.mxu0 %v931
      %1252 = vmatpush1.bf16.msra.mxu0 %v930
      %1253 = vmatprep.subr.bf16.mxu0 %v933
      %1254 = vmatpush1.bf16.msra.mxu0 %v932
      %1255 = vmatprep.subr.bf16.mxu0 %v935
      %1256 = vmatpush1.bf16.msra.mxu0 %v934
      %1257 = vmatprep.subr.bf16.mxu0 %v937
      %1258 = vmatpush1.bf16.msra.mxu0 %v936
      %1259 = vmatprep.subr.bf16.mxu0 %v939
      %1260 = vmatpush1.bf16.msra.mxu0 %v938
      %1261 = vmatprep.subr.bf16.mxu0 %v941
      %1262 = vmatpush1.bf16.msra.mxu0 %v940
      %1263 = vmatprep.subr.bf16.mxu0 %v943
      %1264 = vmatpush1.bf16.msra.mxu0 %v942
      %1265 = vmatprep.mubr.bf16.mxu0 %v373
      %1266 = vmatmul.mubr.bf16.gmra.mrb[0].mxu0 %v372
      %v1267 = vpop.f32.mrb[0].mxu0
      %v1268 = vadd.f32 %v1225, %v1267
      %v1269 = vpop.f32.mrb[0].mxu0
      %v1270 = vadd.f32 %v1227, %v1269
      %v1271 = vpop.f32.mrb[0].mxu0
      %v1272 = vadd.f32 %v1229, %v1271
      %v1273 = vpop.f32.mrb[0].mxu0
      %v1274 = vadd.f32 %v1231, %v1273
      %1275 = vdwg.mxu0
      %1276 = vmatprep.subr.bf16.mxu0 %v945
      %1277 = vmatpush1.bf16.msra.mxu0 %v944
      %1278 = vmatprep.subr.bf16.mxu0 %v947
      %1279 = vmatpush1.bf16.msra.mxu0 %v946
      %1280 = vmatprep.subr.bf16.mxu0 %v949
      %1281 = vmatpush1.bf16.msra.mxu0 %v948
      %1282 = vmatprep.subr.bf16.mxu0 %v951
      %1283 = vmatpush1.bf16.msra.mxu0 %v950
      %1284 = vmatprep.subr.bf16.mxu0 %v953
      %1285 = vmatpush1.bf16.msra.mxu0 %v952
      %1286 = vmatprep.subr.bf16.mxu0 %v955
      %1287 = vmatpush1.bf16.msra.mxu0 %v954
      %1288 = vmatprep.subr.bf16.mxu0 %v957
      %1289 = vmatpush1.bf16.msra.mxu0 %v956
      %1290 = vmatprep.subr.bf16.mxu0 %v959
      %1291 = vmatpush1.bf16.msra.mxu0 %v958
      %1292 = vmatprep.subr.bf16.mxu0 0
      %1293 = vmatpush1.bf16.msra.mxu0 0
      %1294 = vmatprep.subr.bf16.mxu0 0
      %1295 = vmatpush1.bf16.msra.mxu0 0
      %1296 = vmatprep.subr.bf16.mxu0 0
      %1297 = vmatpush1.bf16.msra.mxu0 0
      %1298 = vmatprep.subr.bf16.mxu0 0
      %1299 = vmatpush1.bf16.msra.mxu0 0
      %1300 = vmatprep.subr.bf16.mxu0 0
      %1301 = vmatpush1.bf16.msra.mxu0 0
      %1302 = vmatprep.subr.bf16.mxu0 0
      %1303 = vmatpush1.bf16.msra.mxu0 0
      %1304 = vmatprep.subr.bf16.mxu0 0
      %1305 = vmatpush1.bf16.msra.mxu0 0
      %1306 = vmatprep.subr.bf16.mxu0 0
      %1307 = vmatpush1.bf16.msra.mxu0 0
      %1308 = vmatprep.mubr.bf16.mxu0 0
      %1309 = vmatmul.mubr.bf16.gmra.mrb[0].mxu0 %v374
      %v1310 = vpop.f32.mrb[0].mxu0
      %v1311 = vadd.f32 %v1268, %v1310
      %v1312 = vpop.f32.mrb[0].mxu0
      %v1313 = vadd.f32 %v1270, %v1312
      %v1314 = vpop.f32.mrb[0].mxu0
      %v1315 = vadd.f32 %v1272, %v1314
      %v1316 = vpop.f32.mrb[0].mxu0
      %v1317 = vadd.f32 %v1274, %v1316
      %1318 = vdwg.mxu0
      %vm1319 = vcmp.gt.f32.partialorder %v1311, 0.0
      %vm1320 = vcmp.gt.f32.partialorder %v1313, 0.0
      %vm1321 = vcmp.gt.f32.partialorder %v1315, 0.0
      %vm1322 = vcmp.gt.f32.partialorder %v1317, 0.0
      %v1323 = vmul.f32 %v1311, 0.2
      %v1324 = vmul.f32 %v1313, 0.2
      %v1325 = vmul.f32 %v1315, 0.2
      %v1326 = vmul.f32 %v1317, 0.2
      %v1327 = vsel %vm1319, %v1311, %v1323
      %v1328 = vsel %vm1320, %v1313, %v1324
      %v1329 = vsel %vm1321, %v1315, %v1325
      %v1330 = vsel %vm1322, %v1317, %v1326
      %v1331 = vadd.f32 %v1327, %v1329
      %v1332 = vrot.slane %v1331, 4
      %v1333 = vadd.f32 %v1331, %v1332
      %v1334 = vrot.slane %v1333, 2
      %v1335 = vadd.f32 %v1333, %v1334
      %v1336 = vrot.slane %v1335, 1
      %v1337 = vadd.f32 %v1335, %v1336
      %v1338 = vadd.f32 %v1328, %v1330
      %v1339 = vrot.slane %v1338, 4
      %v1340 = vadd.f32 %v1338, %v1339
      %v1341 = vrot.slane %v1340, 2
      %v1342 = vadd.f32 %v1340, %v1341
      %v1343 = vrot.slane %v1342, 1
      %v1344 = vadd.f32 %v1342, %v1343
      %v1345 = vrcp.pop 16.0
      %v1346 = vmul.f32 %v1337, %v1345
      %v1347 = vmul.f32 %v1344, %v1345
      %v1348 = vsub.f32 %v1327, %v1346
      %v1349 = vsub.f32 %v1328, %v1347
      %v1350 = vsub.f32 %v1329, %v1346
      %v1351 = vsub.f32 %v1330, %v1347
      %v1352 = vmul.f32 %v1348, %v1348
      %v1353 = vmul.f32 %v1349, %v1349
      %v1354 = vmul.f32 %v1350, %v1350
      %v1355 = vmul.f32 %v1351, %v1351
      %v1356 = vadd.f32 %v1352, %v1354
      %v1357 = vrot.slane %v1356, 4
      %v1358 = vadd.f32 %v1356, %v1357
      %v1359 = vrot.slane %v1358, 2
      %v1360 = vadd.f32 %v1358, %v1359
      %v1361 = vrot.slane %v1360, 1
      %v1362 = vadd.f32 %v1360, %v1361
      %v1363 = vadd.f32 %v1353, %v1355
      %v1364 = vrot.slane %v1363, 4
      %v1365 = vadd.f32 %v1363, %v1364
      %v1366 = vrot.slane %v1365, 2
      %v1367 = vadd.f32 %v1365, %v1366
      %v1368 = vrot.slane %v1367, 1
      %v1369 = vadd.f32 %v1367, %v1368
      %v1370 = vmul.f32 %v1362, %v1345
      %v1371 = vmul.f32 %v1369, %v1345
      %v1372 = vadd.f32 %v1370, 1e-05
      %v1373 = vadd.f32 %v1371, 1e-05
      %v1374 = vrsqrt.pop %v1372
      %v1375 = vrsqrt.pop %v1373
      %v1376 = vmul.f32 %v1348, %v1374
      %v1377 = vmul.f32 %v1349, %v1375
      %v1378 = vmul.f32 %v1350, %v1374
      %v1379 = vmul.f32 %v1351, %v1375
      %1380 = vst [vmem:[%s170] sm:$0xff] %v1376
      %1381 = vst [vmem:[%s170 + $0x8] sm:$0xff] %v1377
      %1382 = vst [vmem:[%s170 + $0x10] sm:$0xff] %v1378
      %1383 = vst [vmem:[%s170 + $0x18] sm:$0xff] %v1379
      %p1384 = scmp.lt.s32.totalorder %s14, 1
      %s1385 = scalar_select %p1384, %s14, 1
      %s1386 = smul.addr %s1385, 4
      %s1387 = smul.addr %s1386, 8
      %s1388 = scalar_lea.vmem %s3, %s1387
      // Predicated region
      $region33: #{classifier_forward.7} parent=31 // pred_check
        %p1389 = pneg %p100
      $region34: #{classifier_forward.7} parent=31 // pred_check_branch
        %1391 = sbr.rel (%p1389) target = $region36
      $region35: #{classifier_forward.7} parent=31 // pred_region
        _
      $region36: #{classifier_forward.7} parent=31 // pred_fallthru
        _
    $region32: #{classifier_forward.7} parent=5 // pred_fallthru
      _
    %p1392 = scmp.le.s32.totalorder 2, %s9
    // Predicated region
    $region37: #{classifier_forward.7} parent=5 // pred_check
      %p1393 = pneg %p1392
    $region38: #{classifier_forward.7} parent=5 // pred_check_branch
      %1395 = sbr.rel (%p1393) target = $region40
    $region39: #{classifier_forward.7} parent=5 // pred_region
      %s1396 = ssub.s32 %s9, 2
      // Predicated region
      $region41: #{classifier_forward.7} parent=39 // pred_check
        %p1397 = pneg %p106
      $region42: #{classifier_forward.7} parent=39 // pred_check_branch
        %1399 = sbr.rel (%p1397) target = $region44
      $region43: #{classifier_forward.7} parent=39 // pred_region
        %p1400 = scmp.lt.s32.totalorder %s15, 1
        %s1401 = scalar_select %p1400, %s15, 1
        %s1402 = smul.addr %s1401, 4
        %s1403 = smul.addr %s1402, 8
        %s1404 = scalar_lea.vmem %s3, %s1403
      $region44: #{classifier_forward.7} parent=39 // pred_fallthru
        _
    $region40: #{classifier_forward.7} parent=5 // pred_fallthru
      _
  $region6: #{classifier_forward.7} parent=0 // loop_footer
    %s13 = sadd.s32 1, %s9
  $region7: #{classifier_forward.7} parent=0 // loop_footer_branch
    %8 = sbr.rel target = $region3
  $region8: #{classifier_forward.7} parent=0 // loop_exit
    _

// kernel: classifier_forward.8
$region0: #{classifier_forward.8}
  #allocation0 [shape = 'u32[]', space=smem, size = 0x4, offset = 0x4, fixed_abs, tag = 'smem constant byte address 0x4 - core index']
  #allocation1 [shape = 'u32[144,128]{1,0:T(1,128)}', space=vmem, size = 0x12000, scoped, tag = 'internal scratch']
  %s0 = inlined_call_operand.vmem [shape: bf16[2,4,2304], index: 0, kind: input, shape index: {}]
  %s1 = inlined_call_operand.vmem [shape: bf16[2304,512], index: 1, kind: input, shape index: {}]
  %s2 = inlined_call_operand.vmem [shape: f32[1,512], index: 2, kind: input, shape index: {}]
  %s3 = inlined_call_operand.vmem [shape: f32[2,4,512], index: 3, kind: output, shape index: {}]
  %s4 = sld [smem:[#allocation0]]
  $region45: #{classifier_forward.8} parent=0
    _
  %s6 = ssub.s32 1, %s4
  %s7 = scalar_select 0, %s6, %s4
  loop: start=0, step=1, limit=4
  $region2: #{classifier_forward.8} parent=0 // loop_pre_header
    _
  $region3: #{classifier_forward.8} parent=0 // loop_header
    %s9 = sphi 0, %s13
    %p10 = scmp.ge.s32.totalorder %s9, 4
    %s19 = sphi 0, %s21
    %s22 = sphi 0, %s19
    %s23 = sphi 0, %s22
    %s39 = sphi 0, %s23
    %s43 = sphi 0, %s43
    %s45 = sphi 0, %s43
    %s46 = sphi 0, %s45
    %s60 = sphi 0, %s46
    %s64 = sphi 0, %s64
    %s66 = sphi 0, %s64
    %s67 = sphi 0, %s66
    %s81 = sphi 0, %s67
    %s87 = sphi 0, %s89
    %s90 = sphi 0, %s87
    %s91 = sphi 0, %s90
    %s107 = sphi 0, %s91
  $region4: #{classifier_forward.8} parent=0 // loop_header_branch
    %12 = sbr.rel (%p10) target = $region8
  $region5: #{classifier_forward.8} parent=0 // loop_body
    %s14 = ssub.s32 %s9, 1
    %s15 = ssub.s32 %s9, 2
    %s16 = sadd.s32 %s9, 1
    %s17 = ssub.s32 %s9, %s16
    %p18 = scmp.eq.s32.totalorder %s17, 0
    %s20 = sadd.s32 %s19, 1
    %s21 = scalar_select %p18, %s19, %s20
    %p24 = pneg %p18
    %p25 = scmp.eq.s32.totalorder %s9, 1
    %p26 = por %p24, %p25
    %p27 = scmp.ne.s32.totalorder %s19, %s22
    %p28 = scmp.eq.s32.totalorder %s9, 0
    %p29 = por %p27, %p28
    %p30 = scmp.ne.s32.totalorder %s19, %s22
    %p31 = scmp.eq.s32.totalorder %s14, 1
    %p32 = por %p30, %p31
    %p33 = scmp.ne.s32.totalorder %s22, %s23
    %p34 = scmp.eq.s32.totalorder %s14, 0
    %p35 = por %p33, %p34
    %p36 = scmp.ne.s32.totalorder %s22, %s23
    %p37 = scmp.eq.s32.totalorder %s15, 1
    %p38 = por %p36, %p37
    %p40 = scmp.ne.s32.totalorder %s23, %s39
    %p41 = scmp.eq.s32.totalorder %s15, 0
    %p42 = por %p40, %p41
    %s44 = sadd.s32 %s43, 1
    %p47 = scmp.eq.s32.totalorder %s9, 1
    %p48 = scmp.ne.s32.totalorder %s43, %s45
    %p49 = scmp.eq.s32.totalorder %s9, 0
    %p50 = por %p48, %p49
    %p51 = scmp.ne.s32.totalorder %s43, %s45
    %p52 = scmp.eq.s32.totalorder %s14, 1
    %p53 = por %p51, %p52
    %p54 = scmp.ne.s32.totalorder %s45, %s46
    %p55 = scmp.eq.s32.totalorder %s14, 0
    %p56 = por %p54, %p55
    %p57 = scmp.ne.s32.totalorder %s45, %s46
    %p58 = scmp.eq.s32.totalorder %s15, 1
    %p59 = por %p57, %p58
    %p61 = scmp.ne.s32.totalorder %s46, %s60
    %p62 = scmp.eq.s32.totalorder %s15, 0
    %p63 = por %p61, %p62
    %s65 = sadd.s32 %s64, 1
    %p68 = scmp.eq.s32.totalorder %s9, 1
    %p69 = scmp.ne.s32.totalorder %s64, %s66
    %p70 = scmp.eq.s32.totalorder %s9, 0
    %p71 = por %p69, %p70
    %p72 = scmp.ne.s32.totalorder %s64, %s66
    %p73 = scmp.eq.s32.totalorder %s14, 1
    %p74 = por %p72, %p73
    %p75 = scmp.ne.s32.totalorder %s66, %s67
    %p76 = scmp.eq.s32.totalorder %s14, 0
    %p77 = por %p75, %p76
    %p78 = scmp.ne.s32.totalorder %s66, %s67
    %p79 = scmp.eq.s32.totalorder %s15, 1
    %p80 = por %p78, %p79
    %p82 = scmp.ne.s32.totalorder %s67, %s81
    %p83 = scmp.eq.s32.totalorder %s15, 0
    %p84 = por %p82, %p83
    %s85 = ssub.s32 %s9, %s16
    %p86 = scmp.eq.s32.totalorder %s85, 0
    %s88 = sadd.s32 %s87, 1
    %s89 = scalar_select %p86, %s87, %s88
    %p92 = pneg %p86
    %p93 = scmp.eq.s32.totalorder %s9, 1
    %p94 = por %p92, %p93
    %p95 = scmp.ne.s32.totalorder %s87, %s90
    %p96 = scmp.eq.s32.totalorder %s9, 0
    %p97 = por %p95, %p96
    %p98 = scmp.ne.s32.totalorder %s87, %s90
    %p99 = scmp.eq.s32.totalorder %s14, 1
    %p100 = por %p98, %p99
    %p101 = scmp.ne.s32.totalorder %s90, %s91
    %p102 = scmp.eq.s32.totalorder %s14, 0
    %p103 = por %p101, %p102
    %p104 = scmp.ne.s32.totalorder %s90, %s91
    %p105 = scmp.eq.s32.totalorder %s15, 1
    %p106 = por %p104, %p105
    %p108 = scmp.ne.s32.totalorder %s91, %s107
    %p109 = scmp.eq.s32.totalorder %s15, 0
    %p110 = por %p108, %p109
    %p111 = scmp.le.s32.totalorder 1, %s9
    %p112 = scmp.lt.s32.totalorder %s9, 3
    %p113 = pnand %p111, %p112
    %p114 = pneg %p113
    // Predicated region
    $region9: #{classifier_forward.8} parent=5 // pred_check
      _
    $region10: #{classifier_forward.8} parent=5 // pred_check_branch
      %116 = sbr.rel (%p113) target = $region12
    $region11: #{classifier_forward.8} parent=5 // pred_region
      %s117 = ssub.s32 %s9, 1
      // Predicated region
      $region13: #{classifier_forward.8} parent=11 // pred_check
        %p118 = pneg %p56
      $region14: #{classifier_forward.8} parent=11 // pred_check_branch
        %120 = sbr.rel (%p118) target = $region16
      $region15: #{classifier_forward.8} parent=11 // pred_region
        _
      $region16: #{classifier_forward.8} parent=11 // pred_fallthru
        _
      // Predicated region
      $region17: #{classifier_forward.8} parent=11 // pred_check
        %p121 = pneg %p77
      $region18: #{classifier_forward.8} parent=11 // pred_check_branch
        %123 = sbr.rel (%p121) target = $region20
      $region19: #{classifier_forward.8} parent=11 // pred_region
        _
      $region20: #{classifier_forward.8} parent=11 // pred_fallthru
        _
    $region12: #{classifier_forward.8} parent=5 // pred_fallthru
      _
    %p124 = scmp.lt.s32.totalorder %s9, 2
    // Predicated region
    $region21: #{classifier_forward.8} parent=5 // pred_check
      %p125 = pneg %p124
    $region22: #{classifier_forward.8} parent=5 // pred_check_branch
      %127 = sbr.rel (%p125) target = $region24
    $region23: #{classifier_forward.8} parent=5 // pred_region
      // Predicated region
      $region25: #{classifier_forward.8} parent=23 // pred_check
        %p128 = pneg %p29
      $region26: #{classifier_forward.8} parent=23 // pred_check_branch
        %130 = sbr.rel (%p128) target = $region28
      $region27: #{classifier_forward.8} parent=23 // pred_region
        %p131 = scmp.lt.s32.totalorder %s9, 1
        %s132 = scalar_select %p131, %s9, 1
        %s133 = smul.addr %s132, 18
        %s134 = smul.addr %s133, 2
        %s135 = scalar_lea.vmem %s0, %s134
      $region28: #{classifier_forward.8} parent=23 // pred_fallthru
        _
    $region24: #{classifier_forward.8} parent=5 // pred_fallthru
      _
    %p136 = scmp.le.s32.totalorder 1, %s9
    %p137 = scmp.lt.s32.totalorder %s9, 3
    %p138 = pnand %p136, %p137
    %p139 = pneg %p138
    // Predicated region
    $region29: #{classifier_forward.8} parent=5 // pred_check
      _
    $region30: #{classifier_forward.8} parent=5 // pred_check_branch
      %141 = sbr.rel (%p138) target = $region32
    $region31: #{classifier_forward.8} parent=5 // pred_region
      %s142 = ssub.s32 %s9, 1
      %p143 = scmp.lt.s32.totalorder %s14, 1
      %s144 = scalar_select %p143, %s14, 1
      %s145 = smul.addr %s144, 18
      %s146 = smul.addr %s145, 2
      %s147 = scalar_lea.vmem %s0, %s146
      %p148 = pneg %p35
      %p149 = pneg %p32
      %p150 = pneg %p56
      %p151 = pneg %p53
      %p152 = pneg %p77
      %p153 = pneg %p74
      %p154 = pneg %p103
      %p155 = pneg %p100
      %p156 = scmp.lt.s32.totalorder %s14, 1
      %s157 = scalar_select %p156, %s14, 1
      %s158 = smul.addr %s157, 4
      %s159 = smul.addr %s158, 4
      %s160 = scalar_lea.vmem %s3, %s159
      %p161 = scmp.lt.s32.totalorder %s14, 1
      %s162 = scalar_select %p161, %s14, 1
      %s163 = smul.addr %s162, 18
      %s164 = smul.addr %s163, 2
      %s165 = scalar_lea.vmem %s0, %s164
      %p166 = scmp.lt.s32.totalorder %s14, 1
      %s167 = scalar_select %p166, %s14, 1
      %s168 = smul.addr %s167, 4
      %s169 = smul.addr %s168, 4
      %s170 = scalar_lea.vmem %s3, %s169
      %v171 = vld [vmem:[%s165] sm:$0xff]
      %v172 = vld [vmem:[%s165 + $0x8] sm:$0xff]
      %v173 = vld [vmem:[%s165 + $0x10] sm:$0xff]
      %v174 = vld [vmem:[%s165 + $0x18] sm:$0xff]
      %v175 = vld [vmem:[%s165 + $0x20] sm:$0xf]
      %v176 = vld [vmem:[%s1] sm:$0xff]
      %v177 = vld [vmem:[%s1 + $0x8] sm:$0xff]
      %v178 = vld [vmem:[%s1 + $0x10] sm:$0xff]
      %v179 = vld [vmem:[%s1 + $0x18] sm:$0xff]
      %v180 = vld [vmem:[%s1 + $0x20] sm:$0xff]
      %v181 = vld [vmem:[%s1 + $0x28] sm:$0xff]
      %v182 = vld [vmem:[%s1 + $0x30] sm:$0xff]
      %v183 = vld [vmem:[%s1 + $0x38] sm:$0xff]
      %v184 = vld [vmem:[%s1 + $0x40] sm:$0xff]
      %v185 = vld [vmem:[%s1 + $0x48] sm:$0xff]
      %v186 = vld [vmem:[%s1 + $0x50] sm:$0xff]
      %v187 = vld [vmem:[%s1 + $0x58] sm:$0xff]
      %v188 = vld [vmem:[%s1 + $0x60] sm:$0xff]
      %v189 = vld [vmem:[%s1 + $0x68] sm:$0xff]
      %v190 = vld [vmem:[%s1 + $0x70] sm:$0xff]
      %v191 = vld [vmem:[%s1 + $0x78] sm:$0xff]
      %v192 = vld [vmem:[%s1 + $0x80] sm:$0xff]
      %v193 = vld [vmem:[%s1 + $0x88] sm:$0xff]
      %v194 = vld [vmem:[%s1 + $0x90] sm:$0xff]
      %v195 = vld [vmem:[%s1 + $0x98] sm:$0xff]
      %v196 = vld [vmem:[%s1 + $0xa0] sm:$0xff]
      %v197 = vld [vmem:[%s1 + $0xa8] sm:$0xff]
      %v198 = vld [vmem:[%s1 + $0xb0] sm:$0xff]
      %v199 = vld [vmem:[%s1 + $0xb8] sm:$0xff]
      %v200 = vld [vmem:[%s1 + $0xc0] sm:$0xff]
      %v201 = vld [vmem:[%s1 + $0xc8] sm:$0xff]
      %v202 = vld [vmem:[%s1 + $0xd0] sm:$0xff]
      %v203 = vld [vmem:[%s1 + $0xd8] sm:$0xff]
      %v204 = vld [vmem:[%s1 + $0xe0] sm:$0xff]
      %v205 = vld [vmem:[%s1 + $0xe8] sm:$0xff]
      %v206 = vld [vmem:[%s1 + $0xf0] sm:$0xff]
      %v207 = vld [vmem:[%s1 + $0xf8] sm:$0xff]
      %v208 = vld [vmem:[%s1 + $0x100] sm:$0xff]
      %v209 = vld [vmem:[%s1 + $0x108] sm:$0xff]
      %v210 = vld [vmem:[%s1 + $0x110] sm:$0xff]
      %v211 = vld [vmem:[%s1 + $0x118] sm:$0xff]
      %v212 = vld [vmem:[%s1 + $0x120] sm:$0xff]
      %v213 = vld [vmem:[%s1 + $0x128] sm:$0xff]
      %v214 = vld [vmem:[%s1 + $0x130] sm:$0xff]
      %v215 = vld [vmem:[%s1 + $0x138] sm:$0xff]
      %v216 = vld [vmem:[%s1 + $0x140] sm:$0xff]
      %v217 = vld [vmem:[%s1 + $0x148] sm:$0xff]
      %v218 = vld [vmem:[%s1 + $0x150] sm:$0xff]
      %v219 = vld [vmem:[%s1 + $0x158] sm:$0xff]
      %v220 = vld [vmem:[%s1 + $0x160] sm:$0xff]
      %v221 = vld [vmem:[%s1 + $0x168] sm:$0xff]
      %v222 = vld [vmem:[%s1 + $0x170] sm:$0xff]
      %v223 = vld [vmem:[%s1 + $0x178] sm:$0xff]
      %v224 = vld [vmem:[%s1 + $0x180] sm:$0xff]
      %v225 = vld [vmem:[%s1 + $0x188] sm:$0xff]
      %v226 = vld [vmem:[%s1 + $0x190] sm:$0xff]
      %v227 = vld [vmem:[%s1 + $0x198] sm:$0xff]
      %v228 = vld [vmem:[%s1 + $0x1a0] sm:$0xff]
      %v229 = vld [vmem:[%s1 + $0x1a8] sm:$0xff]
      %v230 = vld [vmem:[%s1 + $0x1b0] sm:$0xff]
      %v231 = vld [vmem:[%s1 + $0x1b8] sm:$0xff]
      %v232 = vld [vmem:[%s1 + $0x1c0] sm:$0xff]
      %v233 = vld [vmem:[%s1 + $0x1c8] sm:$0xff]
      %v234 = vld [vmem:[%s1 + $0x1d0] sm:$0xff]
      %v235 = vld [vmem:[%s1 + $0x1d8] sm:$0xff]
      %v236 = vld [vmem:[%s1 + $0x1e0] sm:$0xff]
      %v237 = vld [vmem:[%s1 + $0x1e8] sm:$0xff]
      %v238 = vld [vmem:[%s1 + $0x1f0] sm:$0xff]
      %v239 = vld [vmem:[%s1 + $0x1f8] sm:$0xff]
      %v240 = vld [vmem:[%s1 + $0x200] sm:$0xff]
      %v241 = vld [vmem:[%s1 + $0x208] sm:$0xff]
      %v242 = vld [vmem:[%s1 + $0x210] sm:$0xff]
      %v243 = vld [vmem:[%s1 + $0x218] sm:$0xff]
      %v244 = vld [vmem:[%s1 + $0x220] sm:$0xff]
      %v245 = vld [vmem:[%s1 + $0x228] sm:$0xff]
      %v246 = vld [vmem:[%s1 + $0x230] sm:$0xff]
      %v247 = vld [vmem:[%s1 + $0x238] sm:$0xff]
      %v248 = vld [vmem:[%s1 + $0x240] sm:$0xff]
      %v249 = vld [vmem:[%s1 + $0x248] sm:$0xff]
      %v250 = vld [vmem:[%s1 + $0x250] sm:$0xff]
      %v251 = vld [vmem:[%s1 + $0x258] sm:$0xff]
      %v252 = vld [vmem:[%s1 + $0x260] sm:$0xff]
      %v253 = vld [vmem:[%s1 + $0x268] sm:$0xff]
      %v254 = vld [vmem:[%s1 + $0x270] sm:$0xff]
      %v255 = vld [vmem:[%s1 + $0x278] sm:$0xff]
      %v256 = vld [vmem:[%s1 + $0x280] sm:$0xff]
      %v257 = vld [vmem:[%s1 + $0x288] sm:$0xff]
      %v258 = vld [vmem:[%s1 + $0x290] sm:$0xff]
      %v259 = vld [vmem:[%s1 + $0x298] sm:$0xff]
      %v260 = vld [vmem:[%s1 + $0x2a0] sm:$0xff]
      %v261 = vld [vmem:[%s1 + $0x2a8] sm:$0xff]
      %v262 = vld [vmem:[%s1 + $0x2b0] sm:$0xff]
      %v263 = vld [vmem:[%s1 + $0x2b8] sm:$0xff]
      %v264 = vld [vmem:[%s1 + $0x2c0] sm:$0xff]
      %v265 = vld [vmem:[%s1 + $0x2c8] sm:$0xff]
      %v266 = vld [vmem:[%s1 + $0x2d0] sm:$0xff]
      %v267 = vld [vmem:[%s1 + $0x2d8] sm:$0xff]
      %v268 = vld [vmem:[%s1 + $0x2e0] sm:$0xff]
      %v269 = vld [vmem:[%s1 + $0x2e8] sm:$0xff]
      %v270 = vld [vmem:[%s1 + $0x2f0] sm:$0xff]
      %v271 = vld [vmem:[%s1 + $0x2f8] sm:$0xff]
      %v272 = vld [vmem:[%s1 + $0x300] sm:$0xff]
      %v273 = vld [vmem:[%s1 + $0x308] sm:$0xff]
      %v274 = vld [vmem:[%s1 + $0x310] sm:$0xff]
      %v275 = vld [vmem:[%s1 + $0x318] sm:$0xff]
      %v276 = vld [vmem:[%s1 + $0x320] sm:$0xff]
      %v277 = vld [vmem:[%s1 + $0x328] sm:$0xff]
      %v278 = vld [vmem:[%s1 + $0x330] sm:$0xff]
      %v279 = vld [vmem:[%s1 + $0x338] sm:$0xff]
      %v280 = vld [vmem:[%s1 + $0x340] sm:$0xff]
      %v281 = vld [vmem:[%s1 + $0x348] sm:$0xff]
      %v282 = vld [vmem:[%s1 + $0x350] sm:$0xff]
      %v283 = vld [vmem:[%s1 + $0x358] sm:$0xff]
      %v284 = vld [vmem:[%s1 + $0x360] sm:$0xff]
      %v285 = vld [vmem:[%s1 + $0x368] sm:$0xff]
      %v286 = vld [vmem:[%s1 + $0x370] sm:$0xff]
      %v287 = vld [vmem:[%s1 + $0x378] sm:$0xff]
      %v288 = vld [vmem:[%s1 + $0x380] sm:$0xff]
      %v289 = vld [vmem:[%s1 + $0x388] sm:$0xff]
      %v290 = vld [vmem:[%s1 + $0x390] sm:$0xff]
      %v291 = vld [vmem:[%s1 + $0x398] sm:$0xff]
      %v292 = vld [vmem:[%s1 + $0x3a0] sm:$0xff]
      %v293 = vld [vmem:[%s1 + $0x3a8] sm:$0xff]
      %v294 = vld [vmem:[%s1 + $0x3b0] sm:$0xff]
      %v295 = vld [vmem:[%s1 + $0x3b8] sm:$0xff]
      %v296 = vld [vmem:[%s1 + $0x3c0] sm:$0xff]
      %v297 = vld [vmem:[%s1 + $0x3c8] sm:$0xff]
      %v298 = vld [vmem:[%s1 + $0x3d0] sm:$0xff]
      %v299 = vld [vmem:[%s1 + $0x3d8] sm:$0xff]
      %v300 = vld [vmem:[%s1 + $0x3e0] sm:$0xff]
      %v301 = vld [vmem:[%s1 + $0x3e8] sm:$0xff]
      %v302 = vld [vmem:[%s1 + $0x3f0] sm:$0xff]
      %v303 = vld [vmem:[%s1 + $0x3f8] sm:$0xff]
      %v304 = vld [vmem:[%s1 + $0x400] sm:$0xff]
      %v305 = vld [vmem:[%s1 + $0x408] sm:$0xff]
      %v306 = vld [vmem:[%s1 + $0x410] sm:$0xff]
      %v307 = vld [vmem:[%s1 + $0x418] sm:$0xff]
      %v308 = vld [vmem:[%s1 + $0x420] sm:$0xff]
      %v309 = vld [vmem:[%s1 + $0x428] sm:$0xff]
      %v310 = vld [vmem:[%s1 + $0x430] sm:$0xff]
      %v311 = vld [vmem:[%s1 + $0x438] sm:$0xff]
      %v312 = vld [vmem:[%s1 + $0x440] sm:$0xff]
      %v313 = vld [vmem:[%s1 + $0x448] sm:$0xff]
      %v314 = vld [vmem:[%s1 + $0x450] sm:$0xff]
      %v315 = vld [vmem:[%s1 + $0x458] sm:$0xff]
      %v316 = vld [vmem:[%s1 + $0x460] sm:$0xff]
      %v317 = vld [vmem:[%s1 + $0x468] sm:$0xff]
      %v318 = vld [vmem:[%s1 + $0x470] sm:$0xff]
      %v319 = vld [vmem:[%s1 + $0x478] sm:$0xff]
      %v320 = vld [vmem:[%s1 + $0x480] sm:$0xff]
      %v321 = vld [vmem:[%s1 + $0x488] sm:$0xff]
      %v322 = vld [vmem:[%s1 + $0x490] sm:$0xff]
      %v323 = vld [vmem:[%s1 + $0x498] sm:$0xff]
      %v324 = vld [vmem:[%s1 + $0x4a0] sm:$0xff]
      %v325 = vld [vmem:[%s1 + $0x4a8] sm:$0xff]
      %v326 = vld [vmem:[%s1 + $0x4b0] sm:$0xff]
      %v327 = vld [vmem:[%s1 + $0x4b8] sm:$0xff]
      %v328 = vld [vmem:[%s1 + $0x4c0] sm:$0xff]
      %v329 = vld [vmem:[%s1 + $0x4c8] sm:$0xff]
      %v330 = vld [vmem:[%s1 + $0x4d0] sm:$0xff]
      %v331 = vld [vmem:[%s1 + $0x4d8] sm:$0xff]
      %v332 = vld [vmem:[%s1 + $0x4e0] sm:$0xff]
      %v333 = vld [vmem:[%s1 + $0x4e8] sm:$0xff]
      %v334 = vld [vmem:[%s1 + $0x4f0] sm:$0xff]
      %v335 = vld [vmem:[%s1 + $0x4f8] sm:$0xff]
      %v336 = vld [vmem:[%s1 + $0x500] sm:$0xff]
      %v337 = vld [vmem:[%s1 + $0x508] sm:$0xff]
      %v338 = vld [vmem:[%s1 + $0x510] sm:$0xff]
      %v339 = vld [vmem:[%s1 + $0x518] sm:$0xff]
      %v340 = vld [vmem:[%s1 + $0x520] sm:$0xff]
      %v341 = vld [vmem:[%s1 + $0x528] sm:$0xff]
      %v342 = vld [vmem:[%s1 + $0x530] sm:$0xff]
      %v343 = vld [vmem:[%s1 + $0x538] sm:$0xff]
      %v344 = vld [vmem:[%s1 + $0x540] sm:$0xff]
      %v345 = vld [vmem:[%s1 + $0x548] sm:$0xff]
      %v346 = vld [vmem:[%s1 + $0x550] sm:$0xff]
      %v347 = vld [vmem:[%s1 + $0x558] sm:$0xff]
      %v348 = vld [vmem:[%s1 + $0x560] sm:$0xff]
      %v349 = vld [vmem:[%s1 + $0x568] sm:$0xff]
      %v350 = vld [vmem:[%s1 + $0x570] sm:$0xff]
      %v351 = vld [vmem:[%s1 + $0x578] sm:$0xff]
      %v352 = vld [vmem:[%s1 + $0x580] sm:$0xff]
      %v353 = vld [vmem:[%s1 + $0x588] sm:$0xff]
      %v354 = vld [vmem:[%s1 + $0x590] sm:$0xff]
      %v355 = vld [vmem:[%s1 + $0x598] sm:$0xff]
      %v356 = vld [vmem:[%s1 + $0x5a0] sm:$0xff]
      %v357 = vld [vmem:[%s1 + $0x5a8] sm:$0xff]
      %v358 = vld [vmem:[%s1 + $0x5b0] sm:$0xff]
      %v359 = vld [vmem:[%s1 + $0x5b8] sm:$0xff]
      %v360 = vld [vmem:[%s1 + $0x5c0] sm:$0xff]
      %v361 = vld [vmem:[%s1 + $0x5c8] sm:$0xff]
      %v362 = vld [vmem:[%s1 + $0x5d0] sm:$0xff]
      %v363 = vld [vmem:[%s1 + $0x5d8] sm:$0xff]
      %v364 = vld [vmem:[%s1 + $0x5e0] sm:$0xff]
      %v365 = vld [vmem:[%s1 + $0x5e8] sm:$0xff]
      %v366 = vld [vmem:[%s1 + $0x5f0] sm:$0xff]
      %v367 = vld [vmem:[%s1 + $0x5f8] sm:$0xff]
      %v368 = vld [vmem:[%s1 + $0x600] sm:$0xff]
      %v369 = vld [vmem:[%s1 + $0x608] sm:$0xff]
      %v370 = vld [vmem:[%s1 + $0x610] sm:$0xff]
      %v371 = vld [vmem:[%s1 + $0x618] sm:$0xff]
      %v372 = vld [vmem:[%s1 + $0x620] sm:$0xff]
      %v373 = vld [vmem:[%s1 + $0x628] sm:$0xff]
      %v374 = vld [vmem:[%s1 + $0x630] sm:$0xff]
      %v375 = vld [vmem:[%s1 + $0x638] sm:$0xff]
      %v376 = vld [vmem:[%s1 + $0x640] sm:$0xff]
      %v377 = vld [vmem:[%s1 + $0x648] sm:$0xff]
      %v378 = vld [vmem:[%s1 + $0x650] sm:$0xff]
      %v379 = vld [vmem:[%s1 + $0x658] sm:$0xff]
      %v380 = vld [vmem:[%s1 + $0x660] sm:$0xff]
      %v381 = vld [vmem:[%s1 + $0x668] sm:$0xff]
      %v382 = vld [vmem:[%s1 + $0x670] sm:$0xff]
      %v383 = vld [vmem:[%s1 + $0x678] sm:$0xff]
      %v384 = vld [vmem:[%s1 + $0x680] sm:$0xff]
      %v385 = vld [vmem:[%s1 + $0x688] sm:$0xff]
      %v386 = vld [vmem:[%s1 + $0x690] sm:$0xff]
      %v387 = vld [vmem:[%s1 + $0x698] sm:$0xff]
      %v388 = vld [vmem:[%s1 + $0x6a0] sm:$0xff]
      %v389 = vld [vmem:[%s1 + $0x6a8] sm:$0xff]
      %v390 = vld [vmem:[%s1 + $0x6b0] sm:$0xff]
      %v391 = vld [vmem:[%s1 + $0x6b8] sm:$0xff]
      %v392 = vld [vmem:[%s1 + $0x6c0] sm:$0xff]
      %v393 = vld [vmem:[%s1 + $0x6c8] sm:$0xff]
      %v394 = vld [vmem:[%s1 + $0x6d0] sm:$0xff]
      %v395 = vld [vmem:[%s1 + $0x6d8] sm:$0xff]
      %v396 = vld [vmem:[%s1 + $0x6e0] sm:$0xff]
      %v397 = vld [vmem:[%s1 + $0x6e8] sm:$0xff]
      %v398 = vld [vmem:[%s1 + $0x6f0] sm:$0xff]
      %v399 = vld [vmem:[%s1 + $0x6f8] sm:$0xff]
      %v400 = vld [vmem:[%s1 + $0x700] sm:$0xff]
      %v401 = vld [vmem:[%s1 + $0x708] sm:$0xff]
      %v402 = vld [vmem:[%s1 + $0x710] sm:$0xff]
      %v403 = vld [vmem:[%s1 + $0x718] sm:$0xff]
      %v404 = vld [vmem:[%s1 + $0x720] sm:$0xff]
      %v405 = vld [vmem:[%s1 + $0x728] sm:$0xff]
      %v406 = vld [vmem:[%s1 + $0x730] sm:$0xff]
      %v407 = vld [vmem:[%s1 + $0x738] sm:$0xff]
      %v408 = vld [vmem:[%s1 + $0x740] sm:$0xff]
      %v409 = vld [vmem:[%s1 + $0x748] sm:$0xff]
      %v410 = vld [vmem:[%s1 + $0x750] sm:$0xff]
      %v411 = vld [vmem:[%s1 + $0x758] sm:$0xff]
      %v412 = vld [vmem:[%s1 + $0x760] sm:$0xff]
      %v413 = vld [vmem:[%s1 + $0x768] sm:$0xff]
      %v414 = vld [vmem:[%s1 + $0x770] sm:$0xff]
      %v415 = vld [vmem:[%s1 + $0x778] sm:$0xff]
      %v416 = vld [vmem:[%s1 + $0x780] sm:$0xff]
      %v417 = vld [vmem:[%s1 + $0x788] sm:$0xff]
      %v418 = vld [vmem:[%s1 + $0x790] sm:$0xff]
      %v419 = vld [vmem:[%s1 + $0x798] sm:$0xff]
      %v420 = vld [vmem:[%s1 + $0x7a0] sm:$0xff]
      %v421 = vld [vmem:[%s1 + $0x7a8] sm:$0xff]
      %v422 = vld [vmem:[%s1 + $0x7b0] sm:$0xff]
      %v423 = vld [vmem:[%s1 + $0x7b8] sm:$0xff]
      %v424 = vld [vmem:[%s1 + $0x7c0] sm:$0xff]
      %v425 = vld [vmem:[%s1 + $0x7c8] sm:$0xff]
      %v426 = vld [vmem:[%s1 + $0x7d0] sm:$0xff]
      %v427 = vld [vmem:[%s1 + $0x7d8] sm:$0xff]
      %v428 = vld [vmem:[%s1 + $0x7e0] sm:$0xff]
      %v429 = vld [vmem:[%s1 + $0x7e8] sm:$0xff]
      %v430 = vld [vmem:[%s1 + $0x7f0] sm:$0xff]
      %v431 = vld [vmem:[%s1 + $0x7f8] sm:$0xff]
      %v432 = vld [vmem:[%s1 + $0x800] sm:$0xff]
      %v433 = vld [vmem:[%s1 + $0x808] sm:$0xff]
      %v434 = vld [vmem:[%s1 + $0x810] sm:$0xff]
      %v435 = vld [vmem:[%s1 + $0x818] sm:$0xff]
      %v436 = vld [vmem:[%s1 + $0x820] sm:$0xff]
      %v437 = vld [vmem:[%s1 + $0x828] sm:$0xff]
      %v438 = vld [vmem:[%s1 + $0x830] sm:$0xff]
      %v439 = vld [vmem:[%s1 + $0x838] sm:$0xff]
      %v440 = vld [vmem:[%s1 + $0x840] sm:$0xff]
      %v441 = vld [vmem:[%s1 + $0x848] sm:$0xff]
      %v442 = vld [vmem:[%s1 + $0x850] sm:$0xff]
      %v443 = vld [vmem:[%s1 + $0x858] sm:$0xff]
      %v444 = vld [vmem:[%s1 + $0x860] sm:$0xff]
      %v445 = vld [vmem:[%s1 + $0x868] sm:$0xff]
      %v446 = vld [vmem:[%s1 + $0x870] sm:$0xff]
      %v447 = vld [vmem:[%s1 + $0x878] sm:$0xff]
      %v448 = vld [vmem:[%s1 + $0x880] sm:$0xff]
      %v449 = vld [vmem:[%s1 + $0x888] sm:$0xff]
      %v450 = vld [vmem:[%s1 + $0x890] sm:$0xff]
      %v451 = vld [vmem:[%s1 + $0x898] sm:$0xff]
      %v452 = vld [vmem:[%s1 + $0x8a0] sm:$0xff]
      %v453 = vld [vmem:[%s1 + $0x8a8] sm:$0xff]
      %v454 = vld [vmem:[%s1 + $0x8b0] sm:$0xff]
      %v455 = vld [vmem:[%s1 + $0x8b8] sm:$0xff]
      %v456 = vld [vmem:[%s1 + $0x8c0] sm:$0xff]
      %v457 = vld [vmem:[%s1 + $0x8c8] sm:$0xff]
      %v458 = vld [vmem:[%s1 + $0x8d0] sm:$0xff]
      %v459 = vld [vmem:[%s1 + $0x8d8] sm:$0xff]
      %v460 = vld [vmem:[%s1 + $0x8e0] sm:$0xff]
      %v461 = vld [vmem:[%s1 + $0x8e8] sm:$0xff]
      %v462 = vld [vmem:[%s1 + $0x8f0] sm:$0xff]
      %v463 = vld [vmem:[%s1 + $0x8f8] sm:$0xff]
      %v464 = vld [vmem:[%s1 + $0x900] sm:$0xff]
      %v465 = vld [vmem:[%s1 + $0x908] sm:$0xff]
      %v466 = vld [vmem:[%s1 + $0x910] sm:$0xff]
      %v467 = vld [vmem:[%s1 + $0x918] sm:$0xff]
      %v468 = vld [vmem:[%s1 + $0x920] sm:$0xff]
      %v469 = vld [vmem:[%s1 + $0x928] sm:$0xff]
      %v470 = vld [vmem:[%s1 + $0x930] sm:$0xff]
      %v471 = vld [vmem:[%s1 + $0x938] sm:$0xff]
      %v472 = vld [vmem:[%s1 + $0x940] sm:$0xff]
      %v473 = vld [vmem:[%s1 + $0x948] sm:$0xff]
      %v474 = vld [vmem:[%s1 + $0x950] sm:$0xff]
      %v475 = vld [vmem:[%s1 + $0x958] sm:$0xff]
      %v476 = vld [vmem:[%s1 + $0x960] sm:$0xff]
      %v477 = vld [vmem:[%s1 + $0x968] sm:$0xff]
      %v478 = vld [vmem:[%s1 + $0x970] sm:$0xff]
      %v479 = vld [vmem:[%s1 + $0x978] sm:$0xff]
      %v480 = vld [vmem:[%s1 + $0x980] sm:$0xff]
      %v481 = vld [vmem:[%s1 + $0x988] sm:$0xff]
      %v482 = vld [vmem:[%s1 + $0x990] sm:$0xff]
      %v483 = vld [vmem:[%s1 + $0x998] sm:$0xff]
      %v484 = vld [vmem:[%s1 + $0x9a0] sm:$0xff]
      %v485 = vld [vmem:[%s1 + $0x9a8] sm:$0xff]
      %v486 = vld [vmem:[%s1 + $0x9b0] sm:$0xff]
      %v487 = vld [vmem:[%s1 + $0x9b8] sm:$0xff]
      %v488 = vld [vmem:[%s1 + $0x9c0] sm:$0xff]
      %v489 = vld [vmem:[%s1 + $0x9c8] sm:$0xff]
      %v490 = vld [vmem:[%s1 + $0x9d0] sm:$0xff]
      %v491 = vld [vmem:[%s1 + $0x9d8] sm:$0xff]
      %v492 = vld [vmem:[%s1 + $0x9e0] sm:$0xff]
      %v493 = vld [vmem:[%s1 + $0x9e8] sm:$0xff]
      %v494 = vld [vmem:[%s1 + $0x9f0] sm:$0xff]
      %v495 = vld [vmem:[%s1 + $0x9f8] sm:$0xff]
      %v496 = vld [vmem:[%s1 + $0xa00] sm:$0xff]
      %v497 = vld [vmem:[%s1 + $0xa08] sm:$0xff]
      %v498 = vld [vmem:[%s1 + $0xa10] sm:$0xff]
      %v499 = vld [vmem:[%s1 + $0xa18] sm:$0xff]
      %v500 = vld [vmem:[%s1 + $0xa20] sm:$0xff]
      %v501 = vld [vmem:[%s1 + $0xa28] sm:$0xff]
      %v502 = vld [vmem:[%s1 + $0xa30] sm:$0xff]
      %v503 = vld [vmem:[%s1 + $0xa38] sm:$0xff]
      %v504 = vld [vmem:[%s1 + $0xa40] sm:$0xff]
      %v505 = vld [vmem:[%s1 + $0xa48] sm:$0xff]
      %v506 = vld [vmem:[%s1 + $0xa50] sm:$0xff]
      %v507 = vld [vmem:[%s1 + $0xa58] sm:$0xff]
      %v508 = vld [vmem:[%s1 + $0xa60] sm:$0xff]
      %v509 = vld [vmem:[%s1 + $0xa68] sm:$0xff]
      %v510 = vld [vmem:[%s1 + $0xa70] sm:$0xff]
      %v511 = vld [vmem:[%s1 + $0xa78] sm:$0xff]
      %v512 = vld [vmem:[%s1 + $0xa80] sm:$0xff]
      %v513 = vld [vmem:[%s1 + $0xa88] sm:$0xff]
      %v514 = vld [vmem:[%s1 + $0xa90] sm:$0xff]
      %v515 = vld [vmem:[%s1 + $0xa98] sm:$0xff]
      %v516 = vld [vmem:[%s1 + $0xaa0] sm:$0xff]
      %v517 = vld [vmem:[%s1 + $0xaa8] sm:$0xff]
      %v518 = vld [vmem:[%s1 + $0xab0] sm:$0xff]
      %v519 = vld [vmem:[%s1 + $0xab8] sm:$0xff]
      %v520 = vld [vmem:[%s1 + $0xac0] sm:$0xff]
      %v521 = vld [vmem:[%s1 + $0xac8] sm:$0xff]
      %v522 = vld [vmem:[%s1 + $0xad0] sm:$0xff]
      %v523 = vld [vmem:[%s1 + $0xad8] sm:$0xff]
      %v524 = vld [vmem:[%s1 + $0xae0] sm:$0xff]
      %v525 = vld [vmem:[%s1 + $0xae8] sm:$0xff]
      %v526 = vld [vmem:[%s1 + $0xaf0] sm:$0xff]
      %v527 = vld [vmem:[%s1 + $0xaf8] sm:$0xff]
      %v528 = vld [vmem:[%s1 + $0xb00] sm:$0xff]
      %v529 = vld [vmem:[%s1 + $0xb08] sm:$0xff]
      %v530 = vld [vmem:[%s1 + $0xb10] sm:$0xff]
      %v531 = vld [vmem:[%s1 + $0xb18] sm:$0xff]
      %v532 = vld [vmem:[%s1 + $0xb20] sm:$0xff]
      %v533 = vld [vmem:[%s1 + $0xb28] sm:$0xff]
      %v534 = vld [vmem:[%s1 + $0xb30] sm:$0xff]
      %v535 = vld [vmem:[%s1 + $0xb38] sm:$0xff]
      %v536 = vld [vmem:[%s1 + $0xb40] sm:$0xff]
      %v537 = vld [vmem:[%s1 + $0xb48] sm:$0xff]
      %v538 = vld [vmem:[%s1 + $0xb50] sm:$0xff]
      %v539 = vld [vmem:[%s1 + $0xb58] sm:$0xff]
      %v540 = vld [vmem:[%s1 + $0xb60] sm:$0xff]
      %v541 = vld [vmem:[%s1 + $0xb68] sm:$0xff]
      %v542 = vld [vmem:[%s1 + $0xb70] sm:$0xff]
      %v543 = vld [vmem:[%s1 + $0xb78] sm:$0xff]
      %v544 = vld [vmem:[%s1 + $0xb80] sm:$0xff]
      %v545 = vld [vmem:[%s1 + $0xb88] sm:$0xff]
      %v546 = vld [vmem:[%s1 + $0xb90] sm:$0xff]
      %v547 = vld [vmem:[%s1 + $0xb98] sm:$0xff]
      %v548 = vld [vmem:[%s1 + $0xba0] sm:$0xff]
      %v549 = vld [vmem:[%s1 + $0xba8] sm:$0xff]
      %v550 = vld [vmem:[%s1 + $0xbb0] sm:$0xff]
      %v551 = vld [vmem:[%s1 + $0xbb8] sm:$0xff]
      %v552 = vld [vmem:[%s1 + $0xbc0] sm:$0xff]
      %v553 = vld [vmem:[%s1 + $0xbc8] sm:$0xff]
      %v554 = vld [vmem:[%s1 + $0xbd0] sm:$0xff]
      %v555 = vld [vmem:[%s1 + $0xbd8] sm:$0xff]
      %v556 = vld [vmem:[%s1 + $0xbe0] sm:$0xff]
      %v557 = vld [vmem:[%s1 + $0xbe8] sm:$0xff]
      %v558 = vld [vmem:[%s1 + $0xbf0] sm:$0xff]
      %v559 = vld [vmem:[%s1 + $0xbf8] sm:$0xff]
      %v560 = vld [vmem:[%s1 + $0xc00] sm:$0xff]
      %v561 = vld [vmem:[%s1 + $0xc08] sm:$0xff]
      %v562 = vld [vmem:[%s1 + $0xc10] sm:$0xff]
      %v563 = vld [vmem:[%s1 + $0xc18] sm:$0xff]
      %v564 = vld [vmem:[%s1 + $0xc20] sm:$0xff]
      %v565 = vld [vmem:[%s1 + $0xc28] sm:$0xff]
      %v566 = vld [vmem:[%s1 + $0xc30] sm:$0xff]
      %v567 = vld [vmem:[%s1 + $0xc38] sm:$0xff]
      %v568 = vld [vmem:[%s1 + $0xc40] sm:$0xff]
      %v569 = vld [vmem:[%s1 + $0xc48] sm:$0xff]
      %v570 = vld [vmem:[%s1 + $0xc50] sm:$0xff]
      %v571 = vld [vmem:[%s1 + $0xc58] sm:$0xff]
      %v572 = vld [vmem:[%s1 + $0xc60] sm:$0xff]
      %v573 = vld [vmem:[%s1 + $0xc68] sm:$0xff]
      %v574 = vld [vmem:[%s1 + $0xc70] sm:$0xff]
      %v575 = vld [vmem:[%s1 + $0xc78] sm:$0xff]
      %v576 = vld [vmem:[%s1 + $0xc80] sm:$0xff]
      %v577 = vld [vmem:[%s1 + $0xc88] sm:$0xff]
      %v578 = vld [vmem:[%s1 + $0xc90] sm:$0xff]
      %v579 = vld [vmem:[%s1 + $0xc98] sm:$0xff]
      %v580 = vld [vmem:[%s1 + $0xca0] sm:$0xff]
      %v581 = vld [vmem:[%s1 + $0xca8] sm:$0xff]
      %v582 = vld [vmem:[%s1 + $0xcb0] sm:$0xff]
      %v583 = vld [vmem:[%s1 + $0xcb8] sm:$0xff]
      %v584 = vld [vmem:[%s1 + $0xcc0] sm:$0xff]
      %v585 = vld [vmem:[%s1 + $0xcc8] sm:$0xff]
      %v586 = vld [vmem:[%s1 + $0xcd0] sm:$0xff]
      %v587 = vld [vmem:[%s1 + $0xcd8] sm:$0xff]
      %v588 = vld [vmem:[%s1 + $0xce0] sm:$0xff]
      %v589 = vld [vmem:[%s1 + $0xce8] sm:$0xff]
      %v590 = vld [vmem:[%s1 + $0xcf0] sm:$0xff]
      %v591 = vld [vmem:[%s1 + $0xcf8] sm:$0xff]
      %v592 = vld [vmem:[%s1 + $0xd00] sm:$0xff]
      %v593 = vld [vmem:[%s1 + $0xd08] sm:$0xff]
      %v594 = vld [vmem:[%s1 + $0xd10] sm:$0xff]
      %v595 = vld [vmem:[%s1 + $0xd18] sm:$0xff]
      %v596 = vld [vmem:[%s1 + $0xd20] sm:$0xff]
      %v597 = vld [vmem:[%s1 + $0xd28] sm:$0xff]
      %v598 = vld [vmem:[%s1 + $0xd30] sm:$0xff]
      %v599 = vld [vmem:[%s1 + $0xd38] sm:$0xff]
      %v600 = vld [vmem:[%s1 + $0xd40] sm:$0xff]
      %v601 = vld [vmem:[%s1 + $0xd48] sm:$0xff]
      %v602 = vld [vmem:[%s1 + $0xd50] sm:$0xff]
      %v603 = vld [vmem:[%s1 + $0xd58] sm:$0xff]
      %v604 = vld [vmem:[%s1 + $0xd60] sm:$0xff]
      %v605 = vld [vmem:[%s1 + $0xd68] sm:$0xff]
      %v606 = vld [vmem:[%s1 + $0xd70] sm:$0xff]
      %v607 = vld [vmem:[%s1 + $0xd78] sm:$0xff]
      %v608 = vld [vmem:[%s1 + $0xd80] sm:$0xff]
      %v609 = vld [vmem:[%s1 + $0xd88] sm:$0xff]
      %v610 = vld [vmem:[%s1 + $0xd90] sm:$0xff]
      %v611 = vld [vmem:[%s1 + $0xd98] sm:$0xff]
      %v612 = vld [vmem:[%s1 + $0xda0] sm:$0xff]
      %v613 = vld [vmem:[%s1 + $0xda8] sm:$0xff]
      %v614 = vld [vmem:[%s1 + $0xdb0] sm:$0xff]
      %v615 = vld [vmem:[%s1 + $0xdb8] sm:$0xff]
      %v616 = vld [vmem:[%s1 + $0xdc0] sm:$0xff]
      %v617 = vld [vmem:[%s1 + $0xdc8] sm:$0xff]
      %v618 = vld [vmem:[%s1 + $0xdd0] sm:$0xff]
      %v619 = vld [vmem:[%s1 + $0xdd8] sm:$0xff]
      %v620 = vld [vmem:[%s1 + $0xde0] sm:$0xff]
      %v621 = vld [vmem:[%s1 + $0xde8] sm:$0xff]
      %v622 = vld [vmem:[%s1 + $0xdf0] sm:$0xff]
      %v623 = vld [vmem:[%s1 + $0xdf8] sm:$0xff]
      %v624 = vld [vmem:[%s1 + $0xe00] sm:$0xff]
      %v625 = vld [vmem:[%s1 + $0xe08] sm:$0xff]
      %v626 = vld [vmem:[%s1 + $0xe10] sm:$0xff]
      %v627 = vld [vmem:[%s1 + $0xe18] sm:$0xff]
      %v628 = vld [vmem:[%s1 + $0xe20] sm:$0xff]
      %v629 = vld [vmem:[%s1 + $0xe28] sm:$0xff]
      %v630 = vld [vmem:[%s1 + $0xe30] sm:$0xff]
      %v631 = vld [vmem:[%s1 + $0xe38] sm:$0xff]
      %v632 = vld [vmem:[%s1 + $0xe40] sm:$0xff]
      %v633 = vld [vmem:[%s1 + $0xe48] sm:$0xff]
      %v634 = vld [vmem:[%s1 + $0xe50] sm:$0xff]
      %v635 = vld [vmem:[%s1 + $0xe58] sm:$0xff]
      %v636 = vld [vmem:[%s1 + $0xe60] sm:$0xff]
      %v637 = vld [vmem:[%s1 + $0xe68] sm:$0xff]
      %v638 = vld [vmem:[%s1 + $0xe70] sm:$0xff]
      %v639 = vld [vmem:[%s1 + $0xe78] sm:$0xff]
      %v640 = vld [vmem:[%s1 + $0xe80] sm:$0xff]
      %v641 = vld [vmem:[%s1 + $0xe88] sm:$0xff]
      %v642 = vld [vmem:[%s1 + $0xe90] sm:$0xff]
      %v643 = vld [vmem:[%s1 + $0xe98] sm:$0xff]
      %v644 = vld [vmem:[%s1 + $0xea0] sm:$0xff]
      %v645 = vld [vmem:[%s1 + $0xea8] sm:$0xff]
      %v646 = vld [vmem:[%s1 + $0xeb0] sm:$0xff]
      %v647 = vld [vmem:[%s1 + $0xeb8] sm:$0xff]
      %v648 = vld [vmem:[%s1 + $0xec0] sm:$0xff]
      %v649 = vld [vmem:[%s1 + $0xec8] sm:$0xff]
      %v650 = vld [vmem:[%s1 + $0xed0] sm:$0xff]
      %v651 = vld [vmem:[%s1 + $0xed8] sm:$0xff]
      %v652 = vld [vmem:[%s1 + $0xee0] sm:$0xff]
      %v653 = vld [vmem:[%s1 + $0xee8] sm:$0xff]
      %v654 = vld [vmem:[%s1 + $0xef0] sm:$0xff]
      %v655 = vld [vmem:[%s1 + $0xef8] sm:$0xff]
      %v656 = vld [vmem:[%s1 + $0xf00] sm:$0xff]
      %v657 = vld [vmem:[%s1 + $0xf08] sm:$0xff]
      %v658 = vld [vmem:[%s1 + $0xf10] sm:$0xff]
      %v659 = vld [vmem:[%s1 + $0xf18] sm:$0xff]
      %v660 = vld [vmem:[%s1 + $0xf20] sm:$0xff]
      %v661 = vld [vmem:[%s1 + $0xf28] sm:$0xff]
      %v662 = vld [vmem:[%s1 + $0xf30] sm:$0xff]
      %v663 = vld [vmem:[%s1 + $0xf38] sm:$0xff]
      %v664 = vld [vmem:[%s1 + $0xf40] sm:$0xff]
      %v665 = vld [vmem:[%s1 + $0xf48] sm:$0xff]
      %v666 = vld [vmem:[%s1 + $0xf50] sm:$0xff]
      %v667 = vld [vmem:[%s1 + $0xf58] sm:$0xff]
      %v668 = vld [vmem:[%s1 + $0xf60] sm:$0xff]
      %v669 = vld [vmem:[%s1 + $0xf68] sm:$0xff]
      %v670 = vld [vmem:[%s1 + $0xf70] sm:$0xff]
      %v671 = vld [vmem:[%s1 + $0xf78] sm:$0xff]
      %v672 = vld [vmem:[%s1 + $0xf80] sm:$0xff]
      %v673 = vld [vmem:[%s1 + $0xf88] sm:$0xff]
      %v674 = vld [vmem:[%s1 + $0xf90] sm:$0xff]
      %v675 = vld [vmem:[%s1 + $0xf98] sm:$0xff]
      %v676 = vld [vmem:[%s1 + $0xfa0] sm:$0xff]
      %v677 = vld [vmem:[%s1 + $0xfa8] sm:$0xff]
      %v678 = vld [vmem:[%s1 + $0xfb0] sm:$0xff]
      %v679 = vld [vmem:[%s1 + $0xfb8] sm:$0xff]
      %v680 = vld [vmem:[%s1 + $0xfc0] sm:$0xff]
      %v681 = vld [vmem:[%s1 + $0xfc8] sm:$0xff]
      %v682 = vld [vmem:[%s1 + $0xfd0] sm:$0xff]
      %v683 = vld [vmem:[%s1 + $0xfd8] sm:$0xff]
      %v684 = vld [vmem:[%s1 + $0xfe0] sm:$0xff]
      %v685 = vld [vmem:[%s1 + $0xfe8] sm:$0xff]
      %v686 = vld [vmem:[%s1 + $0xff0] sm:$0xff]
      %v687 = vld [vmem:[%s1 + $0xff8] sm:$0xff]
      %v688 = vld [vmem:[%s1 + $0x1000] sm:$0xff]
      %v689 = vld [vmem:[%s1 + $0x1008] sm:$0xff]
      %v690 = vld [vmem:[%s1 + $0x1010] sm:$0xff]
      %v691 = vld [vmem:[%s1 + $0x1018] sm:$0xff]
      %v692 = vld [vmem:[%s1 + $0x1020] sm:$0xff]
      %v693 = vld [vmem:[%s1 + $0x1028] sm:$0xff]
      %v694 = vld [vmem:[%s1 + $0x1030] sm:$0xff]
      %v695 = vld [vmem:[%s1 + $0x1038] sm:$0xff]
      %v696 = vld [vmem:[%s1 + $0x1040] sm:$0xff]
      %v697 = vld [vmem:[%s1 + $0x1048] sm:$0xff]
      %v698 = vld [vmem:[%s1 + $0x1050] sm:$0xff]
      %v699 = vld [vmem:[%s1 + $0x1058] sm:$0xff]
      %v700 = vld [vmem:[%s1 + $0x1060] sm:$0xff]
      %v701 = vld [vmem:[%s1 + $0x1068] sm:$0xff]
      %v702 = vld [vmem:[%s1 + $0x1070] sm:$0xff]
      %v703 = vld [vmem:[%s1 + $0x1078] sm:$0xff]
      %v704 = vld [vmem:[%s1 + $0x1080] sm:$0xff]
      %v705 = vld [vmem:[%s1 + $0x1088] sm:$0xff]
      %v706 = vld [vmem:[%s1 + $0x1090] sm:$0xff]
      %v707 = vld [vmem:[%s1 + $0x1098] sm:$0xff]
      %v708 = vld [vmem:[%s1 + $0x10a0] sm:$0xff]
      %v709 = vld [vmem:[%s1 + $0x10a8] sm:$0xff]
      %v710 = vld [vmem:[%s1 + $0x10b0] sm:$0xff]
      %v711 = vld [vmem:[%s1 + $0x10b8] sm:$0xff]
      %v712 = vld [vmem:[%s1 + $0x10c0] sm:$0xff]
      %v713 = vld [vmem:[%s1 + $0x10c8] sm:$0xff]
      %v714 = vld [vmem:[%s1 + $0x10d0] sm:$0xff]
      %v715 = vld [vmem:[%s1 + $0x10d8] sm:$0xff]
      %v716 = vld [vmem:[%s1 + $0x10e0] sm:$0xff]
      %v717 = vld [vmem:[%s1 + $0x10e8] sm:$0xff]
      %v718 = vld [vmem:[%s1 + $0x10f0] sm:$0xff]
      %v719 = vld [vmem:[%s1 + $0x10f8] sm:$0xff]
      %v720 = vld [vmem:[%s1 + $0x1100] sm:$0xff]
      %v721 = vld [vmem:[%s1 + $0x1108] sm:$0xff]
      %v722 = vld [vmem:[%s1 + $0x1110] sm:$0xff]
      %v723 = vld [vmem:[%s1 + $0x1118] sm:$0xff]
      %v724 = vld [vmem:[%s1 + $0x1120] sm:$0xff]
      %v725 = vld [vmem:[%s1 + $0x1128] sm:$0xff]
      %v726 = vld [vmem:[%s1 + $0x1130] sm:$0xff]
      %v727 = vld [vmem:[%s1 + $0x1138] sm:$0xff]
      %v728 = vld [vmem:[%s1 + $0x1140] sm:$0xff]
      %v729 = vld [vmem:[%s1 + $0x1148] sm:$0xff]
      %v730 = vld [vmem:[%s1 + $0x1150] sm:$0xff]
      %v731 = vld [vmem:[%s1 + $0x1158] sm:$0xff]
      %v732 = vld [vmem:[%s1 + $0x1160] sm:$0xff]
      %v733 = vld [vmem:[%s1 + $0x1168] sm:$0xff]
      %v734 = vld [vmem:[%s1 + $0x1170] sm:$0xff]
      %v735 = vld [vmem:[%s1 + $0x1178] sm:$0xff]
      %v736 = vld [vmem:[%s1 + $0x1180] sm:$0xff]
      %v737 = vld [vmem:[%s1 + $0x1188] sm:$0xff]
      %v738 = vld [vmem:[%s1 + $0x1190] sm:$0xff]
      %v739 = vld [vmem:[%s1 + $0x1198] sm:$0xff]
      %v740 = vld [vmem:[%s1 + $0x11a0] sm:$0xff]
      %v741 = vld [vmem:[%s1 + $0x11a8] sm:$0xff]
      %v742 = vld [vmem:[%s1 + $0x11b0] sm:$0xff]
      %v743 = vld [vmem:[%s1 + $0x11b8] sm:$0xff]
      %v744 = vld [vmem:[%s1 + $0x11c0] sm:$0xff]
      %v745 = vld [vmem:[%s1 + $0x11c8] sm:$0xff]
      %v746 = vld [vmem:[%s1 + $0x11d0] sm:$0xff]
      %v747 = vld [vmem:[%s1 + $0x11d8] sm:$0xff]
      %v748 = vld [vmem:[%s1 + $0x11e0] sm:$0xff]
      %v749 = vld [vmem:[%s1 + $0x11e8] sm:$0xff]
      %v750 = vld [vmem:[%s1 + $0x11f0] sm:$0xff]
      %v751 = vld [vmem:[%s1 + $0x11f8] sm:$0xff]
      %v752 = vld [vmem:[%s2] sm:$0xf]
      %v754 = vlaneseq
      %v755 = vshrl.u32 %v754, 7
      %v756 = vsub.s32 0, %v755
      %v757 = vrot.slane %v752, %v756
      %v758 = vlaneseq
      %v759 = vshrl.u32 %v758, 7
      %v760 = vsub.s32 1, %v759
      %v761 = vrot.slane %v752, %v760
      %v762 = vlaneseq
      %v763 = vshrl.u32 %v762, 7
      %v764 = vsub.s32 2, %v763
      %v765 = vrot.slane %v752, %v764
      %v766 = vlaneseq
      %v767 = vshrl.u32 %v766, 7
      %v768 = vsub.s32 3, %v767
      %v769 = vrot.slane %v752, %v768
      %v779 = vcombine.high %v171, %v171
      %v781 = vunpack.c.l.s4 1983009808
      %v782 = vunpack.c.0.s8 %v781
      %v783 = vlaneseq
      %v784 = vshrl.u32 %v783, 7
      %v785 = vsub.s32 %v782, %v784
      %v786 = vrot.slane %v171, %v785
      %v788 = vunpack.c.l.s4 1983009808
      %v789 = vunpack.c.0.s8 %v788
      %v790 = vlaneseq
      %v791 = vshrl.u32 %v790, 7
      %v792 = vsub.s32 %v789, %v791
      %v793 = vrot.slane %v779, %v792
      %v794 = vcombine.high %v786, %v786
      %v795 = vcombine.high %v793, %v793
      %v796 = vcombine.high %v172, %v172
      %v798 = vunpack.c.l.s4 1983009808
      %v799 = vunpack.c.0.s8 %v798
      %v800 = vlaneseq
      %v801 = vshrl.u32 %v800, 7
      %v802 = vsub.s32 %v799, %v801
      %v803 = vrot.slane %v172, %v802
      %v805 = vunpack.c.l.s4 1983009808
      %v806 = vunpack.c.0.s8 %v805
      %v807 = vlaneseq
      %v808 = vshrl.u32 %v807, 7
      %v809 = vsub.s32 %v806, %v808
      %v810 = vrot.slane %v796, %v809
      %v811 = vcombine.high %v803, %v803
      %v812 = vcombine.high %v810, %v810
      %v813 = vcombine.high %v173, %v173
      %v815 = vunpack.c.l.s4 1983009808
      %v816 = vunpack.c.0.s8 %v815
      %v817 = vlaneseq
      %v818 = vshrl.u32 %v817, 7
      %v819 = vsub.s32 %v816, %v818
      %v820 = vrot.slane %v173, %v819
      %v822 = vunpack.c.l.s4 1983009808
      %v823 = vunpack.c.0.s8 %v822
      %v824 = vlaneseq
      %v825 = vshrl.u32 %v824, 7
      %v826 = vsub.s32 %v823, %v825
      %v827 = vrot.slane %v813, %v826
      %v828 = vcombine.high %v820, %v820
      %v829 = vcombine.high %v827, %v827
      %v830 = vcombine.high %v174, %v174
      %v832 = vunpack.c.l.s4 1983009808
      %v833 = vunpack.c.0.s8 %v832
      %v834 = vlaneseq
      %v835 = vshrl.u32 %v834, 7
      %v836 = vsub.s32 %v833, %v835
      %v837 = vrot.slane %v174, %v836
      %v839 = vunpack.c.l.s4 1983009808
      %v840 = vunpack.c.0.s8 %v839
      %v841 = vlaneseq
      %v842 = vshrl.u32 %v841, 7
      %v843 = vsub.s32 %v840, %v842
      %v844 = vrot.slane %v830, %v843
      %v845 = vcombine.high %v837, %v837
      %v846 = vcombine.high %v844, %v844
      %v848 = vunpack.c.l.s4 1983009808
      %v849 = vunpack.c.0.s8 %v848
      %v850 = vlaneseq
      %v851 = vshrl.u32 %v850, 7
      %v852 = vsub.s32 %v849, %v851
      %v853 = vrot.slane %v175, %v852
      %v854 = vcombine.high %v853, %v853
      %v1449 = vunpack.c.l.b16 %v176
      %v1450 = vunpack.c.h.b16 %v176
      %v1451 = vunpack.c.l.b16 %v177
      %v1452 = vunpack.c.h.b16 %v177
      %v1453 = vunpack.c.l.b16 %v178
      %v1454 = vunpack.c.h.b16 %v178
      %v1455 = vunpack.c.l.b16 %v179
      %v1456 = vunpack.c.h.b16 %v179
      %v1457 = vunpack.c.l.b16 %v180
      %v1458 = vunpack.c.h.b16 %v180
      %v1459 = vunpack.c.l.b16 %v181
      %v1460 = vunpack.c.h.b16 %v181
      %v1461 = vunpack.c.l.b16 %v182
      %v1462 = vunpack.c.h.b16 %v182
      %v1463 = vunpack.c.l.b16 %v183
      %v1464 = vunpack.c.h.b16 %v183
      %v1465 = vunpack.c.l.b16 %v184
      %v1466 = vunpack.c.h.b16 %v184
      %v1467 = vunpack.c.l.b16 %v185
      %v1468 = vunpack.c.h.b16 %v185
      %v1469 = vunpack.c.l.b16 %v186
      %v1470 = vunpack.c.h.b16 %v186
      %v1471 = vunpack.c.l.b16 %v187
      %v1472 = vunpack.c.h.b16 %v187
      %v1473 = vunpack.c.l.b16 %v188
      %v1474 = vunpack.c.h.b16 %v188
      %v1475 = vunpack.c.l.b16 %v189
      %v1476 = vunpack.c.h.b16 %v189
      %v1477 = vunpack.c.l.b16 %v190
      %v1478 = vunpack.c.h.b16 %v190
      %v1479 = vunpack.c.l.b16 %v191
      %v1480 = vunpack.c.h.b16 %v191
      %v1481 = vunpack.c.l.b16 %v192
      %v1482 = vunpack.c.h.b16 %v192
      %v1483 = vunpack.c.l.b16 %v193
      %v1484 = vunpack.c.h.b16 %v193
      %v1485 = vunpack.c.l.b16 %v194
      %v1486 = vunpack.c.h.b16 %v194
      %v1487 = vunpack.c.l.b16 %v195
      %v1488 = vunpack.c.h.b16 %v195
      %v1489 = vunpack.c.l.b16 %v196
      %v1490 = vunpack.c.h.b16 %v196
      %v1491 = vunpack.c.l.b16 %v197
      %v1492 = vunpack.c.h.b16 %v197
      %v1493 = vunpack.c.l.b16 %v198
      %v1494 = vunpack.c.h.b16 %v198
      %v1495 = vunpack.c.l.b16 %v199
      %v1496 = vunpack.c.h.b16 %v199
      %v1497 = vunpack.c.l.b16 %v200
      %v1498 = vunpack.c.h.b16 %v200
      %v1499 = vunpack.c.l.b16 %v201
      %v1500 = vunpack.c.h.b16 %v201
      %v1501 = vunpack.c.l.b16 %v202
      %v1502 = vunpack.c.h.b16 %v202
      %v1503 = vunpack.c.l.b16 %v203
      %v1504 = vunpack.c.h.b16 %v203
      %v1505 = vunpack.c.l.b16 %v204
      %v1506 = vunpack.c.h.b16 %v204
      %v1507 = vunpack.c.l.b16 %v205
      %v1508 = vunpack.c.h.b16 %v205
      %v1509 = vunpack.c.l.b16 %v206
      %v1510 = vunpack.c.h.b16 %v206
      %v1511 = vunpack.c.l.b16 %v207
      %v1512 = vunpack.c.h.b16 %v207
      %v1513 = vunpack.c.l.b16 %v208
      %v1514 = vunpack.c.h.b16 %v208
      %v1515 = vunpack.c.l.b16 %v209
      %v1516 = vunpack.c.h.b16 %v209
      %v1517 = vunpack.c.l.b16 %v210
      %v1518 = vunpack.c.h.b16 %v210
      %v1519 = vunpack.c.l.b16 %v211
      %v1520 = vunpack.c.h.b16 %v211
      %v1521 = vunpack.c.l.b16 %v212
      %v1522 = vunpack.c.h.b16 %v212
      %v1523 = vunpack.c.l.b16 %v213
      %v1524 = vunpack.c.h.b16 %v213
      %v1525 = vunpack.c.l.b16 %v214
      %v1526 = vunpack.c.h.b16 %v214
      %v1527 = vunpack.c.l.b16 %v215
      %v1528 = vunpack.c.h.b16 %v215
      %v1529 = vunpack.c.l.b16 %v216
      %v1530 = vunpack.c.h.b16 %v216
      %v1531 = vunpack.c.l.b16 %v217
      %v1532 = vunpack.c.h.b16 %v217
      %v1533 = vunpack.c.l.b16 %v218
      %v1534 = vunpack.c.h.b16 %v218
      %v1535 = vunpack.c.l.b16 %v219
      %v1536 = vunpack.c.h.b16 %v219
      %v1537 = vunpack.c.l.b16 %v220
      %v1538 = vunpack.c.h.b16 %v220
      %v1539 = vunpack.c.l.b16 %v221
      %v1540 = vunpack.c.h.b16 %v221
      %v1541 = vunpack.c.l.b16 %v222
      %v1542 = vunpack.c.h.b16 %v222
      %v1543 = vunpack.c.l.b16 %v223
      %v1544 = vunpack.c.h.b16 %v223
      %v1545 = vunpack.c.l.b16 %v224
      %v1546 = vunpack.c.h.b16 %v224
      %v1547 = vunpack.c.l.b16 %v225
      %v1548 = vunpack.c.h.b16 %v225
      %v1549 = vunpack.c.l.b16 %v226
      %v1550 = vunpack.c.h.b16 %v226
      %v1551 = vunpack.c.l.b16 %v227
      %v1552 = vunpack.c.h.b16 %v227
      %v1553 = vunpack.c.l.b16 %v228
      %v1554 = vunpack.c.h.b16 %v228
      %v1555 = vunpack.c.l.b16 %v229
      %v1556 = vunpack.c.h.b16 %v229
      %v1557 = vunpack.c.l.b16 %v230
      %v1558 = vunpack.c.h.b16 %v230
      %v1559 = vunpack.c.l.b16 %v231
      %v1560 = vunpack.c.h.b16 %v231
      %v1561 = vunpack.c.l.b16 %v232
      %v1562 = vunpack.c.h.b16 %v232
      %v1563 = vunpack.c.l.b16 %v233
      %v1564 = vunpack.c.h.b16 %v233
      %v1565 = vunpack.c.l.b16 %v234
      %v1566 = vunpack.c.h.b16 %v234
      %v1567 = vunpack.c.l.b16 %v235
      %v1568 = vunpack.c.h.b16 %v235
      %v1569 = vunpack.c.l.b16 %v236
      %v1570 = vunpack.c.h.b16 %v236
      %v1571 = vunpack.c.l.b16 %v237
      %v1572 = vunpack.c.h.b16 %v237
      %v1573 = vunpack.c.l.b16 %v238
      %v1574 = vunpack.c.h.b16 %v238
      %v1575 = vunpack.c.l.b16 %v239
      %v1576 = vunpack.c.h.b16 %v239
      %v1577 = vunpack.c.l.b16 %v240
      %v1578 = vunpack.c.h.b16 %v240
      %v1579 = vunpack.c.l.b16 %v241
      %v1580 = vunpack.c.h.b16 %v241
      %v1581 = vunpack.c.l.b16 %v242
      %v1582 = vunpack.c.h.b16 %v242
      %v1583 = vunpack.c.l.b16 %v243
      %v1584 = vunpack.c.h.b16 %v243
      %v1585 = vunpack.c.l.b16 %v244
      %v1586 = vunpack.c.h.b16 %v244
      %v1587 = vunpack.c.l.b16 %v245
      %v1588 = vunpack.c.h.b16 %v245
      %v1589 = vunpack.c.l.b16 %v246
      %v1590 = vunpack.c.h.b16 %v246
      %v1591 = vunpack.c.l.b16 %v247
      %v1592 = vunpack.c.h.b16 %v247
      %v1593 = vunpack.c.l.b16 %v248
      %v1594 = vunpack.c.h.b16 %v248
      %v1595 = vunpack.c.l.b16 %v249
      %v1596 = vunpack.c.h.b16 %v249
      %v1597 = vunpack.c.l.b16 %v250
      %v1598 = vunpack.c.h.b16 %v250
      %v1599 = vunpack.c.l.b16 %v251
      %v1600 = vunpack.c.h.b16 %v251
      %v1601 = vunpack.c.l.b16 %v252
      %v1602 = vunpack.c.h.b16 %v252
      %v1603 = vunpack.c.l.b16 %v253
      %v1604 = vunpack.c.h.b16 %v253
      %v1605 = vunpack.c.l.b16 %v254
      %v1606 = vunpack.c.h.b16 %v254
      %v1607 = vunpack.c.l.b16 %v255
      %v1608 = vunpack.c.h.b16 %v255
      %v1609 = vunpack.c.l.b16 %v256
      %v1610 = vunpack.c.h.b16 %v256
      %v1611 = vunpack.c.l.b16 %v257
      %v1612 = vunpack.c.h.b16 %v257
      %v1613 = vunpack.c.l.b16 %v258
      %v1614 = vunpack.c.h.b16 %v258
      %v1615 = vunpack.c.l.b16 %v259
      %v1616 = vunpack.c.h.b16 %v259
      %v1617 = vunpack.c.l.b16 %v260
      %v1618 = vunpack.c.h.b16 %v260
      %v1619 = vunpack.c.l.b16 %v261
      %v1620 = vunpack.c.h.b16 %v261
      %v1621 = vunpack.c.l.b16 %v262
      %v1622 = vunpack.c.h.b16 %v262
      %v1623 = vunpack.c.l.b16 %v263
      %v1624 = vunpack.c.h.b16 %v263
      %v1625 = vunpack.c.l.b16 %v264
      %v1626 = vunpack.c.h.b16 %v264
      %v1627 = vunpack.c.l.b16 %v265
      %v1628 = vunpack.c.h.b16 %v265
      %v1629 = vunpack.c.l.b16 %v266
      %v1630 = vunpack.c.h.b16 %v266
      %v1631 = vunpack.c.l.b16 %v267
      %v1632 = vunpack.c.h.b16 %v267
      %v1633 = vunpack.c.l.b16 %v268
      %v1634 = vunpack.c.h.b16 %v268
      %v1635 = vunpack.c.l.b16 %v269
      %v1636 = vunpack.c.h.b16 %v269
      %v1637 = vunpack.c.l.b16 %v270
      %v1638 = vunpack.c.h.b16 %v270
      %v1639 = vunpack.c.l.b16 %v271
      %v1640 = vunpack.c.h.b16 %v271
      %v1641 = vunpack.c.l.b16 %v272
      %v1642 = vunpack.c.h.b16 %v272
      %v1643 = vunpack.c.l.b16 %v273
      %v1644 = vunpack.c.h.b16 %v273
      %v1645 = vunpack.c.l.b16 %v274
      %v1646 = vunpack.c.h.b16 %v274
      %v1647 = vunpack.c.l.b16 %v275
      %v1648 = vunpack.c.h.b16 %v275
      %v1649 = vunpack.c.l.b16 %v276
      %v1650 = vunpack.c.h.b16 %v276
      %v1651 = vunpack.c.l.b16 %v277
      %v1652 = vunpack.c.h.b16 %v277
      %v1653 = vunpack.c.l.b16 %v278
      %v1654 = vunpack.c.h.b16 %v278
      %v1655 = vunpack.c.l.b16 %v279
      %v1656 = vunpack.c.h.b16 %v279
      %v1657 = vunpack.c.l.b16 %v280
      %v1658 = vunpack.c.h.b16 %v280
      %v1659 = vunpack.c.l.b16 %v281
      %v1660 = vunpack.c.h.b16 %v281
      %v1661 = vunpack.c.l.b16 %v282
      %v1662 = vunpack.c.h.b16 %v282
      %v1663 = vunpack.c.l.b16 %v283
      %v1664 = vunpack.c.h.b16 %v283
      %v1665 = vunpack.c.l.b16 %v284
      %v1666 = vunpack.c.h.b16 %v284
      %v1667 = vunpack.c.l.b16 %v285
      %v1668 = vunpack.c.h.b16 %v285
      %v1669 = vunpack.c.l.b16 %v286
      %v1670 = vunpack.c.h.b16 %v286
      %v1671 = vunpack.c.l.b16 %v287
      %v1672 = vunpack.c.h.b16 %v287
      %v1673 = vunpack.c.l.b16 %v288
      %v1674 = vunpack.c.h.b16 %v288
      %v1675 = vunpack.c.l.b16 %v289
      %v1676 = vunpack.c.h.b16 %v289
      %v1677 = vunpack.c.l.b16 %v290
      %v1678 = vunpack.c.h.b16 %v290
      %v1679 = vunpack.c.l.b16 %v291
      %v1680 = vunpack.c.h.b16 %v291
      %v1681 = vunpack.c.l.b16 %v292
      %v1682 = vunpack.c.h.b16 %v292
      %v1683 = vunpack.c.l.b16 %v293
      %v1684 = vunpack.c.h.b16 %v293
      %v1685 = vunpack.c.l.b16 %v294
      %v1686 = vunpack.c.h.b16 %v294
      %v1687 = vunpack.c.l.b16 %v295
      %v1688 = vunpack.c.h.b16 %v295
      %v1689 = vunpack.c.l.b16 %v296
      %v1690 = vunpack.c.h.b16 %v296
      %v1691 = vunpack.c.l.b16 %v297
      %v1692 = vunpack.c.h.b16 %v297
      %v1693 = vunpack.c.l.b16 %v298
      %v1694 = vunpack.c.h.b16 %v298
      %v1695 = vunpack.c.l.b16 %v299
      %v1696 = vunpack.c.h.b16 %v299
      %v1697 = vunpack.c.l.b16 %v300
      %v1698 = vunpack.c.h.b16 %v300
      %v1699 = vunpack.c.l.b16 %v301
      %v1700 = vunpack.c.h.b16 %v301
      %v1701 = vunpack.c.l.b16 %v302
      %v1702 = vunpack.c.h.b16 %v302
      %v1703 = vunpack.c.l.b16 %v303
      %v1704 = vunpack.c.h.b16 %v303
      %v1705 = vunpack.c.l.b16 %v304
      %v1706 = vunpack.c.h.b16 %v304
      %v1707 = vunpack.c.l.b16 %v305
      %v1708 = vunpack.c.h.b16 %v305
      %v1709 = vunpack.c.l.b16 %v306
      %v1710 = vunpack.c.h.b16 %v306
      %v1711 = vunpack.c.l.b16 %v307
      %v1712 = vunpack.c.h.b16 %v307
      %v1713 = vunpack.c.l.b16 %v308
      %v1714 = vunpack.c.h.b16 %v308
      %v1715 = vunpack.c.l.b16 %v309
      %v1716 = vunpack.c.h.b16 %v309
      %v1717 = vunpack.c.l.b16 %v310
      %v1718 = vunpack.c.h.b16 %v310
      %v1719 = vunpack.c.l.b16 %v311
      %v1720 = vunpack.c.h.b16 %v311
      %v1721 = vunpack.c.l.b16 %v312
      %v1722 = vunpack.c.h.b16 %v312
      %v1723 = vunpack.c.l.b16 %v313
      %v1724 = vunpack.c.h.b16 %v313
      %v1725 = vunpack.c.l.b16 %v314
      %v1726 = vunpack.c.h.b16 %v314
      %v1727 = vunpack.c.l.b16 %v315
      %v1728 = vunpack.c.h.b16 %v315
      %v1729 = vunpack.c.l.b16 %v316
      %v1730 = vunpack.c.h.b16 %v316
      %v1731 = vunpack.c.l.b16 %v317
      %v1732 = vunpack.c.h.b16 %v317
      %v1733 = vunpack.c.l.b16 %v318
      %v1734 = vunpack.c.h.b16 %v318
      %v1735 = vunpack.c.l.b16 %v319
      %v1736 = vunpack.c.h.b16 %v319
      %v1737 = vunpack.c.l.b16 %v320
      %v1738 = vunpack.c.h.b16 %v320
      %v1739 = vunpack.c.l.b16 %v321
      %v1740 = vunpack.c.h.b16 %v321
      %v1741 = vunpack.c.l.b16 %v322
      %v1742 = vunpack.c.h.b16 %v322
      %v1743 = vunpack.c.l.b16 %v323
      %v1744 = vunpack.c.h.b16 %v323
      %v1745 = vunpack.c.l.b16 %v324
      %v1746 = vunpack.c.h.b16 %v324
      %v1747 = vunpack.c.l.b16 %v325
      %v1748 = vunpack.c.h.b16 %v325
      %v1749 = vunpack.c.l.b16 %v326
      %v1750 = vunpack.c.h.b16 %v326
      %v1751 = vunpack.c.l.b16 %v327
      %v1752 = vunpack.c.h.b16 %v327
      %v1753 = vunpack.c.l.b16 %v328
      %v1754 = vunpack.c.h.b16 %v328
      %v1755 = vunpack.c.l.b16 %v329
      %v1756 = vunpack.c.h.b16 %v329
      %v1757 = vunpack.c.l.b16 %v330
      %v1758 = vunpack.c.h.b16 %v330
      %v1759 = vunpack.c.l.b16 %v331
      %v1760 = vunpack.c.h.b16 %v331
      %v1761 = vunpack.c.l.b16 %v332
      %v1762 = vunpack.c.h.b16 %v332
      %v1763 = vunpack.c.l.b16 %v333
      %v1764 = vunpack.c.h.b16 %v333
      %v1765 = vunpack.c.l.b16 %v334
      %v1766 = vunpack.c.h.b16 %v334
      %v1767 = vunpack.c.l.b16 %v335
      %v1768 = vunpack.c.h.b16 %v335
      %v1769 = vunpack.c.l.b16 %v336
      %v1770 = vunpack.c.h.b16 %v336
      %v1771 = vunpack.c.l.b16 %v337
      %v1772 = vunpack.c.h.b16 %v337
      %v1773 = vunpack.c.l.b16 %v338
      %v1774 = vunpack.c.h.b16 %v338
      %v1775 = vunpack.c.l.b16 %v339
      %v1776 = vunpack.c.h.b16 %v339
      %v1777 = vunpack.c.l.b16 %v340
      %v1778 = vunpack.c.h.b16 %v340
      %v1779 = vunpack.c.l.b16 %v341
      %v1780 = vunpack.c.h.b16 %v341
      %v1781 = vunpack.c.l.b16 %v342
      %v1782 = vunpack.c.h.b16 %v342
      %v1783 = vunpack.c.l.b16 %v343
      %v1784 = vunpack.c.h.b16 %v343
      %v1785 = vunpack.c.l.b16 %v344
      %v1786 = vunpack.c.h.b16 %v344
      %v1787 = vunpack.c.l.b16 %v345
      %v1788 = vunpack.c.h.b16 %v345
      %v1789 = vunpack.c.l.b16 %v346
      %v1790 = vunpack.c.h.b16 %v346
      %v1791 = vunpack.c.l.b16 %v347
      %v1792 = vunpack.c.h.b16 %v347
      %v1793 = vunpack.c.l.b16 %v348
      %v1794 = vunpack.c.h.b16 %v348
      %v1795 = vunpack.c.l.b16 %v349
      %v1796 = vunpack.c.h.b16 %v349
      %v1797 = vunpack.c.l.b16 %v350
      %v1798 = vunpack.c.h.b16 %v350
      %v1799 = vunpack.c.l.b16 %v351
      %v1800 = vunpack.c.h.b16 %v351
      %v1801 = vunpack.c.l.b16 %v352
      %v1802 = vunpack.c.h.b16 %v352
      %v1803 = vunpack.c.l.b16 %v353
      %v1804 = vunpack.c.h.b16 %v353
      %v1805 = vunpack.c.l.b16 %v354
      %v1806 = vunpack.c.h.b16 %v354
      %v1807 = vunpack.c.l.b16 %v355
      %v1808 = vunpack.c.h.b16 %v355
      %v1809 = vunpack.c.l.b16 %v356
      %v1810 = vunpack.c.h.b16 %v356
      %v1811 = vunpack.c.l.b16 %v357
      %v1812 = vunpack.c.h.b16 %v357
      %v1813 = vunpack.c.l.b16 %v358
      %v1814 = vunpack.c.h.b16 %v358
      %v1815 = vunpack.c.l.b16 %v359
      %v1816 = vunpack.c.h.b16 %v359
      %v1817 = vunpack.c.l.b16 %v360
      %v1818 = vunpack.c.h.b16 %v360
      %v1819 = vunpack.c.l.b16 %v361
      %v1820 = vunpack.c.h.b16 %v361
      %v1821 = vunpack.c.l.b16 %v362
      %v1822 = vunpack.c.h.b16 %v362
      %v1823 = vunpack.c.l.b16 %v363
      %v1824 = vunpack.c.h.b16 %v363
      %v1825 = vunpack.c.l.b16 %v364
      %v1826 = vunpack.c.h.b16 %v364
      %v1827 = vunpack.c.l.b16 %v365
      %v1828 = vunpack.c.h.b16 %v365
      %v1829 = vunpack.c.l.b16 %v366
      %v1830 = vunpack.c.h.b16 %v366
      %v1831 = vunpack.c.l.b16 %v367
      %v1832 = vunpack.c.h.b16 %v367
      %v1833 = vunpack.c.l.b16 %v368
      %v1834 = vunpack.c.h.b16 %v368
      %v1835 = vunpack.c.l.b16 %v369
      %v1836 = vunpack.c.h.b16 %v369
      %v1837 = vunpack.c.l.b16 %v370
      %v1838 = vunpack.c.h.b16 %v370
      %v1839 = vunpack.c.l.b16 %v371
      %v1840 = vunpack.c.h.b16 %v371
      %v1841 = vunpack.c.l.b16 %v372
      %v1842 = vunpack.c.h.b16 %v372
      %v1843 = vunpack.c.l.b16 %v373
      %v1844 = vunpack.c.h.b16 %v373
      %v1845 = vunpack.c.l.b16 %v374
      %v1846 = vunpack.c.h.b16 %v374
      %v1847 = vunpack.c.l.b16 %v375
      %v1848 = vunpack.c.h.b16 %v375
      %v1849 = vunpack.c.l.b16 %v376
      %v1850 = vunpack.c.h.b16 %v376
      %v1851 = vunpack.c.l.b16 %v377
      %v1852 = vunpack.c.h.b16 %v377
      %v1853 = vunpack.c.l.b16 %v378
      %v1854 = vunpack.c.h.b16 %v378
      %v1855 = vunpack.c.l.b16 %v379
      %v1856 = vunpack.c.h.b16 %v379
      %v1857 = vunpack.c.l.b16 %v380
      %v1858 = vunpack.c.h.b16 %v380
      %v1859 = vunpack.c.l.b16 %v381
      %v1860 = vunpack.c.h.b16 %v381
      %v1861 = vunpack.c.l.b16 %v382
      %v1862 = vunpack.c.h.b16 %v382
      %v1863 = vunpack.c.l.b16 %v383
      %v1864 = vunpack.c.h.b16 %v383
      %v1865 = vunpack.c.l.b16 %v384
      %v1866 = vunpack.c.h.b16 %v384
      %v1867 = vunpack.c.l.b16 %v385
      %v1868 = vunpack.c.h.b16 %v385
      %v1869 = vunpack.c.l.b16 %v386
      %v1870 = vunpack.c.h.b16 %v386
      %v1871 = vunpack.c.l.b16 %v387
      %v1872 = vunpack.c.h.b16 %v387
      %v1873 = vunpack.c.l.b16 %v388
      %v1874 = vunpack.c.h.b16 %v388
      %v1875 = vunpack.c.l.b16 %v389
      %v1876 = vunpack.c.h.b16 %v389
      %v1877 = vunpack.c.l.b16 %v390
      %v1878 = vunpack.c.h.b16 %v390
      %v1879 = vunpack.c.l.b16 %v391
      %v1880 = vunpack.c.h.b16 %v391
      %v1881 = vunpack.c.l.b16 %v392
      %v1882 = vunpack.c.h.b16 %v392
      %v1883 = vunpack.c.l.b16 %v393
      %v1884 = vunpack.c.h.b16 %v393
      %v1885 = vunpack.c.l.b16 %v394
      %v1886 = vunpack.c.h.b16 %v394
      %v1887 = vunpack.c.l.b16 %v395
      %v1888 = vunpack.c.h.b16 %v395
      %v1889 = vunpack.c.l.b16 %v396
      %v1890 = vunpack.c.h.b16 %v396
      %v1891 = vunpack.c.l.b16 %v397
      %v1892 = vunpack.c.h.b16 %v397
      %v1893 = vunpack.c.l.b16 %v398
      %v1894 = vunpack.c.h.b16 %v398
      %v1895 = vunpack.c.l.b16 %v399
      %v1896 = vunpack.c.h.b16 %v399
      %v1897 = vunpack.c.l.b16 %v400
      %v1898 = vunpack.c.h.b16 %v400
      %v1899 = vunpack.c.l.b16 %v401
      %v1900 = vunpack.c.h.b16 %v401
      %v1901 = vunpack.c.l.b16 %v402
      %v1902 = vunpack.c.h.b16 %v402
      %v1903 = vunpack.c.l.b16 %v403
      %v1904 = vunpack.c.h.b16 %v403
      %v1905 = vunpack.c.l.b16 %v404
      %v1906 = vunpack.c.h.b16 %v404
      %v1907 = vunpack.c.l.b16 %v405
      %v1908 = vunpack.c.h.b16 %v405
      %v1909 = vunpack.c.l.b16 %v406
      %v1910 = vunpack.c.h.b16 %v406
      %v1911 = vunpack.c.l.b16 %v407
      %v1912 = vunpack.c.h.b16 %v407
      %v1913 = vunpack.c.l.b16 %v408
      %v1914 = vunpack.c.h.b16 %v408
      %v1915 = vunpack.c.l.b16 %v409
      %v1916 = vunpack.c.h.b16 %v409
      %v1917 = vunpack.c.l.b16 %v410
      %v1918 = vunpack.c.h.b16 %v410
      %v1919 = vunpack.c.l.b16 %v411
      %v1920 = vunpack.c.h.b16 %v411
      %v1921 = vunpack.c.l.b16 %v412
      %v1922 = vunpack.c.h.b16 %v412
      %v1923 = vunpack.c.l.b16 %v413
      %v1924 = vunpack.c.h.b16 %v413
      %v1925 = vunpack.c.l.b16 %v414
      %v1926 = vunpack.c.h.b16 %v414
      %v1927 = vunpack.c.l.b16 %v415
      %v1928 = vunpack.c.h.b16 %v415
      %v1929 = vunpack.c.l.b16 %v416
      %v1930 = vunpack.c.h.b16 %v416
      %v1931 = vunpack.c.l.b16 %v417
      %v1932 = vunpack.c.h.b16 %v417
      %v1933 = vunpack.c.l.b16 %v418
      %v1934 = vunpack.c.h.b16 %v418
      %v1935 = vunpack.c.l.b16 %v419
      %v1936 = vunpack.c.h.b16 %v419
      %v1937 = vunpack.c.l.b16 %v420
      %v1938 = vunpack.c.h.b16 %v420
      %v1939 = vunpack.c.l.b16 %v421
      %v1940 = vunpack.c.h.b16 %v421
      %v1941 = vunpack.c.l.b16 %v422
      %v1942 = vunpack.c.h.b16 %v422
      %v1943 = vunpack.c.l.b16 %v423
      %v1944 = vunpack.c.h.b16 %v423
      %v1945 = vunpack.c.l.b16 %v424
      %v1946 = vunpack.c.h.b16 %v424
      %v1947 = vunpack.c.l.b16 %v425
      %v1948 = vunpack.c.h.b16 %v425
      %v1949 = vunpack.c.l.b16 %v426
      %v1950 = vunpack.c.h.b16 %v426
      %v1951 = vunpack.c.l.b16 %v427
      %v1952 = vunpack.c.h.b16 %v427
      %v1953 = vunpack.c.l.b16 %v428
      %v1954 = vunpack.c.h.b16 %v428
      %v1955 = vunpack.c.l.b16 %v429
      %v1956 = vunpack.c.h.b16 %v429
      %v1957 = vunpack.c.l.b16 %v430
      %v1958 = vunpack.c.h.b16 %v430
      %v1959 = vunpack.c.l.b16 %v431
      %v1960 = vunpack.c.h.b16 %v431
      %v1961 = vunpack.c.l.b16 %v432
      %v1962 = vunpack.c.h.b16 %v432
      %v1963 = vunpack.c.l.b16 %v433
      %v1964 = vunpack.c.h.b16 %v433
      %v1965 = vunpack.c.l.b16 %v434
      %v1966 = vunpack.c.h.b16 %v434
      %v1967 = vunpack.c.l.b16 %v435
      %v1968 = vunpack.c.h.b16 %v435
      %v1969 = vunpack.c.l.b16 %v436
      %v1970 = vunpack.c.h.b16 %v436
      %v1971 = vunpack.c.l.b16 %v437
      %v1972 = vunpack.c.h.b16 %v437
      %v1973 = vunpack.c.l.b16 %v438
      %v1974 = vunpack.c.h.b16 %v438
      %v1975 = vunpack.c.l.b16 %v439
      %v1976 = vunpack.c.h.b16 %v439
      %v1977 = vunpack.c.l.b16 %v440
      %v1978 = vunpack.c.h.b16 %v440
      %v1979 = vunpack.c.l.b16 %v441
      %v1980 = vunpack.c.h.b16 %v441
      %v1981 = vunpack.c.l.b16 %v442
      %v1982 = vunpack.c.h.b16 %v442
      %v1983 = vunpack.c.l.b16 %v443
      %v1984 = vunpack.c.h.b16 %v443
      %v1985 = vunpack.c.l.b16 %v444
      %v1986 = vunpack.c.h.b16 %v444
      %v1987 = vunpack.c.l.b16 %v445
      %v1988 = vunpack.c.h.b16 %v445
      %v1989 = vunpack.c.l.b16 %v446
      %v1990 = vunpack.c.h.b16 %v446
      %v1991 = vunpack.c.l.b16 %v447
      %v1992 = vunpack.c.h.b16 %v447
      %v1993 = vunpack.c.l.b16 %v448
      %v1994 = vunpack.c.h.b16 %v448
      %v1995 = vunpack.c.l.b16 %v449
      %v1996 = vunpack.c.h.b16 %v449
      %v1997 = vunpack.c.l.b16 %v450
      %v1998 = vunpack.c.h.b16 %v450
      %v1999 = vunpack.c.l.b16 %v451
      %v2000 = vunpack.c.h.b16 %v451
      %v2001 = vunpack.c.l.b16 %v452
      %v2002 = vunpack.c.h.b16 %v452
      %v2003 = vunpack.c.l.b16 %v453
      %v2004 = vunpack.c.h.b16 %v453
      %v2005 = vunpack.c.l.b16 %v454
      %v2006 = vunpack.c.h.b16 %v454
      %v2007 = vunpack.c.l.b16 %v455
      %v2008 = vunpack.c.h.b16 %v455
      %v2009 = vunpack.c.l.b16 %v456
      %v2010 = vunpack.c.h.b16 %v456
      %v2011 = vunpack.c.l.b16 %v457
      %v2012 = vunpack.c.h.b16 %v457
      %v2013 = vunpack.c.l.b16 %v458
      %v2014 = vunpack.c.h.b16 %v458
      %v2015 = vunpack.c.l.b16 %v459
      %v2016 = vunpack.c.h.b16 %v459
      %v2017 = vunpack.c.l.b16 %v460
      %v2018 = vunpack.c.h.b16 %v460
      %v2019 = vunpack.c.l.b16 %v461
      %v2020 = vunpack.c.h.b16 %v461
      %v2021 = vunpack.c.l.b16 %v462
      %v2022 = vunpack.c.h.b16 %v462
      %v2023 = vunpack.c.l.b16 %v463
      %v2024 = vunpack.c.h.b16 %v463
      %v2025 = vunpack.c.l.b16 %v464
      %v2026 = vunpack.c.h.b16 %v464
      %v2027 = vunpack.c.l.b16 %v465
      %v2028 = vunpack.c.h.b16 %v465
      %v2029 = vunpack.c.l.b16 %v466
      %v2030 = vunpack.c.h.b16 %v466
      %v2031 = vunpack.c.l.b16 %v467
      %v2032 = vunpack.c.h.b16 %v467
      %v2033 = vunpack.c.l.b16 %v468
      %v2034 = vunpack.c.h.b16 %v468
      %v2035 = vunpack.c.l.b16 %v469
      %v2036 = vunpack.c.h.b16 %v469
      %v2037 = vunpack.c.l.b16 %v470
      %v2038 = vunpack.c.h.b16 %v470
      %v2039 = vunpack.c.l.b16 %v471
      %v2040 = vunpack.c.h.b16 %v471
      %v2041 = vunpack.c.l.b16 %v472
      %v2042 = vunpack.c.h.b16 %v472
      %v2043 = vunpack.c.l.b16 %v473
      %v2044 = vunpack.c.h.b16 %v473
      %v2045 = vunpack.c.l.b16 %v474
      %v2046 = vunpack.c.h.b16 %v474
      %v2047 = vunpack.c.l.b16 %v475
      %v2048 = vunpack.c.h.b16 %v475
      %v2049 = vunpack.c.l.b16 %v476
      %v2050 = vunpack.c.h.b16 %v476
      %v2051 = vunpack.c.l.b16 %v477
      %v2052 = vunpack.c.h.b16 %v477
      %v2053 = vunpack.c.l.b16 %v478
      %v2054 = vunpack.c.h.b16 %v478
      %v2055 = vunpack.c.l.b16 %v479
      %v2056 = vunpack.c.h.b16 %v479
      %v2057 = vunpack.c.l.b16 %v480
      %v2058 = vunpack.c.h.b16 %v480
      %v2059 = vunpack.c.l.b16 %v481
      %v2060 = vunpack.c.h.b16 %v481
      %v2061 = vunpack.c.l.b16 %v482
      %v2062 = vunpack.c.h.b16 %v482
      %v2063 = vunpack.c.l.b16 %v483
      %v2064 = vunpack.c.h.b16 %v483
      %v2065 = vunpack.c.l.b16 %v484
      %v2066 = vunpack.c.h.b16 %v484
      %v2067 = vunpack.c.l.b16 %v485
      %v2068 = vunpack.c.h.b16 %v485
      %v2069 = vunpack.c.l.b16 %v486
      %v2070 = vunpack.c.h.b16 %v486
      %v2071 = vunpack.c.l.b16 %v487
      %v2072 = vunpack.c.h.b16 %v487
      %v2073 = vunpack.c.l.b16 %v488
      %v2074 = vunpack.c.h.b16 %v488
      %v2075 = vunpack.c.l.b16 %v489
      %v2076 = vunpack.c.h.b16 %v489
      %v2077 = vunpack.c.l.b16 %v490
      %v2078 = vunpack.c.h.b16 %v490
      %v2079 = vunpack.c.l.b16 %v491
      %v2080 = vunpack.c.h.b16 %v491
      %v2081 = vunpack.c.l.b16 %v492
      %v2082 = vunpack.c.h.b16 %v492
      %v2083 = vunpack.c.l.b16 %v493
      %v2084 = vunpack.c.h.b16 %v493
      %v2085 = vunpack.c.l.b16 %v494
      %v2086 = vunpack.c.h.b16 %v494
      %v2087 = vunpack.c.l.b16 %v495
      %v2088 = vunpack.c.h.b16 %v495
      %v2089 = vunpack.c.l.b16 %v496
      %v2090 = vunpack.c.h.b16 %v496
      %v2091 = vunpack.c.l.b16 %v497
      %v2092 = vunpack.c.h.b16 %v497
      %v2093 = vunpack.c.l.b16 %v498
      %v2094 = vunpack.c.h.b16 %v498
      %v2095 = vunpack.c.l.b16 %v499
      %v2096 = vunpack.c.h.b16 %v499
      %v2097 = vunpack.c.l.b16 %v500
      %v2098 = vunpack.c.h.b16 %v500
      %v2099 = vunpack.c.l.b16 %v501
      %v2100 = vunpack.c.h.b16 %v501
      %v2101 = vunpack.c.l.b16 %v502
      %v2102 = vunpack.c.h.b16 %v502
      %v2103 = vunpack.c.l.b16 %v503
      %v2104 = vunpack.c.h.b16 %v503
      %v2105 = vunpack.c.l.b16 %v504
      %v2106 = vunpack.c.h.b16 %v504
      %v2107 = vunpack.c.l.b16 %v505
      %v2108 = vunpack.c.h.b16 %v505
      %v2109 = vunpack.c.l.b16 %v506
      %v2110 = vunpack.c.h.b16 %v506
      %v2111 = vunpack.c.l.b16 %v507
      %v2112 = vunpack.c.h.b16 %v507
      %v2113 = vunpack.c.l.b16 %v508
      %v2114 = vunpack.c.h.b16 %v508
      %v2115 = vunpack.c.l.b16 %v509
      %v2116 = vunpack.c.h.b16 %v509
      %v2117 = vunpack.c.l.b16 %v510
      %v2118 = vunpack.c.h.b16 %v510
      %v2119 = vunpack.c.l.b16 %v511
      %v2120 = vunpack.c.h.b16 %v511
      %v2121 = vunpack.c.l.b16 %v512
      %v2122 = vunpack.c.h.b16 %v512
      %v2123 = vunpack.c.l.b16 %v513
      %v2124 = vunpack.c.h.b16 %v513
      %v2125 = vunpack.c.l.b16 %v514
      %v2126 = vunpack.c.h.b16 %v514
      %v2127 = vunpack.c.l.b16 %v515
      %v2128 = vunpack.c.h.b16 %v515
      %v2129 = vunpack.c.l.b16 %v516
      %v2130 = vunpack.c.h.b16 %v516
      %v2131 = vunpack.c.l.b16 %v517
      %v2132 = vunpack.c.h.b16 %v517
      %v2133 = vunpack.c.l.b16 %v518
      %v2134 = vunpack.c.h.b16 %v518
      %v2135 = vunpack.c.l.b16 %v519
      %v2136 = vunpack.c.h.b16 %v519
      %v2137 = vunpack.c.l.b16 %v520
      %v2138 = vunpack.c.h.b16 %v520
      %v2139 = vunpack.c.l.b16 %v521
      %v2140 = vunpack.c.h.b16 %v521
      %v2141 = vunpack.c.l.b16 %v522
      %v2142 = vunpack.c.h.b16 %v522
      %v2143 = vunpack.c.l.b16 %v523
      %v2144 = vunpack.c.h.b16 %v523
      %v2145 = vunpack.c.l.b16 %v524
      %v2146 = vunpack.c.h.b16 %v524
      %v2147 = vunpack.c.l.b16 %v525
      %v2148 = vunpack.c.h.b16 %v525
      %v2149 = vunpack.c.l.b16 %v526
      %v2150 = vunpack.c.h.b16 %v526
      %v2151 = vunpack.c.l.b16 %v527
      %v2152 = vunpack.c.h.b16 %v527
      %v2153 = vunpack.c.l.b16 %v528
      %v2154 = vunpack.c.h.b16 %v528
      %v2155 = vunpack.c.l.b16 %v529
      %v2156 = vunpack.c.h.b16 %v529
      %v2157 = vunpack.c.l.b16 %v530
      %v2158 = vunpack.c.h.b16 %v530
      %v2159 = vunpack.c.l.b16 %v531
      %v2160 = vunpack.c.h.b16 %v531
      %v2161 = vunpack.c.l.b16 %v532
      %v2162 = vunpack.c.h.b16 %v532
      %v2163 = vunpack.c.l.b16 %v533
      %v2164 = vunpack.c.h.b16 %v533
      %v2165 = vunpack.c.l.b16 %v534
      %v2166 = vunpack.c.h.b16 %v534
      %v2167 = vunpack.c.l.b16 %v535
      %v2168 = vunpack.c.h.b16 %v535
      %v2169 = vunpack.c.l.b16 %v536
      %v2170 = vunpack.c.h.b16 %v536
      %v2171 = vunpack.c.l.b16 %v537
      %v2172 = vunpack.c.h.b16 %v537
      %v2173 = vunpack.c.l.b16 %v538
      %v2174 = vunpack.c.h.b16 %v538
      %v2175 = vunpack.c.l.b16 %v539
      %v2176 = vunpack.c.h.b16 %v539
      %v2177 = vunpack.c.l.b16 %v540
      %v2178 = vunpack.c.h.b16 %v540
      %v2179 = vunpack.c.l.b16 %v541
      %v2180 = vunpack.c.h.b16 %v541
      %v2181 = vunpack.c.l.b16 %v542
      %v2182 = vunpack.c.h.b16 %v542
      %v2183 = vunpack.c.l.b16 %v543
      %v2184 = vunpack.c.h.b16 %v543
      %v2185 = vunpack.c.l.b16 %v544
      %v2186 = vunpack.c.h.b16 %v544
      %v2187 = vunpack.c.l.b16 %v545
      %v2188 = vunpack.c.h.b16 %v545
      %v2189 = vunpack.c.l.b16 %v546
      %v2190 = vunpack.c.h.b16 %v546
      %v2191 = vunpack.c.l.b16 %v547
      %v2192 = vunpack.c.h.b16 %v547
      %v2193 = vunpack.c.l.b16 %v548
      %v2194 = vunpack.c.h.b16 %v548
      %v2195 = vunpack.c.l.b16 %v549
      %v2196 = vunpack.c.h.b16 %v549
      %v2197 = vunpack.c.l.b16 %v550
      %v2198 = vunpack.c.h.b16 %v550
      %v2199 = vunpack.c.l.b16 %v551
      %v2200 = vunpack.c.h.b16 %v551
      %v2201 = vunpack.c.l.b16 %v552
      %v2202 = vunpack.c.h.b16 %v552
      %v2203 = vunpack.c.l.b16 %v553
      %v2204 = vunpack.c.h.b16 %v553
      %v2205 = vunpack.c.l.b16 %v554
      %v2206 = vunpack.c.h.b16 %v554
      %v2207 = vunpack.c.l.b16 %v555
      %v2208 = vunpack.c.h.b16 %v555
      %v2209 = vunpack.c.l.b16 %v556
      %v2210 = vunpack.c.h.b16 %v556
      %v2211 = vunpack.c.l.b16 %v557
      %v2212 = vunpack.c.h.b16 %v557
      %v2213 = vunpack.c.l.b16 %v558
      %v2214 = vunpack.c.h.b16 %v558
      %v2215 = vunpack.c.l.b16 %v559
      %v2216 = vunpack.c.h.b16 %v559
      %v2217 = vunpack.c.l.b16 %v560
      %v2218 = vunpack.c.h.b16 %v560
      %v2219 = vunpack.c.l.b16 %v561
      %v2220 = vunpack.c.h.b16 %v561
      %v2221 = vunpack.c.l.b16 %v562
      %v2222 = vunpack.c.h.b16 %v562
      %v2223 = vunpack.c.l.b16 %v563
      %v2224 = vunpack.c.h.b16 %v563
      %v2225 = vunpack.c.l.b16 %v564
      %v2226 = vunpack.c.h.b16 %v564
      %v2227 = vunpack.c.l.b16 %v565
      %v2228 = vunpack.c.h.b16 %v565
      %v2229 = vunpack.c.l.b16 %v566
      %v2230 = vunpack.c.h.b16 %v566
      %v2231 = vunpack.c.l.b16 %v567
      %v2232 = vunpack.c.h.b16 %v567
      %v2233 = vunpack.c.l.b16 %v568
      %v2234 = vunpack.c.h.b16 %v568
      %v2235 = vunpack.c.l.b16 %v569
      %v2236 = vunpack.c.h.b16 %v569
      %v2237 = vunpack.c.l.b16 %v570
      %v2238 = vunpack.c.h.b16 %v570
      %v2239 = vunpack.c.l.b16 %v571
      %v2240 = vunpack.c.h.b16 %v571
      %v2241 = vunpack.c.l.b16 %v572
      %v2242 = vunpack.c.h.b16 %v572
      %v2243 = vunpack.c.l.b16 %v573
      %v2244 = vunpack.c.h.b16 %v573
      %v2245 = vunpack.c.l.b16 %v574
      %v2246 = vunpack.c.h.b16 %v574
      %v2247 = vunpack.c.l.b16 %v575
      %v2248 = vunpack.c.h.b16 %v575
      %v2249 = vunpack.c.l.b16 %v576
      %v2250 = vunpack.c.h.b16 %v576
      %v2251 = vunpack.c.l.b16 %v577
      %v2252 = vunpack.c.h.b16 %v577
      %v2253 = vunpack.c.l.b16 %v578
      %v2254 = vunpack.c.h.b16 %v578
      %v2255 = vunpack.c.l.b16 %v579
      %v2256 = vunpack.c.h.b16 %v579
      %v2257 = vunpack.c.l.b16 %v580
      %v2258 = vunpack.c.h.b16 %v580
      %v2259 = vunpack.c.l.b16 %v581
      %v2260 = vunpack.c.h.b16 %v581
      %v2261 = vunpack.c.l.b16 %v582
      %v2262 = vunpack.c.h.b16 %v582
      %v2263 = vunpack.c.l.b16 %v583
      %v2264 = vunpack.c.h.b16 %v583
      %v2265 = vunpack.c.l.b16 %v584
      %v2266 = vunpack.c.h.b16 %v584
      %v2267 = vunpack.c.l.b16 %v585
      %v2268 = vunpack.c.h.b16 %v585
      %v2269 = vunpack.c.l.b16 %v586
      %v2270 = vunpack.c.h.b16 %v586
      %v2271 = vunpack.c.l.b16 %v587
      %v2272 = vunpack.c.h.b16 %v587
      %v2273 = vunpack.c.l.b16 %v588
      %v2274 = vunpack.c.h.b16 %v588
      %v2275 = vunpack.c.l.b16 %v589
      %v2276 = vunpack.c.h.b16 %v589
      %v2277 = vunpack.c.l.b16 %v590
      %v2278 = vunpack.c.h.b16 %v590
      %v2279 = vunpack.c.l.b16 %v591
      %v2280 = vunpack.c.h.b16 %v591
      %v2281 = vunpack.c.l.b16 %v592
      %v2282 = vunpack.c.h.b16 %v592
      %v2283 = vunpack.c.l.b16 %v593
      %v2284 = vunpack.c.h.b16 %v593
      %v2285 = vunpack.c.l.b16 %v594
      %v2286 = vunpack.c.h.b16 %v594
      %v2287 = vunpack.c.l.b16 %v595
      %v2288 = vunpack.c.h.b16 %v595
      %v2289 = vunpack.c.l.b16 %v596
      %v2290 = vunpack.c.h.b16 %v596
      %v2291 = vunpack.c.l.b16 %v597
      %v2292 = vunpack.c.h.b16 %v597
      %v2293 = vunpack.c.l.b16 %v598
      %v2294 = vunpack.c.h.b16 %v598
      %v2295 = vunpack.c.l.b16 %v599
      %v2296 = vunpack.c.h.b16 %v599
      %v2297 = vunpack.c.l.b16 %v600
      %v2298 = vunpack.c.h.b16 %v600
      %v2299 = vunpack.c.l.b16 %v601
      %v2300 = vunpack.c.h.b16 %v601
      %v2301 = vunpack.c.l.b16 %v602
      %v2302 = vunpack.c.h.b16 %v602
      %v2303 = vunpack.c.l.b16 %v603
      %v2304 = vunpack.c.h.b16 %v603
      %v2305 = vunpack.c.l.b16 %v604
      %v2306 = vunpack.c.h.b16 %v604
      %v2307 = vunpack.c.l.b16 %v605
      %v2308 = vunpack.c.h.b16 %v605
      %v2309 = vunpack.c.l.b16 %v606
      %v2310 = vunpack.c.h.b16 %v606
      %v2311 = vunpack.c.l.b16 %v607
      %v2312 = vunpack.c.h.b16 %v607
      %v2313 = vunpack.c.l.b16 %v608
      %v2314 = vunpack.c.h.b16 %v608
      %v2315 = vunpack.c.l.b16 %v609
      %v2316 = vunpack.c.h.b16 %v609
      %v2317 = vunpack.c.l.b16 %v610
      %v2318 = vunpack.c.h.b16 %v610
      %v2319 = vunpack.c.l.b16 %v611
      %v2320 = vunpack.c.h.b16 %v611
      %v2321 = vunpack.c.l.b16 %v612
      %v2322 = vunpack.c.h.b16 %v612
      %v2323 = vunpack.c.l.b16 %v613
      %v2324 = vunpack.c.h.b16 %v613
      %v2325 = vunpack.c.l.b16 %v614
      %v2326 = vunpack.c.h.b16 %v614
      %v2327 = vunpack.c.l.b16 %v615
      %v2328 = vunpack.c.h.b16 %v615
      %v2329 = vunpack.c.l.b16 %v616
      %v2330 = vunpack.c.h.b16 %v616
      %v2331 = vunpack.c.l.b16 %v617
      %v2332 = vunpack.c.h.b16 %v617
      %v2333 = vunpack.c.l.b16 %v618
      %v2334 = vunpack.c.h.b16 %v618
      %v2335 = vunpack.c.l.b16 %v619
      %v2336 = vunpack.c.h.b16 %v619
      %v2337 = vunpack.c.l.b16 %v620
      %v2338 = vunpack.c.h.b16 %v620
      %v2339 = vunpack.c.l.b16 %v621
      %v2340 = vunpack.c.h.b16 %v621
      %v2341 = vunpack.c.l.b16 %v622
      %v2342 = vunpack.c.h.b16 %v622
      %v2343 = vunpack.c.l.b16 %v623
      %v2344 = vunpack.c.h.b16 %v623
      %v2345 = vunpack.c.l.b16 %v624
      %v2346 = vunpack.c.h.b16 %v624
      %v2347 = vunpack.c.l.b16 %v625
      %v2348 = vunpack.c.h.b16 %v625
      %v2349 = vunpack.c.l.b16 %v626
      %v2350 = vunpack.c.h.b16 %v626
      %v2351 = vunpack.c.l.b16 %v627
      %v2352 = vunpack.c.h.b16 %v627
      %v2353 = vunpack.c.l.b16 %v628
      %v2354 = vunpack.c.h.b16 %v628
      %v2355 = vunpack.c.l.b16 %v629
      %v2356 = vunpack.c.h.b16 %v629
      %v2357 = vunpack.c.l.b16 %v630
      %v2358 = vunpack.c.h.b16 %v630
      %v2359 = vunpack.c.l.b16 %v631
      %v2360 = vunpack.c.h.b16 %v631
      %v2361 = vunpack.c.l.b16 %v632
      %v2362 = vunpack.c.h.b16 %v632
      %v2363 = vunpack.c.l.b16 %v633
      %v2364 = vunpack.c.h.b16 %v633
      %v2365 = vunpack.c.l.b16 %v634
      %v2366 = vunpack.c.h.b16 %v634
      %v2367 = vunpack.c.l.b16 %v635
      %v2368 = vunpack.c.h.b16 %v635
      %v2369 = vunpack.c.l.b16 %v636
      %v2370 = vunpack.c.h.b16 %v636
      %v2371 = vunpack.c.l.b16 %v637
      %v2372 = vunpack.c.h.b16 %v637
      %v2373 = vunpack.c.l.b16 %v638
      %v2374 = vunpack.c.h.b16 %v638
      %v2375 = vunpack.c.l.b16 %v639
      %v2376 = vunpack.c.h.b16 %v639
      %v2377 = vunpack.c.l.b16 %v640
      %v2378 = vunpack.c.h.b16 %v640
      %v2379 = vunpack.c.l.b16 %v641
      %v2380 = vunpack.c.h.b16 %v641
      %v2381 = vunpack.c.l.b16 %v642
      %v2382 = vunpack.c.h.b16 %v642
      %v2383 = vunpack.c.l.b16 %v643
      %v2384 = vunpack.c.h.b16 %v643
      %v2385 = vunpack.c.l.b16 %v644
      %v2386 = vunpack.c.h.b16 %v644
      %v2387 = vunpack.c.l.b16 %v645
      %v2388 = vunpack.c.h.b16 %v645
      %v2389 = vunpack.c.l.b16 %v646
      %v2390 = vunpack.c.h.b16 %v646
      %v2391 = vunpack.c.l.b16 %v647
      %v2392 = vunpack.c.h.b16 %v647
      %v2393 = vunpack.c.l.b16 %v648
      %v2394 = vunpack.c.h.b16 %v648
      %v2395 = vunpack.c.l.b16 %v649
      %v2396 = vunpack.c.h.b16 %v649
      %v2397 = vunpack.c.l.b16 %v650
      %v2398 = vunpack.c.h.b16 %v650
      %v2399 = vunpack.c.l.b16 %v651
      %v2400 = vunpack.c.h.b16 %v651
      %v2401 = vunpack.c.l.b16 %v652
      %v2402 = vunpack.c.h.b16 %v652
      %v2403 = vunpack.c.l.b16 %v653
      %v2404 = vunpack.c.h.b16 %v653
      %v2405 = vunpack.c.l.b16 %v654
      %v2406 = vunpack.c.h.b16 %v654
      %v2407 = vunpack.c.l.b16 %v655
      %v2408 = vunpack.c.h.b16 %v655
      %v2409 = vunpack.c.l.b16 %v656
      %v2410 = vunpack.c.h.b16 %v656
      %v2411 = vunpack.c.l.b16 %v657
      %v2412 = vunpack.c.h.b16 %v657
      %v2413 = vunpack.c.l.b16 %v658
      %v2414 = vunpack.c.h.b16 %v658
      %v2415 = vunpack.c.l.b16 %v659
      %v2416 = vunpack.c.h.b16 %v659
      %v2417 = vunpack.c.l.b16 %v660
      %v2418 = vunpack.c.h.b16 %v660
      %v2419 = vunpack.c.l.b16 %v661
      %v2420 = vunpack.c.h.b16 %v661
      %v2421 = vunpack.c.l.b16 %v662
      %v2422 = vunpack.c.h.b16 %v662
      %v2423 = vunpack.c.l.b16 %v663
      %v2424 = vunpack.c.h.b16 %v663
      %v2425 = vunpack.c.l.b16 %v664
      %v2426 = vunpack.c.h.b16 %v664
      %v2427 = vunpack.c.l.b16 %v665
      %v2428 = vunpack.c.h.b16 %v665
      %v2429 = vunpack.c.l.b16 %v666
      %v2430 = vunpack.c.h.b16 %v666
      %v2431 = vunpack.c.l.b16 %v667
      %v2432 = vunpack.c.h.b16 %v667
      %v2433 = vunpack.c.l.b16 %v668
      %v2434 = vunpack.c.h.b16 %v668
      %v2435 = vunpack.c.l.b16 %v669
      %v2436 = vunpack.c.h.b16 %v669
      %v2437 = vunpack.c.l.b16 %v670
      %v2438 = vunpack.c.h.b16 %v670
      %v2439 = vunpack.c.l.b16 %v671
      %v2440 = vunpack.c.h.b16 %v671
      %v2441 = vunpack.c.l.b16 %v672
      %v2442 = vunpack.c.h.b16 %v672
      %v2443 = vunpack.c.l.b16 %v673
      %v2444 = vunpack.c.h.b16 %v673
      %v2445 = vunpack.c.l.b16 %v674
      %v2446 = vunpack.c.h.b16 %v674
      %v2447 = vunpack.c.l.b16 %v675
      %v2448 = vunpack.c.h.b16 %v675
      %v2449 = vunpack.c.l.b16 %v676
      %v2450 = vunpack.c.h.b16 %v676
      %v2451 = vunpack.c.l.b16 %v677
      %v2452 = vunpack.c.h.b16 %v677
      %v2453 = vunpack.c.l.b16 %v678
      %v2454 = vunpack.c.h.b16 %v678
      %v2455 = vunpack.c.l.b16 %v679
      %v2456 = vunpack.c.h.b16 %v679
      %v2457 = vunpack.c.l.b16 %v680
      %v2458 = vunpack.c.h.b16 %v680
      %v2459 = vunpack.c.l.b16 %v681
      %v2460 = vunpack.c.h.b16 %v681
      %v2461 = vunpack.c.l.b16 %v682
      %v2462 = vunpack.c.h.b16 %v682
      %v2463 = vunpack.c.l.b16 %v683
      %v2464 = vunpack.c.h.b16 %v683
      %v2465 = vunpack.c.l.b16 %v684
      %v2466 = vunpack.c.h.b16 %v684
      %v2467 = vunpack.c.l.b16 %v685
      %v2468 = vunpack.c.h.b16 %v685
      %v2469 = vunpack.c.l.b16 %v686
      %v2470 = vunpack.c.h.b16 %v686
      %v2471 = vunpack.c.l.b16 %v687
      %v2472 = vunpack.c.h.b16 %v687
      %v2473 = vunpack.c.l.b16 %v688
      %v2474 = vunpack.c.h.b16 %v688
      %v2475 = vunpack.c.l.b16 %v689
      %v2476 = vunpack.c.h.b16 %v689
      %v2477 = vunpack.c.l.b16 %v690
      %v2478 = vunpack.c.h.b16 %v690
      %v2479 = vunpack.c.l.b16 %v691
      %v2480 = vunpack.c.h.b16 %v691
      %v2481 = vunpack.c.l.b16 %v692
      %v2482 = vunpack.c.h.b16 %v692
      %v2483 = vunpack.c.l.b16 %v693
      %v2484 = vunpack.c.h.b16 %v693
      %v2485 = vunpack.c.l.b16 %v694
      %v2486 = vunpack.c.h.b16 %v694
      %v2487 = vunpack.c.l.b16 %v695
      %v2488 = vunpack.c.h.b16 %v695
      %v2489 = vunpack.c.l.b16 %v696
      %v2490 = vunpack.c.h.b16 %v696
      %v2491 = vunpack.c.l.b16 %v697
      %v2492 = vunpack.c.h.b16 %v697
      %v2493 = vunpack.c.l.b16 %v698
      %v2494 = vunpack.c.h.b16 %v698
      %v2495 = vunpack.c.l.b16 %v699
      %v2496 = vunpack.c.h.b16 %v699
      %v2497 = vunpack.c.l.b16 %v700
      %v2498 = vunpack.c.h.b16 %v700
      %v2499 = vunpack.c.l.b16 %v701
      %v2500 = vunpack.c.h.b16 %v701
      %v2501 = vunpack.c.l.b16 %v702
      %v2502 = vunpack.c.h.b16 %v702
      %v2503 = vunpack.c.l.b16 %v703
      %v2504 = vunpack.c.h.b16 %v703
      %v2505 = vunpack.c.l.b16 %v704
      %v2506 = vunpack.c.h.b16 %v704
      %v2507 = vunpack.c.l.b16 %v705
      %v2508 = vunpack.c.h.b16 %v705
      %v2509 = vunpack.c.l.b16 %v706
      %v2510 = vunpack.c.h.b16 %v706
      %v2511 = vunpack.c.l.b16 %v707
      %v2512 = vunpack.c.h.b16 %v707
      %v2513 = vunpack.c.l.b16 %v708
      %v2514 = vunpack.c.h.b16 %v708
      %v2515 = vunpack.c.l.b16 %v709
      %v2516 = vunpack.c.h.b16 %v709
      %v2517 = vunpack.c.l.b16 %v710
      %v2518 = vunpack.c.h.b16 %v710
      %v2519 = vunpack.c.l.b16 %v711
      %v2520 = vunpack.c.h.b16 %v711
      %v2521 = vunpack.c.l.b16 %v712
      %v2522 = vunpack.c.h.b16 %v712
      %v2523 = vunpack.c.l.b16 %v713
      %v2524 = vunpack.c.h.b16 %v713
      %v2525 = vunpack.c.l.b16 %v714
      %v2526 = vunpack.c.h.b16 %v714
      %v2527 = vunpack.c.l.b16 %v715
      %v2528 = vunpack.c.h.b16 %v715
      %v2529 = vunpack.c.l.b16 %v716
      %v2530 = vunpack.c.h.b16 %v716
      %v2531 = vunpack.c.l.b16 %v717
      %v2532 = vunpack.c.h.b16 %v717
      %v2533 = vunpack.c.l.b16 %v718
      %v2534 = vunpack.c.h.b16 %v718
      %v2535 = vunpack.c.l.b16 %v719
      %v2536 = vunpack.c.h.b16 %v719
      %v2537 = vunpack.c.l.b16 %v720
      %v2538 = vunpack.c.h.b16 %v720
      %v2539 = vunpack.c.l.b16 %v721
      %v2540 = vunpack.c.h.b16 %v721
      %v2541 = vunpack.c.l.b16 %v722
      %v2542 = vunpack.c.h.b16 %v722
      %v2543 = vunpack.c.l.b16 %v723
      %v2544 = vunpack.c.h.b16 %v723
      %v2545 = vunpack.c.l.b16 %v724
      %v2546 = vunpack.c.h.b16 %v724
      %v2547 = vunpack.c.l.b16 %v725
      %v2548 = vunpack.c.h.b16 %v725
      %v2549 = vunpack.c.l.b16 %v726
      %v2550 = vunpack.c.h.b16 %v726
      %v2551 = vunpack.c.l.b16 %v727
      %v2552 = vunpack.c.h.b16 %v727
      %v2553 = vunpack.c.l.b16 %v728
      %v2554 = vunpack.c.h.b16 %v728
      %v2555 = vunpack.c.l.b16 %v729
      %v2556 = vunpack.c.h.b16 %v729
      %v2557 = vunpack.c.l.b16 %v730
      %v2558 = vunpack.c.h.b16 %v730
      %v2559 = vunpack.c.l.b16 %v731
      %v2560 = vunpack.c.h.b16 %v731
      %v2561 = vunpack.c.l.b16 %v732
      %v2562 = vunpack.c.h.b16 %v732
      %v2563 = vunpack.c.l.b16 %v733
      %v2564 = vunpack.c.h.b16 %v733
      %v2565 = vunpack.c.l.b16 %v734
      %v2566 = vunpack.c.h.b16 %v734
      %v2567 = vunpack.c.l.b16 %v735
      %v2568 = vunpack.c.h.b16 %v735
      %v2569 = vunpack.c.l.b16 %v736
      %v2570 = vunpack.c.h.b16 %v736
      %v2571 = vunpack.c.l.b16 %v737
      %v2572 = vunpack.c.h.b16 %v737
      %v2573 = vunpack.c.l.b16 %v738
      %v2574 = vunpack.c.h.b16 %v738
      %v2575 = vunpack.c.l.b16 %v739
      %v2576 = vunpack.c.h.b16 %v739
      %v2577 = vunpack.c.l.b16 %v740
      %v2578 = vunpack.c.h.b16 %v740
      %v2579 = vunpack.c.l.b16 %v741
      %v2580 = vunpack.c.h.b16 %v741
      %v2581 = vunpack.c.l.b16 %v742
      %v2582 = vunpack.c.h.b16 %v742
      %v2583 = vunpack.c.l.b16 %v743
      %v2584 = vunpack.c.h.b16 %v743
      %v2585 = vunpack.c.l.b16 %v744
      %v2586 = vunpack.c.h.b16 %v744
      %v2587 = vunpack.c.l.b16 %v745
      %v2588 = vunpack.c.h.b16 %v745
      %v2589 = vunpack.c.l.b16 %v746
      %v2590 = vunpack.c.h.b16 %v746
      %v2591 = vunpack.c.l.b16 %v747
      %v2592 = vunpack.c.h.b16 %v747
      %v2593 = vunpack.c.l.b16 %v748
      %v2594 = vunpack.c.h.b16 %v748
      %v2595 = vunpack.c.l.b16 %v749
      %v2596 = vunpack.c.h.b16 %v749
      %v2597 = vunpack.c.l.b16 %v750
      %v2598 = vunpack.c.h.b16 %v750
      %v2599 = vunpack.c.l.b16 %v751
      %v2600 = vunpack.c.h.b16 %v751
      %v2601 = vpack.c.b16 %v1453, %v1449
      %v2602 = vpack.c.b16 %v1454, %v1450
      %v2603 = vpack.c.b16 %v1455, %v1451
      %v2604 = vpack.c.b16 %v1456, %v1452
      %v2605 = vpack.c.b16 %v1461, %v1457
      %v2606 = vpack.c.b16 %v1462, %v1458
      %v2607 = vpack.c.b16 %v1463, %v1459
      %v2608 = vpack.c.b16 %v1464, %v1460
      %v2609 = vpack.c.b16 %v1469, %v1465
      %v2610 = vpack.c.b16 %v1470, %v1466
      %v2611 = vpack.c.b16 %v1471, %v1467
      %v2612 = vpack.c.b16 %v1472, %v1468
      %v2613 = vpack.c.b16 %v1477, %v1473
      %v2614 = vpack.c.b16 %v1478, %v1474
      %v2615 = vpack.c.b16 %v1479, %v1475
      %v2616 = vpack.c.b16 %v1480, %v1476
      %v2617 = vpack.c.b16 %v1485, %v1481
      %v2618 = vpack.c.b16 %v1486, %v1482
      %v2619 = vpack.c.b16 %v1487, %v1483
      %v2620 = vpack.c.b16 %v1488, %v1484
      %v2621 = vpack.c.b16 %v1493, %v1489
      %v2622 = vpack.c.b16 %v1494, %v1490
      %v2623 = vpack.c.b16 %v1495, %v1491
      %v2624 = vpack.c.b16 %v1496, %v1492
      %v2625 = vpack.c.b16 %v1501, %v1497
      %v2626 = vpack.c.b16 %v1502, %v1498
      %v2627 = vpack.c.b16 %v1503, %v1499
      %v2628 = vpack.c.b16 %v1504, %v1500
      %v2629 = vpack.c.b16 %v1509, %v1505
      %v2630 = vpack.c.b16 %v1510, %v1506
      %v2631 = vpack.c.b16 %v1511, %v1507
      %v2632 = vpack.c.b16 %v1512, %v1508
      %v2633 = vpack.c.b16 %v1517, %v1513
      %v2634 = vpack.c.b16 %v1518, %v1514
      %v2635 = vpack.c.b16 %v1519, %v1515
      %v2636 = vpack.c.b16 %v1520, %v1516
      %v2637 = vpack.c.b16 %v1525, %v1521
      %v2638 = vpack.c.b16 %v1526, %v1522
      %v2639 = vpack.c.b16 %v1527, %v1523
      %v2640 = vpack.c.b16 %v1528, %v1524
      %v2641 = vpack.c.b16 %v1533, %v1529
      %v2642 = vpack.c.b16 %v1534, %v1530
      %v2643 = vpack.c.b16 %v1535, %v1531
      %v2644 = vpack.c.b16 %v1536, %v1532
      %v2645 = vpack.c.b16 %v1541, %v1537
      %v2646 = vpack.c.b16 %v1542, %v1538
      %v2647 = vpack.c.b16 %v1543, %v1539
      %v2648 = vpack.c.b16 %v1544, %v1540
      %v2649 = vpack.c.b16 %v1549, %v1545
      %v2650 = vpack.c.b16 %v1550, %v1546
      %v2651 = vpack.c.b16 %v1551, %v1547
      %v2652 = vpack.c.b16 %v1552, %v1548
      %v2653 = vpack.c.b16 %v1557, %v1553
      %v2654 = vpack.c.b16 %v1558, %v1554
      %v2655 = vpack.c.b16 %v1559, %v1555
      %v2656 = vpack.c.b16 %v1560, %v1556
      %v2657 = vpack.c.b16 %v1565, %v1561
      %v2658 = vpack.c.b16 %v1566, %v1562
      %v2659 = vpack.c.b16 %v1567, %v1563
      %v2660 = vpack.c.b16 %v1568, %v1564
      %v2661 = vpack.c.b16 %v1573, %v1569
      %v2662 = vpack.c.b16 %v1574, %v1570
      %v2663 = vpack.c.b16 %v1575, %v1571
      %v2664 = vpack.c.b16 %v1576, %v1572
      %v2665 = vpack.c.b16 %v1581, %v1577
      %v2666 = vpack.c.b16 %v1582, %v1578
      %v2667 = vpack.c.b16 %v1583, %v1579
      %v2668 = vpack.c.b16 %v1584, %v1580
      %v2669 = vpack.c.b16 %v1589, %v1585
      %v2670 = vpack.c.b16 %v1590, %v1586
      %v2671 = vpack.c.b16 %v1591, %v1587
      %v2672 = vpack.c.b16 %v1592, %v1588
      %v2673 = vpack.c.b16 %v1597, %v1593
      %v2674 = vpack.c.b16 %v1598, %v1594
      %v2675 = vpack.c.b16 %v1599, %v1595
      %v2676 = vpack.c.b16 %v1600, %v1596
      %v2677 = vpack.c.b16 %v1605, %v1601
      %v2678 = vpack.c.b16 %v1606, %v1602
      %v2679 = vpack.c.b16 %v1607, %v1603
      %v2680 = vpack.c.b16 %v1608, %v1604
      %v2681 = vpack.c.b16 %v1613, %v1609
      %v2682 = vpack.c.b16 %v1614, %v1610
      %v2683 = vpack.c.b16 %v1615, %v1611
      %v2684 = vpack.c.b16 %v1616, %v1612
      %v2685 = vpack.c.b16 %v1621, %v1617
      %v2686 = vpack.c.b16 %v1622, %v1618
      %v2687 = vpack.c.b16 %v1623, %v1619
      %v2688 = vpack.c.b16 %v1624, %v1620
      %v2689 = vpack.c.b16 %v1629, %v1625
      %v2690 = vpack.c.b16 %v1630, %v1626
      %v2691 = vpack.c.b16 %v1631, %v1627
      %v2692 = vpack.c.b16 %v1632, %v1628
      %v2693 = vpack.c.b16 %v1637, %v1633
      %v2694 = vpack.c.b16 %v1638, %v1634
      %v2695 = vpack.c.b16 %v1639, %v1635
      %v2696 = vpack.c.b16 %v1640, %v1636
      %v2697 = vpack.c.b16 %v1645, %v1641
      %v2698 = vpack.c.b16 %v1646, %v1642
      %v2699 = vpack.c.b16 %v1647, %v1643
      %v2700 = vpack.c.b16 %v1648, %v1644
      %v2701 = vpack.c.b16 %v1653, %v1649
      %v2702 = vpack.c.b16 %v1654, %v1650
      %v2703 = vpack.c.b16 %v1655, %v1651
      %v2704 = vpack.c.b16 %v1656, %v1652
      %v2705 = vpack.c.b16 %v1661, %v1657
      %v2706 = vpack.c.b16 %v1662, %v1658
      %v2707 = vpack.c.b16 %v1663, %v1659
      %v2708 = vpack.c.b16 %v1664, %v1660
      %v2709 = vpack.c.b16 %v1669, %v1665
      %v2710 = vpack.c.b16 %v1670, %v1666
      %v2711 = vpack.c.b16 %v1671, %v1667
      %v2712 = vpack.c.b16 %v1672, %v1668
      %v2713 = vpack.c.b16 %v1677, %v1673
      %v2714 = vpack.c.b16 %v1678, %v1674
      %v2715 = vpack.c.b16 %v1679, %v1675
      %v2716 = vpack.c.b16 %v1680, %v1676
      %v2717 = vpack.c.b16 %v1685, %v1681
      %v2718 = vpack.c.b16 %v1686, %v1682
      %v2719 = vpack.c.b16 %v1687, %v1683
      %v2720 = vpack.c.b16 %v1688, %v1684
      %v2721 = vpack.c.b16 %v1693, %v1689
      %v2722 = vpack.c.b16 %v1694, %v1690
      %v2723 = vpack.c.b16 %v1695, %v1691
      %v2724 = vpack.c.b16 %v1696, %v1692
      %v2725 = vpack.c.b16 %v1701, %v1697
      %v2726 = vpack.c.b16 %v1702, %v1698
      %v2727 = vpack.c.b16 %v1703, %v1699
      %v2728 = vpack.c.b16 %v1704, %v1700
      %v2729 = vpack.c.b16 %v1709, %v1705
      %v2730 = vpack.c.b16 %v1710, %v1706
      %v2731 = vpack.c.b16 %v1711, %v1707
      %v2732 = vpack.c.b16 %v1712, %v1708
      %v2733 = vpack.c.b16 %v1717, %v1713
      %v2734 = vpack.c.b16 %v1718, %v1714
      %v2735 = vpack.c.b16 %v1719, %v1715
      %v2736 = vpack.c.b16 %v1720, %v1716
      %v2737 = vpack.c.b16 %v1725, %v1721
      %v2738 = vpack.c.b16 %v1726, %v1722
      %v2739 = vpack.c.b16 %v1727, %v1723
      %v2740 = vpack.c.b16 %v1728, %v1724
      %v2741 = vpack.c.b16 %v1733, %v1729
      %v2742 = vpack.c.b16 %v1734, %v1730
      %v2743 = vpack.c.b16 %v1735, %v1731
      %v2744 = vpack.c.b16 %v1736, %v1732
      %v2745 = vpack.c.b16 %v1741, %v1737
      %v2746 = vpack.c.b16 %v1742, %v1738
      %v2747 = vpack.c.b16 %v1743, %v1739
      %v2748 = vpack.c.b16 %v1744, %v1740
      %v2749 = vpack.c.b16 %v1749, %v1745
      %v2750 = vpack.c.b16 %v1750, %v1746
      %v2751 = vpack.c.b16 %v1751, %v1747
      %v2752 = vpack.c.b16 %v1752, %v1748
      %v2753 = vpack.c.b16 %v1757, %v1753
      %v2754 = vpack.c.b16 %v1758, %v1754
      %v2755 = vpack.c.b16 %v1759, %v1755
      %v2756 = vpack.c.b16 %v1760, %v1756
      %v2757 = vpack.c.b16 %v1765, %v1761
      %v2758 = vpack.c.b16 %v1766, %v1762
      %v2759 = vpack.c.b16 %v1767, %v1763
      %v2760 = vpack.c.b16 %v1768, %v1764
      %v2761 = vpack.c.b16 %v1773, %v1769
      %v2762 = vpack.c.b16 %v1774, %v1770
      %v2763 = vpack.c.b16 %v1775, %v1771
      %v2764 = vpack.c.b16 %v1776, %v1772
      %v2765 = vpack.c.b16 %v1781, %v1777
      %v2766 = vpack.c.b16 %v1782, %v1778
      %v2767 = vpack.c.b16 %v1783, %v1779
      %v2768 = vpack.c.b16 %v1784, %v1780
      %v2769 = vpack.c.b16 %v1789, %v1785
      %v2770 = vpack.c.b16 %v1790, %v1786
      %v2771 = vpack.c.b16 %v1791, %v1787
      %v2772 = vpack.c.b16 %v1792, %v1788
      %v2773 = vpack.c.b16 %v1797, %v1793
      %v2774 = vpack.c.b16 %v1798, %v1794
      %v2775 = vpack.c.b16 %v1799, %v1795
      %v2776 = vpack.c.b16 %v1800, %v1796
      %v2777 = vpack.c.b16 %v1805, %v1801
      %v2778 = vpack.c.b16 %v1806, %v1802
      %v2779 = vpack.c.b16 %v1807, %v1803
      %v2780 = vpack.c.b16 %v1808, %v1804
      %v2781 = vpack.c.b16 %v1813, %v1809
      %v2782 = vpack.c.b16 %v1814, %v1810
      %v2783 = vpack.c.b16 %v1815, %v1811
      %v2784 = vpack.c.b16 %v1816, %v1812
      %v2785 = vpack.c.b16 %v1821, %v1817
      %v2786 = vpack.c.b16 %v1822, %v1818
      %v2787 = vpack.c.b16 %v1823, %v1819
      %v2788 = vpack.c.b16 %v1824, %v1820
      %v2789 = vpack.c.b16 %v1829, %v1825
      %v2790 = vpack.c.b16 %v1830, %v1826
      %v2791 = vpack.c.b16 %v1831, %v1827
      %v2792 = vpack.c.b16 %v1832, %v1828
      %v2793 = vpack.c.b16 %v1837, %v1833
      %v2794 = vpack.c.b16 %v1838, %v1834
      %v2795 = vpack.c.b16 %v1839, %v1835
      %v2796 = vpack.c.b16 %v1840, %v1836
      %v2797 = vpack.c.b16 %v1845, %v1841
      %v2798 = vpack.c.b16 %v1846, %v1842
      %v2799 = vpack.c.b16 %v1847, %v1843
      %v2800 = vpack.c.b16 %v1848, %v1844
      %v2801 = vpack.c.b16 %v1853, %v1849
      %v2802 = vpack.c.b16 %v1854, %v1850
      %v2803 = vpack.c.b16 %v1855, %v1851
      %v2804 = vpack.c.b16 %v1856, %v1852
      %v2805 = vpack.c.b16 %v1861, %v1857
      %v2806 = vpack.c.b16 %v1862, %v1858
      %v2807 = vpack.c.b16 %v1863, %v1859
      %v2808 = vpack.c.b16 %v1864, %v1860
      %v2809 = vpack.c.b16 %v1869, %v1865
      %v2810 = vpack.c.b16 %v1870, %v1866
      %v2811 = vpack.c.b16 %v1871, %v1867
      %v2812 = vpack.c.b16 %v1872, %v1868
      %v2813 = vpack.c.b16 %v1877, %v1873
      %v2814 = vpack.c.b16 %v1878, %v1874
      %v2815 = vpack.c.b16 %v1879, %v1875
      %v2816 = vpack.c.b16 %v1880, %v1876
      %v2817 = vpack.c.b16 %v1885, %v1881
      %v2818 = vpack.c.b16 %v1886, %v1882
      %v2819 = vpack.c.b16 %v1887, %v1883
      %v2820 = vpack.c.b16 %v1888, %v1884
      %v2821 = vpack.c.b16 %v1893, %v1889
      %v2822 = vpack.c.b16 %v1894, %v1890
      %v2823 = vpack.c.b16 %v1895, %v1891
      %v2824 = vpack.c.b16 %v1896, %v1892
      %v2825 = vpack.c.b16 %v1901, %v1897
      %v2826 = vpack.c.b16 %v1902, %v1898
      %v2827 = vpack.c.b16 %v1903, %v1899
      %v2828 = vpack.c.b16 %v1904, %v1900
      %v2829 = vpack.c.b16 %v1909, %v1905
      %v2830 = vpack.c.b16 %v1910, %v1906
      %v2831 = vpack.c.b16 %v1911, %v1907
      %v2832 = vpack.c.b16 %v1912, %v1908
      %v2833 = vpack.c.b16 %v1917, %v1913
      %v2834 = vpack.c.b16 %v1918, %v1914
      %v2835 = vpack.c.b16 %v1919, %v1915
      %v2836 = vpack.c.b16 %v1920, %v1916
      %v2837 = vpack.c.b16 %v1925, %v1921
      %v2838 = vpack.c.b16 %v1926, %v1922
      %v2839 = vpack.c.b16 %v1927, %v1923
      %v2840 = vpack.c.b16 %v1928, %v1924
      %v2841 = vpack.c.b16 %v1933, %v1929
      %v2842 = vpack.c.b16 %v1934, %v1930
      %v2843 = vpack.c.b16 %v1935, %v1931
      %v2844 = vpack.c.b16 %v1936, %v1932
      %v2845 = vpack.c.b16 %v1941, %v1937
      %v2846 = vpack.c.b16 %v1942, %v1938
      %v2847 = vpack.c.b16 %v1943, %v1939
      %v2848 = vpack.c.b16 %v1944, %v1940
      %v2849 = vpack.c.b16 %v1949, %v1945
      %v2850 = vpack.c.b16 %v1950, %v1946
      %v2851 = vpack.c.b16 %v1951, %v1947
      %v2852 = vpack.c.b16 %v1952, %v1948
      %v2853 = vpack.c.b16 %v1957, %v1953
      %v2854 = vpack.c.b16 %v1958, %v1954
      %v2855 = vpack.c.b16 %v1959, %v1955
      %v2856 = vpack.c.b16 %v1960, %v1956
      %v2857 = vpack.c.b16 %v1965, %v1961
      %v2858 = vpack.c.b16 %v1966, %v1962
      %v2859 = vpack.c.b16 %v1967, %v1963
      %v2860 = vpack.c.b16 %v1968, %v1964
      %v2861 = vpack.c.b16 %v1973, %v1969
      %v2862 = vpack.c.b16 %v1974, %v1970
      %v2863 = vpack.c.b16 %v1975, %v1971
      %v2864 = vpack.c.b16 %v1976, %v1972
      %v2865 = vpack.c.b16 %v1981, %v1977
      %v2866 = vpack.c.b16 %v1982, %v1978
      %v2867 = vpack.c.b16 %v1983, %v1979
      %v2868 = vpack.c.b16 %v1984, %v1980
      %v2869 = vpack.c.b16 %v1989, %v1985
      %v2870 = vpack.c.b16 %v1990, %v1986
      %v2871 = vpack.c.b16 %v1991, %v1987
      %v2872 = vpack.c.b16 %v1992, %v1988
      %v2873 = vpack.c.b16 %v1997, %v1993
      %v2874 = vpack.c.b16 %v1998, %v1994
      %v2875 = vpack.c.b16 %v1999, %v1995
      %v2876 = vpack.c.b16 %v2000, %v1996
      %v2877 = vpack.c.b16 %v2005, %v2001
      %v2878 = vpack.c.b16 %v2006, %v2002
      %v2879 = vpack.c.b16 %v2007, %v2003
      %v2880 = vpack.c.b16 %v2008, %v2004
      %v2881 = vpack.c.b16 %v2013, %v2009
      %v2882 = vpack.c.b16 %v2014, %v2010
      %v2883 = vpack.c.b16 %v2015, %v2011
      %v2884 = vpack.c.b16 %v2016, %v2012
      %v2885 = vpack.c.b16 %v2021, %v2017
      %v2886 = vpack.c.b16 %v2022, %v2018
      %v2887 = vpack.c.b16 %v2023, %v2019
      %v2888 = vpack.c.b16 %v2024, %v2020
      %v2889 = vpack.c.b16 %v2029, %v2025
      %v2890 = vpack.c.b16 %v2030, %v2026
      %v2891 = vpack.c.b16 %v2031, %v2027
      %v2892 = vpack.c.b16 %v2032, %v2028
      %v2893 = vpack.c.b16 %v2037, %v2033
      %v2894 = vpack.c.b16 %v2038, %v2034
      %v2895 = vpack.c.b16 %v2039, %v2035
      %v2896 = vpack.c.b16 %v2040, %v2036
      %v2897 = vpack.c.b16 %v2045, %v2041
      %v2898 = vpack.c.b16 %v2046, %v2042
      %v2899 = vpack.c.b16 %v2047, %v2043
      %v2900 = vpack.c.b16 %v2048, %v2044
      %v2901 = vpack.c.b16 %v2053, %v2049
      %v2902 = vpack.c.b16 %v2054, %v2050
      %v2903 = vpack.c.b16 %v2055, %v2051
      %v2904 = vpack.c.b16 %v2056, %v2052
      %v2905 = vpack.c.b16 %v2061, %v2057
      %v2906 = vpack.c.b16 %v2062, %v2058
      %v2907 = vpack.c.b16 %v2063, %v2059
      %v2908 = vpack.c.b16 %v2064, %v2060
      %v2909 = vpack.c.b16 %v2069, %v2065
      %v2910 = vpack.c.b16 %v2070, %v2066
      %v2911 = vpack.c.b16 %v2071, %v2067
      %v2912 = vpack.c.b16 %v2072, %v2068
      %v2913 = vpack.c.b16 %v2077, %v2073
      %v2914 = vpack.c.b16 %v2078, %v2074
      %v2915 = vpack.c.b16 %v2079, %v2075
      %v2916 = vpack.c.b16 %v2080, %v2076
      %v2917 = vpack.c.b16 %v2085, %v2081
      %v2918 = vpack.c.b16 %v2086, %v2082
      %v2919 = vpack.c.b16 %v2087, %v2083
      %v2920 = vpack.c.b16 %v2088, %v2084
      %v2921 = vpack.c.b16 %v2093, %v2089
      %v2922 = vpack.c.b16 %v2094, %v2090
      %v2923 = vpack.c.b16 %v2095, %v2091
      %v2924 = vpack.c.b16 %v2096, %v2092
      %v2925 = vpack.c.b16 %v2101, %v2097
      %v2926 = vpack.c.b16 %v2102, %v2098
      %v2927 = vpack.c.b16 %v2103, %v2099
      %v2928 = vpack.c.b16 %v2104, %v2100
      %v2929 = vpack.c.b16 %v2109, %v2105
      %v2930 = vpack.c.b16 %v2110, %v2106
      %v2931 = vpack.c.b16 %v2111, %v2107
      %v2932 = vpack.c.b16 %v2112, %v2108
      %v2933 = vpack.c.b16 %v2117, %v2113
      %v2934 = vpack.c.b16 %v2118, %v2114
      %v2935 = vpack.c.b16 %v2119, %v2115
      %v2936 = vpack.c.b16 %v2120, %v2116
      %v2937 = vpack.c.b16 %v2125, %v2121
      %v2938 = vpack.c.b16 %v2126, %v2122
      %v2939 = vpack.c.b16 %v2127, %v2123
      %v2940 = vpack.c.b16 %v2128, %v2124
      %v2941 = vpack.c.b16 %v2133, %v2129
      %v2942 = vpack.c.b16 %v2134, %v2130
      %v2943 = vpack.c.b16 %v2135, %v2131
      %v2944 = vpack.c.b16 %v2136, %v2132
      %v2945 = vpack.c.b16 %v2141, %v2137
      %v2946 = vpack.c.b16 %v2142, %v2138
      %v2947 = vpack.c.b16 %v2143, %v2139
      %v2948 = vpack.c.b16 %v2144, %v2140
      %v2949 = vpack.c.b16 %v2149, %v2145
      %v2950 = vpack.c.b16 %v2150, %v2146
      %v2951 = vpack.c.b16 %v2151, %v2147
      %v2952 = vpack.c.b16 %v2152, %v2148
      %v2953 = vpack.c.b16 %v2157, %v2153
      %v2954 = vpack.c.b16 %v2158, %v2154
      %v2955 = vpack.c.b16 %v2159, %v2155
      %v2956 = vpack.c.b16 %v2160, %v2156
      %v2957 = vpack.c.b16 %v2165, %v2161
      %v2958 = vpack.c.b16 %v2166, %v2162
      %v2959 = vpack.c.b16 %v2167, %v2163
      %v2960 = vpack.c.b16 %v2168, %v2164
      %v2961 = vpack.c.b16 %v2173, %v2169
      %v2962 = vpack.c.b16 %v2174, %v2170
      %v2963 = vpack.c.b16 %v2175, %v2171
      %v2964 = vpack.c.b16 %v2176, %v2172
      %v2965 = vpack.c.b16 %v2181, %v2177
      %v2966 = vpack.c.b16 %v2182, %v2178
      %v2967 = vpack.c.b16 %v2183, %v2179
      %v2968 = vpack.c.b16 %v2184, %v2180
      %v2969 = vpack.c.b16 %v2189, %v2185
      %v2970 = vpack.c.b16 %v2190, %v2186
      %v2971 = vpack.c.b16 %v2191, %v2187
      %v2972 = vpack.c.b16 %v2192, %v2188
      %v2973 = vpack.c.b16 %v2197, %v2193
      %v2974 = vpack.c.b16 %v2198, %v2194
      %v2975 = vpack.c.b16 %v2199, %v2195
      %v2976 = vpack.c.b16 %v2200, %v2196
      %v2977 = vpack.c.b16 %v2205, %v2201
      %v2978 = vpack.c.b16 %v2206, %v2202
      %v2979 = vpack.c.b16 %v2207, %v2203
      %v2980 = vpack.c.b16 %v2208, %v2204
      %v2981 = vpack.c.b16 %v2213, %v2209
      %v2982 = vpack.c.b16 %v2214, %v2210
      %v2983 = vpack.c.b16 %v2215, %v2211
      %v2984 = vpack.c.b16 %v2216, %v2212
      %v2985 = vpack.c.b16 %v2221, %v2217
      %v2986 = vpack.c.b16 %v2222, %v2218
      %v2987 = vpack.c.b16 %v2223, %v2219
      %v2988 = vpack.c.b16 %v2224, %v2220
      %v2989 = vpack.c.b16 %v2229, %v2225
      %v2990 = vpack.c.b16 %v2230, %v2226
      %v2991 = vpack.c.b16 %v2231, %v2227
      %v2992 = vpack.c.b16 %v2232, %v2228
      %v2993 = vpack.c.b16 %v2237, %v2233
      %v2994 = vpack.c.b16 %v2238, %v2234
      %v2995 = vpack.c.b16 %v2239, %v2235
      %v2996 = vpack.c.b16 %v2240, %v2236
      %v2997 = vpack.c.b16 %v2245, %v2241
      %v2998 = vpack.c.b16 %v2246, %v2242
      %v2999 = vpack.c.b16 %v2247, %v2243
      %v3000 = vpack.c.b16 %v2248, %v2244
      %v3001 = vpack.c.b16 %v2253, %v2249
      %v3002 = vpack.c.b16 %v2254, %v2250
      %v3003 = vpack.c.b16 %v2255, %v2251
      %v3004 = vpack.c.b16 %v2256, %v2252
      %v3005 = vpack.c.b16 %v2261, %v2257
      %v3006 = vpack.c.b16 %v2262, %v2258
      %v3007 = vpack.c.b16 %v2263, %v2259
      %v3008 = vpack.c.b16 %v2264, %v2260
      %v3009 = vpack.c.b16 %v2269, %v2265
      %v3010 = vpack.c.b16 %v2270, %v2266
      %v3011 = vpack.c.b16 %v2271, %v2267
      %v3012 = vpack.c.b16 %v2272, %v2268
      %v3013 = vpack.c.b16 %v2277, %v2273
      %v3014 = vpack.c.b16 %v2278, %v2274
      %v3015 = vpack.c.b16 %v2279, %v2275
      %v3016 = vpack.c.b16 %v2280, %v2276
      %v3017 = vpack.c.b16 %v2285, %v2281
      %v3018 = vpack.c.b16 %v2286, %v2282
      %v3019 = vpack.c.b16 %v2287, %v2283
      %v3020 = vpack.c.b16 %v2288, %v2284
      %v3021 = vpack.c.b16 %v2293, %v2289
      %v3022 = vpack.c.b16 %v2294, %v2290
      %v3023 = vpack.c.b16 %v2295, %v2291
      %v3024 = vpack.c.b16 %v2296, %v2292
      %v3025 = vpack.c.b16 %v2301, %v2297
      %v3026 = vpack.c.b16 %v2302, %v2298
      %v3027 = vpack.c.b16 %v2303, %v2299
      %v3028 = vpack.c.b16 %v2304, %v2300
      %v3029 = vpack.c.b16 %v2309, %v2305
      %v3030 = vpack.c.b16 %v2310, %v2306
      %v3031 = vpack.c.b16 %v2311, %v2307
      %v3032 = vpack.c.b16 %v2312, %v2308
      %v3033 = vpack.c.b16 %v2317, %v2313
      %v3034 = vpack.c.b16 %v2318, %v2314
      %v3035 = vpack.c.b16 %v2319, %v2315
      %v3036 = vpack.c.b16 %v2320, %v2316
      %v3037 = vpack.c.b16 %v2325, %v2321
      %v3038 = vpack.c.b16 %v2326, %v2322
      %v3039 = vpack.c.b16 %v2327, %v2323
      %v3040 = vpack.c.b16 %v2328, %v2324
      %v3041 = vpack.c.b16 %v2333, %v2329
      %v3042 = vpack.c.b16 %v2334, %v2330
      %v3043 = vpack.c.b16 %v2335, %v2331
      %v3044 = vpack.c.b16 %v2336, %v2332
      %v3045 = vpack.c.b16 %v2341, %v2337
      %v3046 = vpack.c.b16 %v2342, %v2338
      %v3047 = vpack.c.b16 %v2343, %v2339
      %v3048 = vpack.c.b16 %v2344, %v2340
      %v3049 = vpack.c.b16 %v2349, %v2345
      %v3050 = vpack.c.b16 %v2350, %v2346
      %v3051 = vpack.c.b16 %v2351, %v2347
      %v3052 = vpack.c.b16 %v2352, %v2348
      %v3053 = vpack.c.b16 %v2357, %v2353
      %v3054 = vpack.c.b16 %v2358, %v2354
      %v3055 = vpack.c.b16 %v2359, %v2355
      %v3056 = vpack.c.b16 %v2360, %v2356
      %v3057 = vpack.c.b16 %v2365, %v2361
      %v3058 = vpack.c.b16 %v2366, %v2362
      %v3059 = vpack.c.b16 %v2367, %v2363
      %v3060 = vpack.c.b16 %v2368, %v2364
      %v3061 = vpack.c.b16 %v2373, %v2369
      %v3062 = vpack.c.b16 %v2374, %v2370
      %v3063 = vpack.c.b16 %v2375, %v2371
      %v3064 = vpack.c.b16 %v2376, %v2372
      %v3065 = vpack.c.b16 %v2381, %v2377
      %v3066 = vpack.c.b16 %v2382, %v2378
      %v3067 = vpack.c.b16 %v2383, %v2379
      %v3068 = vpack.c.b16 %v2384, %v2380
      %v3069 = vpack.c.b16 %v2389, %v2385
      %v3070 = vpack.c.b16 %v2390, %v2386
      %v3071 = vpack.c.b16 %v2391, %v2387
      %v3072 = vpack.c.b16 %v2392, %v2388
      %v3073 = vpack.c.b16 %v2397, %v2393
      %v3074 = vpack.c.b16 %v2398, %v2394
      %v3075 = vpack.c.b16 %v2399, %v2395
      %v3076 = vpack.c.b16 %v2400, %v2396
      %v3077 = vpack.c.b16 %v2405, %v2401
      %v3078 = vpack.c.b16 %v2406, %v2402
      %v3079 = vpack.c.b16 %v2407, %v2403
      %v3080 = vpack.c.b16 %v2408, %v2404
      %v3081 = vpack.c.b16 %v2413, %v2409
      %v3082 = vpack.c.b16 %v2414, %v2410
      %v3083 = vpack.c.b16 %v2415, %v2411
      %v3084 = vpack.c.b16 %v2416, %v2412
      %v3085 = vpack.c.b16 %v2421, %v2417
      %v3086 = vpack.c.b16 %v2422, %v2418
      %v3087 = vpack.c.b16 %v2423, %v2419
      %v3088 = vpack.c.b16 %v2424, %v2420
      %v3089 = vpack.c.b16 %v2429, %v2425
      %v3090 = vpack.c.b16 %v2430, %v2426
      %v3091 = vpack.c.b16 %v2431, %v2427
      %v3092 = vpack.c.b16 %v2432, %v2428
      %v3093 = vpack.c.b16 %v2437, %v2433
      %v3094 = vpack.c.b16 %v2438, %v2434
      %v3095 = vpack.c.b16 %v2439, %v2435
      %v3096 = vpack.c.b16 %v2440, %v2436
      %v3097 = vpack.c.b16 %v2445, %v2441
      %v3098 = vpack.c.b16 %v2446, %v2442
      %v3099 = vpack.c.b16 %v2447, %v2443
      %v3100 = vpack.c.b16 %v2448, %v2444
      %v3101 = vpack.c.b16 %v2453, %v2449
      %v3102 = vpack.c.b16 %v2454, %v2450
      %v3103 = vpack.c.b16 %v2455, %v2451
      %v3104 = vpack.c.b16 %v2456, %v2452
      %v3105 = vpack.c.b16 %v2461, %v2457
      %v3106 = vpack.c.b16 %v2462, %v2458
      %v3107 = vpack.c.b16 %v2463, %v2459
      %v3108 = vpack.c.b16 %v2464, %v2460
      %v3109 = vpack.c.b16 %v2469, %v2465
      %v3110 = vpack.c.b16 %v2470, %v2466
      %v3111 = vpack.c.b16 %v2471, %v2467
      %v3112 = vpack.c.b16 %v2472, %v2468
      %v3113 = vpack.c.b16 %v2477, %v2473
      %v3114 = vpack.c.b16 %v2478, %v2474
      %v3115 = vpack.c.b16 %v2479, %v2475
      %v3116 = vpack.c.b16 %v2480, %v2476
      %v3117 = vpack.c.b16 %v2485, %v2481
      %v3118 = vpack.c.b16 %v2486, %v2482
      %v3119 = vpack.c.b16 %v2487, %v2483
      %v3120 = vpack.c.b16 %v2488, %v2484
      %v3121 = vpack.c.b16 %v2493, %v2489
      %v3122 = vpack.c.b16 %v2494, %v2490
      %v3123 = vpack.c.b16 %v2495, %v2491
      %v3124 = vpack.c.b16 %v2496, %v2492
      %v3125 = vpack.c.b16 %v2501, %v2497
      %v3126 = vpack.c.b16 %v2502, %v2498
      %v3127 = vpack.c.b16 %v2503, %v2499
      %v3128 = vpack.c.b16 %v2504, %v2500
      %v3129 = vpack.c.b16 %v2509, %v2505
      %v3130 = vpack.c.b16 %v2510, %v2506
      %v3131 = vpack.c.b16 %v2511, %v2507
      %v3132 = vpack.c.b16 %v2512, %v2508
      %v3133 = vpack.c.b16 %v2517, %v2513
      %v3134 = vpack.c.b16 %v2518, %v2514
      %v3135 = vpack.c.b16 %v2519, %v2515
      %v3136 = vpack.c.b16 %v2520, %v2516
      %v3137 = vpack.c.b16 %v2525, %v2521
      %v3138 = vpack.c.b16 %v2526, %v2522
      %v3139 = vpack.c.b16 %v2527, %v2523
      %v3140 = vpack.c.b16 %v2528, %v2524
      %v3141 = vpack.c.b16 %v2533, %v2529
      %v3142 = vpack.c.b16 %v2534, %v2530
      %v3143 = vpack.c.b16 %v2535, %v2531
      %v3144 = vpack.c.b16 %v2536, %v2532
      %v3145 = vpack.c.b16 %v2541, %v2537
      %v3146 = vpack.c.b16 %v2542, %v2538
      %v3147 = vpack.c.b16 %v2543, %v2539
      %v3148 = vpack.c.b16 %v2544, %v2540
      %v3149 = vpack.c.b16 %v2549, %v2545
      %v3150 = vpack.c.b16 %v2550, %v2546
      %v3151 = vpack.c.b16 %v2551, %v2547
      %v3152 = vpack.c.b16 %v2552, %v2548
      %v3153 = vpack.c.b16 %v2557, %v2553
      %v3154 = vpack.c.b16 %v2558, %v2554
      %v3155 = vpack.c.b16 %v2559, %v2555
      %v3156 = vpack.c.b16 %v2560, %v2556
      %v3157 = vpack.c.b16 %v2565, %v2561
      %v3158 = vpack.c.b16 %v2566, %v2562
      %v3159 = vpack.c.b16 %v2567, %v2563
      %v3160 = vpack.c.b16 %v2568, %v2564
      %v3161 = vpack.c.b16 %v2573, %v2569
      %v3162 = vpack.c.b16 %v2574, %v2570
      %v3163 = vpack.c.b16 %v2575, %v2571
      %v3164 = vpack.c.b16 %v2576, %v2572
      %v3165 = vpack.c.b16 %v2581, %v2577
      %v3166 = vpack.c.b16 %v2582, %v2578
      %v3167 = vpack.c.b16 %v2583, %v2579
      %v3168 = vpack.c.b16 %v2584, %v2580
      %v3169 = vpack.c.b16 %v2589, %v2585
      %v3170 = vpack.c.b16 %v2590, %v2586
      %v3171 = vpack.c.b16 %v2591, %v2587
      %v3172 = vpack.c.b16 %v2592, %v2588
      %v3173 = vpack.c.b16 %v2597, %v2593
      %v3174 = vpack.c.b16 %v2598, %v2594
      %v3175 = vpack.c.b16 %v2599, %v2595
      %v3176 = vpack.c.b16 %v2600, %v2596
      %3753 = vmatprep.subr.bf16.mxu0 %v2602
      %3754 = vmatpush1.bf16.msra.mxu0 %v2601
      %3755 = vmatprep.subr.bf16.mxu0 %v2606
      %3756 = vmatpush1.bf16.msra.mxu0 %v2605
      %3757 = vmatprep.subr.bf16.mxu0 %v2610
      %3758 = vmatpush1.bf16.msra.mxu0 %v2609
      %3759 = vmatprep.subr.bf16.mxu0 %v2614
      %3760 = vmatpush1.bf16.msra.mxu0 %v2613
      %3761 = vmatprep.subr.bf16.mxu0 %v2618
      %3762 = vmatpush1.bf16.msra.mxu0 %v2617
      %3763 = vmatprep.subr.bf16.mxu0 %v2622
      %3764 = vmatpush1.bf16.msra.mxu0 %v2621
      %3765 = vmatprep.subr.bf16.mxu0 %v2626
      %3766 = vmatpush1.bf16.msra.mxu0 %v2625
      %3767 = vmatprep.subr.bf16.mxu0 %v2630
      %3768 = vmatpush1.bf16.msra.mxu0 %v2629
      %3769 = vmatprep.subr.bf16.mxu0 %v2634
      %3770 = vmatpush1.bf16.msra.mxu0 %v2633
      %3771 = vmatprep.subr.bf16.mxu0 %v2638
      %3772 = vmatpush1.bf16.msra.mxu0 %v2637
      %3773 = vmatprep.subr.bf16.mxu0 %v2642
      %3774 = vmatpush1.bf16.msra.mxu0 %v2641
      %3775 = vmatprep.subr.bf16.mxu0 %v2646
      %3776 = vmatpush1.bf16.msra.mxu0 %v2645
      %3777 = vmatprep.subr.bf16.mxu0 %v2650
      %3778 = vmatpush1.bf16.msra.mxu0 %v2649
      %3779 = vmatprep.subr.bf16.mxu0 %v2654
      %3780 = vmatpush1.bf16.msra.mxu0 %v2653
      %3781 = vmatprep.subr.bf16.mxu0 %v2658
      %3782 = vmatpush1.bf16.msra.mxu0 %v2657
      %3783 = vmatprep.subr.bf16.mxu0 %v2662
      %3784 = vmatpush1.bf16.msra.mxu0 %v2661
      %3785 = vmatprep.mubr.bf16.mxu0 %v794
      %3786 = vmatmul.mubr.bf16.gmra.mrb[0].mxu0 %v786
      %v3787 = vpop.f32.mrb[0].mxu0
      %v3788 = vadd.f32 %v757, %v3787
      %v3789 = vpop.f32.mrb[0].mxu0
      %v3790 = vadd.f32 %v761, %v3789
      %v3791 = vpop.f32.mrb[0].mxu0
      %v3792 = vpop.f32.mrb[0].mxu0
      %3793 = vdwg.mxu0
      %3794 = vmatprep.subr.bf16.mxu0 %v2666
      %3795 = vmatpush1.bf16.msra.mxu0 %v2665
      %3796 = vmatprep.subr.bf16.mxu0 %v2670
      %3797 = vmatpush1.bf16.msra.mxu0 %v2669
      %3798 = vmatprep.subr.bf16.mxu0 %v2674
      %3799 = vmatpush1.bf16.msra.mxu0 %v2673
      %3800 = vmatprep.subr.bf16.mxu0 %v2678
      %3801 = vmatpush1.bf16.msra.mxu0 %v2677
      %3802 = vmatprep.subr.bf16.mxu0 %v2682
      %3803 = vmatpush1.bf16.msra.mxu0 %v2681
      %3804 = vmatprep.subr.bf16.mxu0 %v2686
      %3805 = vmatpush1.bf16.msra.mxu0 %v2685
      %3806 = vmatprep.subr.bf16.mxu0 %v2690
      %3807 = vmatpush1.bf16.msra.mxu0 %v2689
      %3808 = vmatprep.subr.bf16.mxu0 %v2694
      %3809 = vmatpush1.bf16.msra.mxu0 %v2693
      %3810 = vmatprep.subr.bf16.mxu0 %v2698
      %3811 = vmatpush1.bf16.msra.mxu0 %v2697
      %3812 = vmatprep.subr.bf16.mxu0 %v2702
      %3813 = vmatpush1.bf16.msra.mxu0 %v2701
      %3814 = vmatprep.subr.bf16.mxu0 %v2706
      %3815 = vmatpush1.bf16.msra.mxu0 %v2705
      %3816 = vmatprep.subr.bf16.mxu0 %v2710
      %3817 = vmatpush1.bf16.msra.mxu0 %v2709
      %3818 = vmatprep.subr.bf16.mxu0 %v2714
      %3819 = vmatpush1.bf16.msra.mxu0 %v2713
      %3820 = vmatprep.subr.bf16.mxu0 %v2718
      %3821 = vmatpush1.bf16.msra.mxu0 %v2717
      %3822 = vmatprep.subr.bf16.mxu0 %v2722
      %3823 = vmatpush1.bf16.msra.mxu0 %v2721
      %3824 = vmatprep.subr.bf16.mxu0 %v2726
      %3825 = vmatpush1.bf16.msra.mxu0 %v2725
      %3826 = vmatprep.mubr.bf16.mxu0 %v795
      %3827 = vmatmul.mubr.bf16.gmra.mrb[0].mxu0 %v793
      %v3828 = vpop.f32.mrb[0].mxu0
      %v3829 = vadd.f32 %v3788, %v3828
      %v3830 = vpop.f32.mrb[0].mxu0
      %v3831 = vadd.f32 %v3790, %v3830
      %v3832 = vpop.f32.mrb[0].mxu0
      %v3833 = vpop.f32.mrb[0].mxu0
      %3834 = vdwg.mxu0
      %3835 = vmatprep.subr.bf16.mxu0 %v2730
      %3836 = vmatpush1.bf16.msra.mxu0 %v2729
      %3837 = vmatprep.subr.bf16.mxu0 %v2734
      %3838 = vmatpush1.bf16.msra.mxu0 %v2733
      %3839 = vmatprep.subr.bf16.mxu0 %v2738
      %3840 = vmatpush1.bf16.msra.mxu0 %v2737
      %3841 = vmatprep.subr.bf16.mxu0 %v2742
      %3842 = vmatpush1.bf16.msra.mxu0 %v2741
      %3843 = vmatprep.subr.bf16.mxu0 %v2746
      %3844 = vmatpush1.bf16.msra.mxu0 %v2745
      %3845 = vmatprep.subr.bf16.mxu0 %v2750
      %3846 = vmatpush1.bf16.msra.mxu0 %v2749
      %3847 = vmatprep.subr.bf16.mxu0 %v2754
      %3848 = vmatpush1.bf16.msra.mxu0 %v2753
      %3849 = vmatprep.subr.bf16.mxu0 %v2758
      %3850 = vmatpush1.bf16.msra.mxu0 %v2757
      %3851 = vmatprep.subr.bf16.mxu0 %v2762
      %3852 = vmatpush1.bf16.msra.mxu0 %v2761
      %3853 = vmatprep.subr.bf16.mxu0 %v2766
      %3854 = vmatpush1.bf16.msra.mxu0 %v2765
      %3855 = vmatprep.subr.bf16.mxu0 %v2770
      %3856 = vmatpush1.bf16.msra.mxu0 %v2769
      %3857 = vmatprep.subr.bf16.mxu0 %v2774
      %3858 = vmatpush1.bf16.msra.mxu0 %v2773
      %3859 = vmatprep.subr.bf16.mxu0 %v2778
      %3860 = vmatpush1.bf16.msra.mxu0 %v2777
      %3861 = vmatprep.subr.bf16.mxu0 %v2782
      %3862 = vmatpush1.bf16.msra.mxu0 %v2781
      %3863 = vmatprep.subr.bf16.mxu0 %v2786
      %3864 = vmatpush1.bf16.msra.mxu0 %v2785
      %3865 = vmatprep.subr.bf16.mxu0 %v2790
      %3866 = vmatpush1.bf16.msra.mxu0 %v2789
      %3867 = vmatprep.mubr.bf16.mxu0 %v811
      %3868 = vmatmul.mubr.bf16.gmra.mrb[0].mxu0 %v803
      %v3869 = vpop.f32.mrb[0].mxu0
      %v3870 = vadd.f32 %v3829, %v3869
      %v3871 = vpop.f32.mrb[0].mxu0
      %v3872 = vadd.f32 %v3831, %v3871
      %v3873 = vpop.f32.mrb[0].mxu0
      %v3874 = vpop.f32.mrb[0].mxu0
      %3875 = vdwg.mxu0
      %3876 = vmatprep.subr.bf16.mxu0 %v2794
      %3877 = vmatpush1.bf16.msra.mxu0 %v2793
      %3878 = vmatprep.subr.bf16.mxu0 %v2798
      %3879 = vmatpush1.bf16.msra.mxu0 %v2797
      %3880 = vmatprep.subr.bf16.mxu0 %v2802
      %3881 = vmatpush1.bf16.msra.mxu0 %v2801
      %3882 = vmatprep.subr.bf16.mxu0 %v2806
      %3883 = vmatpush1.bf16.msra.mxu0 %v2805
      %3884 = vmatprep.subr.bf16.mxu0 %v2810
      %3885 = vmatpush1.bf16.msra.mxu0 %v2809
      %3886 = vmatprep.subr.bf16.mxu0 %v2814
      %3887 = vmatpush1.bf16.msra.mxu0 %v2813
      %3888 = vmatprep.subr.bf16.mxu0 %v2818
      %3889 = vmatpush1.bf16.msra.mxu0 %v2817
      %3890 = vmatprep.subr.bf16.mxu0 %v2822
      %3891 = vmatpush1.bf16.msra.mxu0 %v2821
      %3892 = vmatprep.subr.bf16.mxu0 %v2826
      %3893 = vmatpush1.bf16.msra.mxu0 %v2825
      %3894 = vmatprep.subr.bf16.mxu0 %v2830
      %3895 = vmatpush1.bf16.msra.mxu0 %v2829
      %3896 = vmatprep.subr.bf16.mxu0 %v2834
      %3897 = vmatpush1.bf16.msra.mxu0 %v2833
      %3898 = vmatprep.subr.bf16.mxu0 %v2838
      %3899 = vmatpush1.bf16.msra.mxu0 %v2837
      %3900 = vmatprep.subr.bf16.mxu0 %v2842
      %3901 = vmatpush1.bf16.msra.mxu0 %v2841
      %3902 = vmatprep.subr.bf16.mxu0 %v2846
      %3903 = vmatpush1.bf16.msra.mxu0 %v2845
      %3904 = vmatprep.subr.bf16.mxu0 %v2850
      %3905 = vmatpush1.bf16.msra.mxu0 %v2849
      %3906 = vmatprep.subr.bf16.mxu0 %v2854
      %3907 = vmatpush1.bf16.msra.mxu0 %v2853
      %3908 = vmatprep.mubr.bf16.mxu0 %v812
      %3909 = vmatmul.mubr.bf16.gmra.mrb[0].mxu0 %v810
      %v3910 = vpop.f32.mrb[0].mxu0
      %v3911 = vadd.f32 %v3870, %v3910
      %v3912 = vpop.f32.mrb[0].mxu0
      %v3913 = vadd.f32 %v3872, %v3912
      %v3914 = vpop.f32.mrb[0].mxu0
      %v3915 = vpop.f32.mrb[0].mxu0
      %3916 = vdwg.mxu0
      %3917 = vmatprep.subr.bf16.mxu0 %v2858
      %3918 = vmatpush1.bf16.msra.mxu0 %v2857
      %3919 = vmatprep.subr.bf16.mxu0 %v2862
      %3920 = vmatpush1.bf16.msra.mxu0 %v2861
      %3921 = vmatprep.subr.bf16.mxu0 %v2866
      %3922 = vmatpush1.bf16.msra.mxu0 %v2865
      %3923 = vmatprep.subr.bf16.mxu0 %v2870
      %3924 = vmatpush1.bf16.msra.mxu0 %v2869
      %3925 = vmatprep.subr.bf16.mxu0 %v2874
      %3926 = vmatpush1.bf16.msra.mxu0 %v2873
      %3927 = vmatprep.subr.bf16.mxu0 %v2878
      %3928 = vmatpush1.bf16.msra.mxu0 %v2877
      %3929 = vmatprep.subr.bf16.mxu0 %v2882
      %3930 = vmatpush1.bf16.msra.mxu0 %v2881
      %3931 = vmatprep.subr.bf16.mxu0 %v2886
      %3932 = vmatpush1.bf16.msra.mxu0 %v2885
      %3933 = vmatprep.subr.bf16.mxu0 %v2890
      %3934 = vmatpush1.bf16.msra.mxu0 %v2889
      %3935 = vmatprep.subr.bf16.mxu0 %v2894
      %3936 = vmatpush1.bf16.msra.mxu0 %v2893
      %3937 = vmatprep.subr.bf16.mxu0 %v2898
      %3938 = vmatpush1.bf16.msra.mxu0 %v2897
      %3939 = vmatprep.subr.bf16.mxu0 %v2902
      %3940 = vmatpush1.bf16.msra.mxu0 %v2901
      %3941 = vmatprep.subr.bf16.mxu0 %v2906
      %3942 = vmatpush1.bf16.msra.mxu0 %v2905
      %3943 = vmatprep.subr.bf16.mxu0 %v2910
      %3944 = vmatpush1.bf16.msra.mxu0 %v2909
      %3945 = vmatprep.subr.bf16.mxu0 %v2914
      %3946 = vmatpush1.bf16.msra.mxu0 %v2913
      %3947 = vmatprep.subr.bf16.mxu0 %v2918
      %3948 = vmatpush1.bf16.msra.mxu0 %v2917
      %3949 = vmatprep.mubr.bf16.mxu0 %v828
      %3950 = vmatmul.mubr.bf16.gmra.mrb[0].mxu0 %v820
      %v3951 = vpop.f32.mrb[0].mxu0
      %v3952 = vadd.f32 %v3911, %v3951
      %v3953 = vpop.f32.mrb[0].mxu0
      %v3954 = vadd.f32 %v3913, %v3953
      %v3955 = vpop.f32.mrb[0].mxu0
      %v3956 = vpop.f32.mrb[0].mxu0
      %3957 = vdwg.mxu0
      %3958 = vmatprep.subr.bf16.mxu0 %v2922
      %3959 = vmatpush1.bf16.msra.mxu0 %v2921
      %3960 = vmatprep.subr.bf16.mxu0 %v2926
      %3961 = vmatpush1.bf16.msra.mxu0 %v2925
      %3962 = vmatprep.subr.bf16.mxu0 %v2930
      %3963 = vmatpush1.bf16.msra.mxu0 %v2929
      %3964 = vmatprep.subr.bf16.mxu0 %v2934
      %3965 = vmatpush1.bf16.msra.mxu0 %v2933
      %3966 = vmatprep.subr.bf16.mxu0 %v2938
      %3967 = vmatpush1.bf16.msra.mxu0 %v2937
      %3968 = vmatprep.subr.bf16.mxu0 %v2942
      %3969 = vmatpush1.bf16.msra.mxu0 %v2941
      %3970 = vmatprep.subr.bf16.mxu0 %v2946
      %3971 = vmatpush1.bf16.msra.mxu0 %v2945
      %3972 = vmatprep.subr.bf16.mxu0 %v2950
      %3973 = vmatpush1.bf16.msra.mxu0 %v2949
      %3974 = vmatprep.subr.bf16.mxu0 %v2954
      %3975 = vmatpush1.bf16.msra.mxu0 %v2953
      %3976 = vmatprep.subr.bf16.mxu0 %v2958
      %3977 = vmatpush1.bf16.msra.mxu0 %v2957
      %3978 = vmatprep.subr.bf16.mxu0 %v2962
      %3979 = vmatpush1.bf16.msra.mxu0 %v2961
      %3980 = vmatprep.subr.bf16.mxu0 %v2966
      %3981 = vmatpush1.bf16.msra.mxu0 %v2965
      %3982 = vmatprep.subr.bf16.mxu0 %v2970
      %3983 = vmatpush1.bf16.msra.mxu0 %v2969
      %3984 = vmatprep.subr.bf16.mxu0 %v2974
      %3985 = vmatpush1.bf16.msra.mxu0 %v2973
      %3986 = vmatprep.subr.bf16.mxu0 %v2978
      %3987 = vmatpush1.bf16.msra.mxu0 %v2977
      %3988 = vmatprep.subr.bf16.mxu0 %v2982
      %3989 = vmatpush1.bf16.msra.mxu0 %v2981
      %3990 = vmatprep.mubr.bf16.mxu0 %v829
      %3991 = vmatmul.mubr.bf16.gmra.mrb[0].mxu0 %v827
      %v3992 = vpop.f32.mrb[0].mxu0
      %v3993 = vadd.f32 %v3952, %v3992
      %v3994 = vpop.f32.mrb[0].mxu0
      %v3995 = vadd.f32 %v3954, %v3994
      %v3996 = vpop.f32.mrb[0].mxu0
      %v3997 = vpop.f32.mrb[0].mxu0
      %3998 = vdwg.mxu0
      %3999 = vmatprep.subr.bf16.mxu0 %v2986
      %4000 = vmatpush1.bf16.msra.mxu0 %v2985
      %4001 = vmatprep.subr.bf16.mxu0 %v2990
      %4002 = vmatpush1.bf16.msra.mxu0 %v2989
      %4003 = vmatprep.subr.bf16.mxu0 %v2994
      %4004 = vmatpush1.bf16.msra.mxu0 %v2993
      %4005 = vmatprep.subr.bf16.mxu0 %v2998
      %4006 = vmatpush1.bf16.msra.mxu0 %v2997
      %4007 = vmatprep.subr.bf16.mxu0 %v3002
      %4008 = vmatpush1.bf16.msra.mxu0 %v3001
      %4009 = vmatprep.subr.bf16.mxu0 %v3006
      %4010 = vmatpush1.bf16.msra.mxu0 %v3005
      %4011 = vmatprep.subr.bf16.mxu0 %v3010
      %4012 = vmatpush1.bf16.msra.mxu0 %v3009
      %4013 = vmatprep.subr.bf16.mxu0 %v3014
      %4014 = vmatpush1.bf16.msra.mxu0 %v3013
      %4015 = vmatprep.subr.bf16.mxu0 %v3018
      %4016 = vmatpush1.bf16.msra.mxu0 %v3017
      %4017 = vmatprep.subr.bf16.mxu0 %v3022
      %4018 = vmatpush1.bf16.msra.mxu0 %v3021
      %4019 = vmatprep.subr.bf16.mxu0 %v3026
      %4020 = vmatpush1.bf16.msra.mxu0 %v3025
      %4021 = vmatprep.subr.bf16.mxu0 %v3030
      %4022 = vmatpush1.bf16.msra.mxu0 %v3029
      %4023 = vmatprep.subr.bf16.mxu0 %v3034
      %4024 = vmatpush1.bf16.msra.mxu0 %v3033
      %4025 = vmatprep.subr.bf16.mxu0 %v3038
      %4026 = vmatpush1.bf16.msra.mxu0 %v3037
      %4027 = vmatprep.subr.bf16.mxu0 %v3042
      %4028 = vmatpush1.bf16.msra.mxu0 %v3041
      %4029 = vmatprep.subr.bf16.mxu0 %v3046
      %4030 = vmatpush1.bf16.msra.mxu0 %v3045
      %4031 = vmatprep.mubr.bf16.mxu0 %v845
      %4032 = vmatmul.mubr.bf16.gmra.mrb[0].mxu0 %v837
      %v4033 = vpop.f32.mrb[0].mxu0
      %v4034 = vadd.f32 %v3993, %v4033
      %v4035 = vpop.f32.mrb[0].mxu0
      %v4036 = vadd.f32 %v3995, %v4035
      %v4037 = vpop.f32.mrb[0].mxu0
      %v4038 = vpop.f32.mrb[0].mxu0
      %4039 = vdwg.mxu0
      %4040 = vmatprep.subr.bf16.mxu0 %v3050
      %4041 = vmatpush1.bf16.msra.mxu0 %v3049
      %4042 = vmatprep.subr.bf16.mxu0 %v3054
      %4043 = vmatpush1.bf16.msra.mxu0 %v3053
      %4044 = vmatprep.subr.bf16.mxu0 %v3058
      %4045 = vmatpush1.bf16.msra.mxu0 %v3057
      %4046 = vmatprep.subr.bf16.mxu0 %v3062
      %4047 = vmatpush1.bf16.msra.mxu0 %v3061
      %4048 = vmatprep.subr.bf16.mxu0 %v3066
      %4049 = vmatpush1.bf16.msra.mxu0 %v3065
      %4050 = vmatprep.subr.bf16.mxu0 %v3070
      %4051 = vmatpush1.bf16.msra.mxu0 %v3069
      %4052 = vmatprep.subr.bf16.mxu0 %v3074
      %4053 = vmatpush1.bf16.msra.mxu0 %v3073
      %4054 = vmatprep.subr.bf16.mxu0 %v3078
      %4055 = vmatpush1.bf16.msra.mxu0 %v3077
      %4056 = vmatprep.subr.bf16.mxu0 %v3082
      %4057 = vmatpush1.bf16.msra.mxu0 %v3081
      %4058 = vmatprep.subr.bf16.mxu0 %v3086
      %4059 = vmatpush1.bf16.msra.mxu0 %v3085
      %4060 = vmatprep.subr.bf16.mxu0 %v3090
      %4061 = vmatpush1.bf16.msra.mxu0 %v3089
      %4062 = vmatprep.subr.bf16.mxu0 %v3094
      %4063 = vmatpush1.bf16.msra.mxu0 %v3093
      %4064 = vmatprep.subr.bf16.mxu0 %v3098
      %4065 = vmatpush1.bf16.msra.mxu0 %v3097
      %4066 = vmatprep.subr.bf16.mxu0 %v3102
      %4067 = vmatpush1.bf16.msra.mxu0 %v3101
      %4068 = vmatprep.subr.bf16.mxu0 %v3106
      %4069 = vmatpush1.bf16.msra.mxu0 %v3105
      %4070 = vmatprep.subr.bf16.mxu0 %v3110
      %4071 = vmatpush1.bf16.msra.mxu0 %v3109
      %4072 = vmatprep.mubr.bf16.mxu0 %v846
      %4073 = vmatmul.mubr.bf16.gmra.mrb[0].mxu0 %v844
      %v4074 = vpop.f32.mrb[0].mxu0
      %v4075 = vadd.f32 %v4034, %v4074
      %v4076 = vpop.f32.mrb[0].mxu0
      %v4077 = vadd.f32 %v4036, %v4076
      %v4078 = vpop.f32.mrb[0].mxu0
      %v4079 = vpop.f32.mrb[0].mxu0
      %4080 = vdwg.mxu0
      %4081 = vmatprep.subr.bf16.mxu0 %v3114
      %4082 = vmatpush1.bf16.msra.mxu0 %v3113
      %4083 = vmatprep.subr.bf16.mxu0 %v3118
      %4084 = vmatpush1.bf16.msra.mxu0 %v3117
      %4085 = vmatprep.subr.bf16.mxu0 %v3122
      %4086 = vmatpush1.bf16.msra.mxu0 %v3121
      %4087 = vmatprep.subr.bf16.mxu0 %v3126
      %4088 = vmatpush1.bf16.msra.mxu0 %v3125
      %4089 = vmatprep.subr.bf16.mxu0 %v3130
      %4090 = vmatpush1.bf16.msra.mxu0 %v3129
      %4091 = vmatprep.subr.bf16.mxu0 %v3134
      %4092 = vmatpush1.bf16.msra.mxu0 %v3133
      %4093 = vmatprep.subr.bf16.mxu0 %v3138
      %4094 = vmatpush1.bf16.msra.mxu0 %v3137
      %4095 = vmatprep.subr.bf16.mxu0 %v3142
      %4096 = vmatpush1.bf16.msra.mxu0 %v3141
      %4097 = vmatprep.subr.bf16.mxu0 %v3146
      %4098 = vmatpush1.bf16.msra.mxu0 %v3145
      %4099 = vmatprep.subr.bf16.mxu0 %v3150
      %4100 = vmatpush1.bf16.msra.mxu0 %v3149
      %4101 = vmatprep.subr.bf16.mxu0 %v3154
      %4102 = vmatpush1.bf16.msra.mxu0 %v3153
      %4103 = vmatprep.subr.bf16.mxu0 %v3158
      %4104 = vmatpush1.bf16.msra.mxu0 %v3157
      %4105 = vmatprep.subr.bf16.mxu0 %v3162
      %4106 = vmatpush1.bf16.msra.mxu0 %v3161
      %4107 = vmatprep.subr.bf16.mxu0 %v3166
      %4108 = vmatpush1.bf16.msra.mxu0 %v3165
      %4109 = vmatprep.subr.bf16.mxu0 %v3170
      %4110 = vmatpush1.bf16.msra.mxu0 %v3169
      %4111 = vmatprep.subr.bf16.mxu0 %v3174
      %4112 = vmatpush1.bf16.msra.mxu0 %v3173
      %4113 = vmatprep.mubr.bf16.mxu0 %v854
      %4114 = vmatmul.mubr.bf16.gmra.mrb[0].mxu0 %v853
      %v4115 = vpop.f32.mrb[0].mxu0
      %v4116 = vadd.f32 %v4075, %v4115
      %v4117 = vpop.f32.mrb[0].mxu0
      %v4118 = vadd.f32 %v4077, %v4117
      %v4119 = vpop.f32.mrb[0].mxu0
      %v4120 = vpop.f32.mrb[0].mxu0
      %4121 = vdwg.mxu0
      %4122 = vmatprep.subr.bf16.mxu0 %v2604
      %4123 = vmatpush1.bf16.msra.mxu0 %v2603
      %4124 = vmatprep.subr.bf16.mxu0 %v2608
      %4125 = vmatpush1.bf16.msra.mxu0 %v2607
      %4126 = vmatprep.subr.bf16.mxu0 %v2612
      %4127 = vmatpush1.bf16.msra.mxu0 %v2611
      %4128 = vmatprep.subr.bf16.mxu0 %v2616
      %4129 = vmatpush1.bf16.msra.mxu0 %v2615
      %4130 = vmatprep.subr.bf16.mxu0 %v2620
      %4131 = vmatpush1.bf16.msra.mxu0 %v2619
      %4132 = vmatprep.subr.bf16.mxu0 %v2624
      %4133 = vmatpush1.bf16.msra.mxu0 %v2623
      %4134 = vmatprep.subr.bf16.mxu0 %v2628
      %4135 = vmatpush1.bf16.msra.mxu0 %v2627
      %4136 = vmatprep.subr.bf16.mxu0 %v2632
      %4137 = vmatpush1.bf16.msra.mxu0 %v2631
      %4138 = vmatprep.subr.bf16.mxu0 %v2636
      %4139 = vmatpush1.bf16.msra.mxu0 %v2635
      %4140 = vmatprep.subr.bf16.mxu0 %v2640
      %4141 = vmatpush1.bf16.msra.mxu0 %v2639
      %4142 = vmatprep.subr.bf16.mxu0 %v2644
      %4143 = vmatpush1.bf16.msra.mxu0 %v2643
      %4144 = vmatprep.subr.bf16.mxu0 %v2648
      %4145 = vmatpush1.bf16.msra.mxu0 %v2647
      %4146 = vmatprep.subr.bf16.mxu0 %v2652
      %4147 = vmatpush1.bf16.msra.mxu0 %v2651
      %4148 = vmatprep.subr.bf16.mxu0 %v2656
      %4149 = vmatpush1.bf16.msra.mxu0 %v2655
      %4150 = vmatprep.subr.bf16.mxu0 %v2660
      %4151 = vmatpush1.bf16.msra.mxu0 %v2659
      %4152 = vmatprep.subr.bf16.mxu0 %v2664
      %4153 = vmatpush1.bf16.msra.mxu0 %v2663
      %4154 = vmatprep.mubr.bf16.mxu0 %v794
      %4155 = vmatmul.mubr.bf16.gmra.mrb[0].mxu0 %v786
      %v4156 = vpop.f32.mrb[0].mxu0
      %v4157 = vadd.f32 %v765, %v4156
      %v4158 = vpop.f32.mrb[0].mxu0
      %v4159 = vadd.f32 %v769, %v4158
      %v4160 = vpop.f32.mrb[0].mxu0
      %v4161 = vpop.f32.mrb[0].mxu0
      %4162 = vdwg.mxu0
      %4163 = vmatprep.subr.bf16.mxu0 %v2668
      %4164 = vmatpush1.bf16.msra.mxu0 %v2667
      %4165 = vmatprep.subr.bf16.mxu0 %v2672
      %4166 = vmatpush1.bf16.msra.mxu0 %v2671
      %4167 = vmatprep.subr.bf16.mxu0 %v2676
      %4168 = vmatpush1.bf16.msra.mxu0 %v2675
      %4169 = vmatprep.subr.bf16.mxu0 %v2680
      %4170 = vmatpush1.bf16.msra.mxu0 %v2679
      %4171 = vmatprep.subr.bf16.mxu0 %v2684
      %4172 = vmatpush1.bf16.msra.mxu0 %v2683
      %4173 = vmatprep.subr.bf16.mxu0 %v2688
      %4174 = vmatpush1.bf16.msra.mxu0 %v2687
      %4175 = vmatprep.subr.bf16.mxu0 %v2692
      %4176 = vmatpush1.bf16.msra.mxu0 %v2691
      %4177 = vmatprep.subr.bf16.mxu0 %v2696
      %4178 = vmatpush1.bf16.msra.mxu0 %v2695
      %4179 = vmatprep.subr.bf16.mxu0 %v2700
      %4180 = vmatpush1.bf16.msra.mxu0 %v2699
      %4181 = vmatprep.subr.bf16.mxu0 %v2704
      %4182 = vmatpush1.bf16.msra.mxu0 %v2703
      %4183 = vmatprep.subr.bf16.mxu0 %v2708
      %4184 = vmatpush1.bf16.msra.mxu0 %v2707
      %4185 = vmatprep.subr.bf16.mxu0 %v2712
      %4186 = vmatpush1.bf16.msra.mxu0 %v2711
      %4187 = vmatprep.subr.bf16.mxu0 %v2716
      %4188 = vmatpush1.bf16.msra.mxu0 %v2715
      %4189 = vmatprep.subr.bf16.mxu0 %v2720
      %4190 = vmatpush1.bf16.msra.mxu0 %v2719
      %4191 = vmatprep.subr.bf16.mxu0 %v2724
      %4192 = vmatpush1.bf16.msra.mxu0 %v2723
      %4193 = vmatprep.subr.bf16.mxu0 %v2728
      %4194 = vmatpush1.bf16.msra.mxu0 %v2727
      %4195 = vmatprep.mubr.bf16.mxu0 %v795
      %4196 = vmatmul.mubr.bf16.gmra.mrb[0].mxu0 %v793
      %v4197 = vpop.f32.mrb[0].mxu0
      %v4198 = vadd.f32 %v4157, %v4197
      %v4199 = vpop.f32.mrb[0].mxu0
      %v4200 = vadd.f32 %v4159, %v4199
      %v4201 = vpop.f32.mrb[0].mxu0
      %v4202 = vpop.f32.mrb[0].mxu0
      %4203 = vdwg.mxu0
      %4204 = vmatprep.subr.bf16.mxu0 %v2732
      %4205 = vmatpush1.bf16.msra.mxu0 %v2731
      %4206 = vmatprep.subr.bf16.mxu0 %v2736
      %4207 = vmatpush1.bf16.msra.mxu0 %v2735
      %4208 = vmatprep.subr.bf16.mxu0 %v2740
      %4209 = vmatpush1.bf16.msra.mxu0 %v2739
      %4210 = vmatprep.subr.bf16.mxu0 %v2744
      %4211 = vmatpush1.bf16.msra.mxu0 %v2743
      %4212 = vmatprep.subr.bf16.mxu0 %v2748
      %4213 = vmatpush1.bf16.msra.mxu0 %v2747
      %4214 = vmatprep.subr.bf16.mxu0 %v2752
      %4215 = vmatpush1.bf16.msra.mxu0 %v2751
      %4216 = vmatprep.subr.bf16.mxu0 %v2756
      %4217 = vmatpush1.bf16.msra.mxu0 %v2755
      %4218 = vmatprep.subr.bf16.mxu0 %v2760
      %4219 = vmatpush1.bf16.msra.mxu0 %v2759
      %4220 = vmatprep.subr.bf16.mxu0 %v2764
      %4221 = vmatpush1.bf16.msra.mxu0 %v2763
      %4222 = vmatprep.subr.bf16.mxu0 %v2768
      %4223 = vmatpush1.bf16.msra.mxu0 %v2767
      %4224 = vmatprep.subr.bf16.mxu0 %v2772
      %4225 = vmatpush1.bf16.msra.mxu0 %v2771
      %4226 = vmatprep.subr.bf16.mxu0 %v2776
      %4227 = vmatpush1.bf16.msra.mxu0 %v2775
      %4228 = vmatprep.subr.bf16.mxu0 %v2780
      %4229 = vmatpush1.bf16.msra.mxu0 %v2779
      %4230 = vmatprep.subr.bf16.mxu0 %v2784
      %4231 = vmatpush1.bf16.msra.mxu0 %v2783
      %4232 = vmatprep.subr.bf16.mxu0 %v2788
      %4233 = vmatpush1.bf16.msra.mxu0 %v2787
      %4234 = vmatprep.subr.bf16.mxu0 %v2792
      %4235 = vmatpush1.bf16.msra.mxu0 %v2791
      %4236 = vmatprep.mubr.bf16.mxu0 %v811
      %4237 = vmatmul.mubr.bf16.gmra.mrb[0].mxu0 %v803
      %v4238 = vpop.f32.mrb[0].mxu0
      %v4239 = vadd.f32 %v4198, %v4238
      %v4240 = vpop.f32.mrb[0].mxu0
      %v4241 = vadd.f32 %v4200, %v4240
      %v4242 = vpop.f32.mrb[0].mxu0
      %v4243 = vpop.f32.mrb[0].mxu0
      %4244 = vdwg.mxu0
      %4245 = vmatprep.subr.bf16.mxu0 %v2796
      %4246 = vmatpush1.bf16.msra.mxu0 %v2795
      %4247 = vmatprep.subr.bf16.mxu0 %v2800
      %4248 = vmatpush1.bf16.msra.mxu0 %v2799
      %4249 = vmatprep.subr.bf16.mxu0 %v2804
      %4250 = vmatpush1.bf16.msra.mxu0 %v2803
      %4251 = vmatprep.subr.bf16.mxu0 %v2808
      %4252 = vmatpush1.bf16.msra.mxu0 %v2807
      %4253 = vmatprep.subr.bf16.mxu0 %v2812
      %4254 = vmatpush1.bf16.msra.mxu0 %v2811
      %4255 = vmatprep.subr.bf16.mxu0 %v2816
      %4256 = vmatpush1.bf16.msra.mxu0 %v2815
      %4257 = vmatprep.subr.bf16.mxu0 %v2820
      %4258 = vmatpush1.bf16.msra.mxu0 %v2819
      %4259 = vmatprep.subr.bf16.mxu0 %v2824
      %4260 = vmatpush1.bf16.msra.mxu0 %v2823
      %4261 = vmatprep.subr.bf16.mxu0 %v2828
      %4262 = vmatpush1.bf16.msra.mxu0 %v2827
      %4263 = vmatprep.subr.bf16.mxu0 %v2832
      %4264 = vmatpush1.bf16.msra.mxu0 %v2831
      %4265 = vmatprep.subr.bf16.mxu0 %v2836
      %4266 = vmatpush1.bf16.msra.mxu0 %v2835
      %4267 = vmatprep.subr.bf16.mxu0 %v2840
      %4268 = vmatpush1.bf16.msra.mxu0 %v2839
      %4269 = vmatprep.subr.bf16.mxu0 %v2844
      %4270 = vmatpush1.bf16.msra.mxu0 %v2843
      %4271 = vmatprep.subr.bf16.mxu0 %v2848
      %4272 = vmatpush1.bf16.msra.mxu0 %v2847
      %4273 = vmatprep.subr.bf16.mxu0 %v2852
      %4274 = vmatpush1.bf16.msra.mxu0 %v2851
      %4275 = vmatprep.subr.bf16.mxu0 %v2856
      %4276 = vmatpush1.bf16.msra.mxu0 %v2855
      %4277 = vmatprep.mubr.bf16.mxu0 %v812
      %4278 = vmatmul.mubr.bf16.gmra.mrb[0].mxu0 %v810
      %v4279 = vpop.f32.mrb[0].mxu0
      %v4280 = vadd.f32 %v4239, %v4279
      %v4281 = vpop.f32.mrb[0].mxu0
      %v4282 = vadd.f32 %v4241, %v4281
      %v4283 = vpop.f32.mrb[0].mxu0
      %v4284 = vpop.f32.mrb[0].mxu0
      %4285 = vdwg.mxu0
      %4286 = vmatprep.subr.bf16.mxu0 %v2860
      %4287 = vmatpush1.bf16.msra.mxu0 %v2859
      %4288 = vmatprep.subr.bf16.mxu0 %v2864
      %4289 = vmatpush1.bf16.msra.mxu0 %v2863
      %4290 = vmatprep.subr.bf16.mxu0 %v2868
      %4291 = vmatpush1.bf16.msra.mxu0 %v2867
      %4292 = vmatprep.subr.bf16.mxu0 %v2872
      %4293 = vmatpush1.bf16.msra.mxu0 %v2871
      %4294 = vmatprep.subr.bf16.mxu0 %v2876
      %4295 = vmatpush1.bf16.msra.mxu0 %v2875
      %4296 = vmatprep.subr.bf16.mxu0 %v2880
      %4297 = vmatpush1.bf16.msra.mxu0 %v2879
      %4298 = vmatprep.subr.bf16.mxu0 %v2884
      %4299 = vmatpush1.bf16.msra.mxu0 %v2883
      %4300 = vmatprep.subr.bf16.mxu0 %v2888
      %4301 = vmatpush1.bf16.msra.mxu0 %v2887
      %4302 = vmatprep.subr.bf16.mxu0 %v2892
      %4303 = vmatpush1.bf16.msra.mxu0 %v2891
      %4304 = vmatprep.subr.bf16.mxu0 %v2896
      %4305 = vmatpush1.bf16.msra.mxu0 %v2895
      %4306 = vmatprep.subr.bf16.mxu0 %v2900
      %4307 = vmatpush1.bf16.msra.mxu0 %v2899
      %4308 = vmatprep.subr.bf16.mxu0 %v2904
      %4309 = vmatpush1.bf16.msra.mxu0 %v2903
      %4310 = vmatprep.subr.bf16.mxu0 %v2908
      %4311 = vmatpush1.bf16.msra.mxu0 %v2907
      %4312 = vmatprep.subr.bf16.mxu0 %v2912
      %4313 = vmatpush1.bf16.msra.mxu0 %v2911
      %4314 = vmatprep.subr.bf16.mxu0 %v2916
      %4315 = vmatpush1.bf16.msra.mxu0 %v2915
      %4316 = vmatprep.subr.bf16.mxu0 %v2920
      %4317 = vmatpush1.bf16.msra.mxu0 %v2919
      %4318 = vmatprep.mubr.bf16.mxu0 %v828
      %4319 = vmatmul.mubr.bf16.gmra.mrb[0].mxu0 %v820
      %v4320 = vpop.f32.mrb[0].mxu0
      %v4321 = vadd.f32 %v4280, %v4320
      %v4322 = vpop.f32.mrb[0].mxu0
      %v4323 = vadd.f32 %v4282, %v4322
      %v4324 = vpop.f32.mrb[0].mxu0
      %v4325 = vpop.f32.mrb[0].mxu0
      %4326 = vdwg.mxu0
      %4327 = vmatprep.subr.bf16.mxu0 %v2924
      %4328 = vmatpush1.bf16.msra.mxu0 %v2923
      %4329 = vmatprep.subr.bf16.mxu0 %v2928
      %4330 = vmatpush1.bf16.msra.mxu0 %v2927
      %4331 = vmatprep.subr.bf16.mxu0 %v2932
      %4332 = vmatpush1.bf16.msra.mxu0 %v2931
      %4333 = vmatprep.subr.bf16.mxu0 %v2936
      %4334 = vmatpush1.bf16.msra.mxu0 %v2935
      %4335 = vmatprep.subr.bf16.mxu0 %v2940
      %4336 = vmatpush1.bf16.msra.mxu0 %v2939
      %4337 = vmatprep.subr.bf16.mxu0 %v2944
      %4338 = vmatpush1.bf16.msra.mxu0 %v2943
      %4339 = vmatprep.subr.bf16.mxu0 %v2948
      %4340 = vmatpush1.bf16.msra.mxu0 %v2947
      %4341 = vmatprep.subr.bf16.mxu0 %v2952
      %4342 = vmatpush1.bf16.msra.mxu0 %v2951
      %4343 = vmatprep.subr.bf16.mxu0 %v2956
      %4344 = vmatpush1.bf16.msra.mxu0 %v2955
      %4345 = vmatprep.subr.bf16.mxu0 %v2960
      %4346 = vmatpush1.bf16.msra.mxu0 %v2959
      %4347 = vmatprep.subr.bf16.mxu0 %v2964
      %4348 = vmatpush1.bf16.msra.mxu0 %v2963
      %4349 = vmatprep.subr.bf16.mxu0 %v2968
      %4350 = vmatpush1.bf16.msra.mxu0 %v2967
      %4351 = vmatprep.subr.bf16.mxu0 %v2972
      %4352 = vmatpush1.bf16.msra.mxu0 %v2971
      %4353 = vmatprep.subr.bf16.mxu0 %v2976
      %4354 = vmatpush1.bf16.msra.mxu0 %v2975
      %4355 = vmatprep.subr.bf16.mxu0 %v2980
      %4356 = vmatpush1.bf16.msra.mxu0 %v2979
      %4357 = vmatprep.subr.bf16.mxu0 %v2984
      %4358 = vmatpush1.bf16.msra.mxu0 %v2983
      %4359 = vmatprep.mubr.bf16.mxu0 %v829
      %4360 = vmatmul.mubr.bf16.gmra.mrb[0].mxu0 %v827
      %v4361 = vpop.f32.mrb[0].mxu0
      %v4362 = vadd.f32 %v4321, %v4361
      %v4363 = vpop.f32.mrb[0].mxu0
      %v4364 = vadd.f32 %v4323, %v4363
      %v4365 = vpop.f32.mrb[0].mxu0
      %v4366 = vpop.f32.mrb[0].mxu0
      %4367 = vdwg.mxu0
      %4368 = vmatprep.subr.bf16.mxu0 %v2988
      %4369 = vmatpush1.bf16.msra.mxu0 %v2987
      %4370 = vmatprep.subr.bf16.mxu0 %v2992
      %4371 = vmatpush1.bf16.msra.mxu0 %v2991
      %4372 = vmatprep.subr.bf16.mxu0 %v2996
      %4373 = vmatpush1.bf16.msra.mxu0 %v2995
      %4374 = vmatprep.subr.bf16.mxu0 %v3000
      %4375 = vmatpush1.bf16.msra.mxu0 %v2999
      %4376 = vmatprep.subr.bf16.mxu0 %v3004
      %4377 = vmatpush1.bf16.msra.mxu0 %v3003
      %4378 = vmatprep.subr.bf16.mxu0 %v3008
      %4379 = vmatpush1.bf16.msra.mxu0 %v3007
      %4380 = vmatprep.subr.bf16.mxu0 %v3012
      %4381 = vmatpush1.bf16.msra.mxu0 %v3011
      %4382 = vmatprep.subr.bf16.mxu0 %v3016
      %4383 = vmatpush1.bf16.msra.mxu0 %v3015
      %4384 = vmatprep.subr.bf16.mxu0 %v3020
      %4385 = vmatpush1.bf16.msra.mxu0 %v3019
      %4386 = vmatprep.subr.bf16.mxu0 %v3024
      %4387 = vmatpush1.bf16.msra.mxu0 %v3023
      %4388 = vmatprep.subr.bf16.mxu0 %v3028
      %4389 = vmatpush1.bf16.msra.mxu0 %v3027
      %4390 = vmatprep.subr.bf16.mxu0 %v3032
      %4391 = vmatpush1.bf16.msra.mxu0 %v3031
      %4392 = vmatprep.subr.bf16.mxu0 %v3036
      %4393 = vmatpush1.bf16.msra.mxu0 %v3035
      %4394 = vmatprep.subr.bf16.mxu0 %v3040
      %4395 = vmatpush1.bf16.msra.mxu0 %v3039
      %4396 = vmatprep.subr.bf16.mxu0 %v3044
      %4397 = vmatpush1.bf16.msra.mxu0 %v3043
      %4398 = vmatprep.subr.bf16.mxu0 %v3048
      %4399 = vmatpush1.bf16.msra.mxu0 %v3047
      %4400 = vmatprep.mubr.bf16.mxu0 %v845
      %4401 = vmatmul.mubr.bf16.gmra.mrb[0].mxu0 %v837
      %v4402 = vpop.f32.mrb[0].mxu0
      %v4403 = vadd.f32 %v4362, %v4402
      %v4404 = vpop.f32.mrb[0].mxu0
      %v4405 = vadd.f32 %v4364, %v4404
      %v4406 = vpop.f32.mrb[0].mxu0
      %v4407 = vpop.f32.mrb[0].mxu0
      %4408 = vdwg.mxu0
      %4409 = vmatprep.subr.bf16.mxu0 %v3052
      %4410 = vmatpush1.bf16.msra.mxu0 %v3051
      %4411 = vmatprep.subr.bf16.mxu0 %v3056
      %4412 = vmatpush1.bf16.msra.mxu0 %v3055
      %4413 = vmatprep.subr.bf16.mxu0 %v3060
      %4414 = vmatpush1.bf16.msra.mxu0 %v3059
      %4415 = vmatprep.subr.bf16.mxu0 %v3064
      %4416 = vmatpush1.bf16.msra.mxu0 %v3063
      %4417 = vmatprep.subr.bf16.mxu0 %v3068
      %4418 = vmatpush1.bf16.msra.mxu0 %v3067
      %4419 = vmatprep.subr.bf16.mxu0 %v3072
      %4420 = vmatpush1.bf16.msra.mxu0 %v3071
      %4421 = vmatprep.subr.bf16.mxu0 %v3076
      %4422 = vmatpush1.bf16.msra.mxu0 %v3075
      %4423 = vmatprep.subr.bf16.mxu0 %v3080
      %4424 = vmatpush1.bf16.msra.mxu0 %v3079
      %4425 = vmatprep.subr.bf16.mxu0 %v3084
      %4426 = vmatpush1.bf16.msra.mxu0 %v3083
      %4427 = vmatprep.subr.bf16.mxu0 %v3088
      %4428 = vmatpush1.bf16.msra.mxu0 %v3087
      %4429 = vmatprep.subr.bf16.mxu0 %v3092
      %4430 = vmatpush1.bf16.msra.mxu0 %v3091
      %4431 = vmatprep.subr.bf16.mxu0 %v3096
      %4432 = vmatpush1.bf16.msra.mxu0 %v3095
      %4433 = vmatprep.subr.bf16.mxu0 %v3100
      %4434 = vmatpush1.bf16.msra.mxu0 %v3099
      %4435 = vmatprep.subr.bf16.mxu0 %v3104
      %4436 = vmatpush1.bf16.msra.mxu0 %v3103
      %4437 = vmatprep.subr.bf16.mxu0 %v3108
      %4438 = vmatpush1.bf16.msra.mxu0 %v3107
      %4439 = vmatprep.subr.bf16.mxu0 %v3112
      %4440 = vmatpush1.bf16.msra.mxu0 %v3111
      %4441 = vmatprep.mubr.bf16.mxu0 %v846
      %4442 = vmatmul.mubr.bf16.gmra.mrb[0].mxu0 %v844
      %v4443 = vpop.f32.mrb[0].mxu0
      %v4444 = vadd.f32 %v4403, %v4443
      %v4445 = vpop.f32.mrb[0].mxu0
      %v4446 = vadd.f32 %v4405, %v4445
      %v4447 = vpop.f32.mrb[0].mxu0
      %v4448 = vpop.f32.mrb[0].mxu0
      %4449 = vdwg.mxu0
      %4450 = vmatprep.subr.bf16.mxu0 %v3116
      %4451 = vmatpush1.bf16.msra.mxu0 %v3115
      %4452 = vmatprep.subr.bf16.mxu0 %v3120
      %4453 = vmatpush1.bf16.msra.mxu0 %v3119
      %4454 = vmatprep.subr.bf16.mxu0 %v3124
      %4455 = vmatpush1.bf16.msra.mxu0 %v3123
      %4456 = vmatprep.subr.bf16.mxu0 %v3128
      %4457 = vmatpush1.bf16.msra.mxu0 %v3127
      %4458 = vmatprep.subr.bf16.mxu0 %v3132
      %4459 = vmatpush1.bf16.msra.mxu0 %v3131
      %4460 = vmatprep.subr.bf16.mxu0 %v3136
      %4461 = vmatpush1.bf16.msra.mxu0 %v3135
      %4462 = vmatprep.subr.bf16.mxu0 %v3140
      %4463 = vmatpush1.bf16.msra.mxu0 %v3139
      %4464 = vmatprep.subr.bf16.mxu0 %v3144
      %4465 = vmatpush1.bf16.msra.mxu0 %v3143
      %4466 = vmatprep.subr.bf16.mxu0 %v3148
      %4467 = vmatpush1.bf16.msra.mxu0 %v3147
      %4468 = vmatprep.subr.bf16.mxu0 %v3152
      %4469 = vmatpush1.bf16.msra.mxu0 %v3151
      %4470 = vmatprep.subr.bf16.mxu0 %v3156
      %4471 = vmatpush1.bf16.msra.mxu0 %v3155
      %4472 = vmatprep.subr.bf16.mxu0 %v3160
      %4473 = vmatpush1.bf16.msra.mxu0 %v3159
      %4474 = vmatprep.subr.bf16.mxu0 %v3164
      %4475 = vmatpush1.bf16.msra.mxu0 %v3163
      %4476 = vmatprep.subr.bf16.mxu0 %v3168
      %4477 = vmatpush1.bf16.msra.mxu0 %v3167
      %4478 = vmatprep.subr.bf16.mxu0 %v3172
      %4479 = vmatpush1.bf16.msra.mxu0 %v3171
      %4480 = vmatprep.subr.bf16.mxu0 %v3176
      %4481 = vmatpush1.bf16.msra.mxu0 %v3175
      %4482 = vmatprep.mubr.bf16.mxu0 %v854
      %4483 = vmatmul.mubr.bf16.gmra.mrb[0].mxu0 %v853
      %v4484 = vpop.f32.mrb[0].mxu0
      %v4485 = vadd.f32 %v4444, %v4484
      %v4486 = vpop.f32.mrb[0].mxu0
      %v4487 = vadd.f32 %v4446, %v4486
      %v4488 = vpop.f32.mrb[0].mxu0
      %v4489 = vpop.f32.mrb[0].mxu0
      %4490 = vdwg.mxu0
      %vm4491 = vcmp.gt.f32.partialorder %v4116, 0.0
      %vm4492 = vcmp.gt.f32.partialorder %v4118, 0.0
      %vm4493 = vcmp.gt.f32.partialorder %v4485, 0.0
      %vm4494 = vcmp.gt.f32.partialorder %v4487, 0.0
      %v4495 = vmul.f32 %v4116, 0.2
      %v4496 = vmul.f32 %v4118, 0.2
      %v4497 = vmul.f32 %v4485, 0.2
      %v4498 = vmul.f32 %v4487, 0.2
      %v4499 = vsel %vm4491, %v4116, %v4495
      %v4500 = vsel %vm4492, %v4118, %v4496
      %v4501 = vsel %vm4493, %v4485, %v4497
      %v4502 = vsel %vm4494, %v4487, %v4498
      %vm4503 = vcmask 1043456
      %v4504 = vsel %vm4503, %v4499, 0.0
      %v4505 = vrot.slane %v4504, 4
      %v4506 = vadd.f32 %v4504, %v4505
      %v4507 = vrot.slane %v4506, 2
      %v4508 = vadd.f32 %v4506, %v4507
      %v4509 = vrot.slane %v4508, 1
      %v4510 = vadd.f32 %v4508, %v4509
      %v4511 = vsel %vm4503, %v4500, 0.0
      %v4512 = vrot.slane %v4511, 4
      %v4513 = vadd.f32 %v4511, %v4512
      %v4514 = vrot.slane %v4513, 2
      %v4515 = vadd.f32 %v4513, %v4514
      %v4516 = vrot.slane %v4515, 1
      %v4517 = vadd.f32 %v4515, %v4516
      %v4518 = vsel %vm4503, %v4501, 0.0
      %v4519 = vrot.slane %v4518, 4
      %v4520 = vadd.f32 %v4518, %v4519
      %v4521 = vrot.slane %v4520, 2
      %v4522 = vadd.f32 %v4520, %v4521
      %v4523 = vrot.slane %v4522, 1
      %v4524 = vadd.f32 %v4522, %v4523
      %v4525 = vsel %vm4503, %v4502, 0.0
      %v4526 = vrot.slane %v4525, 4
      %v4527 = vadd.f32 %v4525, %v4526
      %v4528 = vrot.slane %v4527, 2
      %v4529 = vadd.f32 %v4527, %v4528
      %v4530 = vrot.slane %v4529, 1
      %v4531 = vadd.f32 %v4529, %v4530
      %v4532 = vrcp.pop 4.0
      %v4533 = vmul.f32 %v4510, %v4532
      %v4534 = vmul.f32 %v4517, %v4532
      %v4535 = vmul.f32 %v4524, %v4532
      %v4536 = vmul.f32 %v4531, %v4532
      %v4537 = vsub.f32 %v4499, %v4533
      %v4538 = vsub.f32 %v4500, %v4534
      %v4539 = vsub.f32 %v4501, %v4535
      %v4540 = vsub.f32 %v4502, %v4536
      %v4541 = vmul.f32 %v4537, %v4537
      %v4542 = vmul.f32 %v4538, %v4538
      %v4543 = vmul.f32 %v4539, %v4539
      %v4544 = vmul.f32 %v4540, %v4540
      %v4545 = vsel %vm4503, %v4541, 0.0
      %v4546 = vrot.slane %v4545, 4
      %v4547 = vadd.f32 %v4545, %v4546
      %v4548 = vrot.slane %v4547, 2
      %v4549 = vadd.f32 %v4547, %v4548
      %v4550 = vrot.slane %v4549, 1
      %v4551 = vadd.f32 %v4549, %v4550
      %v4552 = vsel %vm4503, %v4542, 0.0
      %v4553 = vrot.slane %v4552, 4
      %v4554 = vadd.f32 %v4552, %v4553
      %v4555 = vrot.slane %v4554, 2
      %v4556 = vadd.f32 %v4554, %v4555
      %v4557 = vrot.slane %v4556, 1
      %v4558 = vadd.f32 %v4556, %v4557
      %v4559 = vsel %vm4503, %v4543, 0.0
      %v4560 = vrot.slane %v4559, 4
      %v4561 = vadd.f32 %v4559, %v4560
      %v4562 = vrot.slane %v4561, 2
      %v4563 = vadd.f32 %v4561, %v4562
      %v4564 = vrot.slane %v4563, 1
      %v4565 = vadd.f32 %v4563, %v4564
      %v4566 = vsel %vm4503, %v4544, 0.0
      %v4567 = vrot.slane %v4566, 4
      %v4568 = vadd.f32 %v4566, %v4567
      %v4569 = vrot.slane %v4568, 2
      %v4570 = vadd.f32 %v4568, %v4569
      %v4571 = vrot.slane %v4570, 1
      %v4572 = vadd.f32 %v4570, %v4571
      %v4573 = vmul.f32 %v4551, %v4532
      %v4574 = vmul.f32 %v4558, %v4532
      %v4575 = vmul.f32 %v4565, %v4532
      %v4576 = vmul.f32 %v4572, %v4532
      %v4577 = vadd.f32 %v4573, 1e-05
      %v4578 = vadd.f32 %v4574, 1e-05
      %v4579 = vadd.f32 %v4575, 1e-05
      %v4580 = vadd.f32 %v4576, 1e-05
      %v4581 = vrsqrt.pop %v4577
      %v4582 = vrsqrt.pop %v4578
      %v4583 = vrsqrt.pop %v4579
      %v4584 = vrsqrt.pop %v4580
      %v4585 = vmul.f32 %v4537, %v4581
      %v4586 = vmul.f32 %v4538, %v4582
      %v4587 = vmul.f32 %v4539, %v4583
      %v4588 = vmul.f32 %v4540, %v4584
      %v4593 = vcombine.low %v4585, %v4586
      %v4594 = vcombine.low %v4587, %v4588
      %4597 = vst [vmem:[%s170] sm:$0xff] %v4593
      %4598 = vst [vmem:[%s170 + $0x8] sm:$0xff] %v4594
      %p4599 = scmp.lt.s32.totalorder %s14, 1
      %s4600 = scalar_select %p4599, %s14, 1
      %s4601 = smul.addr %s4600, 4
      %s4602 = smul.addr %s4601, 4
      %s4603 = scalar_lea.vmem %s3, %s4602
      // Predicated region
      $region33: #{classifier_forward.8} parent=31 // pred_check
        %p4604 = pneg %p100
      $region34: #{classifier_forward.8} parent=31 // pred_check_branch
        %4606 = sbr.rel (%p4604) target = $region36
      $region35: #{classifier_forward.8} parent=31 // pred_region
        _
      $region36: #{classifier_forward.8} parent=31 // pred_fallthru
        _
    $region32: #{classifier_forward.8} parent=5 // pred_fallthru
      _
    %p4607 = scmp.le.s32.totalorder 2, %s9
    // Predicated region
    $region37: #{classifier_forward.8} parent=5 // pred_check
      %p4608 = pneg %p4607
    $region38: #{classifier_forward.8} parent=5 // pred_check_branch
      %4610 = sbr.rel (%p4608) target = $region40
    $region39: #{classifier_forward.8} parent=5 // pred_region
      %s4611 = ssub.s32 %s9, 2
      // Predicated region
      $region41: #{classifier_forward.8} parent=39 // pred_check
        %p4612 = pneg %p106
      $region42: #{classifier_forward.8} parent=39 // pred_check_branch
        %4614 = sbr.rel (%p4612) target = $region44
      $region43: #{classifier_forward.8} parent=39 // pred_region
        %p4615 = scmp.lt.s32.totalorder %s15, 1
        %s4616 = scalar_select %p4615, %s15, 1
        %s4617 = smul.addr %s4616, 4
        %s4618 = smul.addr %s4617, 4
        %s4619 = scalar_lea.vmem %s3, %s4618
      $region44: #{classifier_forward.8} parent=39 // pred_fallthru
        _
    $region40: #{classifier_forward.8} parent=5 // pred_fallthru
      _
  $region6: #{classifier_forward.8} parent=0 // loop_footer
    %s13 = sadd.s32 1, %s9
  $region7: #{classifier_forward.8} parent=0 // loop_footer_branch
    %8 = sbr.rel target = $region3
  $region8: #{classifier_forward.8} parent=0 // loop_exit
    _

// kernel: classifier_forward.9
$region0: #{classifier_forward.9}
  #allocation0 [shape = 'u32[]', space=smem, size = 0x4, offset = 0x4, fixed_abs, tag = 'smem constant byte address 0x4 - core index']
  #allocation1 [shape = 'u32[144,128]{1,0:T(1,128)}', space=vmem, size = 0x12000, scoped, tag = 'internal scratch']
  %s0 = inlined_call_operand.vmem [shape: bf16[2,2048], index: 0, kind: input, shape index: {}]
  %s1 = inlined_call_operand.vmem [shape: bf16[2048,128], index: 1, kind: input, shape index: {}]
  %s2 = inlined_call_operand.vmem [shape: f32[1,128], index: 2, kind: input, shape index: {}]
  %s3 = inlined_call_operand.hbm [shape: f32[2,128], index: 3, kind: output, shape index: {}]
  %s4 = sld [smem:[#allocation0]]
  $region22: #{classifier_forward.9} parent=0
    _
  %s6 = ssub.s32 1, %s4
  %s7 = scalar_select 0, %s6, %s4
  $region1: #{classifier_forward.9} parent=0
    #allocation2 [shape = 'u8[1024]{0}', space=vmem, size = 0x400, scoped, tag = 'output window, operand 0, single buffered']
    #allocation3 [shape = 's32[1]{0}', space=sflag, size = 0x4, scoped, tag = 'scoped memory for classifier_forward.9']
    %8 = vsyncpa [#allocation3], 0
    // Predicated region
    $region2: #{classifier_forward.9} parent=1 // pred_check
      _
    $region3: #{classifier_forward.9} parent=1 // pred_check_branch
      %10 = sbr.rel (0) target = $region5
    $region4: #{classifier_forward.9} parent=1 // pred_region
      _
    $region5: #{classifier_forward.9} parent=1 // pred_fallthru
      _
    // Predicated region
    $region6: #{classifier_forward.9} parent=1 // pred_check
      _
    $region7: #{classifier_forward.9} parent=1 // pred_check_branch
      %12 = sbr.rel (0) target = $region9
    $region8: #{classifier_forward.9} parent=1 // pred_region
      _
    $region9: #{classifier_forward.9} parent=1 // pred_fallthru
      _
    // Predicated region
    $region10: #{classifier_forward.9} parent=1 // pred_check
      _
    $region11: #{classifier_forward.9} parent=1 // pred_check_branch
      %14 = sbr.rel (0) target = $region13
    $region12: #{classifier_forward.9} parent=1 // pred_region
      _
    $region13: #{classifier_forward.9} parent=1 // pred_fallthru
      _
    %v16 = vld [vmem:[%s0] sm:$0xff]
    %v17 = vld [vmem:[%s0 + $0x8] sm:$0xff]
    %v18 = vld [vmem:[%s1] sm:$0xf]
    %v19 = vld [vmem:[%s1 + $0x4] sm:$0xf]
    %v20 = vld [vmem:[%s1 + $0x8] sm:$0xf]
    %v21 = vld [vmem:[%s1 + $0xc] sm:$0xf]
    %v22 = vld [vmem:[%s1 + $0x10] sm:$0xf]
    %v23 = vld [vmem:[%s1 + $0x14] sm:$0xf]
    %v24 = vld [vmem:[%s1 + $0x18] sm:$0xf]
    %v25 = vld [vmem:[%s1 + $0x1c] sm:$0xf]
    %v26 = vld [vmem:[%s1 + $0x20] sm:$0xf]
    %v27 = vld [vmem:[%s1 + $0x24] sm:$0xf]
    %v28 = vld [vmem:[%s1 + $0x28] sm:$0xf]
    %v29 = vld [vmem:[%s1 + $0x2c] sm:$0xf]
    %v30 = vld [vmem:[%s1 + $0x30] sm:$0xf]
    %v31 = vld [vmem:[%s1 + $0x34] sm:$0xf]
    %v32 = vld [vmem:[%s1 + $0x38] sm:$0xf]
    %v33 = vld [vmem:[%s1 + $0x3c] sm:$0xf]
    %v34 = vld [vmem:[%s1 + $0x40] sm:$0xf]
    %v35 = vld [vmem:[%s1 + $0x44] sm:$0xf]
    %v36 = vld [vmem:[%s1 + $0x48] sm:$0xf]
    %v37 = vld [vmem:[%s1 + $0x4c] sm:$0xf]
    %v38 = vld [vmem:[%s1 + $0x50] sm:$0xf]
    %v39 = vld [vmem:[%s1 + $0x54] sm:$0xf]
    %v40 = vld [vmem:[%s1 + $0x58] sm:$0xf]
    %v41 = vld [vmem:[%s1 + $0x5c] sm:$0xf]
    %v42 = vld [vmem:[%s1 + $0x60] sm:$0xf]
    %v43 = vld [vmem:[%s1 + $0x64] sm:$0xf]
    %v44 = vld [vmem:[%s1 + $0x68] sm:$0xf]
    %v45 = vld [vmem:[%s1 + $0x6c] sm:$0xf]
    %v46 = vld [vmem:[%s1 + $0x70] sm:$0xf]
    %v47 = vld [vmem:[%s1 + $0x74] sm:$0xf]
    %v48 = vld [vmem:[%s1 + $0x78] sm:$0xf]
    %v49 = vld [vmem:[%s1 + $0x7c] sm:$0xf]
    %v50 = vld [vmem:[%s1 + $0x80] sm:$0xf]
    %v51 = vld [vmem:[%s1 + $0x84] sm:$0xf]
    %v52 = vld [vmem:[%s1 + $0x88] sm:$0xf]
    %v53 = vld [vmem:[%s1 + $0x8c] sm:$0xf]
    %v54 = vld [vmem:[%s1 + $0x90] sm:$0xf]
    %v55 = vld [vmem:[%s1 + $0x94] sm:$0xf]
    %v56 = vld [vmem:[%s1 + $0x98] sm:$0xf]
    %v57 = vld [vmem:[%s1 + $0x9c] sm:$0xf]
    %v58 = vld [vmem:[%s1 + $0xa0] sm:$0xf]
    %v59 = vld [vmem:[%s1 + $0xa4] sm:$0xf]
    %v60 = vld [vmem:[%s1 + $0xa8] sm:$0xf]
    %v61 = vld [vmem:[%s1 + $0xac] sm:$0xf]
    %v62 = vld [vmem:[%s1 + $0xb0] sm:$0xf]
    %v63 = vld [vmem:[%s1 + $0xb4] sm:$0xf]
    %v64 = vld [vmem:[%s1 + $0xb8] sm:$0xf]
    %v65 = vld [vmem:[%s1 + $0xbc] sm:$0xf]
    %v66 = vld [vmem:[%s1 + $0xc0] sm:$0xf]
    %v67 = vld [vmem:[%s1 + $0xc4] sm:$0xf]
    %v68 = vld [vmem:[%s1 + $0xc8] sm:$0xf]
    %v69 = vld [vmem:[%s1 + $0xcc] sm:$0xf]
    %v70 = vld [vmem:[%s1 + $0xd0] sm:$0xf]
    %v71 = vld [vmem:[%s1 + $0xd4] sm:$0xf]
    %v72 = vld [vmem:[%s1 + $0xd8] sm:$0xf]
    %v73 = vld [vmem:[%s1 + $0xdc] sm:$0xf]
    %v74 = vld [vmem:[%s1 + $0xe0] sm:$0xf]
    %v75 = vld [vmem:[%s1 + $0xe4] sm:$0xf]
    %v76 = vld [vmem:[%s1 + $0xe8] sm:$0xf]
    %v77 = vld [vmem:[%s1 + $0xec] sm:$0xf]
    %v78 = vld [vmem:[%s1 + $0xf0] sm:$0xf]
    %v79 = vld [vmem:[%s1 + $0xf4] sm:$0xf]
    %v80 = vld [vmem:[%s1 + $0xf8] sm:$0xf]
    %v81 = vld [vmem:[%s1 + $0xfc] sm:$0xf]
    %v82 = vld [vmem:[%s1 + $0x100] sm:$0xf]
    %v83 = vld [vmem:[%s1 + $0x104] sm:$0xf]
    %v84 = vld [vmem:[%s1 + $0x108] sm:$0xf]
    %v85 = vld [vmem:[%s1 + $0x10c] sm:$0xf]
    %v86 = vld [vmem:[%s1 + $0x110] sm:$0xf]
    %v87 = vld [vmem:[%s1 + $0x114] sm:$0xf]
    %v88 = vld [vmem:[%s1 + $0x118] sm:$0xf]
    %v89 = vld [vmem:[%s1 + $0x11c] sm:$0xf]
    %v90 = vld [vmem:[%s1 + $0x120] sm:$0xf]
    %v91 = vld [vmem:[%s1 + $0x124] sm:$0xf]
    %v92 = vld [vmem:[%s1 + $0x128] sm:$0xf]
    %v93 = vld [vmem:[%s1 + $0x12c] sm:$0xf]
    %v94 = vld [vmem:[%s1 + $0x130] sm:$0xf]
    %v95 = vld [vmem:[%s1 + $0x134] sm:$0xf]
    %v96 = vld [vmem:[%s1 + $0x138] sm:$0xf]
    %v97 = vld [vmem:[%s1 + $0x13c] sm:$0xf]
    %v98 = vld [vmem:[%s1 + $0x140] sm:$0xf]
    %v99 = vld [vmem:[%s1 + $0x144] sm:$0xf]
    %v100 = vld [vmem:[%s1 + $0x148] sm:$0xf]
    %v101 = vld [vmem:[%s1 + $0x14c] sm:$0xf]
    %v102 = vld [vmem:[%s1 + $0x150] sm:$0xf]
    %v103 = vld [vmem:[%s1 + $0x154] sm:$0xf]
    %v104 = vld [vmem:[%s1 + $0x158] sm:$0xf]
    %v105 = vld [vmem:[%s1 + $0x15c] sm:$0xf]
    %v106 = vld [vmem:[%s1 + $0x160] sm:$0xf]
    %v107 = vld [vmem:[%s1 + $0x164] sm:$0xf]
    %v108 = vld [vmem:[%s1 + $0x168] sm:$0xf]
    %v109 = vld [vmem:[%s1 + $0x16c] sm:$0xf]
    %v110 = vld [vmem:[%s1 + $0x170] sm:$0xf]
    %v111 = vld [vmem:[%s1 + $0x174] sm:$0xf]
    %v112 = vld [vmem:[%s1 + $0x178] sm:$0xf]
    %v113 = vld [vmem:[%s1 + $0x17c] sm:$0xf]
    %v114 = vld [vmem:[%s1 + $0x180] sm:$0xf]
    %v115 = vld [vmem:[%s1 + $0x184] sm:$0xf]
    %v116 = vld [vmem:[%s1 + $0x188] sm:$0xf]
    %v117 = vld [vmem:[%s1 + $0x18c] sm:$0xf]
    %v118 = vld [vmem:[%s1 + $0x190] sm:$0xf]
    %v119 = vld [vmem:[%s1 + $0x194] sm:$0xf]
    %v120 = vld [vmem:[%s1 + $0x198] sm:$0xf]
    %v121 = vld [vmem:[%s1 + $0x19c] sm:$0xf]
    %v122 = vld [vmem:[%s1 + $0x1a0] sm:$0xf]
    %v123 = vld [vmem:[%s1 + $0x1a4] sm:$0xf]
    %v124 = vld [vmem:[%s1 + $0x1a8] sm:$0xf]
    %v125 = vld [vmem:[%s1 + $0x1ac] sm:$0xf]
    %v126 = vld [vmem:[%s1 + $0x1b0] sm:$0xf]
    %v127 = vld [vmem:[%s1 + $0x1b4] sm:$0xf]
    %v128 = vld [vmem:[%s1 + $0x1b8] sm:$0xf]
    %v129 = vld [vmem:[%s1 + $0x1bc] sm:$0xf]
    %v130 = vld [vmem:[%s1 + $0x1c0] sm:$0xf]
    %v131 = vld [vmem:[%s1 + $0x1c4] sm:$0xf]
    %v132 = vld [vmem:[%s1 + $0x1c8] sm:$0xf]
    %v133 = vld [vmem:[%s1 + $0x1cc] sm:$0xf]
    %v134 = vld [vmem:[%s1 + $0x1d0] sm:$0xf]
    %v135 = vld [vmem:[%s1 + $0x1d4] sm:$0xf]
    %v136 = vld [vmem:[%s1 + $0x1d8] sm:$0xf]
    %v137 = vld [vmem:[%s1 + $0x1dc] sm:$0xf]
    %v138 = vld [vmem:[%s1 + $0x1e0] sm:$0xf]
    %v139 = vld [vmem:[%s1 + $0x1e4] sm:$0xf]
    %v140 = vld [vmem:[%s1 + $0x1e8] sm:$0xf]
    %v141 = vld [vmem:[%s1 + $0x1ec] sm:$0xf]
    %v142 = vld [vmem:[%s1 + $0x1f0] sm:$0xf]
    %v143 = vld [vmem:[%s1 + $0x1f4] sm:$0xf]
    %v144 = vld [vmem:[%s1 + $0x1f8] sm:$0xf]
    %v145 = vld [vmem:[%s1 + $0x1fc] sm:$0xf]
    %v146 = vld [vmem:[%s1 + $0x200] sm:$0xf]
    %v147 = vld [vmem:[%s1 + $0x204] sm:$0xf]
    %v148 = vld [vmem:[%s1 + $0x208] sm:$0xf]
    %v149 = vld [vmem:[%s1 + $0x20c] sm:$0xf]
    %v150 = vld [vmem:[%s1 + $0x210] sm:$0xf]
    %v151 = vld [vmem:[%s1 + $0x214] sm:$0xf]
    %v152 = vld [vmem:[%s1 + $0x218] sm:$0xf]
    %v153 = vld [vmem:[%s1 + $0x21c] sm:$0xf]
    %v154 = vld [vmem:[%s1 + $0x220] sm:$0xf]
    %v155 = vld [vmem:[%s1 + $0x224] sm:$0xf]
    %v156 = vld [vmem:[%s1 + $0x228] sm:$0xf]
    %v157 = vld [vmem:[%s1 + $0x22c] sm:$0xf]
    %v158 = vld [vmem:[%s1 + $0x230] sm:$0xf]
    %v159 = vld [vmem:[%s1 + $0x234] sm:$0xf]
    %v160 = vld [vmem:[%s1 + $0x238] sm:$0xf]
    %v161 = vld [vmem:[%s1 + $0x23c] sm:$0xf]
    %v162 = vld [vmem:[%s1 + $0x240] sm:$0xf]
    %v163 = vld [vmem:[%s1 + $0x244] sm:$0xf]
    %v164 = vld [vmem:[%s1 + $0x248] sm:$0xf]
    %v165 = vld [vmem:[%s1 + $0x24c] sm:$0xf]
    %v166 = vld [vmem:[%s1 + $0x250] sm:$0xf]
    %v167 = vld [vmem:[%s1 + $0x254] sm:$0xf]
    %v168 = vld [vmem:[%s1 + $0x258] sm:$0xf]
    %v169 = vld [vmem:[%s1 + $0x25c] sm:$0xf]
    %v170 = vld [vmem:[%s1 + $0x260] sm:$0xf]
    %v171 = vld [vmem:[%s1 + $0x264] sm:$0xf]
    %v172 = vld [vmem:[%s1 + $0x268] sm:$0xf]
    %v173 = vld [vmem:[%s1 + $0x26c] sm:$0xf]
    %v174 = vld [vmem:[%s1 + $0x270] sm:$0xf]
    %v175 = vld [vmem:[%s1 + $0x274] sm:$0xf]
    %v176 = vld [vmem:[%s1 + $0x278] sm:$0xf]
    %v177 = vld [vmem:[%s1 + $0x27c] sm:$0xf]
    %v178 = vld [vmem:[%s1 + $0x280] sm:$0xf]
    %v179 = vld [vmem:[%s1 + $0x284] sm:$0xf]
    %v180 = vld [vmem:[%s1 + $0x288] sm:$0xf]
    %v181 = vld [vmem:[%s1 + $0x28c] sm:$0xf]
    %v182 = vld [vmem:[%s1 + $0x290] sm:$0xf]
    %v183 = vld [vmem:[%s1 + $0x294] sm:$0xf]
    %v184 = vld [vmem:[%s1 + $0x298] sm:$0xf]
    %v185 = vld [vmem:[%s1 + $0x29c] sm:$0xf]
    %v186 = vld [vmem:[%s1 + $0x2a0] sm:$0xf]
    %v187 = vld [vmem:[%s1 + $0x2a4] sm:$0xf]
    %v188 = vld [vmem:[%s1 + $0x2a8] sm:$0xf]
    %v189 = vld [vmem:[%s1 + $0x2ac] sm:$0xf]
    %v190 = vld [vmem:[%s1 + $0x2b0] sm:$0xf]
    %v191 = vld [vmem:[%s1 + $0x2b4] sm:$0xf]
    %v192 = vld [vmem:[%s1 + $0x2b8] sm:$0xf]
    %v193 = vld [vmem:[%s1 + $0x2bc] sm:$0xf]
    %v194 = vld [vmem:[%s1 + $0x2c0] sm:$0xf]
    %v195 = vld [vmem:[%s1 + $0x2c4] sm:$0xf]
    %v196 = vld [vmem:[%s1 + $0x2c8] sm:$0xf]
    %v197 = vld [vmem:[%s1 + $0x2cc] sm:$0xf]
    %v198 = vld [vmem:[%s1 + $0x2d0] sm:$0xf]
    %v199 = vld [vmem:[%s1 + $0x2d4] sm:$0xf]
    %v200 = vld [vmem:[%s1 + $0x2d8] sm:$0xf]
    %v201 = vld [vmem:[%s1 + $0x2dc] sm:$0xf]
    %v202 = vld [vmem:[%s1 + $0x2e0] sm:$0xf]
    %v203 = vld [vmem:[%s1 + $0x2e4] sm:$0xf]
    %v204 = vld [vmem:[%s1 + $0x2e8] sm:$0xf]
    %v205 = vld [vmem:[%s1 + $0x2ec] sm:$0xf]
    %v206 = vld [vmem:[%s1 + $0x2f0] sm:$0xf]
    %v207 = vld [vmem:[%s1 + $0x2f4] sm:$0xf]
    %v208 = vld [vmem:[%s1 + $0x2f8] sm:$0xf]
    %v209 = vld [vmem:[%s1 + $0x2fc] sm:$0xf]
    %v210 = vld [vmem:[%s1 + $0x300] sm:$0xf]
    %v211 = vld [vmem:[%s1 + $0x304] sm:$0xf]
    %v212 = vld [vmem:[%s1 + $0x308] sm:$0xf]
    %v213 = vld [vmem:[%s1 + $0x30c] sm:$0xf]
    %v214 = vld [vmem:[%s1 + $0x310] sm:$0xf]
    %v215 = vld [vmem:[%s1 + $0x314] sm:$0xf]
    %v216 = vld [vmem:[%s1 + $0x318] sm:$0xf]
    %v217 = vld [vmem:[%s1 + $0x31c] sm:$0xf]
    %v218 = vld [vmem:[%s1 + $0x320] sm:$0xf]
    %v219 = vld [vmem:[%s1 + $0x324] sm:$0xf]
    %v220 = vld [vmem:[%s1 + $0x328] sm:$0xf]
    %v221 = vld [vmem:[%s1 + $0x32c] sm:$0xf]
    %v222 = vld [vmem:[%s1 + $0x330] sm:$0xf]
    %v223 = vld [vmem:[%s1 + $0x334] sm:$0xf]
    %v224 = vld [vmem:[%s1 + $0x338] sm:$0xf]
    %v225 = vld [vmem:[%s1 + $0x33c] sm:$0xf]
    %v226 = vld [vmem:[%s1 + $0x340] sm:$0xf]
    %v227 = vld [vmem:[%s1 + $0x344] sm:$0xf]
    %v228 = vld [vmem:[%s1 + $0x348] sm:$0xf]
    %v229 = vld [vmem:[%s1 + $0x34c] sm:$0xf]
    %v230 = vld [vmem:[%s1 + $0x350] sm:$0xf]
    %v231 = vld [vmem:[%s1 + $0x354] sm:$0xf]
    %v232 = vld [vmem:[%s1 + $0x358] sm:$0xf]
    %v233 = vld [vmem:[%s1 + $0x35c] sm:$0xf]
    %v234 = vld [vmem:[%s1 + $0x360] sm:$0xf]
    %v235 = vld [vmem:[%s1 + $0x364] sm:$0xf]
    %v236 = vld [vmem:[%s1 + $0x368] sm:$0xf]
    %v237 = vld [vmem:[%s1 + $0x36c] sm:$0xf]
    %v238 = vld [vmem:[%s1 + $0x370] sm:$0xf]
    %v239 = vld [vmem:[%s1 + $0x374] sm:$0xf]
    %v240 = vld [vmem:[%s1 + $0x378] sm:$0xf]
    %v241 = vld [vmem:[%s1 + $0x37c] sm:$0xf]
    %v242 = vld [vmem:[%s1 + $0x380] sm:$0xf]
    %v243 = vld [vmem:[%s1 + $0x384] sm:$0xf]
    %v244 = vld [vmem:[%s1 + $0x388] sm:$0xf]
    %v245 = vld [vmem:[%s1 + $0x38c] sm:$0xf]
    %v246 = vld [vmem:[%s1 + $0x390] sm:$0xf]
    %v247 = vld [vmem:[%s1 + $0x394] sm:$0xf]
    %v248 = vld [vmem:[%s1 + $0x398] sm:$0xf]
    %v249 = vld [vmem:[%s1 + $0x39c] sm:$0xf]
    %v250 = vld [vmem:[%s1 + $0x3a0] sm:$0xf]
    %v251 = vld [vmem:[%s1 + $0x3a4] sm:$0xf]
    %v252 = vld [vmem:[%s1 + $0x3a8] sm:$0xf]
    %v253 = vld [vmem:[%s1 + $0x3ac] sm:$0xf]
    %v254 = vld [vmem:[%s1 + $0x3b0] sm:$0xf]
    %v255 = vld [vmem:[%s1 + $0x3b4] sm:$0xf]
    %v256 = vld [vmem:[%s1 + $0x3b8] sm:$0xf]
    %v257 = vld [vmem:[%s1 + $0x3bc] sm:$0xf]
    %v258 = vld [vmem:[%s1 + $0x3c0] sm:$0xf]
    %v259 = vld [vmem:[%s1 + $0x3c4] sm:$0xf]
    %v260 = vld [vmem:[%s1 + $0x3c8] sm:$0xf]
    %v261 = vld [vmem:[%s1 + $0x3cc] sm:$0xf]
    %v262 = vld [vmem:[%s1 + $0x3d0] sm:$0xf]
    %v263 = vld [vmem:[%s1 + $0x3d4] sm:$0xf]
    %v264 = vld [vmem:[%s1 + $0x3d8] sm:$0xf]
    %v265 = vld [vmem:[%s1 + $0x3dc] sm:$0xf]
    %v266 = vld [vmem:[%s1 + $0x3e0] sm:$0xf]
    %v267 = vld [vmem:[%s1 + $0x3e4] sm:$0xf]
    %v268 = vld [vmem:[%s1 + $0x3e8] sm:$0xf]
    %v269 = vld [vmem:[%s1 + $0x3ec] sm:$0xf]
    %v270 = vld [vmem:[%s1 + $0x3f0] sm:$0xf]
    %v271 = vld [vmem:[%s1 + $0x3f4] sm:$0xf]
    %v272 = vld [vmem:[%s1 + $0x3f8] sm:$0xf]
    %v273 = vld [vmem:[%s1 + $0x3fc] sm:$0xf]
    %v274 = vld [vmem:[%s2] sm:$0x1]
    %v276 = vlaneseq
    %v277 = vshrl.u32 %v276, 7
    %v278 = vsub.s32 0, %v277
    %v279 = vrot.slane %v274, %v278
    %v283 = vcombine.high %v16, %v16
    %v285 = vunpack.c.l.s4 1966171168
    %v286 = vunpack.c.0.s8 %v285
    %v287 = vlaneseq
    %v288 = vshrl.u32 %v287, 7
    %v289 = vsub.s32 %v286, %v288
    %v290 = vrot.slane %v16, %v289
    %v292 = vunpack.c.l.s4 1966171168
    %v293 = vunpack.c.0.s8 %v292
    %v294 = vlaneseq
    %v295 = vshrl.u32 %v294, 7
    %v296 = vsub.s32 %v293, %v295
    %v297 = vrot.slane %v283, %v296
    %v298 = vcombine.high %v290, %v290
    %v299 = vcombine.high %v297, %v297
    %v301 = vunpack.c.l.s4 1966171168
    %v302 = vunpack.c.0.s8 %v301
    %v303 = vlaneseq
    %v304 = vshrl.u32 %v303, 7
    %v305 = vsub.s32 %v302, %v304
    %v306 = vrot.slane %v290, %v305
    %v308 = vunpack.c.l.s4 1966171168
    %v309 = vunpack.c.0.s8 %v308
    %v310 = vlaneseq
    %v311 = vshrl.u32 %v310, 7
    %v312 = vsub.s32 %v309, %v311
    %v313 = vrot.slane %v297, %v312
    %v315 = vunpack.c.l.s4 1966171168
    %v316 = vunpack.c.0.s8 %v315
    %v317 = vlaneseq
    %v318 = vshrl.u32 %v317, 7
    %v319 = vsub.s32 %v316, %v318
    %v320 = vrot.slane %v298, %v319
    %v322 = vunpack.c.l.s4 1966171168
    %v323 = vunpack.c.0.s8 %v322
    %v324 = vlaneseq
    %v325 = vshrl.u32 %v324, 7
    %v326 = vsub.s32 %v323, %v325
    %v327 = vrot.slane %v299, %v326
    %v328 = vcombine.high %v306, %v306
    %v329 = vcombine.high %v313, %v313
    %v330 = vcombine.high %v320, %v320
    %v331 = vcombine.high %v327, %v327
    %v332 = vcombine.high %v17, %v17
    %v334 = vunpack.c.l.s4 1966171168
    %v335 = vunpack.c.0.s8 %v334
    %v336 = vlaneseq
    %v337 = vshrl.u32 %v336, 7
    %v338 = vsub.s32 %v335, %v337
    %v339 = vrot.slane %v17, %v338
    %v341 = vunpack.c.l.s4 1966171168
    %v342 = vunpack.c.0.s8 %v341
    %v343 = vlaneseq
    %v344 = vshrl.u32 %v343, 7
    %v345 = vsub.s32 %v342, %v344
    %v346 = vrot.slane %v332, %v345
    %v347 = vcombine.high %v339, %v339
    %v348 = vcombine.high %v346, %v346
    %v350 = vunpack.c.l.s4 1966171168
    %v351 = vunpack.c.0.s8 %v350
    %v352 = vlaneseq
    %v353 = vshrl.u32 %v352, 7
    %v354 = vsub.s32 %v351, %v353
    %v355 = vrot.slane %v339, %v354
    %v357 = vunpack.c.l.s4 1966171168
    %v358 = vunpack.c.0.s8 %v357
    %v359 = vlaneseq
    %v360 = vshrl.u32 %v359, 7
    %v361 = vsub.s32 %v358, %v360
    %v362 = vrot.slane %v346, %v361
    %v364 = vunpack.c.l.s4 1966171168
    %v365 = vunpack.c.0.s8 %v364
    %v366 = vlaneseq
    %v367 = vshrl.u32 %v366, 7
    %v368 = vsub.s32 %v365, %v367
    %v369 = vrot.slane %v347, %v368
    %v371 = vunpack.c.l.s4 1966171168
    %v372 = vunpack.c.0.s8 %v371
    %v373 = vlaneseq
    %v374 = vshrl.u32 %v373, 7
    %v375 = vsub.s32 %v372, %v374
    %v376 = vrot.slane %v348, %v375
    %v377 = vcombine.high %v355, %v355
    %v378 = vcombine.high %v362, %v362
    %v379 = vcombine.high %v369, %v369
    %v380 = vcombine.high %v376, %v376
    %v653 = vunpack.c.l.b16 %v18
    %v654 = vunpack.c.l.b16 %v19
    %v655 = vunpack.c.l.b16 %v20
    %v656 = vunpack.c.l.b16 %v21
    %v657 = vunpack.c.l.b16 %v22
    %v658 = vunpack.c.l.b16 %v23
    %v659 = vunpack.c.l.b16 %v24
    %v660 = vunpack.c.l.b16 %v25
    %v661 = vunpack.c.l.b16 %v26
    %v662 = vunpack.c.l.b16 %v27
    %v663 = vunpack.c.l.b16 %v28
    %v664 = vunpack.c.l.b16 %v29
    %v665 = vunpack.c.l.b16 %v30
    %v666 = vunpack.c.l.b16 %v31
    %v667 = vunpack.c.l.b16 %v32
    %v668 = vunpack.c.l.b16 %v33
    %v669 = vunpack.c.l.b16 %v34
    %v670 = vunpack.c.l.b16 %v35
    %v671 = vunpack.c.l.b16 %v36
    %v672 = vunpack.c.l.b16 %v37
    %v673 = vunpack.c.l.b16 %v38
    %v674 = vunpack.c.l.b16 %v39
    %v675 = vunpack.c.l.b16 %v40
    %v676 = vunpack.c.l.b16 %v41
    %v677 = vunpack.c.l.b16 %v42
    %v678 = vunpack.c.l.b16 %v43
    %v679 = vunpack.c.l.b16 %v44
    %v680 = vunpack.c.l.b16 %v45
    %v681 = vunpack.c.l.b16 %v46
    %v682 = vunpack.c.l.b16 %v47
    %v683 = vunpack.c.l.b16 %v48
    %v684 = vunpack.c.l.b16 %v49
    %v685 = vunpack.c.l.b16 %v50
    %v686 = vunpack.c.l.b16 %v51
    %v687 = vunpack.c.l.b16 %v52
    %v688 = vunpack.c.l.b16 %v53
    %v689 = vunpack.c.l.b16 %v54
    %v690 = vunpack.c.l.b16 %v55
    %v691 = vunpack.c.l.b16 %v56
    %v692 = vunpack.c.l.b16 %v57
    %v693 = vunpack.c.l.b16 %v58
    %v694 = vunpack.c.l.b16 %v59
    %v695 = vunpack.c.l.b16 %v60
    %v696 = vunpack.c.l.b16 %v61
    %v697 = vunpack.c.l.b16 %v62
    %v698 = vunpack.c.l.b16 %v63
    %v699 = vunpack.c.l.b16 %v64
    %v700 = vunpack.c.l.b16 %v65
    %v701 = vunpack.c.l.b16 %v66
    %v702 = vunpack.c.l.b16 %v67
    %v703 = vunpack.c.l.b16 %v68
    %v704 = vunpack.c.l.b16 %v69
    %v705 = vunpack.c.l.b16 %v70
    %v706 = vunpack.c.l.b16 %v71
    %v707 = vunpack.c.l.b16 %v72
    %v708 = vunpack.c.l.b16 %v73
    %v709 = vunpack.c.l.b16 %v74
    %v710 = vunpack.c.l.b16 %v75
    %v711 = vunpack.c.l.b16 %v76
    %v712 = vunpack.c.l.b16 %v77
    %v713 = vunpack.c.l.b16 %v78
    %v714 = vunpack.c.l.b16 %v79
    %v715 = vunpack.c.l.b16 %v80
    %v716 = vunpack.c.l.b16 %v81
    %v717 = vunpack.c.l.b16 %v82
    %v718 = vunpack.c.l.b16 %v83
    %v719 = vunpack.c.l.b16 %v84
    %v720 = vunpack.c.l.b16 %v85
    %v721 = vunpack.c.l.b16 %v86
    %v722 = vunpack.c.l.b16 %v87
    %v723 = vunpack.c.l.b16 %v88
    %v724 = vunpack.c.l.b16 %v89
    %v725 = vunpack.c.l.b16 %v90
    %v726 = vunpack.c.l.b16 %v91
    %v727 = vunpack.c.l.b16 %v92
    %v728 = vunpack.c.l.b16 %v93
    %v729 = vunpack.c.l.b16 %v94
    %v730 = vunpack.c.l.b16 %v95
    %v731 = vunpack.c.l.b16 %v96
    %v732 = vunpack.c.l.b16 %v97
    %v733 = vunpack.c.l.b16 %v98
    %v734 = vunpack.c.l.b16 %v99
    %v735 = vunpack.c.l.b16 %v100
    %v736 = vunpack.c.l.b16 %v101
    %v737 = vunpack.c.l.b16 %v102
    %v738 = vunpack.c.l.b16 %v103
    %v739 = vunpack.c.l.b16 %v104
    %v740 = vunpack.c.l.b16 %v105
    %v741 = vunpack.c.l.b16 %v106
    %v742 = vunpack.c.l.b16 %v107
    %v743 = vunpack.c.l.b16 %v108
    %v744 = vunpack.c.l.b16 %v109
    %v745 = vunpack.c.l.b16 %v110
    %v746 = vunpack.c.l.b16 %v111
    %v747 = vunpack.c.l.b16 %v112
    %v748 = vunpack.c.l.b16 %v113
    %v749 = vunpack.c.l.b16 %v114
    %v750 = vunpack.c.l.b16 %v115
    %v751 = vunpack.c.l.b16 %v116
    %v752 = vunpack.c.l.b16 %v117
    %v753 = vunpack.c.l.b16 %v118
    %v754 = vunpack.c.l.b16 %v119
    %v755 = vunpack.c.l.b16 %v120
    %v756 = vunpack.c.l.b16 %v121
    %v757 = vunpack.c.l.b16 %v122
    %v758 = vunpack.c.l.b16 %v123
    %v759 = vunpack.c.l.b16 %v124
    %v760 = vunpack.c.l.b16 %v125
    %v761 = vunpack.c.l.b16 %v126
    %v762 = vunpack.c.l.b16 %v127
    %v763 = vunpack.c.l.b16 %v128
    %v764 = vunpack.c.l.b16 %v129
    %v765 = vunpack.c.l.b16 %v130
    %v766 = vunpack.c.l.b16 %v131
    %v767 = vunpack.c.l.b16 %v132
    %v768 = vunpack.c.l.b16 %v133
    %v769 = vunpack.c.l.b16 %v134
    %v770 = vunpack.c.l.b16 %v135
    %v771 = vunpack.c.l.b16 %v136
    %v772 = vunpack.c.l.b16 %v137
    %v773 = vunpack.c.l.b16 %v138
    %v774 = vunpack.c.l.b16 %v139
    %v775 = vunpack.c.l.b16 %v140
    %v776 = vunpack.c.l.b16 %v141
    %v777 = vunpack.c.l.b16 %v142
    %v778 = vunpack.c.l.b16 %v143
    %v779 = vunpack.c.l.b16 %v144
    %v780 = vunpack.c.l.b16 %v145
    %v781 = vunpack.c.l.b16 %v146
    %v782 = vunpack.c.l.b16 %v147
    %v783 = vunpack.c.l.b16 %v148
    %v784 = vunpack.c.l.b16 %v149
    %v785 = vunpack.c.l.b16 %v150
    %v786 = vunpack.c.l.b16 %v151
    %v787 = vunpack.c.l.b16 %v152
    %v788 = vunpack.c.l.b16 %v153
    %v789 = vunpack.c.l.b16 %v154
    %v790 = vunpack.c.l.b16 %v155
    %v791 = vunpack.c.l.b16 %v156
    %v792 = vunpack.c.l.b16 %v157
    %v793 = vunpack.c.l.b16 %v158
    %v794 = vunpack.c.l.b16 %v159
    %v795 = vunpack.c.l.b16 %v160
    %v796 = vunpack.c.l.b16 %v161
    %v797 = vunpack.c.l.b16 %v162
    %v798 = vunpack.c.l.b16 %v163
    %v799 = vunpack.c.l.b16 %v164
    %v800 = vunpack.c.l.b16 %v165
    %v801 = vunpack.c.l.b16 %v166
    %v802 = vunpack.c.l.b16 %v167
    %v803 = vunpack.c.l.b16 %v168
    %v804 = vunpack.c.l.b16 %v169
    %v805 = vunpack.c.l.b16 %v170
    %v806 = vunpack.c.l.b16 %v171
    %v807 = vunpack.c.l.b16 %v172
    %v808 = vunpack.c.l.b16 %v173
    %v809 = vunpack.c.l.b16 %v174
    %v810 = vunpack.c.l.b16 %v175
    %v811 = vunpack.c.l.b16 %v176
    %v812 = vunpack.c.l.b16 %v177
    %v813 = vunpack.c.l.b16 %v178
    %v814 = vunpack.c.l.b16 %v179
    %v815 = vunpack.c.l.b16 %v180
    %v816 = vunpack.c.l.b16 %v181
    %v817 = vunpack.c.l.b16 %v182
    %v818 = vunpack.c.l.b16 %v183
    %v819 = vunpack.c.l.b16 %v184
    %v820 = vunpack.c.l.b16 %v185
    %v821 = vunpack.c.l.b16 %v186
    %v822 = vunpack.c.l.b16 %v187
    %v823 = vunpack.c.l.b16 %v188
    %v824 = vunpack.c.l.b16 %v189
    %v825 = vunpack.c.l.b16 %v190
    %v826 = vunpack.c.l.b16 %v191
    %v827 = vunpack.c.l.b16 %v192
    %v828 = vunpack.c.l.b16 %v193
    %v829 = vunpack.c.l.b16 %v194
    %v830 = vunpack.c.l.b16 %v195
    %v831 = vunpack.c.l.b16 %v196
    %v832 = vunpack.c.l.b16 %v197
    %v833 = vunpack.c.l.b16 %v198
    %v834 = vunpack.c.l.b16 %v199
    %v835 = vunpack.c.l.b16 %v200
    %v836 = vunpack.c.l.b16 %v201
    %v837 = vunpack.c.l.b16 %v202
    %v838 = vunpack.c.l.b16 %v203
    %v839 = vunpack.c.l.b16 %v204
    %v840 = vunpack.c.l.b16 %v205
    %v841 = vunpack.c.l.b16 %v206
    %v842 = vunpack.c.l.b16 %v207
    %v843 = vunpack.c.l.b16 %v208
    %v844 = vunpack.c.l.b16 %v209
    %v845 = vunpack.c.l.b16 %v210
    %v846 = vunpack.c.l.b16 %v211
    %v847 = vunpack.c.l.b16 %v212
    %v848 = vunpack.c.l.b16 %v213
    %v849 = vunpack.c.l.b16 %v214
    %v850 = vunpack.c.l.b16 %v215
    %v851 = vunpack.c.l.b16 %v216
    %v852 = vunpack.c.l.b16 %v217
    %v853 = vunpack.c.l.b16 %v218
    %v854 = vunpack.c.l.b16 %v219
    %v855 = vunpack.c.l.b16 %v220
    %v856 = vunpack.c.l.b16 %v221
    %v857 = vunpack.c.l.b16 %v222
    %v858 = vunpack.c.l.b16 %v223
    %v859 = vunpack.c.l.b16 %v224
    %v860 = vunpack.c.l.b16 %v225
    %v861 = vunpack.c.l.b16 %v226
    %v862 = vunpack.c.l.b16 %v227
    %v863 = vunpack.c.l.b16 %v228
    %v864 = vunpack.c.l.b16 %v229
    %v865 = vunpack.c.l.b16 %v230
    %v866 = vunpack.c.l.b16 %v231
    %v867 = vunpack.c.l.b16 %v232
    %v868 = vunpack.c.l.b16 %v233
    %v869 = vunpack.c.l.b16 %v234
    %v870 = vunpack.c.l.b16 %v235
    %v871 = vunpack.c.l.b16 %v236
    %v872 = vunpack.c.l.b16 %v237
    %v873 = vunpack.c.l.b16 %v238
    %v874 = vunpack.c.l.b16 %v239
    %v875 = vunpack.c.l.b16 %v240
    %v876 = vunpack.c.l.b16 %v241
    %v877 = vunpack.c.l.b16 %v242
    %v878 = vunpack.c.l.b16 %v243
    %v879 = vunpack.c.l.b16 %v244
    %v880 = vunpack.c.l.b16 %v245
    %v881 = vunpack.c.l.b16 %v246
    %v882 = vunpack.c.l.b16 %v247
    %v883 = vunpack.c.l.b16 %v248
    %v884 = vunpack.c.l.b16 %v249
    %v885 = vunpack.c.l.b16 %v250
    %v886 = vunpack.c.l.b16 %v251
    %v887 = vunpack.c.l.b16 %v252
    %v888 = vunpack.c.l.b16 %v253
    %v889 = vunpack.c.l.b16 %v254
    %v890 = vunpack.c.l.b16 %v255
    %v891 = vunpack.c.l.b16 %v256
    %v892 = vunpack.c.l.b16 %v257
    %v893 = vunpack.c.l.b16 %v258
    %v894 = vunpack.c.l.b16 %v259
    %v895 = vunpack.c.l.b16 %v260
    %v896 = vunpack.c.l.b16 %v261
    %v897 = vunpack.c.l.b16 %v262
    %v898 = vunpack.c.l.b16 %v263
    %v899 = vunpack.c.l.b16 %v264
    %v900 = vunpack.c.l.b16 %v265
    %v901 = vunpack.c.l.b16 %v266
    %v902 = vunpack.c.l.b16 %v267
    %v903 = vunpack.c.l.b16 %v268
    %v904 = vunpack.c.l.b16 %v269
    %v905 = vunpack.c.l.b16 %v270
    %v906 = vunpack.c.l.b16 %v271
    %v907 = vunpack.c.l.b16 %v272
    %v908 = vunpack.c.l.b16 %v273
    %v909 = vpack.c.b16 %v654, %v653
    %v910 = vpack.c.b16 %v656, %v655
    %v911 = vpack.c.b16 %v658, %v657
    %v912 = vpack.c.b16 %v660, %v659
    %v913 = vpack.c.b16 %v662, %v661
    %v914 = vpack.c.b16 %v664, %v663
    %v915 = vpack.c.b16 %v666, %v665
    %v916 = vpack.c.b16 %v668, %v667
    %v917 = vpack.c.b16 %v670, %v669
    %v918 = vpack.c.b16 %v672, %v671
    %v919 = vpack.c.b16 %v674, %v673
    %v920 = vpack.c.b16 %v676, %v675
    %v921 = vpack.c.b16 %v678, %v677
    %v922 = vpack.c.b16 %v680, %v679
    %v923 = vpack.c.b16 %v682, %v681
    %v924 = vpack.c.b16 %v684, %v683
    %v925 = vpack.c.b16 %v686, %v685
    %v926 = vpack.c.b16 %v688, %v687
    %v927 = vpack.c.b16 %v690, %v689
    %v928 = vpack.c.b16 %v692, %v691
    %v929 = vpack.c.b16 %v694, %v693
    %v930 = vpack.c.b16 %v696, %v695
    %v931 = vpack.c.b16 %v698, %v697
    %v932 = vpack.c.b16 %v700, %v699
    %v933 = vpack.c.b16 %v702, %v701
    %v934 = vpack.c.b16 %v704, %v703
    %v935 = vpack.c.b16 %v706, %v705
    %v936 = vpack.c.b16 %v708, %v707
    %v937 = vpack.c.b16 %v710, %v709
    %v938 = vpack.c.b16 %v712, %v711
    %v939 = vpack.c.b16 %v714, %v713
    %v940 = vpack.c.b16 %v716, %v715
    %v941 = vpack.c.b16 %v718, %v717
    %v942 = vpack.c.b16 %v720, %v719
    %v943 = vpack.c.b16 %v722, %v721
    %v944 = vpack.c.b16 %v724, %v723
    %v945 = vpack.c.b16 %v726, %v725
    %v946 = vpack.c.b16 %v728, %v727
    %v947 = vpack.c.b16 %v730, %v729
    %v948 = vpack.c.b16 %v732, %v731
    %v949 = vpack.c.b16 %v734, %v733
    %v950 = vpack.c.b16 %v736, %v735
    %v951 = vpack.c.b16 %v738, %v737
    %v952 = vpack.c.b16 %v740, %v739
    %v953 = vpack.c.b16 %v742, %v741
    %v954 = vpack.c.b16 %v744, %v743
    %v955 = vpack.c.b16 %v746, %v745
    %v956 = vpack.c.b16 %v748, %v747
    %v957 = vpack.c.b16 %v750, %v749
    %v958 = vpack.c.b16 %v752, %v751
    %v959 = vpack.c.b16 %v754, %v753
    %v960 = vpack.c.b16 %v756, %v755
    %v961 = vpack.c.b16 %v758, %v757
    %v962 = vpack.c.b16 %v760, %v759
    %v963 = vpack.c.b16 %v762, %v761
    %v964 = vpack.c.b16 %v764, %v763
    %v965 = vpack.c.b16 %v766, %v765
    %v966 = vpack.c.b16 %v768, %v767
    %v967 = vpack.c.b16 %v770, %v769
    %v968 = vpack.c.b16 %v772, %v771
    %v969 = vpack.c.b16 %v774, %v773
    %v970 = vpack.c.b16 %v776, %v775
    %v971 = vpack.c.b16 %v778, %v777
    %v972 = vpack.c.b16 %v780, %v779
    %v973 = vpack.c.b16 %v782, %v781
    %v974 = vpack.c.b16 %v784, %v783
    %v975 = vpack.c.b16 %v786, %v785
    %v976 = vpack.c.b16 %v788, %v787
    %v977 = vpack.c.b16 %v790, %v789
    %v978 = vpack.c.b16 %v792, %v791
    %v979 = vpack.c.b16 %v794, %v793
    %v980 = vpack.c.b16 %v796, %v795
    %v981 = vpack.c.b16 %v798, %v797
    %v982 = vpack.c.b16 %v800, %v799
    %v983 = vpack.c.b16 %v802, %v801
    %v984 = vpack.c.b16 %v804, %v803
    %v985 = vpack.c.b16 %v806, %v805
    %v986 = vpack.c.b16 %v808, %v807
    %v987 = vpack.c.b16 %v810, %v809
    %v988 = vpack.c.b16 %v812, %v811
    %v989 = vpack.c.b16 %v814, %v813
    %v990 = vpack.c.b16 %v816, %v815
    %v991 = vpack.c.b16 %v818, %v817
    %v992 = vpack.c.b16 %v820, %v819
    %v993 = vpack.c.b16 %v822, %v821
    %v994 = vpack.c.b16 %v824, %v823
    %v995 = vpack.c.b16 %v826, %v825
    %v996 = vpack.c.b16 %v828, %v827
    %v997 = vpack.c.b16 %v830, %v829
    %v998 = vpack.c.b16 %v832, %v831
    %v999 = vpack.c.b16 %v834, %v833
    %v1000 = vpack.c.b16 %v836, %v835
    %v1001 = vpack.c.b16 %v838, %v837
    %v1002 = vpack.c.b16 %v840, %v839
    %v1003 = vpack.c.b16 %v842, %v841
    %v1004 = vpack.c.b16 %v844, %v843
    %v1005 = vpack.c.b16 %v846, %v845
    %v1006 = vpack.c.b16 %v848, %v847
    %v1007 = vpack.c.b16 %v850, %v849
    %v1008 = vpack.c.b16 %v852, %v851
    %v1009 = vpack.c.b16 %v854, %v853
    %v1010 = vpack.c.b16 %v856, %v855
    %v1011 = vpack.c.b16 %v858, %v857
    %v1012 = vpack.c.b16 %v860, %v859
    %v1013 = vpack.c.b16 %v862, %v861
    %v1014 = vpack.c.b16 %v864, %v863
    %v1015 = vpack.c.b16 %v866, %v865
    %v1016 = vpack.c.b16 %v868, %v867
    %v1017 = vpack.c.b16 %v870, %v869
    %v1018 = vpack.c.b16 %v872, %v871
    %v1019 = vpack.c.b16 %v874, %v873
    %v1020 = vpack.c.b16 %v876, %v875
    %v1021 = vpack.c.b16 %v878, %v877
    %v1022 = vpack.c.b16 %v880, %v879
    %v1023 = vpack.c.b16 %v882, %v881
    %v1024 = vpack.c.b16 %v884, %v883
    %v1025 = vpack.c.b16 %v886, %v885
    %v1026 = vpack.c.b16 %v888, %v887
    %v1027 = vpack.c.b16 %v890, %v889
    %v1028 = vpack.c.b16 %v892, %v891
    %v1029 = vpack.c.b16 %v894, %v893
    %v1030 = vpack.c.b16 %v896, %v895
    %v1031 = vpack.c.b16 %v898, %v897
    %v1032 = vpack.c.b16 %v900, %v899
    %v1033 = vpack.c.b16 %v902, %v901
    %v1034 = vpack.c.b16 %v904, %v903
    %v1035 = vpack.c.b16 %v906, %v905
    %v1036 = vpack.c.b16 %v908, %v907
    %1165 = vmatprep.subr.bf16.mxu0 0
    %1166 = vmatpush1.bf16.msra.mxu0 %v909
    %1167 = vmatprep.subr.bf16.mxu0 0
    %1168 = vmatpush1.bf16.msra.mxu0 %v910
    %1169 = vmatprep.subr.bf16.mxu0 0
    %1170 = vmatpush1.bf16.msra.mxu0 %v911
    %1171 = vmatprep.subr.bf16.mxu0 0
    %1172 = vmatpush1.bf16.msra.mxu0 %v912
    %1173 = vmatprep.subr.bf16.mxu0 0
    %1174 = vmatpush1.bf16.msra.mxu0 %v913
    %1175 = vmatprep.subr.bf16.mxu0 0
    %1176 = vmatpush1.bf16.msra.mxu0 %v914
    %1177 = vmatprep.subr.bf16.mxu0 0
    %1178 = vmatpush1.bf16.msra.mxu0 %v915
    %1179 = vmatprep.subr.bf16.mxu0 0
    %1180 = vmatpush1.bf16.msra.mxu0 %v916
    %1181 = vmatprep.subr.bf16.mxu0 0
    %1182 = vmatpush1.bf16.msra.mxu0 %v917
    %1183 = vmatprep.subr.bf16.mxu0 0
    %1184 = vmatpush1.bf16.msra.mxu0 %v918
    %1185 = vmatprep.subr.bf16.mxu0 0
    %1186 = vmatpush1.bf16.msra.mxu0 %v919
    %1187 = vmatprep.subr.bf16.mxu0 0
    %1188 = vmatpush1.bf16.msra.mxu0 %v920
    %1189 = vmatprep.subr.bf16.mxu0 0
    %1190 = vmatpush1.bf16.msra.mxu0 %v921
    %1191 = vmatprep.subr.bf16.mxu0 0
    %1192 = vmatpush1.bf16.msra.mxu0 %v922
    %1193 = vmatprep.subr.bf16.mxu0 0
    %1194 = vmatpush1.bf16.msra.mxu0 %v923
    %1195 = vmatprep.subr.bf16.mxu0 0
    %1196 = vmatpush1.bf16.msra.mxu0 %v924
    %1197 = vmatprep.mubr.bf16.mxu0 %v320
    %1198 = vmatmul.mubr.bf16.gmra.mrb[0].mxu0 %v306
    %v1199 = vpop.f32.mrb[0].mxu0
    %v1200 = vadd.f32 %v279, %v1199
    %v1201 = vpop.f32.mrb[0].mxu0
    %v1202 = vpop.f32.mrb[0].mxu0
    %v1203 = vpop.f32.mrb[0].mxu0
    %1204 = vdwg.mxu0
    %1205 = vmatprep.subr.bf16.mxu0 0
    %1206 = vmatpush1.bf16.msra.mxu0 %v925
    %1207 = vmatprep.subr.bf16.mxu0 0
    %1208 = vmatpush1.bf16.msra.mxu0 %v926
    %1209 = vmatprep.subr.bf16.mxu0 0
    %1210 = vmatpush1.bf16.msra.mxu0 %v927
    %1211 = vmatprep.subr.bf16.mxu0 0
    %1212 = vmatpush1.bf16.msra.mxu0 %v928
    %1213 = vmatprep.subr.bf16.mxu0 0
    %1214 = vmatpush1.bf16.msra.mxu0 %v929
    %1215 = vmatprep.subr.bf16.mxu0 0
    %1216 = vmatpush1.bf16.msra.mxu0 %v930
    %1217 = vmatprep.subr.bf16.mxu0 0
    %1218 = vmatpush1.bf16.msra.mxu0 %v931
    %1219 = vmatprep.subr.bf16.mxu0 0
    %1220 = vmatpush1.bf16.msra.mxu0 %v932
    %1221 = vmatprep.subr.bf16.mxu0 0
    %1222 = vmatpush1.bf16.msra.mxu0 %v933
    %1223 = vmatprep.subr.bf16.mxu0 0
    %1224 = vmatpush1.bf16.msra.mxu0 %v934
    %1225 = vmatprep.subr.bf16.mxu0 0
    %1226 = vmatpush1.bf16.msra.mxu0 %v935
    %1227 = vmatprep.subr.bf16.mxu0 0
    %1228 = vmatpush1.bf16.msra.mxu0 %v936
    %1229 = vmatprep.subr.bf16.mxu0 0
    %1230 = vmatpush1.bf16.msra.mxu0 %v937
    %1231 = vmatprep.subr.bf16.mxu0 0
    %1232 = vmatpush1.bf16.msra.mxu0 %v938
    %1233 = vmatprep.subr.bf16.mxu0 0
    %1234 = vmatpush1.bf16.msra.mxu0 %v939
    %1235 = vmatprep.subr.bf16.mxu0 0
    %1236 = vmatpush1.bf16.msra.mxu0 %v940
    %1237 = vmatprep.mubr.bf16.mxu0 %v330
    %1238 = vmatmul.mubr.bf16.gmra.mrb[0].mxu0 %v328
    %v1239 = vpop.f32.mrb[0].mxu0
    %v1240 = vadd.f32 %v1200, %v1239
    %v1241 = vpop.f32.mrb[0].mxu0
    %v1242 = vpop.f32.mrb[0].mxu0
    %v1243 = vpop.f32.mrb[0].mxu0
    %1244 = vdwg.mxu0
    %1245 = vmatprep.subr.bf16.mxu0 0
    %1246 = vmatpush1.bf16.msra.mxu0 %v941
    %1247 = vmatprep.subr.bf16.mxu0 0
    %1248 = vmatpush1.bf16.msra.mxu0 %v942
    %1249 = vmatprep.subr.bf16.mxu0 0
    %1250 = vmatpush1.bf16.msra.mxu0 %v943
    %1251 = vmatprep.subr.bf16.mxu0 0
    %1252 = vmatpush1.bf16.msra.mxu0 %v944
    %1253 = vmatprep.subr.bf16.mxu0 0
    %1254 = vmatpush1.bf16.msra.mxu0 %v945
    %1255 = vmatprep.subr.bf16.mxu0 0
    %1256 = vmatpush1.bf16.msra.mxu0 %v946
    %1257 = vmatprep.subr.bf16.mxu0 0
    %1258 = vmatpush1.bf16.msra.mxu0 %v947
    %1259 = vmatprep.subr.bf16.mxu0 0
    %1260 = vmatpush1.bf16.msra.mxu0 %v948
    %1261 = vmatprep.subr.bf16.mxu0 0
    %1262 = vmatpush1.bf16.msra.mxu0 %v949
    %1263 = vmatprep.subr.bf16.mxu0 0
    %1264 = vmatpush1.bf16.msra.mxu0 %v950
    %1265 = vmatprep.subr.bf16.mxu0 0
    %1266 = vmatpush1.bf16.msra.mxu0 %v951
    %1267 = vmatprep.subr.bf16.mxu0 0
    %1268 = vmatpush1.bf16.msra.mxu0 %v952
    %1269 = vmatprep.subr.bf16.mxu0 0
    %1270 = vmatpush1.bf16.msra.mxu0 %v953
    %1271 = vmatprep.subr.bf16.mxu0 0
    %1272 = vmatpush1.bf16.msra.mxu0 %v954
    %1273 = vmatprep.subr.bf16.mxu0 0
    %1274 = vmatpush1.bf16.msra.mxu0 %v955
    %1275 = vmatprep.subr.bf16.mxu0 0
    %1276 = vmatpush1.bf16.msra.mxu0 %v956
    %1277 = vmatprep.mubr.bf16.mxu0 %v327
    %1278 = vmatmul.mubr.bf16.gmra.mrb[0].mxu0 %v313
    %v1279 = vpop.f32.mrb[0].mxu0
    %v1280 = vadd.f32 %v1240, %v1279
    %v1281 = vpop.f32.mrb[0].mxu0
    %v1282 = vpop.f32.mrb[0].mxu0
    %v1283 = vpop.f32.mrb[0].mxu0
    %1284 = vdwg.mxu0
    %1285 = vmatprep.subr.bf16.mxu0 0
    %1286 = vmatpush1.bf16.msra.mxu0 %v957
    %1287 = vmatprep.subr.bf16.mxu0 0
    %1288 = vmatpush1.bf16.msra.mxu0 %v958
    %1289 = vmatprep.subr.bf16.mxu0 0
    %1290 = vmatpush1.bf16.msra.mxu0 %v959
    %1291 = vmatprep.subr.bf16.mxu0 0
    %1292 = vmatpush1.bf16.msra.mxu0 %v960
    %1293 = vmatprep.subr.bf16.mxu0 0
    %1294 = vmatpush1.bf16.msra.mxu0 %v961
    %1295 = vmatprep.subr.bf16.mxu0 0
    %1296 = vmatpush1.bf16.msra.mxu0 %v962
    %1297 = vmatprep.subr.bf16.mxu0 0
    %1298 = vmatpush1.bf16.msra.mxu0 %v963
    %1299 = vmatprep.subr.bf16.mxu0 0
    %1300 = vmatpush1.bf16.msra.mxu0 %v964
    %1301 = vmatprep.subr.bf16.mxu0 0
    %1302 = vmatpush1.bf16.msra.mxu0 %v965
    %1303 = vmatprep.subr.bf16.mxu0 0
    %1304 = vmatpush1.bf16.msra.mxu0 %v966
    %1305 = vmatprep.subr.bf16.mxu0 0
    %1306 = vmatpush1.bf16.msra.mxu0 %v967
    %1307 = vmatprep.subr.bf16.mxu0 0
    %1308 = vmatpush1.bf16.msra.mxu0 %v968
    %1309 = vmatprep.subr.bf16.mxu0 0
    %1310 = vmatpush1.bf16.msra.mxu0 %v969
    %1311 = vmatprep.subr.bf16.mxu0 0
    %1312 = vmatpush1.bf16.msra.mxu0 %v970
    %1313 = vmatprep.subr.bf16.mxu0 0
    %1314 = vmatpush1.bf16.msra.mxu0 %v971
    %1315 = vmatprep.subr.bf16.mxu0 0
    %1316 = vmatpush1.bf16.msra.mxu0 %v972
    %1317 = vmatprep.mubr.bf16.mxu0 %v331
    %1318 = vmatmul.mubr.bf16.gmra.mrb[0].mxu0 %v329
    %v1319 = vpop.f32.mrb[0].mxu0
    %v1320 = vadd.f32 %v1280, %v1319
    %v1321 = vpop.f32.mrb[0].mxu0
    %v1322 = vpop.f32.mrb[0].mxu0
    %v1323 = vpop.f32.mrb[0].mxu0
    %1324 = vdwg.mxu0
    %1325 = vmatprep.subr.bf16.mxu0 0
    %1326 = vmatpush1.bf16.msra.mxu0 %v973
    %1327 = vmatprep.subr.bf16.mxu0 0
    %1328 = vmatpush1.bf16.msra.mxu0 %v974
    %1329 = vmatprep.subr.bf16.mxu0 0
    %1330 = vmatpush1.bf16.msra.mxu0 %v975
    %1331 = vmatprep.subr.bf16.mxu0 0
    %1332 = vmatpush1.bf16.msra.mxu0 %v976
    %1333 = vmatprep.subr.bf16.mxu0 0
    %1334 = vmatpush1.bf16.msra.mxu0 %v977
    %1335 = vmatprep.subr.bf16.mxu0 0
    %1336 = vmatpush1.bf16.msra.mxu0 %v978
    %1337 = vmatprep.subr.bf16.mxu0 0
    %1338 = vmatpush1.bf16.msra.mxu0 %v979
    %1339 = vmatprep.subr.bf16.mxu0 0
    %1340 = vmatpush1.bf16.msra.mxu0 %v980
    %1341 = vmatprep.subr.bf16.mxu0 0
    %1342 = vmatpush1.bf16.msra.mxu0 %v981
    %1343 = vmatprep.subr.bf16.mxu0 0
    %1344 = vmatpush1.bf16.msra.mxu0 %v982
    %1345 = vmatprep.subr.bf16.mxu0 0
    %1346 = vmatpush1.bf16.msra.mxu0 %v983
    %1347 = vmatprep.subr.bf16.mxu0 0
    %1348 = vmatpush1.bf16.msra.mxu0 %v984
    %1349 = vmatprep.subr.bf16.mxu0 0
    %1350 = vmatpush1.bf16.msra.mxu0 %v985
    %1351 = vmatprep.subr.bf16.mxu0 0
    %1352 = vmatpush1.bf16.msra.mxu0 %v986
    %1353 = vmatprep.subr.bf16.mxu0 0
    %1354 = vmatpush1.bf16.msra.mxu0 %v987
    %1355 = vmatprep.subr.bf16.mxu0 0
    %1356 = vmatpush1.bf16.msra.mxu0 %v988
    %1357 = vmatprep.mubr.bf16.mxu0 %v369
    %1358 = vmatmul.mubr.bf16.gmra.mrb[0].mxu0 %v355
    %v1359 = vpop.f32.mrb[0].mxu0
    %v1360 = vadd.f32 %v1320, %v1359
    %v1361 = vpop.f32.mrb[0].mxu0
    %v1362 = vpop.f32.mrb[0].mxu0
    %v1363 = vpop.f32.mrb[0].mxu0
    %1364 = vdwg.mxu0
    %1365 = vmatprep.subr.bf16.mxu0 0
    %1366 = vmatpush1.bf16.msra.mxu0 %v989
    %1367 = vmatprep.subr.bf16.mxu0 0
    %1368 = vmatpush1.bf16.msra.mxu0 %v990
    %1369 = vmatprep.subr.bf16.mxu0 0
    %1370 = vmatpush1.bf16.msra.mxu0 %v991
    %1371 = vmatprep.subr.bf16.mxu0 0
    %1372 = vmatpush1.bf16.msra.mxu0 %v992
    %1373 = vmatprep.subr.bf16.mxu0 0
    %1374 = vmatpush1.bf16.msra.mxu0 %v993
    %1375 = vmatprep.subr.bf16.mxu0 0
    %1376 = vmatpush1.bf16.msra.mxu0 %v994
    %1377 = vmatprep.subr.bf16.mxu0 0
    %1378 = vmatpush1.bf16.msra.mxu0 %v995
    %1379 = vmatprep.subr.bf16.mxu0 0
    %1380 = vmatpush1.bf16.msra.mxu0 %v996
    %1381 = vmatprep.subr.bf16.mxu0 0
    %1382 = vmatpush1.bf16.msra.mxu0 %v997
    %1383 = vmatprep.subr.bf16.mxu0 0
    %1384 = vmatpush1.bf16.msra.mxu0 %v998
    %1385 = vmatprep.subr.bf16.mxu0 0
    %1386 = vmatpush1.bf16.msra.mxu0 %v999
    %1387 = vmatprep.subr.bf16.mxu0 0
    %1388 = vmatpush1.bf16.msra.mxu0 %v1000
    %1389 = vmatprep.subr.bf16.mxu0 0
    %1390 = vmatpush1.bf16.msra.mxu0 %v1001
    %1391 = vmatprep.subr.bf16.mxu0 0
    %1392 = vmatpush1.bf16.msra.mxu0 %v1002
    %1393 = vmatprep.subr.bf16.mxu0 0
    %1394 = vmatpush1.bf16.msra.mxu0 %v1003
    %1395 = vmatprep.subr.bf16.mxu0 0
    %1396 = vmatpush1.bf16.msra.mxu0 %v1004
    %1397 = vmatprep.mubr.bf16.mxu0 %v379
    %1398 = vmatmul.mubr.bf16.gmra.mrb[0].mxu0 %v377
    %v1399 = vpop.f32.mrb[0].mxu0
    %v1400 = vadd.f32 %v1360, %v1399
    %v1401 = vpop.f32.mrb[0].mxu0
    %v1402 = vpop.f32.mrb[0].mxu0
    %v1403 = vpop.f32.mrb[0].mxu0
    %1404 = vdwg.mxu0
    %1405 = vmatprep.subr.bf16.mxu0 0
    %1406 = vmatpush1.bf16.msra.mxu0 %v1005
    %1407 = vmatprep.subr.bf16.mxu0 0
    %1408 = vmatpush1.bf16.msra.mxu0 %v1006
    %1409 = vmatprep.subr.bf16.mxu0 0
    %1410 = vmatpush1.bf16.msra.mxu0 %v1007
    %1411 = vmatprep.subr.bf16.mxu0 0
    %1412 = vmatpush1.bf16.msra.mxu0 %v1008
    %1413 = vmatprep.subr.bf16.mxu0 0
    %1414 = vmatpush1.bf16.msra.mxu0 %v1009
    %1415 = vmatprep.subr.bf16.mxu0 0
    %1416 = vmatpush1.bf16.msra.mxu0 %v1010
    %1417 = vmatprep.subr.bf16.mxu0 0
    %1418 = vmatpush1.bf16.msra.mxu0 %v1011
    %1419 = vmatprep.subr.bf16.mxu0 0
    %1420 = vmatpush1.bf16.msra.mxu0 %v1012
    %1421 = vmatprep.subr.bf16.mxu0 0
    %1422 = vmatpush1.bf16.msra.mxu0 %v1013
    %1423 = vmatprep.subr.bf16.mxu0 0
    %1424 = vmatpush1.bf16.msra.mxu0 %v1014
    %1425 = vmatprep.subr.bf16.mxu0 0
    %1426 = vmatpush1.bf16.msra.mxu0 %v1015
    %1427 = vmatprep.subr.bf16.mxu0 0
    %1428 = vmatpush1.bf16.msra.mxu0 %v1016
    %1429 = vmatprep.subr.bf16.mxu0 0
    %1430 = vmatpush1.bf16.msra.mxu0 %v1017
    %1431 = vmatprep.subr.bf16.mxu0 0
    %1432 = vmatpush1.bf16.msra.mxu0 %v1018
    %1433 = vmatprep.subr.bf16.mxu0 0
    %1434 = vmatpush1.bf16.msra.mxu0 %v1019
    %1435 = vmatprep.subr.bf16.mxu0 0
    %1436 = vmatpush1.bf16.msra.mxu0 %v1020
    %1437 = vmatprep.mubr.bf16.mxu0 %v376
    %1438 = vmatmul.mubr.bf16.gmra.mrb[0].mxu0 %v362
    %v1439 = vpop.f32.mrb[0].mxu0
    %v1440 = vadd.f32 %v1400, %v1439
    %v1441 = vpop.f32.mrb[0].mxu0
    %v1442 = vpop.f32.mrb[0].mxu0
    %v1443 = vpop.f32.mrb[0].mxu0
    %1444 = vdwg.mxu0
    %1445 = vmatprep.subr.bf16.mxu0 0
    %1446 = vmatpush1.bf16.msra.mxu0 %v1021
    %1447 = vmatprep.subr.bf16.mxu0 0
    %1448 = vmatpush1.bf16.msra.mxu0 %v1022
    %1449 = vmatprep.subr.bf16.mxu0 0
    %1450 = vmatpush1.bf16.msra.mxu0 %v1023
    %1451 = vmatprep.subr.bf16.mxu0 0
    %1452 = vmatpush1.bf16.msra.mxu0 %v1024
    %1453 = vmatprep.subr.bf16.mxu0 0
    %1454 = vmatpush1.bf16.msra.mxu0 %v1025
    %1455 = vmatprep.subr.bf16.mxu0 0
    %1456 = vmatpush1.bf16.msra.mxu0 %v1026
    %1457 = vmatprep.subr.bf16.mxu0 0
    %1458 = vmatpush1.bf16.msra.mxu0 %v1027
    %1459 = vmatprep.subr.bf16.mxu0 0
    %1460 = vmatpush1.bf16.msra.mxu0 %v1028
    %1461 = vmatprep.subr.bf16.mxu0 0
    %1462 = vmatpush1.bf16.msra.mxu0 %v1029
    %1463 = vmatprep.subr.bf16.mxu0 0
    %1464 = vmatpush1.bf16.msra.mxu0 %v1030
    %1465 = vmatprep.subr.bf16.mxu0 0
    %1466 = vmatpush1.bf16.msra.mxu0 %v1031
    %1467 = vmatprep.subr.bf16.mxu0 0
    %1468 = vmatpush1.bf16.msra.mxu0 %v1032
    %1469 = vmatprep.subr.bf16.mxu0 0
    %1470 = vmatpush1.bf16.msra.mxu0 %v1033
    %1471 = vmatprep.subr.bf16.mxu0 0
    %1472 = vmatpush1.bf16.msra.mxu0 %v1034
    %1473 = vmatprep.subr.bf16.mxu0 0
    %1474 = vmatpush1.bf16.msra.mxu0 %v1035
    %1475 = vmatprep.subr.bf16.mxu0 0
    %1476 = vmatpush1.bf16.msra.mxu0 %v1036
    %1477 = vmatprep.mubr.bf16.mxu0 %v380
    %1478 = vmatmul.mubr.bf16.gmra.mrb[0].mxu0 %v378
    %v1479 = vpop.f32.mrb[0].mxu0
    %v1480 = vadd.f32 %v1440, %v1479
    %v1481 = vpop.f32.mrb[0].mxu0
    %v1482 = vpop.f32.mrb[0].mxu0
    %v1483 = vpop.f32.mrb[0].mxu0
    %1484 = vdwg.mxu0
    %v1485 = vlaneseq
    %v1486 = vand.u32 %v1485, 127
    %vm1487 = vcmp.lt.s32.totalorder %v1486, 10
    %v1488 = vsel %vm1487, %v1480, -1e+30
    %vm1489 = vcmask 1041408
    %v1490 = vsel %vm1489, %v1488, -inf
    %1491 = vmax.xlane.f32.xlu0 %v1490
    %v1492 = vpop.xlane.xlu0 %1491
    %v1493 = vsub.f32 %v1488, %v1492
    %v1494 = vmul.f32 %v1493, 1.442695
    %v1495 = vpow.pop %v1494
    %v1496 = vsel %vm1487, %v1495, 0.0
    %v1497 = vsel %vm1489, %v1496, 0.0
    %1498 = vadd.xlane.f32.xlu0 %v1497
    %v1499 = vpop.xlane.xlu0 %1498
    %v1500 = vrcp.pop %v1499
    %v1501 = vmul.f32 %v1496, %v1500
    %1502 = vst [vmem:[#allocation2] sm:$0x3] %v1501
    // Predicated region
    $region14: #{classifier_forward.9} parent=1 // pred_check
      _
    $region15: #{classifier_forward.9} parent=1 // pred_check_branch
      %1504 = sbr.rel (0) target = $region17
    $region16: #{classifier_forward.9} parent=1 // pred_region
      %s1506 = ssub.s32 32, 32
      %1507 = vsyncadd [#allocation3], %s1506
      %s1509 = sshll.u32 [#allocation2], 4
      %s1510 = int_to_ptr.vmem [resolvable:$true] %s1509
      %1512 = dma.vmem_to_hbm [thread:$0]  %s1510, 32, %s3, [#allocation3]
    $region17: #{classifier_forward.9} parent=1 // pred_fallthru
      _
    // Predicated region
    $region18: #{classifier_forward.9} parent=1 // pred_check
      _
    $region19: #{classifier_forward.9} parent=1 // pred_check_branch
      %1514 = sbr.rel (0) target = $region21
    $region20: #{classifier_forward.9} parent=1 // pred_region
      %1515 = dma.done [#allocation3], 32
    $region21: #{classifier_forward.9} parent=1 // pred_fallthru
      _
    %1516 = vsyncpa [#allocation3], 1

</llo_original>
